<compile_context>
chip_gen: v5e
topology: v5e:2x2
jax: 0.10.0
libtpu: 0.0.40
codegen_flags: <defaults>
</compile_context>

<pallas_src>
import jax
import jax.numpy as jnp
import numpy as np
from jax.experimental import pallas as pl
from jax.experimental.pallas import tpu as pltpu

EPS = 1e-5  # PyTorch BatchNorm2d default eps


# ----------------------------------------------------------------------------
# Fused dense-block kernel (all layers, one image per grid step)
# ----------------------------------------------------------------------------
def _make_dense_block_kernel(c0, H, W, layer_dims):
    """Build the fused dense-block kernel body.

    layer_dims: static list of (cin, cmid, growth) per layer.
    Kernel args: x_ref, mask_ref, s1_tbl, t1_tbl, t2_tbl, w2_tbl,
                 then one w1 ref per layer, then out_ref = (H*W, C_total) slab.
    """
    HW = H * W
    taps = tuple((kh, kw) for kh in range(3) for kw in range(3))

    def kernel(x_ref, mask_ref, s1_ref, t1_ref, t2_ref, w2_ref, *rest):
        out_ref = rest[-1]
        w1_refs = rest[:-1]

        # Input features occupy channels [0, c0) of the shared slab.
        out_ref[:, 0:c0] = x_ref[...]

        # Host-precomputed W-edge masks, shape (HW, 1) each:
        #   column 0 -> 1.0 where w >= 1, column 1 -> 1.0 where w <= W-2.
        m_w_ge1 = mask_ref[:, 0:1]
        m_w_le = mask_ref[:, 1:2]

        c_off = c0
        for li, (cin, cmid, gr) in enumerate(layer_dims):
            # torch.cat(features, 1) == read the first `cin` slab channels.
            x = out_ref[:, 0:cin]

            # norm1 (pre-folded scale/shift) + relu1 -- fp32 VPU math.
            s1 = s1_ref[li:li + 1, 0:cin]
            t1 = t1_ref[li:li + 1, 0:cin]
            y1 = jnp.maximum(x * s1 + t1, 0.0)

            # conv1: 1x1 conv == channel matmul on the MXU (bf16 in, fp32 acc).
            # BN2 scale s2 is pre-folded into w1's columns -> only t2 remains.
            z = jnp.dot(y1.astype(jnp.bfloat16), w1_refs[li][...],
                        preferred_element_type=jnp.float32)        # (HW, cmid)

            # norm2 (shift only) + relu2, cast to bf16 at the MXU boundary.
            t2 = t2_ref[li:li + 1, :]
            y2 = jnp.maximum(z + t2, 0.0).astype(jnp.bfloat16)

            # conv2: 3x3, stride 1, pad 1 -- ONE wide matmul producing all nine
            # taps at once (output width 9*gr), then combine the nine gr-wide
            # column groups with static zero-filled row shifts + edge masks.
            p_all = jnp.dot(y2, w2_ref[li],
                            preferred_element_type=jnp.float32)    # (HW, 9*gr)

            acc = p_all[:, 4 * gr:5 * gr]                # center tap (kh=kw=1)
            for t, (kh, kw) in enumerate(taps):
                if kh == 1 and kw == 1:
                    continue
                dr = (kh - 1) * W + (kw - 1)             # row offset in (HW, .)
                tap = p_all[:, t * gr:(t + 1) * gr]
                if dr > 0:
                    sh = jnp.concatenate(
                        [tap[dr:, :], jnp.zeros((dr, gr), jnp.float32)], axis=0)
                else:
                    sh = jnp.concatenate(
                        [jnp.zeros((-dr, gr), jnp.float32), tap[:HW + dr, :]],
                        axis=0)
                if kw == 0:
                    sh = sh * m_w_ge1
                elif kw == 2:
                    sh = sh * m_w_le
                acc = acc + sh

            # New features land in their static channel slice of the slab.
            # TODO(synk): on v5e, batch several layers' gr-wide writes into
            #             128-lane-aligned chunks to avoid masked vst.msk.
            out_ref[:, c_off:c_off + gr] = acc.astype(out_ref.dtype)
            c_off += gr

    return kernel


def _const_spec(shape):
    nd = len(shape)
    return pl.BlockSpec(shape, lambda n, _nd=nd: (0,) * _nd)


def _vmem_limit_bytes(vmem_est):
    # Generation-aware clamp: ~56 MiB on 64 MiB parts (v7x), ~100 MiB on
    # 128 MiB parts (v5e/v6e).  Falls back to the conservative cap off-TPU.
    try:
        cap = int(pltpu.get_tpu_info().vmem_capacity_bytes)
    except Exception:
        cap = 64 * 2 ** 20
    hard_cap = 100 * 2 ** 20 if cap >= 100 * 2 ** 20 else 56 * 2 ** 20
    return int(min(max(2 * vmem_est, 16 * 2 ** 20), hard_cap))


# ----------------------------------------------------------------------------
# _DenseBlock wrapper: NCHW <-> flattened NHWC at the boundary, BN folding
# ----------------------------------------------------------------------------
def dense_block_forward(x_nchw, params):
    x = jnp.transpose(x_nchw, (0, 2, 3, 1)).astype(jnp.float32)   # NHWC
    N, H, W, C0 = x.shape
    HW = H * W
    x2 = x.reshape(N, HW, C0)                                     # flattened

    L = len(params)
    cmid = params[0]["w1"].shape[1]
    gr = params[0]["w2"].shape[3]
    cin_max = C0 + (L - 1) * gr
    c_total = C0 + L * gr

    s1_rows, t1_rows, t2_rows, w1_list, w2_list, layer_dims = [], [], [], [], [], []
    flops = 0
    c_run = C0
    for p in params:
        cin, cm = p["w1"].shape
        g = p["w2"].shape[3]
        assert cin == c_run and cm == cmid and g == gr, (cin, c_run, cm, g)
        # Fold BN running stats into per-channel scale/shift (wrapper-side).
        s1 = p["g1"].reshape(-1) * jax.lax.rsqrt(p["v1"].reshape(-1) + EPS)
        t1 = p["b1"].reshape(-1) - p["m1"].reshape(-1) * s1
        s2 = p["g2"].reshape(-1) * jax.lax.rsqrt(p["v2"].reshape(-1) + EPS)
        t2 = p["b2"].reshape(-1) - p["m2"].reshape(-1) * s2
        # Fold s2 into conv1's weight columns (conv1 is bias-free 1x1).
        w1 = (p["w1"] * s2[None, :]).astype(jnp.bfloat16)          # (cin, cmid)
        # HWIO (3,3,cmid,gr) -> (cmid, 9*gr), column order (kh, kw, g).
        w2 = jnp.transpose(p["w2"], (2, 0, 1, 3)).reshape(
            cmid, 9 * gr).astype(jnp.bfloat16)
        pad = cin_max - cin
        s1_rows.append(jnp.pad(s1, (0, pad)))
        t1_rows.append(jnp.pad(t1, (0, pad)))
        t2_rows.append(t2)
        w1_list.append(w1)
        w2_list.append(w2)
        layer_dims.append((cin, cmid, gr))
        flops += N * 2 * HW * cmid * (cin + 9 * gr)
        c_run += gr

    s1_tbl = jnp.stack(s1_rows).astype(jnp.float32)                # (L, cin_max)
    t1_tbl = jnp.stack(t1_rows).astype(jnp.float32)                # (L, cin_max)
    t2_tbl = jnp.stack(t2_rows).astype(jnp.float32)                # (L, cmid)
    w2_tbl = jnp.stack(w2_list)                                    # (L, cmid, 9*gr)

    # W-edge masks for the shifted-output conv2 taps (computed on the host).
    col = np.arange(HW, dtype=np.int32) % W
    edge_mask = jnp.asarray(
        np.stack([(col >= 1), (col <= W - 2)], axis=1).astype(np.float32))

    flat_args = [x2, edge_mask, s1_tbl, t1_tbl, t2_tbl, w2_tbl] + w1_list
    in_specs = [pl.BlockSpec((None, HW, C0), lambda n: (n, 0, 0))]
    in_specs += [_const_spec(a.shape) for a in flat_args[1:]]

    out_shape = jax.ShapeDtypeStruct((N, HW, c_total), jnp.float32)
    out_spec = pl.BlockSpec((None, HW, c_total), lambda n: (n, 0, 0))

    # Rough VMEM need: double-buffered in/out blocks + params + temporaries.
    in_block_bytes = HW * C0 * 4
    out_block_bytes = HW * c_total * 4
    param_bytes = sum(int(np.prod(a.shape)) * a.dtype.itemsize
                      for a in flat_args[1:])
    tmp_bytes = HW * (10 * cin_max + 8 * cmid + 6 * 9 * gr) * 4
    vmem_est = 2 * (in_block_bytes + out_block_bytes) + 2 * param_bytes + tmp_bytes
    vmem_limit = _vmem_limit_bytes(vmem_est)

    bytes_accessed = int(N * (in_block_bytes + out_block_bytes) + param_bytes)

    y = pl.pallas_call(
        _make_dense_block_kernel(C0, H, W, layer_dims),
        out_shape=out_shape,
        grid=(N,),
        in_specs=in_specs,
        out_specs=out_spec,
        compiler_params=pltpu.CompilerParams(
            dimension_semantics=("parallel",),
            vmem_limit_bytes=vmem_limit),
        cost_estimate=pl.CostEstimate(
            flops=int(flops), transcendentals=0,
            bytes_accessed=bytes_accessed),
    )(*flat_args)

    return jnp.transpose(y.reshape(N, H, W, c_total), (0, 3, 1, 2))  # NCHW


# ----------------------------------------------------------------------------
# Deterministic parameter init (shapes follow _DenseLayer.__init__)
# ----------------------------------------------------------------------------
def init_dense_block_params(key, num_layers, num_input_features, bn_size,
                            growth_rate):
    params = []
    cmid = bn_size * growth_rate
    for i in range(num_layers):
        cin = num_input_features + i * growth_rate
        ks = jax.random.split(jax.random.fold_in(key, i), 10)
        p = dict(
            g1=jax.random.uniform(ks[0], (1, cin), jnp.float32, 0.5, 1.5),
            b1=0.1 * jax.random.normal(ks[1], (1, cin), jnp.float32),
            m1=0.1 * jax.random.normal(ks[2], (1, cin), jnp.float32),
            v1=jax.random.uniform(ks[3], (1, cin), jnp.float32, 0.5, 1.5),
            # conv1 weight (Cout, Cin, 1, 1) stored transposed as (Cin, Cout)
            w1=jax.random.normal(ks[4], (cin, cmid), jnp.float32) / np.sqrt(cin),
            g2=jax.random.uniform(ks[5], (1, cmid), jnp.float32, 0.5, 1.5),
            b2=0.1 * jax.random.normal(ks[6], (1, cmid), jnp.float32),
            m2=0.1 * jax.random.normal(ks[7], (1, cmid), jnp.float32),
            v2=jax.random.uniform(ks[8], (1, cmid), jnp.float32, 0.5, 1.5),
            # conv2 weight (Cout, Cin, 3, 3) stored HWIO as (3, 3, Cmid, growth)
            w2=jax.random.normal(ks[9], (3, 3, cmid, growth_rate),
                                 jnp.float32) / np.sqrt(9 * cmid),
        )
        params.append(p)
    return params


# ----------------------------------------------------------------------------
# Pure-JAX fp32 reference for correctness checking
# ----------------------------------------------------------------------------
def _dense_layer_ref(x_nhwc, p):
    def bn_relu(t, g, b, m, v):
        r = lambda a: a.reshape(1, 1, 1, -1)
        return jnp.maximum((t - r(m)) * (r(g) / jnp.sqrt(r(v) + EPS)) + r(b), 0.0)

    y1 = bn_relu(x_nhwc, p["g1"], p["b1"], p["m1"], p["v1"])
    z = jnp.einsum("nhwc,ck->nhwk", y1, p["w1"])
    y2 = bn_relu(z, p["g2"], p["b2"], p["m2"], p["v2"])
    return jax.lax.conv_general_dilated(
        y2, p["w2"], window_strides=(1, 1), padding="SAME",
        dimension_numbers=("NHWC", "HWIO", "NHWC"))


def dense_block_ref(x_nchw, params):
    feats = [jnp.transpose(x_nchw, (0, 2, 3, 1))]
    for p in params:
        feats.append(_dense_layer_ref(jnp.concatenate(feats, axis=-1), p))
    return jnp.transpose(jnp.concatenate(feats, axis=-1), (0, 3, 1, 2))


if __name__ == "__main__":
    # Small DenseBlock: 3 layers, 8 input features, bn_size=2, growth_rate=8
    num_layers, num_input_features, bn_size, growth_rate = 3, 8, 2, 8
    N, H, W = 2, 16, 16

    key = jax.random.PRNGKey(0)
    k_x, k_p = jax.random.split(key)
    x = jax.random.normal(k_x, (N, num_input_features, H, W), jnp.float32)  # NCHW
    params = init_dense_block_params(k_p, num_layers, num_input_features,
                                     bn_size, growth_rate)

    out = jax.block_until_ready(dense_block_forward(x, params))

    expected_channels = num_input_features + num_layers * growth_rate
    assert out.shape == (N, expected_channels, H, W), out.shape

    ref = jax.block_until_ready(dense_block_ref(x, params))
    # bf16 MXU operands (fp32 accumulation) vs fp32 reference -> loose tolerance.
    np.testing.assert_allclose(np.asarray(out), np.asarray(ref),
                               rtol=5e-2, atol=5e-2)

    print("KERNEL_OK")
</pallas_src>

<mosaic_0001>
module attributes {stable_mosaic.version = 11 : i64} {
  func.func @kernel(%arg0: i32, %arg1: memref<1x256x8xf32, #tpu.memory_space<vmem>>, %arg2: memref<256x2xf32, #tpu.memory_space<vmem>>, %arg3: memref<3x24xf32, #tpu.memory_space<vmem>>, %arg4: memref<3x24xf32, #tpu.memory_space<vmem>>, %arg5: memref<3x16xf32, #tpu.memory_space<vmem>>, %arg6: memref<3x16x72xbf16, #tpu.memory_space<vmem>>, %arg7: memref<8x16xbf16, #tpu.memory_space<vmem>>, %arg8: memref<16x16xbf16, #tpu.memory_space<vmem>>, %arg9: memref<24x16xbf16, #tpu.memory_space<vmem>>, %arg10: memref<1x256x32xf32, #tpu.memory_space<vmem>>) attributes {dimension_semantics = [#tpu.dimension_semantics<parallel>], iteration_bounds = array<i64: 2>, scalar_prefetch = 0 : i64, scratch_operands = 0 : i64, tpu.core_type = #tpu.core_type<tc>, window_params = [{transform_indices = @transform_0, window_bounds = array<i64: 1, 256, 8>}, {pipeline_mode = #tpu.pipeline_mode<synchronous>, transform_indices = @transform_1, window_bounds = array<i64: 256, 2>}, {pipeline_mode = #tpu.pipeline_mode<synchronous>, transform_indices = @transform_2, window_bounds = array<i64: 3, 24>}, {pipeline_mode = #tpu.pipeline_mode<synchronous>, transform_indices = @transform_3, window_bounds = array<i64: 3, 24>}, {pipeline_mode = #tpu.pipeline_mode<synchronous>, transform_indices = @transform_4, window_bounds = array<i64: 3, 16>}, {pipeline_mode = #tpu.pipeline_mode<synchronous>, transform_indices = @transform_5, window_bounds = array<i64: 3, 16, 72>}, {pipeline_mode = #tpu.pipeline_mode<synchronous>, transform_indices = @transform_6, window_bounds = array<i64: 8, 16>}, {pipeline_mode = #tpu.pipeline_mode<synchronous>, transform_indices = @transform_7, window_bounds = array<i64: 16, 16>}, {pipeline_mode = #tpu.pipeline_mode<synchronous>, transform_indices = @transform_8, window_bounds = array<i64: 24, 16>}, {transform_indices = @transform_9, window_bounds = array<i64: 1, 256, 32>}]} {
    %c0 = arith.constant 0 : index
    %c0_0 = arith.constant 0 : index
    %c0_1 = arith.constant 0 : index
    %0 = vector.load %arg1[%c0, %c0_0, %c0_1] : memref<1x256x8xf32, #tpu.memory_space<vmem>>, vector<1x256x8xf32>
    %1 = vector.shape_cast %0 : vector<1x256x8xf32> to vector<256x8xf32>
    %c0_2 = arith.constant 0 : index
    %c0_3 = arith.constant 0 : index
    %c0_4 = arith.constant 0 : index
    %2 = vector.load %arg10[%c0_2, %c0_3, %c0_4] : memref<1x256x32xf32, #tpu.memory_space<vmem>>, vector<1x256x8xf32>
    %3 = vector.shape_cast %2 : vector<1x256x8xf32> to vector<256x8xf32>
    %4 = vector.shape_cast %1 : vector<256x8xf32> to vector<1x256x8xf32>
    tpu.vector_store %arg10[%c0_2, %c0_3, %c0_4], %4 {strides = array<i32>} : memref<1x256x32xf32, #tpu.memory_space<vmem>>, vector<1x256x8xf32>,
    %c0_5 = arith.constant 0 : index
    %c0_6 = arith.constant 0 : index
    %5 = vector.load %arg2[%c0_5, %c0_6] : memref<256x2xf32, #tpu.memory_space<vmem>>, vector<256x1xf32>
    %c0_7 = arith.constant 0 : index
    %c1 = arith.constant 1 : index
    %6 = vector.load %arg2[%c0_7, %c1] : memref<256x2xf32, #tpu.memory_space<vmem>>, vector<256x1xf32>
    %c0_8 = arith.constant 0 : index
    %c0_9 = arith.constant 0 : index
    %c0_10 = arith.constant 0 : index
    %7 = vector.load %arg10[%c0_8, %c0_9, %c0_10] : memref<1x256x32xf32, #tpu.memory_space<vmem>>, vector<1x256x8xf32>
    %8 = vector.shape_cast %7 : vector<1x256x8xf32> to vector<256x8xf32>
    %c0_11 = arith.constant 0 : index
    %c0_12 = arith.constant 0 : index
    %9 = vector.load %arg3[%c0_11, %c0_12] : memref<3x24xf32, #tpu.memory_space<vmem>>, vector<1x8xf32>
    %c0_13 = arith.constant 0 : index
    %c0_14 = arith.constant 0 : index
    %10 = vector.load %arg4[%c0_13, %c0_14] : memref<3x24xf32, #tpu.memory_space<vmem>>, vector<1x8xf32>
    %11 = vector.broadcast %9 : vector<1x8xf32> to vector<256x8xf32>
    %12 = arith.mulf %8, %11 : vector<256x8xf32>
    %13 = vector.broadcast %10 : vector<1x8xf32> to vector<256x8xf32>
    %14 = arith.addf %12, %13 : vector<256x8xf32>
    %cst = arith.constant 0.000000e+00 : f32
    %15 = vector.broadcast %cst : f32 to vector<256x8xf32>
    %16 = arith.maximumf %14, %15 : vector<256x8xf32>
    %17 = arith.truncf %16 : vector<256x8xf32> to vector<256x8xbf16>
    %c0_15 = arith.constant 0 : index
    %c0_16 = arith.constant 0 : index
    %18 = vector.load %arg7[%c0_15, %c0_16] : memref<8x16xbf16, #tpu.memory_space<vmem>>, vector<8x16xbf16>
    %cst_17 = arith.constant dense<0.000000e+00> : vector<256x16xf32>
    %19 = tpu.matmul %17, %18, %cst_17 {dimension_numbers = #tpu.dot_dimension_numbers<[1], [0], [0], [1], [0, 0, 1, 1], [], []>} : vector<256x8xbf16>, vector<8x16xbf16>, vector<256x16xf32> -> vector<256x16xf32>
    %c0_18 = arith.constant 0 : index
    %c0_19 = arith.constant 0 : index
    %20 = vector.load %arg5[%c0_18, %c0_19] : memref<3x16xf32, #tpu.memory_space<vmem>>, vector<1x16xf32>
    %21 = vector.broadcast %20 : vector<1x16xf32> to vector<256x16xf32>
    %22 = arith.addf %19, %21 : vector<256x16xf32>
    %cst_20 = arith.constant 0.000000e+00 : f32
    %23 = vector.broadcast %cst_20 : f32 to vector<256x16xf32>
    %24 = arith.maximumf %22, %23 : vector<256x16xf32>
    %25 = arith.truncf %24 : vector<256x16xf32> to vector<256x16xbf16>
    %c0_21 = arith.constant 0 : index
    %c0_22 = arith.constant 0 : index
    %c0_23 = arith.constant 0 : index
    %26 = vector.load %arg6[%c0_21, %c0_22, %c0_23] : memref<3x16x72xbf16, #tpu.memory_space<vmem>>, vector<1x16x72xbf16>
    %27 = vector.shape_cast %26 : vector<1x16x72xbf16> to vector<16x72xbf16>
    %cst_24 = arith.constant dense<0.000000e+00> : vector<256x72xf32>
    %28 = tpu.matmul %25, %27, %cst_24 {dimension_numbers = #tpu.dot_dimension_numbers<[1], [0], [0], [1], [0, 0, 1, 1], [], []>} : vector<256x16xbf16>, vector<16x72xbf16>, vector<256x72xf32> -> vector<256x72xf32>
    %29 = vector.extract_strided_slice %28 {offsets = [0, 32], sizes = [256, 8], strides = [1, 1]} : vector<256x72xf32> to vector<256x8xf32>
    %30 = vector.extract_strided_slice %28 {offsets = [0, 0], sizes = [256, 8], strides = [1, 1]} : vector<256x72xf32> to vector<256x8xf32>
    %cst_25 = arith.constant 0.000000e+00 : f32
    %31 = vector.broadcast %cst_25 : f32 to vector<17x8xf32>
    %32 = vector.extract_strided_slice %30 {offsets = [0, 0], sizes = [239, 8], strides = [1, 1]} : vector<256x8xf32> to vector<239x8xf32>
    %33 = tpu.concatenate %31, %32 in 0 : vector<17x8xf32>, vector<239x8xf32> -> vector<256x8xf32>
    %34 = vector.broadcast %5 : vector<256x1xf32> to vector<256x8xf32>
    %35 = arith.mulf %33, %34 : vector<256x8xf32>
    %36 = arith.addf %29, %35 : vector<256x8xf32>
    %37 = vector.extract_strided_slice %28 {offsets = [0, 8], sizes = [256, 8], strides = [1, 1]} : vector<256x72xf32> to vector<256x8xf32>
    %cst_26 = arith.constant 0.000000e+00 : f32
    %38 = vector.broadcast %cst_26 : f32 to vector<16x8xf32>
    %39 = vector.extract_strided_slice %37 {offsets = [0, 0], sizes = [240, 8], strides = [1, 1]} : vector<256x8xf32> to vector<240x8xf32>
    %40 = tpu.concatenate %38, %39 in 0 : vector<16x8xf32>, vector<240x8xf32> -> vector<256x8xf32>
    %41 = arith.addf %36, %40 : vector<256x8xf32>
    %42 = vector.extract_strided_slice %28 {offsets = [0, 16], sizes = [256, 8], strides = [1, 1]} : vector<256x72xf32> to vector<256x8xf32>
    %cst_27 = arith.constant 0.000000e+00 : f32
    %43 = vector.broadcast %cst_27 : f32 to vector<15x8xf32>
    %44 = vector.extract_strided_slice %42 {offsets = [0, 0], sizes = [241, 8], strides = [1, 1]} : vector<256x8xf32> to vector<241x8xf32>
    %45 = tpu.concatenate %43, %44 in 0 : vector<15x8xf32>, vector<241x8xf32> -> vector<256x8xf32>
    %46 = vector.broadcast %6 : vector<256x1xf32> to vector<256x8xf32>
    %47 = arith.mulf %45, %46 : vector<256x8xf32>
    %48 = arith.addf %41, %47 : vector<256x8xf32>
    %49 = vector.extract_strided_slice %28 {offsets = [0, 24], sizes = [256, 8], strides = [1, 1]} : vector<256x72xf32> to vector<256x8xf32>
    %cst_28 = arith.constant 0.000000e+00 : f32
    %50 = vector.broadcast %cst_28 : f32 to vector<1x8xf32>
    %51 = vector.extract_strided_slice %49 {offsets = [0, 0], sizes = [255, 8], strides = [1, 1]} : vector<256x8xf32> to vector<255x8xf32>
    %52 = tpu.concatenate %50, %51 in 0 : vector<1x8xf32>, vector<255x8xf32> -> vector<256x8xf32>
    %53 = vector.broadcast %5 : vector<256x1xf32> to vector<256x8xf32>
    %54 = arith.mulf %52, %53 : vector<256x8xf32>
    %55 = arith.addf %48, %54 : vector<256x8xf32>
    %56 = vector.extract_strided_slice %28 {offsets = [0, 40], sizes = [256, 8], strides = [1, 1]} : vector<256x72xf32> to vector<256x8xf32>
    %57 = vector.extract_strided_slice %56 {offsets = [1, 0], sizes = [255, 8], strides = [1, 1]} : vector<256x8xf32> to vector<255x8xf32>
    %cst_29 = arith.constant 0.000000e+00 : f32
    %58 = vector.broadcast %cst_29 : f32 to vector<1x8xf32>
    %59 = tpu.concatenate %57, %58 in 0 : vector<255x8xf32>, vector<1x8xf32> -> vector<256x8xf32>
    %60 = vector.broadcast %6 : vector<256x1xf32> to vector<256x8xf32>
    %61 = arith.mulf %59, %60 : vector<256x8xf32>
    %62 = arith.addf %55, %61 : vector<256x8xf32>
    %63 = vector.extract_strided_slice %28 {offsets = [0, 48], sizes = [256, 8], strides = [1, 1]} : vector<256x72xf32> to vector<256x8xf32>
    %64 = vector.extract_strided_slice %63 {offsets = [15, 0], sizes = [241, 8], strides = [1, 1]} : vector<256x8xf32> to vector<241x8xf32>
    %cst_30 = arith.constant 0.000000e+00 : f32
    %65 = vector.broadcast %cst_30 : f32 to vector<15x8xf32>
    %66 = tpu.concatenate %64, %65 in 0 : vector<241x8xf32>, vector<15x8xf32> -> vector<256x8xf32>
    %67 = vector.broadcast %5 : vector<256x1xf32> to vector<256x8xf32>
    %68 = arith.mulf %66, %67 : vector<256x8xf32>
    %69 = arith.addf %62, %68 : vector<256x8xf32>
    %70 = vector.extract_strided_slice %28 {offsets = [0, 56], sizes = [256, 8], strides = [1, 1]} : vector<256x72xf32> to vector<256x8xf32>
    %71 = vector.extract_strided_slice %70 {offsets = [16, 0], sizes = [240, 8], strides = [1, 1]} : vector<256x8xf32> to vector<240x8xf32>
    %cst_31 = arith.constant 0.000000e+00 : f32
    %72 = vector.broadcast %cst_31 : f32 to vector<16x8xf32>
    %73 = tpu.concatenate %71, %72 in 0 : vector<240x8xf32>, vector<16x8xf32> -> vector<256x8xf32>
    %74 = arith.addf %69, %73 : vector<256x8xf32>
    %75 = vector.extract_strided_slice %28 {offsets = [0, 64], sizes = [256, 8], strides = [1, 1]} : vector<256x72xf32> to vector<256x8xf32>
    %76 = vector.extract_strided_slice %75 {offsets = [17, 0], sizes = [239, 8], strides = [1, 1]} : vector<256x8xf32> to vector<239x8xf32>
    %cst_32 = arith.constant 0.000000e+00 : f32
    %77 = vector.broadcast %cst_32 : f32 to vector<17x8xf32>
    %78 = tpu.concatenate %76, %77 in 0 : vector<239x8xf32>, vector<17x8xf32> -> vector<256x8xf32>
    %79 = vector.broadcast %6 : vector<256x1xf32> to vector<256x8xf32>
    %80 = arith.mulf %78, %79 : vector<256x8xf32>
    %81 = arith.addf %74, %80 : vector<256x8xf32>
    %c0_33 = arith.constant 0 : index
    %c0_34 = arith.constant 0 : index
    %c8 = arith.constant 8 : index
    %82 = vector.load %arg10[%c0_33, %c0_34, %c8] : memref<1x256x32xf32, #tpu.memory_space<vmem>>, vector<1x256x8xf32>
    %83 = vector.shape_cast %82 : vector<1x256x8xf32> to vector<256x8xf32>
    %84 = vector.shape_cast %81 : vector<256x8xf32> to vector<1x256x8xf32>
    tpu.vector_store %arg10[%c0_33, %c0_34, %c8], %84 {strides = array<i32>} : memref<1x256x32xf32, #tpu.memory_space<vmem>>, vector<1x256x8xf32>,
    %c0_35 = arith.constant 0 : index
    %c0_36 = arith.constant 0 : index
    %c0_37 = arith.constant 0 : index
    %85 = vector.load %arg10[%c0_35, %c0_36, %c0_37] : memref<1x256x32xf32, #tpu.memory_space<vmem>>, vector<1x256x16xf32>
    %86 = vector.shape_cast %85 : vector<1x256x16xf32> to vector<256x16xf32>
    %c1_38 = arith.constant 1 : index
    %c0_39 = arith.constant 0 : index
    %87 = vector.load %arg3[%c1_38, %c0_39] : memref<3x24xf32, #tpu.memory_space<vmem>>, vector<1x16xf32>
    %c1_40 = arith.constant 1 : index
    %c0_41 = arith.constant 0 : index
    %88 = vector.load %arg4[%c1_40, %c0_41] : memref<3x24xf32, #tpu.memory_space<vmem>>, vector<1x16xf32>
    %89 = vector.broadcast %87 : vector<1x16xf32> to vector<256x16xf32>
    %90 = arith.mulf %86, %89 : vector<256x16xf32>
    %91 = vector.broadcast %88 : vector<1x16xf32> to vector<256x16xf32>
    %92 = arith.addf %90, %91 : vector<256x16xf32>
    %cst_42 = arith.constant 0.000000e+00 : f32
    %93 = vector.broadcast %cst_42 : f32 to vector<256x16xf32>
    %94 = arith.maximumf %92, %93 : vector<256x16xf32>
    %95 = arith.truncf %94 : vector<256x16xf32> to vector<256x16xbf16>
    %c0_43 = arith.constant 0 : index
    %c0_44 = arith.constant 0 : index
    %96 = vector.load %arg8[%c0_43, %c0_44] : memref<16x16xbf16, #tpu.memory_space<vmem>>, vector<16x16xbf16>
    %cst_45 = arith.constant dense<0.000000e+00> : vector<256x16xf32>
    %97 = tpu.matmul %95, %96, %cst_45 {dimension_numbers = #tpu.dot_dimension_numbers<[1], [0], [0], [1], [0, 0, 1, 1], [], []>} : vector<256x16xbf16>, vector<16x16xbf16>, vector<256x16xf32> -> vector<256x16xf32>
    %c1_46 = arith.constant 1 : index
    %c0_47 = arith.constant 0 : index
    %98 = vector.load %arg5[%c1_46, %c0_47] : memref<3x16xf32, #tpu.memory_space<vmem>>, vector<1x16xf32>
    %99 = vector.broadcast %98 : vector<1x16xf32> to vector<256x16xf32>
    %100 = arith.addf %97, %99 : vector<256x16xf32>
    %cst_48 = arith.constant 0.000000e+00 : f32
    %101 = vector.broadcast %cst_48 : f32 to vector<256x16xf32>
    %102 = arith.maximumf %100, %101 : vector<256x16xf32>
    %103 = arith.truncf %102 : vector<256x16xf32> to vector<256x16xbf16>
    %c1_49 = arith.constant 1 : index
    %c0_50 = arith.constant 0 : index
    %c0_51 = arith.constant 0 : index
    %104 = vector.load %arg6[%c1_49, %c0_50, %c0_51] : memref<3x16x72xbf16, #tpu.memory_space<vmem>>, vector<1x16x72xbf16>
    %105 = vector.shape_cast %104 : vector<1x16x72xbf16> to vector<16x72xbf16>
    %cst_52 = arith.constant dense<0.000000e+00> : vector<256x72xf32>
    %106 = tpu.matmul %103, %105, %cst_52 {dimension_numbers = #tpu.dot_dimension_numbers<[1], [0], [0], [1], [0, 0, 1, 1], [], []>} : vector<256x16xbf16>, vector<16x72xbf16>, vector<256x72xf32> -> vector<256x72xf32>
    %107 = vector.extract_strided_slice %106 {offsets = [0, 32], sizes = [256, 8], strides = [1, 1]} : vector<256x72xf32> to vector<256x8xf32>
    %108 = vector.extract_strided_slice %106 {offsets = [0, 0], sizes = [256, 8], strides = [1, 1]} : vector<256x72xf32> to vector<256x8xf32>
    %cst_53 = arith.constant 0.000000e+00 : f32
    %109 = vector.broadcast %cst_53 : f32 to vector<17x8xf32>
    %110 = vector.extract_strided_slice %108 {offsets = [0, 0], sizes = [239, 8], strides = [1, 1]} : vector<256x8xf32> to vector<239x8xf32>
    %111 = tpu.concatenate %109, %110 in 0 : vector<17x8xf32>, vector<239x8xf32> -> vector<256x8xf32>
    %112 = vector.broadcast %5 : vector<256x1xf32> to vector<256x8xf32>
    %113 = arith.mulf %111, %112 : vector<256x8xf32>
    %114 = arith.addf %107, %113 : vector<256x8xf32>
    %115 = vector.extract_strided_slice %106 {offsets = [0, 8], sizes = [256, 8], strides = [1, 1]} : vector<256x72xf32> to vector<256x8xf32>
    %cst_54 = arith.constant 0.000000e+00 : f32
    %116 = vector.broadcast %cst_54 : f32 to vector<16x8xf32>
    %117 = vector.extract_strided_slice %115 {offsets = [0, 0], sizes = [240, 8], strides = [1, 1]} : vector<256x8xf32> to vector<240x8xf32>
    %118 = tpu.concatenate %116, %117 in 0 : vector<16x8xf32>, vector<240x8xf32> -> vector<256x8xf32>
    %119 = arith.addf %114, %118 : vector<256x8xf32>
    %120 = vector.extract_strided_slice %106 {offsets = [0, 16], sizes = [256, 8], strides = [1, 1]} : vector<256x72xf32> to vector<256x8xf32>
    %cst_55 = arith.constant 0.000000e+00 : f32
    %121 = vector.broadcast %cst_55 : f32 to vector<15x8xf32>
    %122 = vector.extract_strided_slice %120 {offsets = [0, 0], sizes = [241, 8], strides = [1, 1]} : vector<256x8xf32> to vector<241x8xf32>
    %123 = tpu.concatenate %121, %122 in 0 : vector<15x8xf32>, vector<241x8xf32> -> vector<256x8xf32>
    %124 = vector.broadcast %6 : vector<256x1xf32> to vector<256x8xf32>
    %125 = arith.mulf %123, %124 : vector<256x8xf32>
    %126 = arith.addf %119, %125 : vector<256x8xf32>
    %127 = vector.extract_strided_slice %106 {offsets = [0, 24], sizes = [256, 8], strides = [1, 1]} : vector<256x72xf32> to vector<256x8xf32>
    %cst_56 = arith.constant 0.000000e+00 : f32
    %128 = vector.broadcast %cst_56 : f32 to vector<1x8xf32>
    %129 = vector.extract_strided_slice %127 {offsets = [0, 0], sizes = [255, 8], strides = [1, 1]} : vector<256x8xf32> to vector<255x8xf32>
    %130 = tpu.concatenate %128, %129 in 0 : vector<1x8xf32>, vector<255x8xf32> -> vector<256x8xf32>
    %131 = vector.broadcast %5 : vector<256x1xf32> to vector<256x8xf32>
    %132 = arith.mulf %130, %131 : vector<256x8xf32>
    %133 = arith.addf %126, %132 : vector<256x8xf32>
    %134 = vector.extract_strided_slice %106 {offsets = [0, 40], sizes = [256, 8], strides = [1, 1]} : vector<256x72xf32> to vector<256x8xf32>
    %135 = vector.extract_strided_slice %134 {offsets = [1, 0], sizes = [255, 8], strides = [1, 1]} : vector<256x8xf32> to vector<255x8xf32>
    %cst_57 = arith.constant 0.000000e+00 : f32
    %136 = vector.broadcast %cst_57 : f32 to vector<1x8xf32>
    %137 = tpu.concatenate %135, %136 in 0 : vector<255x8xf32>, vector<1x8xf32> -> vector<256x8xf32>
    %138 = vector.broadcast %6 : vector<256x1xf32> to vector<256x8xf32>
    %139 = arith.mulf %137, %138 : vector<256x8xf32>
    %140 = arith.addf %133, %139 : vector<256x8xf32>
    %141 = vector.extract_strided_slice %106 {offsets = [0, 48], sizes = [256, 8], strides = [1, 1]} : vector<256x72xf32> to vector<256x8xf32>
    %142 = vector.extract_strided_slice %141 {offsets = [15, 0], sizes = [241, 8], strides = [1, 1]} : vector<256x8xf32> to vector<241x8xf32>
    %cst_58 = arith.constant 0.000000e+00 : f32
    %143 = vector.broadcast %cst_58 : f32 to vector<15x8xf32>
    %144 = tpu.concatenate %142, %143 in 0 : vector<241x8xf32>, vector<15x8xf32> -> vector<256x8xf32>
    %145 = vector.broadcast %5 : vector<256x1xf32> to vector<256x8xf32>
    %146 = arith.mulf %144, %145 : vector<256x8xf32>
    %147 = arith.addf %140, %146 : vector<256x8xf32>
    %148 = vector.extract_strided_slice %106 {offsets = [0, 56], sizes = [256, 8], strides = [1, 1]} : vector<256x72xf32> to vector<256x8xf32>
    %149 = vector.extract_strided_slice %148 {offsets = [16, 0], sizes = [240, 8], strides = [1, 1]} : vector<256x8xf32> to vector<240x8xf32>
    %cst_59 = arith.constant 0.000000e+00 : f32
    %150 = vector.broadcast %cst_59 : f32 to vector<16x8xf32>
    %151 = tpu.concatenate %149, %150 in 0 : vector<240x8xf32>, vector<16x8xf32> -> vector<256x8xf32>
    %152 = arith.addf %147, %151 : vector<256x8xf32>
    %153 = vector.extract_strided_slice %106 {offsets = [0, 64], sizes = [256, 8], strides = [1, 1]} : vector<256x72xf32> to vector<256x8xf32>
    %154 = vector.extract_strided_slice %153 {offsets = [17, 0], sizes = [239, 8], strides = [1, 1]} : vector<256x8xf32> to vector<239x8xf32>
    %cst_60 = arith.constant 0.000000e+00 : f32
    %155 = vector.broadcast %cst_60 : f32 to vector<17x8xf32>
    %156 = tpu.concatenate %154, %155 in 0 : vector<239x8xf32>, vector<17x8xf32> -> vector<256x8xf32>
    %157 = vector.broadcast %6 : vector<256x1xf32> to vector<256x8xf32>
    %158 = arith.mulf %156, %157 : vector<256x8xf32>
    %159 = arith.addf %152, %158 : vector<256x8xf32>
    %c0_61 = arith.constant 0 : index
    %c0_62 = arith.constant 0 : index
    %c16 = arith.constant 16 : index
    %160 = vector.load %arg10[%c0_61, %c0_62, %c16] : memref<1x256x32xf32, #tpu.memory_space<vmem>>, vector<1x256x8xf32>
    %161 = vector.shape_cast %160 : vector<1x256x8xf32> to vector<256x8xf32>
    %162 = vector.shape_cast %159 : vector<256x8xf32> to vector<1x256x8xf32>
    tpu.vector_store %arg10[%c0_61, %c0_62, %c16], %162 {strides = array<i32>} : memref<1x256x32xf32, #tpu.memory_space<vmem>>, vector<1x256x8xf32>,
    %c0_63 = arith.constant 0 : index
    %c0_64 = arith.constant 0 : index
    %c0_65 = arith.constant 0 : index
    %163 = vector.load %arg10[%c0_63, %c0_64, %c0_65] : memref<1x256x32xf32, #tpu.memory_space<vmem>>, vector<1x256x24xf32>
    %164 = vector.shape_cast %163 : vector<1x256x24xf32> to vector<256x24xf32>
    %c2 = arith.constant 2 : index
    %c0_66 = arith.constant 0 : index
    %165 = vector.load %arg3[%c2, %c0_66] : memref<3x24xf32, #tpu.memory_space<vmem>>, vector<1x24xf32>
    %c2_67 = arith.constant 2 : index
    %c0_68 = arith.constant 0 : index
    %166 = vector.load %arg4[%c2_67, %c0_68] : memref<3x24xf32, #tpu.memory_space<vmem>>, vector<1x24xf32>
    %167 = vector.broadcast %165 : vector<1x24xf32> to vector<256x24xf32>
    %168 = arith.mulf %164, %167 : vector<256x24xf32>
    %169 = vector.broadcast %166 : vector<1x24xf32> to vector<256x24xf32>
    %170 = arith.addf %168, %169 : vector<256x24xf32>
    %cst_69 = arith.constant 0.000000e+00 : f32
    %171 = vector.broadcast %cst_69 : f32 to vector<256x24xf32>
    %172 = arith.maximumf %170, %171 : vector<256x24xf32>
    %173 = arith.truncf %172 : vector<256x24xf32> to vector<256x24xbf16>
    %c0_70 = arith.constant 0 : index
    %c0_71 = arith.constant 0 : index
    %174 = vector.load %arg9[%c0_70, %c0_71] : memref<24x16xbf16, #tpu.memory_space<vmem>>, vector<24x16xbf16>
    %cst_72 = arith.constant dense<0.000000e+00> : vector<256x16xf32>
    %175 = tpu.matmul %173, %174, %cst_72 {dimension_numbers = #tpu.dot_dimension_numbers<[1], [0], [0], [1], [0, 0, 1, 1], [], []>} : vector<256x24xbf16>, vector<24x16xbf16>, vector<256x16xf32> -> vector<256x16xf32>
    %c2_73 = arith.constant 2 : index
    %c0_74 = arith.constant 0 : index
    %176 = vector.load %arg5[%c2_73, %c0_74] : memref<3x16xf32, #tpu.memory_space<vmem>>, vector<1x16xf32>
    %177 = vector.broadcast %176 : vector<1x16xf32> to vector<256x16xf32>
    %178 = arith.addf %175, %177 : vector<256x16xf32>
    %cst_75 = arith.constant 0.000000e+00 : f32
    %179 = vector.broadcast %cst_75 : f32 to vector<256x16xf32>
    %180 = arith.maximumf %178, %179 : vector<256x16xf32>
    %181 = arith.truncf %180 : vector<256x16xf32> to vector<256x16xbf16>
    %c2_76 = arith.constant 2 : index
    %c0_77 = arith.constant 0 : index
    %c0_78 = arith.constant 0 : index
    %182 = vector.load %arg6[%c2_76, %c0_77, %c0_78] : memref<3x16x72xbf16, #tpu.memory_space<vmem>>, vector<1x16x72xbf16>
    %183 = vector.shape_cast %182 : vector<1x16x72xbf16> to vector<16x72xbf16>
    %cst_79 = arith.constant dense<0.000000e+00> : vector<256x72xf32>
    %184 = tpu.matmul %181, %183, %cst_79 {dimension_numbers = #tpu.dot_dimension_numbers<[1], [0], [0], [1], [0, 0, 1, 1], [], []>} : vector<256x16xbf16>, vector<16x72xbf16>, vector<256x72xf32> -> vector<256x72xf32>
    %185 = vector.extract_strided_slice %184 {offsets = [0, 32], sizes = [256, 8], strides = [1, 1]} : vector<256x72xf32> to vector<256x8xf32>
    %186 = vector.extract_strided_slice %184 {offsets = [0, 0], sizes = [256, 8], strides = [1, 1]} : vector<256x72xf32> to vector<256x8xf32>
    %cst_80 = arith.constant 0.000000e+00 : f32
    %187 = vector.broadcast %cst_80 : f32 to vector<17x8xf32>
    %188 = vector.extract_strided_slice %186 {offsets = [0, 0], sizes = [239, 8], strides = [1, 1]} : vector<256x8xf32> to vector<239x8xf32>
    %189 = tpu.concatenate %187, %188 in 0 : vector<17x8xf32>, vector<239x8xf32> -> vector<256x8xf32>
    %190 = vector.broadcast %5 : vector<256x1xf32> to vector<256x8xf32>
    %191 = arith.mulf %189, %190 : vector<256x8xf32>
    %192 = arith.addf %185, %191 : vector<256x8xf32>
    %193 = vector.extract_strided_slice %184 {offsets = [0, 8], sizes = [256, 8], strides = [1, 1]} : vector<256x72xf32> to vector<256x8xf32>
    %cst_81 = arith.constant 0.000000e+00 : f32
    %194 = vector.broadcast %cst_81 : f32 to vector<16x8xf32>
    %195 = vector.extract_strided_slice %193 {offsets = [0, 0], sizes = [240, 8], strides = [1, 1]} : vector<256x8xf32> to vector<240x8xf32>
    %196 = tpu.concatenate %194, %195 in 0 : vector<16x8xf32>, vector<240x8xf32> -> vector<256x8xf32>
    %197 = arith.addf %192, %196 : vector<256x8xf32>
    %198 = vector.extract_strided_slice %184 {offsets = [0, 16], sizes = [256, 8], strides = [1, 1]} : vector<256x72xf32> to vector<256x8xf32>
    %cst_82 = arith.constant 0.000000e+00 : f32
    %199 = vector.broadcast %cst_82 : f32 to vector<15x8xf32>
    %200 = vector.extract_strided_slice %198 {offsets = [0, 0], sizes = [241, 8], strides = [1, 1]} : vector<256x8xf32> to vector<241x8xf32>
    %201 = tpu.concatenate %199, %200 in 0 : vector<15x8xf32>, vector<241x8xf32> -> vector<256x8xf32>
    %202 = vector.broadcast %6 : vector<256x1xf32> to vector<256x8xf32>
    %203 = arith.mulf %201, %202 : vector<256x8xf32>
    %204 = arith.addf %197, %203 : vector<256x8xf32>
    %205 = vector.extract_strided_slice %184 {offsets = [0, 24], sizes = [256, 8], strides = [1, 1]} : vector<256x72xf32> to vector<256x8xf32>
    %cst_83 = arith.constant 0.000000e+00 : f32
    %206 = vector.broadcast %cst_83 : f32 to vector<1x8xf32>
    %207 = vector.extract_strided_slice %205 {offsets = [0, 0], sizes = [255, 8], strides = [1, 1]} : vector<256x8xf32> to vector<255x8xf32>
    %208 = tpu.concatenate %206, %207 in 0 : vector<1x8xf32>, vector<255x8xf32> -> vector<256x8xf32>
    %209 = vector.broadcast %5 : vector<256x1xf32> to vector<256x8xf32>
    %210 = arith.mulf %208, %209 : vector<256x8xf32>
    %211 = arith.addf %204, %210 : vector<256x8xf32>
    %212 = vector.extract_strided_slice %184 {offsets = [0, 40], sizes = [256, 8], strides = [1, 1]} : vector<256x72xf32> to vector<256x8xf32>
    %213 = vector.extract_strided_slice %212 {offsets = [1, 0], sizes = [255, 8], strides = [1, 1]} : vector<256x8xf32> to vector<255x8xf32>
    %cst_84 = arith.constant 0.000000e+00 : f32
    %214 = vector.broadcast %cst_84 : f32 to vector<1x8xf32>
    %215 = tpu.concatenate %213, %214 in 0 : vector<255x8xf32>, vector<1x8xf32> -> vector<256x8xf32>
    %216 = vector.broadcast %6 : vector<256x1xf32> to vector<256x8xf32>
    %217 = arith.mulf %215, %216 : vector<256x8xf32>
    %218 = arith.addf %211, %217 : vector<256x8xf32>
    %219 = vector.extract_strided_slice %184 {offsets = [0, 48], sizes = [256, 8], strides = [1, 1]} : vector<256x72xf32> to vector<256x8xf32>
    %220 = vector.extract_strided_slice %219 {offsets = [15, 0], sizes = [241, 8], strides = [1, 1]} : vector<256x8xf32> to vector<241x8xf32>
    %cst_85 = arith.constant 0.000000e+00 : f32
    %221 = vector.broadcast %cst_85 : f32 to vector<15x8xf32>
    %222 = tpu.concatenate %220, %221 in 0 : vector<241x8xf32>, vector<15x8xf32> -> vector<256x8xf32>
    %223 = vector.broadcast %5 : vector<256x1xf32> to vector<256x8xf32>
    %224 = arith.mulf %222, %223 : vector<256x8xf32>
    %225 = arith.addf %218, %224 : vector<256x8xf32>
    %226 = vector.extract_strided_slice %184 {offsets = [0, 56], sizes = [256, 8], strides = [1, 1]} : vector<256x72xf32> to vector<256x8xf32>
    %227 = vector.extract_strided_slice %226 {offsets = [16, 0], sizes = [240, 8], strides = [1, 1]} : vector<256x8xf32> to vector<240x8xf32>
    %cst_86 = arith.constant 0.000000e+00 : f32
    %228 = vector.broadcast %cst_86 : f32 to vector<16x8xf32>
    %229 = tpu.concatenate %227, %228 in 0 : vector<240x8xf32>, vector<16x8xf32> -> vector<256x8xf32>
    %230 = arith.addf %225, %229 : vector<256x8xf32>
    %231 = vector.extract_strided_slice %184 {offsets = [0, 64], sizes = [256, 8], strides = [1, 1]} : vector<256x72xf32> to vector<256x8xf32>
    %232 = vector.extract_strided_slice %231 {offsets = [17, 0], sizes = [239, 8], strides = [1, 1]} : vector<256x8xf32> to vector<239x8xf32>
    %cst_87 = arith.constant 0.000000e+00 : f32
    %233 = vector.broadcast %cst_87 : f32 to vector<17x8xf32>
    %234 = tpu.concatenate %232, %233 in 0 : vector<239x8xf32>, vector<17x8xf32> -> vector<256x8xf32>
    %235 = vector.broadcast %6 : vector<256x1xf32> to vector<256x8xf32>
    %236 = arith.mulf %234, %235 : vector<256x8xf32>
    %237 = arith.addf %230, %236 : vector<256x8xf32>
    %c0_88 = arith.constant 0 : index
    %c0_89 = arith.constant 0 : index
    %c24 = arith.constant 24 : index
    %238 = vector.load %arg10[%c0_88, %c0_89, %c24] : memref<1x256x32xf32, #tpu.memory_space<vmem>>, vector<1x256x8xf32>
    %239 = vector.shape_cast %238 : vector<1x256x8xf32> to vector<256x8xf32>
    %240 = vector.shape_cast %237 : vector<256x8xf32> to vector<1x256x8xf32>
    tpu.vector_store %arg10[%c0_88, %c0_89, %c24], %240 {strides = array<i32>} : memref<1x256x32xf32, #tpu.memory_space<vmem>>, vector<1x256x8xf32>,
    return
  }
  func.func @transform_0(%arg0: i32) -> (i32, i32, i32) {
    %c0_i32 = arith.constant 0 : i32
    %c0_i32_0 = arith.constant 0 : i32
    %c0_i32_1 = arith.constant 0 : i32
    return %arg0, %c0_i32, %c0_i32_0 : i32, i32, i32
  }
  func.func @transform_1(%arg0: i32) -> (i32, i32) {
    %c0_i32 = arith.constant 0 : i32
    %c0_i32_0 = arith.constant 0 : i32
    %c0_i32_1 = arith.constant 0 : i32
    return %c0_i32, %c0_i32_0 : i32, i32
  }
  func.func @transform_2(%arg0: i32) -> (i32, i32) {
    %c0_i32 = arith.constant 0 : i32
    %c0_i32_0 = arith.constant 0 : i32
    %c0_i32_1 = arith.constant 0 : i32
    return %c0_i32, %c0_i32_0 : i32, i32
  }
  func.func @transform_3(%arg0: i32) -> (i32, i32) {
    %c0_i32 = arith.constant 0 : i32
    %c0_i32_0 = arith.constant 0 : i32
    %c0_i32_1 = arith.constant 0 : i32
    return %c0_i32, %c0_i32_0 : i32, i32
  }
  func.func @transform_4(%arg0: i32) -> (i32, i32) {
    %c0_i32 = arith.constant 0 : i32
    %c0_i32_0 = arith.constant 0 : i32
    %c0_i32_1 = arith.constant 0 : i32
    return %c0_i32, %c0_i32_0 : i32, i32
  }
  func.func @transform_5(%arg0: i32) -> (i32, i32, i32) {
    %c0_i32 = arith.constant 0 : i32
    %c0_i32_0 = arith.constant 0 : i32
    %c0_i32_1 = arith.constant 0 : i32
    %c0_i32_2 = arith.constant 0 : i32
    return %c0_i32, %c0_i32_0, %c0_i32_1 : i32, i32, i32
  }
  func.func @transform_6(%arg0: i32) -> (i32, i32) {
    %c0_i32 = arith.constant 0 : i32
    %c0_i32_0 = arith.constant 0 : i32
    %c0_i32_1 = arith.constant 0 : i32
    return %c0_i32, %c0_i32_0 : i32, i32
  }
  func.func @transform_7(%arg0: i32) -> (i32, i32) {
    %c0_i32 = arith.constant 0 : i32
    %c0_i32_0 = arith.constant 0 : i32
    %c0_i32_1 = arith.constant 0 : i32
    return %c0_i32, %c0_i32_0 : i32, i32
  }
  func.func @transform_8(%arg0: i32) -> (i32, i32) {
    %c0_i32 = arith.constant 0 : i32
    %c0_i32_0 = arith.constant 0 : i32
    %c0_i32_1 = arith.constant 0 : i32
    return %c0_i32, %c0_i32_0 : i32, i32
  }
  func.func @transform_9(%arg0: i32) -> (i32, i32, i32) {
    %c0_i32 = arith.constant 0 : i32
    %c0_i32_0 = arith.constant 0 : i32
    %c0_i32_1 = arith.constant 0 : i32
    return %arg0, %c0_i32, %c0_i32_0 : i32, i32, i32
  }
}

</mosaic_0001>

<llo_original>
// kernel: tpu_custom_call.1
$region0: #{tpu_custom_call.1}
  #allocation0 [shape = 'u32[]', space=smem, size = 0x4, offset = 0x4, fixed_abs, tag = 'smem constant byte address 0x4 - core index']
  #allocation1 [shape = 'u32[72,128]{1,0:T(1,128)}', space=vmem, size = 0x9000, scoped, tag = 'internal scratch']
  %s0 = inlined_call_operand.vmem [shape: f32[2,256,8], index: 0, kind: input, shape index: {}]
  %s1 = inlined_call_operand.vmem [shape: f32[256,2], index: 1, kind: input, shape index: {}]
  %s2 = inlined_call_operand.vmem [shape: f32[3,24], index: 2, kind: input, shape index: {}]
  %s3 = inlined_call_operand.vmem [shape: f32[3,24], index: 3, kind: input, shape index: {}]
  %s4 = inlined_call_operand.vmem [shape: f32[3,16], index: 4, kind: input, shape index: {}]
  %s5 = inlined_call_operand.vmem [shape: bf16[3,16,72], index: 5, kind: input, shape index: {}]
  %s6 = inlined_call_operand.vmem [shape: bf16[8,16], index: 6, kind: input, shape index: {}]
  %s7 = inlined_call_operand.vmem [shape: bf16[16,16], index: 7, kind: input, shape index: {}]
  %s8 = inlined_call_operand.vmem [shape: bf16[24,16], index: 8, kind: input, shape index: {}]
  %s9 = inlined_call_operand.vmem [shape: f32[2,256,32], index: 9, kind: output, shape index: {}]
  %s10 = sld [smem:[#allocation0]]
  $region69: #{tpu_custom_call.1} parent=0
    _
  %s12 = ssub.s32 1, %s10
  %s13 = scalar_select 0, %s12, %s10
  loop: start=0, step=1, limit=4
  $region2: #{tpu_custom_call.1} parent=0 // loop_pre_header
    _
  $region3: #{tpu_custom_call.1} parent=0 // loop_header
    %s15 = sphi 0, %s19
    %p16 = scmp.ge.s32.totalorder %s15, 4
    %s25 = sphi 0, %s27
    %s28 = sphi 0, %s25
    %s29 = sphi 0, %s28
    %s45 = sphi 0, %s29
    %s49 = sphi 0, %s49
    %s51 = sphi 0, %s49
    %s52 = sphi 0, %s51
    %s66 = sphi 0, %s52
    %s70 = sphi 0, %s70
    %s72 = sphi 0, %s70
    %s73 = sphi 0, %s72
    %s87 = sphi 0, %s73
    %s91 = sphi 0, %s91
    %s93 = sphi 0, %s91
    %s94 = sphi 0, %s93
    %s108 = sphi 0, %s94
    %s112 = sphi 0, %s112
    %s114 = sphi 0, %s112
    %s115 = sphi 0, %s114
    %s129 = sphi 0, %s115
    %s133 = sphi 0, %s133
    %s135 = sphi 0, %s133
    %s136 = sphi 0, %s135
    %s150 = sphi 0, %s136
    %s154 = sphi 0, %s154
    %s156 = sphi 0, %s154
    %s157 = sphi 0, %s156
    %s171 = sphi 0, %s157
    %s175 = sphi 0, %s175
    %s177 = sphi 0, %s175
    %s178 = sphi 0, %s177
    %s192 = sphi 0, %s178
    %s196 = sphi 0, %s196
    %s198 = sphi 0, %s196
    %s199 = sphi 0, %s198
    %s213 = sphi 0, %s199
    %s219 = sphi 0, %s221
    %s222 = sphi 0, %s219
    %s223 = sphi 0, %s222
    %s239 = sphi 0, %s223
  $region4: #{tpu_custom_call.1} parent=0 // loop_header_branch
    %18 = sbr.rel (%p16) target = $region8
  $region5: #{tpu_custom_call.1} parent=0 // loop_body
    %s20 = ssub.s32 %s15, 1
    %s21 = ssub.s32 %s15, 2
    %s22 = sadd.s32 %s15, 1
    %s23 = ssub.s32 %s15, %s22
    %p24 = scmp.eq.s32.totalorder %s23, 0
    %s26 = sadd.s32 %s25, 1
    %s27 = scalar_select %p24, %s25, %s26
    %p30 = pneg %p24
    %p31 = scmp.eq.s32.totalorder %s15, 1
    %p32 = por %p30, %p31
    %p33 = scmp.ne.s32.totalorder %s25, %s28
    %p34 = scmp.eq.s32.totalorder %s15, 0
    %p35 = por %p33, %p34
    %p36 = scmp.ne.s32.totalorder %s25, %s28
    %p37 = scmp.eq.s32.totalorder %s20, 1
    %p38 = por %p36, %p37
    %p39 = scmp.ne.s32.totalorder %s28, %s29
    %p40 = scmp.eq.s32.totalorder %s20, 0
    %p41 = por %p39, %p40
    %p42 = scmp.ne.s32.totalorder %s28, %s29
    %p43 = scmp.eq.s32.totalorder %s21, 1
    %p44 = por %p42, %p43
    %p46 = scmp.ne.s32.totalorder %s29, %s45
    %p47 = scmp.eq.s32.totalorder %s21, 0
    %p48 = por %p46, %p47
    %s50 = sadd.s32 %s49, 1
    %p53 = scmp.eq.s32.totalorder %s15, 1
    %p54 = scmp.ne.s32.totalorder %s49, %s51
    %p55 = scmp.eq.s32.totalorder %s15, 0
    %p56 = por %p54, %p55
    %p57 = scmp.ne.s32.totalorder %s49, %s51
    %p58 = scmp.eq.s32.totalorder %s20, 1
    %p59 = por %p57, %p58
    %p60 = scmp.ne.s32.totalorder %s51, %s52
    %p61 = scmp.eq.s32.totalorder %s20, 0
    %p62 = por %p60, %p61
    %p63 = scmp.ne.s32.totalorder %s51, %s52
    %p64 = scmp.eq.s32.totalorder %s21, 1
    %p65 = por %p63, %p64
    %p67 = scmp.ne.s32.totalorder %s52, %s66
    %p68 = scmp.eq.s32.totalorder %s21, 0
    %p69 = por %p67, %p68
    %s71 = sadd.s32 %s70, 1
    %p74 = scmp.eq.s32.totalorder %s15, 1
    %p75 = scmp.ne.s32.totalorder %s70, %s72
    %p76 = scmp.eq.s32.totalorder %s15, 0
    %p77 = por %p75, %p76
    %p78 = scmp.ne.s32.totalorder %s70, %s72
    %p79 = scmp.eq.s32.totalorder %s20, 1
    %p80 = por %p78, %p79
    %p81 = scmp.ne.s32.totalorder %s72, %s73
    %p82 = scmp.eq.s32.totalorder %s20, 0
    %p83 = por %p81, %p82
    %p84 = scmp.ne.s32.totalorder %s72, %s73
    %p85 = scmp.eq.s32.totalorder %s21, 1
    %p86 = por %p84, %p85
    %p88 = scmp.ne.s32.totalorder %s73, %s87
    %p89 = scmp.eq.s32.totalorder %s21, 0
    %p90 = por %p88, %p89
    %s92 = sadd.s32 %s91, 1
    %p95 = scmp.eq.s32.totalorder %s15, 1
    %p96 = scmp.ne.s32.totalorder %s91, %s93
    %p97 = scmp.eq.s32.totalorder %s15, 0
    %p98 = por %p96, %p97
    %p99 = scmp.ne.s32.totalorder %s91, %s93
    %p100 = scmp.eq.s32.totalorder %s20, 1
    %p101 = por %p99, %p100
    %p102 = scmp.ne.s32.totalorder %s93, %s94
    %p103 = scmp.eq.s32.totalorder %s20, 0
    %p104 = por %p102, %p103
    %p105 = scmp.ne.s32.totalorder %s93, %s94
    %p106 = scmp.eq.s32.totalorder %s21, 1
    %p107 = por %p105, %p106
    %p109 = scmp.ne.s32.totalorder %s94, %s108
    %p110 = scmp.eq.s32.totalorder %s21, 0
    %p111 = por %p109, %p110
    %s113 = sadd.s32 %s112, 1
    %p116 = scmp.eq.s32.totalorder %s15, 1
    %p117 = scmp.ne.s32.totalorder %s112, %s114
    %p118 = scmp.eq.s32.totalorder %s15, 0
    %p119 = por %p117, %p118
    %p120 = scmp.ne.s32.totalorder %s112, %s114
    %p121 = scmp.eq.s32.totalorder %s20, 1
    %p122 = por %p120, %p121
    %p123 = scmp.ne.s32.totalorder %s114, %s115
    %p124 = scmp.eq.s32.totalorder %s20, 0
    %p125 = por %p123, %p124
    %p126 = scmp.ne.s32.totalorder %s114, %s115
    %p127 = scmp.eq.s32.totalorder %s21, 1
    %p128 = por %p126, %p127
    %p130 = scmp.ne.s32.totalorder %s115, %s129
    %p131 = scmp.eq.s32.totalorder %s21, 0
    %p132 = por %p130, %p131
    %s134 = sadd.s32 %s133, 1
    %p137 = scmp.eq.s32.totalorder %s15, 1
    %p138 = scmp.ne.s32.totalorder %s133, %s135
    %p139 = scmp.eq.s32.totalorder %s15, 0
    %p140 = por %p138, %p139
    %p141 = scmp.ne.s32.totalorder %s133, %s135
    %p142 = scmp.eq.s32.totalorder %s20, 1
    %p143 = por %p141, %p142
    %p144 = scmp.ne.s32.totalorder %s135, %s136
    %p145 = scmp.eq.s32.totalorder %s20, 0
    %p146 = por %p144, %p145
    %p147 = scmp.ne.s32.totalorder %s135, %s136
    %p148 = scmp.eq.s32.totalorder %s21, 1
    %p149 = por %p147, %p148
    %p151 = scmp.ne.s32.totalorder %s136, %s150
    %p152 = scmp.eq.s32.totalorder %s21, 0
    %p153 = por %p151, %p152
    %s155 = sadd.s32 %s154, 1
    %p158 = scmp.eq.s32.totalorder %s15, 1
    %p159 = scmp.ne.s32.totalorder %s154, %s156
    %p160 = scmp.eq.s32.totalorder %s15, 0
    %p161 = por %p159, %p160
    %p162 = scmp.ne.s32.totalorder %s154, %s156
    %p163 = scmp.eq.s32.totalorder %s20, 1
    %p164 = por %p162, %p163
    %p165 = scmp.ne.s32.totalorder %s156, %s157
    %p166 = scmp.eq.s32.totalorder %s20, 0
    %p167 = por %p165, %p166
    %p168 = scmp.ne.s32.totalorder %s156, %s157
    %p169 = scmp.eq.s32.totalorder %s21, 1
    %p170 = por %p168, %p169
    %p172 = scmp.ne.s32.totalorder %s157, %s171
    %p173 = scmp.eq.s32.totalorder %s21, 0
    %p174 = por %p172, %p173
    %s176 = sadd.s32 %s175, 1
    %p179 = scmp.eq.s32.totalorder %s15, 1
    %p180 = scmp.ne.s32.totalorder %s175, %s177
    %p181 = scmp.eq.s32.totalorder %s15, 0
    %p182 = por %p180, %p181
    %p183 = scmp.ne.s32.totalorder %s175, %s177
    %p184 = scmp.eq.s32.totalorder %s20, 1
    %p185 = por %p183, %p184
    %p186 = scmp.ne.s32.totalorder %s177, %s178
    %p187 = scmp.eq.s32.totalorder %s20, 0
    %p188 = por %p186, %p187
    %p189 = scmp.ne.s32.totalorder %s177, %s178
    %p190 = scmp.eq.s32.totalorder %s21, 1
    %p191 = por %p189, %p190
    %p193 = scmp.ne.s32.totalorder %s178, %s192
    %p194 = scmp.eq.s32.totalorder %s21, 0
    %p195 = por %p193, %p194
    %s197 = sadd.s32 %s196, 1
    %p200 = scmp.eq.s32.totalorder %s15, 1
    %p201 = scmp.ne.s32.totalorder %s196, %s198
    %p202 = scmp.eq.s32.totalorder %s15, 0
    %p203 = por %p201, %p202
    %p204 = scmp.ne.s32.totalorder %s196, %s198
    %p205 = scmp.eq.s32.totalorder %s20, 1
    %p206 = por %p204, %p205
    %p207 = scmp.ne.s32.totalorder %s198, %s199
    %p208 = scmp.eq.s32.totalorder %s20, 0
    %p209 = por %p207, %p208
    %p210 = scmp.ne.s32.totalorder %s198, %s199
    %p211 = scmp.eq.s32.totalorder %s21, 1
    %p212 = por %p210, %p211
    %p214 = scmp.ne.s32.totalorder %s199, %s213
    %p215 = scmp.eq.s32.totalorder %s21, 0
    %p216 = por %p214, %p215
    %s217 = ssub.s32 %s15, %s22
    %p218 = scmp.eq.s32.totalorder %s217, 0
    %s220 = sadd.s32 %s219, 1
    %s221 = scalar_select %p218, %s219, %s220
    %p224 = pneg %p218
    %p225 = scmp.eq.s32.totalorder %s15, 1
    %p226 = por %p224, %p225
    %p227 = scmp.ne.s32.totalorder %s219, %s222
    %p228 = scmp.eq.s32.totalorder %s15, 0
    %p229 = por %p227, %p228
    %p230 = scmp.ne.s32.totalorder %s219, %s222
    %p231 = scmp.eq.s32.totalorder %s20, 1
    %p232 = por %p230, %p231
    %p233 = scmp.ne.s32.totalorder %s222, %s223
    %p234 = scmp.eq.s32.totalorder %s20, 0
    %p235 = por %p233, %p234
    %p236 = scmp.ne.s32.totalorder %s222, %s223
    %p237 = scmp.eq.s32.totalorder %s21, 1
    %p238 = por %p236, %p237
    %p240 = scmp.ne.s32.totalorder %s223, %s239
    %p241 = scmp.eq.s32.totalorder %s21, 0
    %p242 = por %p240, %p241
    %p243 = scmp.le.s32.totalorder 1, %s15
    %p244 = scmp.lt.s32.totalorder %s15, 3
    %p245 = pnand %p243, %p244
    %p246 = pneg %p245
    // Predicated region
    $region9: #{tpu_custom_call.1} parent=5 // pred_check
      _
    $region10: #{tpu_custom_call.1} parent=5 // pred_check_branch
      %248 = sbr.rel (%p245) target = $region12
    $region11: #{tpu_custom_call.1} parent=5 // pred_region
      %s249 = ssub.s32 %s15, 1
      // Predicated region
      $region13: #{tpu_custom_call.1} parent=11 // pred_check
        %p250 = pneg %p62
      $region14: #{tpu_custom_call.1} parent=11 // pred_check_branch
        %252 = sbr.rel (%p250) target = $region16
      $region15: #{tpu_custom_call.1} parent=11 // pred_region
        _
      $region16: #{tpu_custom_call.1} parent=11 // pred_fallthru
        _
      // Predicated region
      $region17: #{tpu_custom_call.1} parent=11 // pred_check
        %p253 = pneg %p83
      $region18: #{tpu_custom_call.1} parent=11 // pred_check_branch
        %255 = sbr.rel (%p253) target = $region20
      $region19: #{tpu_custom_call.1} parent=11 // pred_region
        _
      $region20: #{tpu_custom_call.1} parent=11 // pred_fallthru
        _
      // Predicated region
      $region21: #{tpu_custom_call.1} parent=11 // pred_check
        %p256 = pneg %p104
      $region22: #{tpu_custom_call.1} parent=11 // pred_check_branch
        %258 = sbr.rel (%p256) target = $region24
      $region23: #{tpu_custom_call.1} parent=11 // pred_region
        _
      $region24: #{tpu_custom_call.1} parent=11 // pred_fallthru
        _
      // Predicated region
      $region25: #{tpu_custom_call.1} parent=11 // pred_check
        %p259 = pneg %p125
      $region26: #{tpu_custom_call.1} parent=11 // pred_check_branch
        %261 = sbr.rel (%p259) target = $region28
      $region27: #{tpu_custom_call.1} parent=11 // pred_region
        _
      $region28: #{tpu_custom_call.1} parent=11 // pred_fallthru
        _
      // Predicated region
      $region29: #{tpu_custom_call.1} parent=11 // pred_check
        %p262 = pneg %p146
      $region30: #{tpu_custom_call.1} parent=11 // pred_check_branch
        %264 = sbr.rel (%p262) target = $region32
      $region31: #{tpu_custom_call.1} parent=11 // pred_region
        _
      $region32: #{tpu_custom_call.1} parent=11 // pred_fallthru
        _
      // Predicated region
      $region33: #{tpu_custom_call.1} parent=11 // pred_check
        %p265 = pneg %p167
      $region34: #{tpu_custom_call.1} parent=11 // pred_check_branch
        %267 = sbr.rel (%p265) target = $region36
      $region35: #{tpu_custom_call.1} parent=11 // pred_region
        _
      $region36: #{tpu_custom_call.1} parent=11 // pred_fallthru
        _
      // Predicated region
      $region37: #{tpu_custom_call.1} parent=11 // pred_check
        %p268 = pneg %p188
      $region38: #{tpu_custom_call.1} parent=11 // pred_check_branch
        %270 = sbr.rel (%p268) target = $region40
      $region39: #{tpu_custom_call.1} parent=11 // pred_region
        _
      $region40: #{tpu_custom_call.1} parent=11 // pred_fallthru
        _
      // Predicated region
      $region41: #{tpu_custom_call.1} parent=11 // pred_check
        %p271 = pneg %p209
      $region42: #{tpu_custom_call.1} parent=11 // pred_check_branch
        %273 = sbr.rel (%p271) target = $region44
      $region43: #{tpu_custom_call.1} parent=11 // pred_region
        _
      $region44: #{tpu_custom_call.1} parent=11 // pred_fallthru
        _
    $region12: #{tpu_custom_call.1} parent=5 // pred_fallthru
      _
    %p274 = scmp.lt.s32.totalorder %s15, 2
    // Predicated region
    $region45: #{tpu_custom_call.1} parent=5 // pred_check
      %p275 = pneg %p274
    $region46: #{tpu_custom_call.1} parent=5 // pred_check_branch
      %277 = sbr.rel (%p275) target = $region48
    $region47: #{tpu_custom_call.1} parent=5 // pred_region
      // Predicated region
      $region49: #{tpu_custom_call.1} parent=47 // pred_check
        %p278 = pneg %p35
      $region50: #{tpu_custom_call.1} parent=47 // pred_check_branch
        %280 = sbr.rel (%p278) target = $region52
      $region51: #{tpu_custom_call.1} parent=47 // pred_region
        %p281 = scmp.lt.s32.totalorder %s15, 1
        %s282 = scalar_select %p281, %s15, 1
        %s283 = smul.addr %s282, 32
        %s284 = smul.addr %s283, 8
        %s285 = scalar_lea.vmem %s0, %s284
      $region52: #{tpu_custom_call.1} parent=47 // pred_fallthru
        _
    $region48: #{tpu_custom_call.1} parent=5 // pred_fallthru
      _
    %p286 = scmp.le.s32.totalorder 1, %s15
    %p287 = scmp.lt.s32.totalorder %s15, 3
    %p288 = pnand %p286, %p287
    %p289 = pneg %p288
    // Predicated region
    $region53: #{tpu_custom_call.1} parent=5 // pred_check
      _
    $region54: #{tpu_custom_call.1} parent=5 // pred_check_branch
      %291 = sbr.rel (%p288) target = $region56
    $region55: #{tpu_custom_call.1} parent=5 // pred_region
      %s292 = ssub.s32 %s15, 1
      %p293 = scmp.lt.s32.totalorder %s20, 1
      %s294 = scalar_select %p293, %s20, 1
      %s295 = smul.addr %s294, 32
      %s296 = smul.addr %s295, 8
      %s297 = scalar_lea.vmem %s0, %s296
      %p298 = pneg %p41
      %p299 = pneg %p38
      %p300 = pneg %p62
      %p301 = pneg %p59
      %p302 = pneg %p83
      %p303 = pneg %p80
      %p304 = pneg %p104
      %p305 = pneg %p101
      %p306 = pneg %p125
      %p307 = pneg %p122
      %p308 = pneg %p146
      %p309 = pneg %p143
      %p310 = pneg %p167
      %p311 = pneg %p164
      %p312 = pneg %p188
      %p313 = pneg %p185
      %p314 = pneg %p209
      %p315 = pneg %p206
      %p316 = pneg %p235
      %p317 = pneg %p232
      %p318 = scmp.lt.s32.totalorder %s20, 1
      %s319 = scalar_select %p318, %s20, 1
      %s320 = smul.addr %s319, 32
      %s321 = smul.addr %s320, 8
      %s322 = scalar_lea.vmem %s9, %s321
      %p323 = scmp.lt.s32.totalorder %s20, 1
      %s324 = scalar_select %p323, %s20, 1
      %s325 = smul.addr %s324, 32
      %s326 = smul.addr %s325, 8
      %s327 = scalar_lea.vmem %s0, %s326
      %p328 = scmp.lt.s32.totalorder %s20, 1
      %s329 = scalar_select %p328, %s20, 1
      %s330 = smul.addr %s329, 32
      %s331 = smul.addr %s330, 8
      %s332 = scalar_lea.vmem %s9, %s331
      %v334 = vld [vmem:[%s327] sm:$0xff]
      %v335 = vld [vmem:[%s327 + $0x8] sm:$0xff]
      %v336 = vld [vmem:[%s327 + $0x10] sm:$0xff]
      %v337 = vld [vmem:[%s327 + $0x18] sm:$0xff]
      %v338 = vld [vmem:[%s327 + $0x20] sm:$0xff]
      %v339 = vld [vmem:[%s327 + $0x28] sm:$0xff]
      %v340 = vld [vmem:[%s327 + $0x30] sm:$0xff]
      %v341 = vld [vmem:[%s327 + $0x38] sm:$0xff]
      %v342 = vld [vmem:[%s327 + $0x40] sm:$0xff]
      %v343 = vld [vmem:[%s327 + $0x48] sm:$0xff]
      %v344 = vld [vmem:[%s327 + $0x50] sm:$0xff]
      %v345 = vld [vmem:[%s327 + $0x58] sm:$0xff]
      %v346 = vld [vmem:[%s327 + $0x60] sm:$0xff]
      %v347 = vld [vmem:[%s327 + $0x68] sm:$0xff]
      %v348 = vld [vmem:[%s327 + $0x70] sm:$0xff]
      %v349 = vld [vmem:[%s327 + $0x78] sm:$0xff]
      %v350 = vld [vmem:[%s327 + $0x80] sm:$0xff]
      %v351 = vld [vmem:[%s327 + $0x88] sm:$0xff]
      %v352 = vld [vmem:[%s327 + $0x90] sm:$0xff]
      %v353 = vld [vmem:[%s327 + $0x98] sm:$0xff]
      %v354 = vld [vmem:[%s327 + $0xa0] sm:$0xff]
      %v355 = vld [vmem:[%s327 + $0xa8] sm:$0xff]
      %v356 = vld [vmem:[%s327 + $0xb0] sm:$0xff]
      %v357 = vld [vmem:[%s327 + $0xb8] sm:$0xff]
      %v358 = vld [vmem:[%s327 + $0xc0] sm:$0xff]
      %v359 = vld [vmem:[%s327 + $0xc8] sm:$0xff]
      %v360 = vld [vmem:[%s327 + $0xd0] sm:$0xff]
      %v361 = vld [vmem:[%s327 + $0xd8] sm:$0xff]
      %v362 = vld [vmem:[%s327 + $0xe0] sm:$0xff]
      %v363 = vld [vmem:[%s327 + $0xe8] sm:$0xff]
      %v364 = vld [vmem:[%s327 + $0xf0] sm:$0xff]
      %v365 = vld [vmem:[%s327 + $0xf8] sm:$0xff]
      %vm366 = vcmask 64512
      %367 = vst.msk [vmem:[%s332] sm:$0xff] %vm366, %v334
      %368 = vst.msk [vmem:[%s332 + $0x8] sm:$0xff] %vm366, %v335
      %369 = vst.msk [vmem:[%s332 + $0x10] sm:$0xff] %vm366, %v336
      %370 = vst.msk [vmem:[%s332 + $0x18] sm:$0xff] %vm366, %v337
      %371 = vst.msk [vmem:[%s332 + $0x20] sm:$0xff] %vm366, %v338
      %372 = vst.msk [vmem:[%s332 + $0x28] sm:$0xff] %vm366, %v339
      %373 = vst.msk [vmem:[%s332 + $0x30] sm:$0xff] %vm366, %v340
      %374 = vst.msk [vmem:[%s332 + $0x38] sm:$0xff] %vm366, %v341
      %375 = vst.msk [vmem:[%s332 + $0x40] sm:$0xff] %vm366, %v342
      %376 = vst.msk [vmem:[%s332 + $0x48] sm:$0xff] %vm366, %v343
      %377 = vst.msk [vmem:[%s332 + $0x50] sm:$0xff] %vm366, %v344
      %378 = vst.msk [vmem:[%s332 + $0x58] sm:$0xff] %vm366, %v345
      %379 = vst.msk [vmem:[%s332 + $0x60] sm:$0xff] %vm366, %v346
      %380 = vst.msk [vmem:[%s332 + $0x68] sm:$0xff] %vm366, %v347
      %381 = vst.msk [vmem:[%s332 + $0x70] sm:$0xff] %vm366, %v348
      %382 = vst.msk [vmem:[%s332 + $0x78] sm:$0xff] %vm366, %v349
      %383 = vst.msk [vmem:[%s332 + $0x80] sm:$0xff] %vm366, %v350
      %384 = vst.msk [vmem:[%s332 + $0x88] sm:$0xff] %vm366, %v351
      %385 = vst.msk [vmem:[%s332 + $0x90] sm:$0xff] %vm366, %v352
      %386 = vst.msk [vmem:[%s332 + $0x98] sm:$0xff] %vm366, %v353
      %387 = vst.msk [vmem:[%s332 + $0xa0] sm:$0xff] %vm366, %v354
      %388 = vst.msk [vmem:[%s332 + $0xa8] sm:$0xff] %vm366, %v355
      %389 = vst.msk [vmem:[%s332 + $0xb0] sm:$0xff] %vm366, %v356
      %390 = vst.msk [vmem:[%s332 + $0xb8] sm:$0xff] %vm366, %v357
      %391 = vst.msk [vmem:[%s332 + $0xc0] sm:$0xff] %vm366, %v358
      %392 = vst.msk [vmem:[%s332 + $0xc8] sm:$0xff] %vm366, %v359
      %393 = vst.msk [vmem:[%s332 + $0xd0] sm:$0xff] %vm366, %v360
      %394 = vst.msk [vmem:[%s332 + $0xd8] sm:$0xff] %vm366, %v361
      %395 = vst.msk [vmem:[%s332 + $0xe0] sm:$0xff] %vm366, %v362
      %396 = vst.msk [vmem:[%s332 + $0xe8] sm:$0xff] %vm366, %v363
      %397 = vst.msk [vmem:[%s332 + $0xf0] sm:$0xff] %vm366, %v364
      %398 = vst.msk [vmem:[%s332 + $0xf8] sm:$0xff] %vm366, %v365
      %v399 = vld [vmem:[%s1] sm:$0xff]
      %v400 = vld [vmem:[%s1 + $0x8] sm:$0xff]
      %v401 = vld [vmem:[%s1 + $0x10] sm:$0xff]
      %v402 = vld [vmem:[%s1 + $0x18] sm:$0xff]
      %v403 = vld [vmem:[%s1 + $0x20] sm:$0xff]
      %v404 = vld [vmem:[%s1 + $0x28] sm:$0xff]
      %v405 = vld [vmem:[%s1 + $0x30] sm:$0xff]
      %v406 = vld [vmem:[%s1 + $0x38] sm:$0xff]
      %v407 = vld [vmem:[%s1 + $0x40] sm:$0xff]
      %v408 = vld [vmem:[%s1 + $0x48] sm:$0xff]
      %v409 = vld [vmem:[%s1 + $0x50] sm:$0xff]
      %v410 = vld [vmem:[%s1 + $0x58] sm:$0xff]
      %v411 = vld [vmem:[%s1 + $0x60] sm:$0xff]
      %v412 = vld [vmem:[%s1 + $0x68] sm:$0xff]
      %v413 = vld [vmem:[%s1 + $0x70] sm:$0xff]
      %v414 = vld [vmem:[%s1 + $0x78] sm:$0xff]
      %v415 = vld [vmem:[%s1 + $0x80] sm:$0xff]
      %v416 = vld [vmem:[%s1 + $0x88] sm:$0xff]
      %v417 = vld [vmem:[%s1 + $0x90] sm:$0xff]
      %v418 = vld [vmem:[%s1 + $0x98] sm:$0xff]
      %v419 = vld [vmem:[%s1 + $0xa0] sm:$0xff]
      %v420 = vld [vmem:[%s1 + $0xa8] sm:$0xff]
      %v421 = vld [vmem:[%s1 + $0xb0] sm:$0xff]
      %v422 = vld [vmem:[%s1 + $0xb8] sm:$0xff]
      %v423 = vld [vmem:[%s1 + $0xc0] sm:$0xff]
      %v424 = vld [vmem:[%s1 + $0xc8] sm:$0xff]
      %v425 = vld [vmem:[%s1 + $0xd0] sm:$0xff]
      %v426 = vld [vmem:[%s1 + $0xd8] sm:$0xff]
      %v427 = vld [vmem:[%s1 + $0xe0] sm:$0xff]
      %v428 = vld [vmem:[%s1 + $0xe8] sm:$0xff]
      %v429 = vld [vmem:[%s1 + $0xf0] sm:$0xff]
      %v430 = vld [vmem:[%s1 + $0xf8] sm:$0xff]
      %v431 = vld [vmem:[%s332] sm:$0xff]
      %v432 = vld [vmem:[%s332 + $0x8] sm:$0xff]
      %v433 = vld [vmem:[%s332 + $0x10] sm:$0xff]
      %v434 = vld [vmem:[%s332 + $0x18] sm:$0xff]
      %v435 = vld [vmem:[%s332 + $0x20] sm:$0xff]
      %v436 = vld [vmem:[%s332 + $0x28] sm:$0xff]
      %v437 = vld [vmem:[%s332 + $0x30] sm:$0xff]
      %v438 = vld [vmem:[%s332 + $0x38] sm:$0xff]
      %v439 = vld [vmem:[%s332 + $0x40] sm:$0xff]
      %v440 = vld [vmem:[%s332 + $0x48] sm:$0xff]
      %v441 = vld [vmem:[%s332 + $0x50] sm:$0xff]
      %v442 = vld [vmem:[%s332 + $0x58] sm:$0xff]
      %v443 = vld [vmem:[%s332 + $0x60] sm:$0xff]
      %v444 = vld [vmem:[%s332 + $0x68] sm:$0xff]
      %v445 = vld [vmem:[%s332 + $0x70] sm:$0xff]
      %v446 = vld [vmem:[%s332 + $0x78] sm:$0xff]
      %v447 = vld [vmem:[%s332 + $0x80] sm:$0xff]
      %v448 = vld [vmem:[%s332 + $0x88] sm:$0xff]
      %v449 = vld [vmem:[%s332 + $0x90] sm:$0xff]
      %v450 = vld [vmem:[%s332 + $0x98] sm:$0xff]
      %v451 = vld [vmem:[%s332 + $0xa0] sm:$0xff]
      %v452 = vld [vmem:[%s332 + $0xa8] sm:$0xff]
      %v453 = vld [vmem:[%s332 + $0xb0] sm:$0xff]
      %v454 = vld [vmem:[%s332 + $0xb8] sm:$0xff]
      %v455 = vld [vmem:[%s332 + $0xc0] sm:$0xff]
      %v456 = vld [vmem:[%s332 + $0xc8] sm:$0xff]
      %v457 = vld [vmem:[%s332 + $0xd0] sm:$0xff]
      %v458 = vld [vmem:[%s332 + $0xd8] sm:$0xff]
      %v459 = vld [vmem:[%s332 + $0xe0] sm:$0xff]
      %v460 = vld [vmem:[%s332 + $0xe8] sm:$0xff]
      %v461 = vld [vmem:[%s332 + $0xf0] sm:$0xff]
      %v462 = vld [vmem:[%s332 + $0xf8] sm:$0xff]
      %v463 = vld [vmem:[%s2] sm:$0x1]
      %v464 = vld [vmem:[%s3] sm:$0x1]
      %v465 = vperm.slane %v463, 0
      %v466 = vmul.f32 %v431, %v465
      %v467 = vmul.f32 %v432, %v465
      %v468 = vmul.f32 %v433, %v465
      %v469 = vmul.f32 %v434, %v465
      %v470 = vmul.f32 %v435, %v465
      %v471 = vmul.f32 %v436, %v465
      %v472 = vmul.f32 %v437, %v465
      %v473 = vmul.f32 %v438, %v465
      %v474 = vmul.f32 %v439, %v465
      %v475 = vmul.f32 %v440, %v465
      %v476 = vmul.f32 %v441, %v465
      %v477 = vmul.f32 %v442, %v465
      %v478 = vmul.f32 %v443, %v465
      %v479 = vmul.f32 %v444, %v465
      %v480 = vmul.f32 %v445, %v465
      %v481 = vmul.f32 %v446, %v465
      %v482 = vmul.f32 %v447, %v465
      %v483 = vmul.f32 %v448, %v465
      %v484 = vmul.f32 %v449, %v465
      %v485 = vmul.f32 %v450, %v465
      %v486 = vmul.f32 %v451, %v465
      %v487 = vmul.f32 %v452, %v465
      %v488 = vmul.f32 %v453, %v465
      %v489 = vmul.f32 %v454, %v465
      %v490 = vmul.f32 %v455, %v465
      %v491 = vmul.f32 %v456, %v465
      %v492 = vmul.f32 %v457, %v465
      %v493 = vmul.f32 %v458, %v465
      %v494 = vmul.f32 %v459, %v465
      %v495 = vmul.f32 %v460, %v465
      %v496 = vmul.f32 %v461, %v465
      %v497 = vmul.f32 %v462, %v465
      %v498 = vperm.slane %v464, 0
      %v499 = vadd.f32 %v466, %v498
      %v500 = vadd.f32 %v467, %v498
      %v501 = vadd.f32 %v468, %v498
      %v502 = vadd.f32 %v469, %v498
      %v503 = vadd.f32 %v470, %v498
      %v504 = vadd.f32 %v471, %v498
      %v505 = vadd.f32 %v472, %v498
      %v506 = vadd.f32 %v473, %v498
      %v507 = vadd.f32 %v474, %v498
      %v508 = vadd.f32 %v475, %v498
      %v509 = vadd.f32 %v476, %v498
      %v510 = vadd.f32 %v477, %v498
      %v511 = vadd.f32 %v478, %v498
      %v512 = vadd.f32 %v479, %v498
      %v513 = vadd.f32 %v480, %v498
      %v514 = vadd.f32 %v481, %v498
      %v515 = vadd.f32 %v482, %v498
      %v516 = vadd.f32 %v483, %v498
      %v517 = vadd.f32 %v484, %v498
      %v518 = vadd.f32 %v485, %v498
      %v519 = vadd.f32 %v486, %v498
      %v520 = vadd.f32 %v487, %v498
      %v521 = vadd.f32 %v488, %v498
      %v522 = vadd.f32 %v489, %v498
      %v523 = vadd.f32 %v490, %v498
      %v524 = vadd.f32 %v491, %v498
      %v525 = vadd.f32 %v492, %v498
      %v526 = vadd.f32 %v493, %v498
      %v527 = vadd.f32 %v494, %v498
      %v528 = vadd.f32 %v495, %v498
      %v529 = vadd.f32 %v496, %v498
      %v530 = vadd.f32 %v497, %v498
      %v531 = vmax.f32 %v499, 0.0
      %v532 = vmax.f32 %v500, 0.0
      %v533 = vmax.f32 %v501, 0.0
      %v534 = vmax.f32 %v502, 0.0
      %v535 = vmax.f32 %v503, 0.0
      %v536 = vmax.f32 %v504, 0.0
      %v537 = vmax.f32 %v505, 0.0
      %v538 = vmax.f32 %v506, 0.0
      %v539 = vmax.f32 %v507, 0.0
      %v540 = vmax.f32 %v508, 0.0
      %v541 = vmax.f32 %v509, 0.0
      %v542 = vmax.f32 %v510, 0.0
      %v543 = vmax.f32 %v511, 0.0
      %v544 = vmax.f32 %v512, 0.0
      %v545 = vmax.f32 %v513, 0.0
      %v546 = vmax.f32 %v514, 0.0
      %v547 = vmax.f32 %v515, 0.0
      %v548 = vmax.f32 %v516, 0.0
      %v549 = vmax.f32 %v517, 0.0
      %v550 = vmax.f32 %v518, 0.0
      %v551 = vmax.f32 %v519, 0.0
      %v552 = vmax.f32 %v520, 0.0
      %v553 = vmax.f32 %v521, 0.0
      %v554 = vmax.f32 %v522, 0.0
      %v555 = vmax.f32 %v523, 0.0
      %v556 = vmax.f32 %v524, 0.0
      %v557 = vmax.f32 %v525, 0.0
      %v558 = vmax.f32 %v526, 0.0
      %v559 = vmax.f32 %v527, 0.0
      %v560 = vmax.f32 %v528, 0.0
      %v561 = vmax.f32 %v529, 0.0
      %v562 = vmax.f32 %v530, 0.0
      %v563 = vpack.c.bf16 %v532, %v531
      %v564 = vpack.c.bf16 %v534, %v533
      %v565 = vpack.c.bf16 %v536, %v535
      %v566 = vpack.c.bf16 %v538, %v537
      %v567 = vpack.c.bf16 %v540, %v539
      %v568 = vpack.c.bf16 %v542, %v541
      %v569 = vpack.c.bf16 %v544, %v543
      %v570 = vpack.c.bf16 %v546, %v545
      %v571 = vpack.c.bf16 %v548, %v547
      %v572 = vpack.c.bf16 %v550, %v549
      %v573 = vpack.c.bf16 %v552, %v551
      %v574 = vpack.c.bf16 %v554, %v553
      %v575 = vpack.c.bf16 %v556, %v555
      %v576 = vpack.c.bf16 %v558, %v557
      %v577 = vpack.c.bf16 %v560, %v559
      %v578 = vpack.c.bf16 %v562, %v561
      %v579 = vld [vmem:[%s6] sm:$0xf]
      %v580 = vld [vmem:[%s4] sm:$0x1]
      %v581 = vperm.slane %v580, 0
      %v583 = vsel %vm366, %v563, 0
      %v586 = vsel %vm366, %v564, 0
      %v589 = vsel %vm366, %v565, 0
      %v592 = vsel %vm366, %v566, 0
      %v595 = vsel %vm366, %v567, 0
      %v598 = vsel %vm366, %v568, 0
      %v601 = vsel %vm366, %v569, 0
      %v604 = vsel %vm366, %v570, 0
      %v607 = vsel %vm366, %v571, 0
      %v610 = vsel %vm366, %v572, 0
      %v613 = vsel %vm366, %v573, 0
      %v616 = vsel %vm366, %v574, 0
      %v619 = vsel %vm366, %v575, 0
      %v622 = vsel %vm366, %v576, 0
      %v625 = vsel %vm366, %v577, 0
      %v628 = vsel %vm366, %v578, 0
      %vm630 = vcmask 1043456
      %v632 = vsel %vm630, %v579, 0
      %634 = vmatpush.bf16.msra.mxu0 0
      %635 = vmatpush.bf16.msra.mxu0 0
      %636 = vmatpush.bf16.msra.mxu0 0
      %637 = vmatpush.bf16.msra.mxu0 0
      %638 = vmatpush.bf16.msra.mxu0 0
      %639 = vmatpush.bf16.msra.mxu0 0
      %640 = vmatpush.bf16.msra.mxu0 0
      %641 = vmatpush.bf16.msra.mxu0 %v632
      %642 = vmatmul.bf16.gmra.mxu0 %v583
      %v643 = vpop.f32.mrf.mxu0
      %v644 = vadd.f32 %v581, %v643
      %v645 = vpop.f32.mrf.mxu0
      %v646 = vadd.f32 %v581, %v645
      %647 = vmatmul.bf16.gmra.mxu0 %v586
      %v648 = vpop.f32.mrf.mxu0
      %v649 = vadd.f32 %v581, %v648
      %v650 = vpop.f32.mrf.mxu0
      %v651 = vadd.f32 %v581, %v650
      %652 = vmatmul.bf16.gmra.mxu0 %v589
      %v653 = vpop.f32.mrf.mxu0
      %v654 = vadd.f32 %v581, %v653
      %v655 = vpop.f32.mrf.mxu0
      %v656 = vadd.f32 %v581, %v655
      %657 = vmatmul.bf16.gmra.mxu0 %v592
      %v658 = vpop.f32.mrf.mxu0
      %v659 = vadd.f32 %v581, %v658
      %v660 = vpop.f32.mrf.mxu0
      %v661 = vadd.f32 %v581, %v660
      %662 = vmatmul.bf16.gmra.mxu0 %v595
      %v663 = vpop.f32.mrf.mxu0
      %v664 = vadd.f32 %v581, %v663
      %v665 = vpop.f32.mrf.mxu0
      %v666 = vadd.f32 %v581, %v665
      %667 = vmatmul.bf16.gmra.mxu0 %v598
      %v668 = vpop.f32.mrf.mxu0
      %v669 = vadd.f32 %v581, %v668
      %v670 = vpop.f32.mrf.mxu0
      %v671 = vadd.f32 %v581, %v670
      %672 = vmatmul.bf16.gmra.mxu0 %v601
      %v673 = vpop.f32.mrf.mxu0
      %v674 = vadd.f32 %v581, %v673
      %v675 = vpop.f32.mrf.mxu0
      %v676 = vadd.f32 %v581, %v675
      %677 = vmatmul.bf16.gmra.mxu0 %v604
      %v678 = vpop.f32.mrf.mxu0
      %v679 = vadd.f32 %v581, %v678
      %v680 = vpop.f32.mrf.mxu0
      %v681 = vadd.f32 %v581, %v680
      %682 = vmatmul.bf16.gmra.mxu0 %v607
      %v683 = vpop.f32.mrf.mxu0
      %v684 = vadd.f32 %v581, %v683
      %v685 = vpop.f32.mrf.mxu0
      %v686 = vadd.f32 %v581, %v685
      %687 = vmatmul.bf16.gmra.mxu0 %v610
      %v688 = vpop.f32.mrf.mxu0
      %v689 = vadd.f32 %v581, %v688
      %v690 = vpop.f32.mrf.mxu0
      %v691 = vadd.f32 %v581, %v690
      %692 = vmatmul.bf16.gmra.mxu0 %v613
      %v693 = vpop.f32.mrf.mxu0
      %v694 = vadd.f32 %v581, %v693
      %v695 = vpop.f32.mrf.mxu0
      %v696 = vadd.f32 %v581, %v695
      %697 = vmatmul.bf16.gmra.mxu0 %v616
      %v698 = vpop.f32.mrf.mxu0
      %v699 = vadd.f32 %v581, %v698
      %v700 = vpop.f32.mrf.mxu0
      %v701 = vadd.f32 %v581, %v700
      %702 = vmatmul.bf16.gmra.mxu0 %v619
      %v703 = vpop.f32.mrf.mxu0
      %v704 = vadd.f32 %v581, %v703
      %v705 = vpop.f32.mrf.mxu0
      %v706 = vadd.f32 %v581, %v705
      %707 = vmatmul.bf16.gmra.mxu0 %v622
      %v708 = vpop.f32.mrf.mxu0
      %v709 = vadd.f32 %v581, %v708
      %v710 = vpop.f32.mrf.mxu0
      %v711 = vadd.f32 %v581, %v710
      %712 = vmatmul.bf16.gmra.mxu0 %v625
      %v713 = vpop.f32.mrf.mxu0
      %v714 = vadd.f32 %v581, %v713
      %v715 = vpop.f32.mrf.mxu0
      %v716 = vadd.f32 %v581, %v715
      %717 = vmatmul.bf16.gmra.mxu0 %v628
      %v718 = vpop.f32.mrf.mxu0
      %v719 = vadd.f32 %v581, %v718
      %v720 = vpop.f32.mrf.mxu0
      %v721 = vadd.f32 %v581, %v720
      %722 = vdwg.mxu0
      %v723 = vmax.f32 %v644, 0.0
      %v724 = vmax.f32 %v646, 0.0
      %v725 = vmax.f32 %v649, 0.0
      %v726 = vmax.f32 %v651, 0.0
      %v727 = vmax.f32 %v654, 0.0
      %v728 = vmax.f32 %v656, 0.0
      %v729 = vmax.f32 %v659, 0.0
      %v730 = vmax.f32 %v661, 0.0
      %v731 = vmax.f32 %v664, 0.0
      %v732 = vmax.f32 %v666, 0.0
      %v733 = vmax.f32 %v669, 0.0
      %v734 = vmax.f32 %v671, 0.0
      %v735 = vmax.f32 %v674, 0.0
      %v736 = vmax.f32 %v676, 0.0
      %v737 = vmax.f32 %v679, 0.0
      %v738 = vmax.f32 %v681, 0.0
      %v739 = vmax.f32 %v684, 0.0
      %v740 = vmax.f32 %v686, 0.0
      %v741 = vmax.f32 %v689, 0.0
      %v742 = vmax.f32 %v691, 0.0
      %v743 = vmax.f32 %v694, 0.0
      %v744 = vmax.f32 %v696, 0.0
      %v745 = vmax.f32 %v699, 0.0
      %v746 = vmax.f32 %v701, 0.0
      %v747 = vmax.f32 %v704, 0.0
      %v748 = vmax.f32 %v706, 0.0
      %v749 = vmax.f32 %v709, 0.0
      %v750 = vmax.f32 %v711, 0.0
      %v751 = vmax.f32 %v714, 0.0
      %v752 = vmax.f32 %v716, 0.0
      %v753 = vmax.f32 %v719, 0.0
      %v754 = vmax.f32 %v721, 0.0
      %v755 = vpack.c.bf16 %v724, %v723
      %v756 = vpack.c.bf16 %v726, %v725
      %v757 = vpack.c.bf16 %v728, %v727
      %v758 = vpack.c.bf16 %v730, %v729
      %v759 = vpack.c.bf16 %v732, %v731
      %v760 = vpack.c.bf16 %v734, %v733
      %v761 = vpack.c.bf16 %v736, %v735
      %v762 = vpack.c.bf16 %v738, %v737
      %v763 = vpack.c.bf16 %v740, %v739
      %v764 = vpack.c.bf16 %v742, %v741
      %v765 = vpack.c.bf16 %v744, %v743
      %v766 = vpack.c.bf16 %v746, %v745
      %v767 = vpack.c.bf16 %v748, %v747
      %v768 = vpack.c.bf16 %v750, %v749
      %v769 = vpack.c.bf16 %v752, %v751
      %v770 = vpack.c.bf16 %v754, %v753
      %v771 = vld [vmem:[%s5] sm:$0xf]
      %v772 = vld [vmem:[%s5 + $0x4] sm:$0xf]
      %v775 = vunpack.c.l.b16 %v771
      %v776 = vunpack.c.l.b16 %v772
      %v777 = vpack.c.b16 %v776, %v775
      %vm779 = vcmask 130048
      %v781 = vsel %vm779, %v755, 0
      %v784 = vsel %vm779, %v756, 0
      %v787 = vsel %vm779, %v757, 0
      %v790 = vsel %vm779, %v758, 0
      %v793 = vsel %vm779, %v759, 0
      %v796 = vsel %vm779, %v760, 0
      %v799 = vsel %vm779, %v761, 0
      %v802 = vsel %vm779, %v762, 0
      %v805 = vsel %vm779, %v763, 0
      %v808 = vsel %vm779, %v764, 0
      %v811 = vsel %vm779, %v765, 0
      %v814 = vsel %vm779, %v766, 0
      %v817 = vsel %vm779, %v767, 0
      %v820 = vsel %vm779, %v768, 0
      %v823 = vsel %vm779, %v769, 0
      %v826 = vsel %vm779, %v770, 0
      %828 = vmatpush.bf16.msra.mxu0 0
      %829 = vmatpush.bf16.msra.mxu0 0
      %830 = vmatpush.bf16.msra.mxu0 0
      %831 = vmatpush.bf16.msra.mxu0 0
      %832 = vmatpush.bf16.msra.mxu0 0
      %833 = vmatpush.bf16.msra.mxu0 0
      %834 = vmatpush.bf16.msra.mxu0 0
      %835 = vmatpush.bf16.msra.mxu0 %v777
      %836 = vmatmul.bf16.gmra.mxu0 %v781
      %v837 = vpop.f32.mrf.mxu0
      %v838 = vadd.f32 0.0, %v837
      %v839 = vpop.f32.mrf.mxu0
      %v840 = vadd.f32 0.0, %v839
      %841 = vmatmul.bf16.gmra.mxu0 %v784
      %v842 = vpop.f32.mrf.mxu0
      %v843 = vadd.f32 0.0, %v842
      %v844 = vpop.f32.mrf.mxu0
      %v845 = vadd.f32 0.0, %v844
      %846 = vmatmul.bf16.gmra.mxu0 %v787
      %v847 = vpop.f32.mrf.mxu0
      %v848 = vadd.f32 0.0, %v847
      %v849 = vpop.f32.mrf.mxu0
      %v850 = vadd.f32 0.0, %v849
      %851 = vmatmul.bf16.gmra.mxu0 %v790
      %v852 = vpop.f32.mrf.mxu0
      %v853 = vadd.f32 0.0, %v852
      %v854 = vpop.f32.mrf.mxu0
      %v855 = vadd.f32 0.0, %v854
      %856 = vmatmul.bf16.gmra.mxu0 %v793
      %v857 = vpop.f32.mrf.mxu0
      %v858 = vadd.f32 0.0, %v857
      %v859 = vpop.f32.mrf.mxu0
      %v860 = vadd.f32 0.0, %v859
      %861 = vmatmul.bf16.gmra.mxu0 %v796
      %v862 = vpop.f32.mrf.mxu0
      %v863 = vadd.f32 0.0, %v862
      %v864 = vpop.f32.mrf.mxu0
      %v865 = vadd.f32 0.0, %v864
      %866 = vmatmul.bf16.gmra.mxu0 %v799
      %v867 = vpop.f32.mrf.mxu0
      %v868 = vadd.f32 0.0, %v867
      %v869 = vpop.f32.mrf.mxu0
      %v870 = vadd.f32 0.0, %v869
      %871 = vmatmul.bf16.gmra.mxu0 %v802
      %v872 = vpop.f32.mrf.mxu0
      %v873 = vadd.f32 0.0, %v872
      %v874 = vpop.f32.mrf.mxu0
      %v875 = vadd.f32 0.0, %v874
      %876 = vmatmul.bf16.gmra.mxu0 %v805
      %v877 = vpop.f32.mrf.mxu0
      %v878 = vadd.f32 0.0, %v877
      %v879 = vpop.f32.mrf.mxu0
      %v880 = vadd.f32 0.0, %v879
      %881 = vmatmul.bf16.gmra.mxu0 %v808
      %v882 = vpop.f32.mrf.mxu0
      %v883 = vadd.f32 0.0, %v882
      %v884 = vpop.f32.mrf.mxu0
      %v885 = vadd.f32 0.0, %v884
      %886 = vmatmul.bf16.gmra.mxu0 %v811
      %v887 = vpop.f32.mrf.mxu0
      %v888 = vadd.f32 0.0, %v887
      %v889 = vpop.f32.mrf.mxu0
      %v890 = vadd.f32 0.0, %v889
      %891 = vmatmul.bf16.gmra.mxu0 %v814
      %v892 = vpop.f32.mrf.mxu0
      %v893 = vadd.f32 0.0, %v892
      %v894 = vpop.f32.mrf.mxu0
      %v895 = vadd.f32 0.0, %v894
      %896 = vmatmul.bf16.gmra.mxu0 %v817
      %v897 = vpop.f32.mrf.mxu0
      %v898 = vadd.f32 0.0, %v897
      %v899 = vpop.f32.mrf.mxu0
      %v900 = vadd.f32 0.0, %v899
      %901 = vmatmul.bf16.gmra.mxu0 %v820
      %v902 = vpop.f32.mrf.mxu0
      %v903 = vadd.f32 0.0, %v902
      %v904 = vpop.f32.mrf.mxu0
      %v905 = vadd.f32 0.0, %v904
      %906 = vmatmul.bf16.gmra.mxu0 %v823
      %v907 = vpop.f32.mrf.mxu0
      %v908 = vadd.f32 0.0, %v907
      %v909 = vpop.f32.mrf.mxu0
      %v910 = vadd.f32 0.0, %v909
      %911 = vmatmul.bf16.gmra.mxu0 %v826
      %v912 = vpop.f32.mrf.mxu0
      %v913 = vadd.f32 0.0, %v912
      %v914 = vpop.f32.mrf.mxu0
      %v915 = vadd.f32 0.0, %v914
      %916 = vdwg.mxu0
      %vm947 = vcmask 1040384
      %v948 = vrot.slane %v838, 7
      %v949 = vrot.slane %v840, 7
      %v950 = vsel %vm947, %v948, %v949
      %v951 = vrot.slane %v843, 7
      %v952 = vsel %vm947, %v949, %v951
      %v953 = vrot.slane %v845, 7
      %v954 = vsel %vm947, %v951, %v953
      %v955 = vrot.slane %v848, 7
      %v956 = vsel %vm947, %v953, %v955
      %v957 = vrot.slane %v850, 7
      %v958 = vsel %vm947, %v955, %v957
      %v959 = vrot.slane %v853, 7
      %v960 = vsel %vm947, %v957, %v959
      %v961 = vrot.slane %v855, 7
      %v962 = vsel %vm947, %v959, %v961
      %v963 = vrot.slane %v858, 7
      %v964 = vsel %vm947, %v961, %v963
      %v965 = vrot.slane %v860, 7
      %v966 = vsel %vm947, %v963, %v965
      %v967 = vrot.slane %v863, 7
      %v968 = vsel %vm947, %v965, %v967
      %v969 = vrot.slane %v865, 7
      %v970 = vsel %vm947, %v967, %v969
      %v971 = vrot.slane %v868, 7
      %v972 = vsel %vm947, %v969, %v971
      %v973 = vrot.slane %v870, 7
      %v974 = vsel %vm947, %v971, %v973
      %v975 = vrot.slane %v873, 7
      %v976 = vsel %vm947, %v973, %v975
      %v977 = vrot.slane %v875, 7
      %v978 = vsel %vm947, %v975, %v977
      %v979 = vrot.slane %v878, 7
      %v980 = vsel %vm947, %v977, %v979
      %v981 = vrot.slane %v880, 7
      %v982 = vsel %vm947, %v979, %v981
      %v983 = vrot.slane %v883, 7
      %v984 = vsel %vm947, %v981, %v983
      %v985 = vrot.slane %v885, 7
      %v986 = vsel %vm947, %v983, %v985
      %v987 = vrot.slane %v888, 7
      %v988 = vsel %vm947, %v985, %v987
      %v989 = vrot.slane %v890, 7
      %v990 = vsel %vm947, %v987, %v989
      %v991 = vrot.slane %v893, 7
      %v992 = vsel %vm947, %v989, %v991
      %v993 = vrot.slane %v895, 7
      %v994 = vsel %vm947, %v991, %v993
      %v995 = vrot.slane %v898, 7
      %v996 = vsel %vm947, %v993, %v995
      %v997 = vrot.slane %v900, 7
      %v998 = vsel %vm947, %v995, %v997
      %v999 = vrot.slane %v903, 7
      %v1000 = vsel %vm947, %v997, %v999
      %v1001 = vrot.slane %v905, 7
      %v1002 = vsel %vm947, %v999, %v1001
      %v1003 = vrot.slane %v908, 7
      %v1004 = vsel %vm947, %v1001, %v1003
      %v1005 = vrot.slane %v910, 7
      %v1006 = vsel %vm947, %v1003, %v1005
      %v1037 = vsel %vm947, 0.0, %v948
      %1039 = vset.pattern.permute.xlu0 0
      %1040 = vperm.xlu0 %1039, %v399
      %v1041 = vpop.permute.xlu0 %1040
      %1044 = vset.pattern.permute.xlu0 0
      %1045 = vperm.xlu0 %1044, %v400
      %v1046 = vpop.permute.xlu0 %1045
      %1049 = vset.pattern.permute.xlu0 0
      %1050 = vperm.xlu0 %1049, %v401
      %v1051 = vpop.permute.xlu0 %1050
      %1054 = vset.pattern.permute.xlu0 0
      %1055 = vperm.xlu0 %1054, %v402
      %v1056 = vpop.permute.xlu0 %1055
      %1059 = vset.pattern.permute.xlu0 0
      %1060 = vperm.xlu0 %1059, %v403
      %v1061 = vpop.permute.xlu0 %1060
      %1064 = vset.pattern.permute.xlu0 0
      %1065 = vperm.xlu0 %1064, %v404
      %v1066 = vpop.permute.xlu0 %1065
      %1069 = vset.pattern.permute.xlu0 0
      %1070 = vperm.xlu0 %1069, %v405
      %v1071 = vpop.permute.xlu0 %1070
      %1074 = vset.pattern.permute.xlu0 0
      %1075 = vperm.xlu0 %1074, %v406
      %v1076 = vpop.permute.xlu0 %1075
      %1079 = vset.pattern.permute.xlu0 0
      %1080 = vperm.xlu0 %1079, %v407
      %v1081 = vpop.permute.xlu0 %1080
      %1084 = vset.pattern.permute.xlu0 0
      %1085 = vperm.xlu0 %1084, %v408
      %v1086 = vpop.permute.xlu0 %1085
      %1089 = vset.pattern.permute.xlu0 0
      %1090 = vperm.xlu0 %1089, %v409
      %v1091 = vpop.permute.xlu0 %1090
      %1094 = vset.pattern.permute.xlu0 0
      %1095 = vperm.xlu0 %1094, %v410
      %v1096 = vpop.permute.xlu0 %1095
      %1099 = vset.pattern.permute.xlu0 0
      %1100 = vperm.xlu0 %1099, %v411
      %v1101 = vpop.permute.xlu0 %1100
      %1104 = vset.pattern.permute.xlu0 0
      %1105 = vperm.xlu0 %1104, %v412
      %v1106 = vpop.permute.xlu0 %1105
      %1109 = vset.pattern.permute.xlu0 0
      %1110 = vperm.xlu0 %1109, %v413
      %v1111 = vpop.permute.xlu0 %1110
      %1114 = vset.pattern.permute.xlu0 0
      %1115 = vperm.xlu0 %1114, %v414
      %v1116 = vpop.permute.xlu0 %1115
      %1119 = vset.pattern.permute.xlu0 0
      %1120 = vperm.xlu0 %1119, %v415
      %v1121 = vpop.permute.xlu0 %1120
      %1124 = vset.pattern.permute.xlu0 0
      %1125 = vperm.xlu0 %1124, %v416
      %v1126 = vpop.permute.xlu0 %1125
      %1129 = vset.pattern.permute.xlu0 0
      %1130 = vperm.xlu0 %1129, %v417
      %v1131 = vpop.permute.xlu0 %1130
      %1134 = vset.pattern.permute.xlu0 0
      %1135 = vperm.xlu0 %1134, %v418
      %v1136 = vpop.permute.xlu0 %1135
      %1139 = vset.pattern.permute.xlu0 0
      %1140 = vperm.xlu0 %1139, %v419
      %v1141 = vpop.permute.xlu0 %1140
      %1144 = vset.pattern.permute.xlu0 0
      %1145 = vperm.xlu0 %1144, %v420
      %v1146 = vpop.permute.xlu0 %1145
      %1149 = vset.pattern.permute.xlu0 0
      %1150 = vperm.xlu0 %1149, %v421
      %v1151 = vpop.permute.xlu0 %1150
      %1154 = vset.pattern.permute.xlu0 0
      %1155 = vperm.xlu0 %1154, %v422
      %v1156 = vpop.permute.xlu0 %1155
      %1159 = vset.pattern.permute.xlu0 0
      %1160 = vperm.xlu0 %1159, %v423
      %v1161 = vpop.permute.xlu0 %1160
      %1164 = vset.pattern.permute.xlu0 0
      %1165 = vperm.xlu0 %1164, %v424
      %v1166 = vpop.permute.xlu0 %1165
      %1169 = vset.pattern.permute.xlu0 0
      %1170 = vperm.xlu0 %1169, %v425
      %v1171 = vpop.permute.xlu0 %1170
      %1174 = vset.pattern.permute.xlu0 0
      %1175 = vperm.xlu0 %1174, %v426
      %v1176 = vpop.permute.xlu0 %1175
      %1179 = vset.pattern.permute.xlu0 0
      %1180 = vperm.xlu0 %1179, %v427
      %v1181 = vpop.permute.xlu0 %1180
      %1184 = vset.pattern.permute.xlu0 0
      %1185 = vperm.xlu0 %1184, %v428
      %v1186 = vpop.permute.xlu0 %1185
      %1189 = vset.pattern.permute.xlu0 0
      %1190 = vperm.xlu0 %1189, %v429
      %v1191 = vpop.permute.xlu0 %1190
      %1194 = vset.pattern.permute.xlu0 0
      %1195 = vperm.xlu0 %1194, %v430
      %v1196 = vpop.permute.xlu0 %1195
      %v1198 = vmul.f32 %v1041, 0.0
      %v1199 = vmul.f32 %v1046, 0.0
      %v1200 = vmul.f32 %v1037, %v1051
      %v1201 = vmul.f32 %v950, %v1056
      %v1202 = vmul.f32 %v952, %v1061
      %v1203 = vmul.f32 %v954, %v1066
      %v1204 = vmul.f32 %v956, %v1071
      %v1205 = vmul.f32 %v958, %v1076
      %v1206 = vmul.f32 %v960, %v1081
      %v1207 = vmul.f32 %v962, %v1086
      %v1208 = vmul.f32 %v964, %v1091
      %v1209 = vmul.f32 %v966, %v1096
      %v1210 = vmul.f32 %v968, %v1101
      %v1211 = vmul.f32 %v970, %v1106
      %v1212 = vmul.f32 %v972, %v1111
      %v1213 = vmul.f32 %v974, %v1116
      %v1214 = vmul.f32 %v976, %v1121
      %v1215 = vmul.f32 %v978, %v1126
      %v1216 = vmul.f32 %v980, %v1131
      %v1217 = vmul.f32 %v982, %v1136
      %v1218 = vmul.f32 %v984, %v1141
      %v1219 = vmul.f32 %v986, %v1146
      %v1220 = vmul.f32 %v988, %v1151
      %v1221 = vmul.f32 %v990, %v1156
      %v1222 = vmul.f32 %v992, %v1161
      %v1223 = vmul.f32 %v994, %v1166
      %v1224 = vmul.f32 %v996, %v1171
      %v1225 = vmul.f32 %v998, %v1176
      %v1226 = vmul.f32 %v1000, %v1181
      %v1227 = vmul.f32 %v1002, %v1186
      %v1228 = vmul.f32 %v1004, %v1191
      %v1229 = vmul.f32 %v1006, %v1196
      %1262 = vrot.lane.b32.xlu0 %v1198, 32
      %v1263 = vpop.permute.xlu0 %1262
      %1264 = vrot.lane.b32.xlu0 %v1199, 32
      %v1265 = vpop.permute.xlu0 %1264
      %1266 = vrot.lane.b32.xlu0 %v1200, 32
      %v1267 = vpop.permute.xlu0 %1266
      %1268 = vrot.lane.b32.xlu0 %v1201, 32
      %v1269 = vpop.permute.xlu0 %1268
      %1270 = vrot.lane.b32.xlu0 %v1202, 32
      %v1271 = vpop.permute.xlu0 %1270
      %1272 = vrot.lane.b32.xlu0 %v1203, 32
      %v1273 = vpop.permute.xlu0 %1272
      %1274 = vrot.lane.b32.xlu0 %v1204, 32
      %v1275 = vpop.permute.xlu0 %1274
      %1276 = vrot.lane.b32.xlu0 %v1205, 32
      %v1277 = vpop.permute.xlu0 %1276
      %1278 = vrot.lane.b32.xlu0 %v1206, 32
      %v1279 = vpop.permute.xlu0 %1278
      %1280 = vrot.lane.b32.xlu0 %v1207, 32
      %v1281 = vpop.permute.xlu0 %1280
      %1282 = vrot.lane.b32.xlu0 %v1208, 32
      %v1283 = vpop.permute.xlu0 %1282
      %1284 = vrot.lane.b32.xlu0 %v1209, 32
      %v1285 = vpop.permute.xlu0 %1284
      %1286 = vrot.lane.b32.xlu0 %v1210, 32
      %v1287 = vpop.permute.xlu0 %1286
      %1288 = vrot.lane.b32.xlu0 %v1211, 32
      %v1289 = vpop.permute.xlu0 %1288
      %1290 = vrot.lane.b32.xlu0 %v1212, 32
      %v1291 = vpop.permute.xlu0 %1290
      %1292 = vrot.lane.b32.xlu0 %v1213, 32
      %v1293 = vpop.permute.xlu0 %1292
      %1294 = vrot.lane.b32.xlu0 %v1214, 32
      %v1295 = vpop.permute.xlu0 %1294
      %1296 = vrot.lane.b32.xlu0 %v1215, 32
      %v1297 = vpop.permute.xlu0 %1296
      %1298 = vrot.lane.b32.xlu0 %v1216, 32
      %v1299 = vpop.permute.xlu0 %1298
      %1300 = vrot.lane.b32.xlu0 %v1217, 32
      %v1301 = vpop.permute.xlu0 %1300
      %1302 = vrot.lane.b32.xlu0 %v1218, 32
      %v1303 = vpop.permute.xlu0 %1302
      %1304 = vrot.lane.b32.xlu0 %v1219, 32
      %v1305 = vpop.permute.xlu0 %1304
      %1306 = vrot.lane.b32.xlu0 %v1220, 32
      %v1307 = vpop.permute.xlu0 %1306
      %1308 = vrot.lane.b32.xlu0 %v1221, 32
      %v1309 = vpop.permute.xlu0 %1308
      %1310 = vrot.lane.b32.xlu0 %v1222, 32
      %v1311 = vpop.permute.xlu0 %1310
      %1312 = vrot.lane.b32.xlu0 %v1223, 32
      %v1313 = vpop.permute.xlu0 %1312
      %1314 = vrot.lane.b32.xlu0 %v1224, 32
      %v1315 = vpop.permute.xlu0 %1314
      %1316 = vrot.lane.b32.xlu0 %v1225, 32
      %v1317 = vpop.permute.xlu0 %1316
      %1318 = vrot.lane.b32.xlu0 %v1226, 32
      %v1319 = vpop.permute.xlu0 %1318
      %1320 = vrot.lane.b32.xlu0 %v1227, 32
      %v1321 = vpop.permute.xlu0 %1320
      %1322 = vrot.lane.b32.xlu0 %v1228, 32
      %v1323 = vpop.permute.xlu0 %1322
      %1324 = vrot.lane.b32.xlu0 %v1229, 32
      %v1325 = vpop.permute.xlu0 %1324
      %v1358 = vadd.f32 %v838, %v1263
      %v1359 = vadd.f32 %v840, %v1265
      %v1360 = vadd.f32 %v843, %v1267
      %v1361 = vadd.f32 %v845, %v1269
      %v1362 = vadd.f32 %v848, %v1271
      %v1363 = vadd.f32 %v850, %v1273
      %v1364 = vadd.f32 %v853, %v1275
      %v1365 = vadd.f32 %v855, %v1277
      %v1366 = vadd.f32 %v858, %v1279
      %v1367 = vadd.f32 %v860, %v1281
      %v1368 = vadd.f32 %v863, %v1283
      %v1369 = vadd.f32 %v865, %v1285
      %v1370 = vadd.f32 %v868, %v1287
      %v1371 = vadd.f32 %v870, %v1289
      %v1372 = vadd.f32 %v873, %v1291
      %v1373 = vadd.f32 %v875, %v1293
      %v1374 = vadd.f32 %v878, %v1295
      %v1375 = vadd.f32 %v880, %v1297
      %v1376 = vadd.f32 %v883, %v1299
      %v1377 = vadd.f32 %v885, %v1301
      %v1378 = vadd.f32 %v888, %v1303
      %v1379 = vadd.f32 %v890, %v1305
      %v1380 = vadd.f32 %v893, %v1307
      %v1381 = vadd.f32 %v895, %v1309
      %v1382 = vadd.f32 %v898, %v1311
      %v1383 = vadd.f32 %v900, %v1313
      %v1384 = vadd.f32 %v903, %v1315
      %v1385 = vadd.f32 %v905, %v1317
      %v1386 = vadd.f32 %v908, %v1319
      %v1387 = vadd.f32 %v910, %v1321
      %v1388 = vadd.f32 %v913, %v1323
      %v1389 = vadd.f32 %v915, %v1325
      %1390 = vrot.lane.b32.xlu0 %v838, 120
      %v1391 = vpop.permute.xlu0 %1390
      %1392 = vrot.lane.b32.xlu0 %v840, 120
      %v1393 = vpop.permute.xlu0 %1392
      %1394 = vrot.lane.b32.xlu0 %v843, 120
      %v1395 = vpop.permute.xlu0 %1394
      %1396 = vrot.lane.b32.xlu0 %v845, 120
      %v1397 = vpop.permute.xlu0 %1396
      %1398 = vrot.lane.b32.xlu0 %v848, 120
      %v1399 = vpop.permute.xlu0 %1398
      %1400 = vrot.lane.b32.xlu0 %v850, 120
      %v1401 = vpop.permute.xlu0 %1400
      %1402 = vrot.lane.b32.xlu0 %v853, 120
      %v1403 = vpop.permute.xlu0 %1402
      %1404 = vrot.lane.b32.xlu0 %v855, 120
      %v1405 = vpop.permute.xlu0 %1404
      %1406 = vrot.lane.b32.xlu0 %v858, 120
      %v1407 = vpop.permute.xlu0 %1406
      %1408 = vrot.lane.b32.xlu0 %v860, 120
      %v1409 = vpop.permute.xlu0 %1408
      %1410 = vrot.lane.b32.xlu0 %v863, 120
      %v1411 = vpop.permute.xlu0 %1410
      %1412 = vrot.lane.b32.xlu0 %v865, 120
      %v1413 = vpop.permute.xlu0 %1412
      %1414 = vrot.lane.b32.xlu0 %v868, 120
      %v1415 = vpop.permute.xlu0 %1414
      %1416 = vrot.lane.b32.xlu0 %v870, 120
      %v1417 = vpop.permute.xlu0 %1416
      %1418 = vrot.lane.b32.xlu0 %v873, 120
      %v1419 = vpop.permute.xlu0 %1418
      %1420 = vrot.lane.b32.xlu0 %v875, 120
      %v1421 = vpop.permute.xlu0 %1420
      %1422 = vrot.lane.b32.xlu0 %v878, 120
      %v1423 = vpop.permute.xlu0 %1422
      %1424 = vrot.lane.b32.xlu0 %v880, 120
      %v1425 = vpop.permute.xlu0 %1424
      %1426 = vrot.lane.b32.xlu0 %v883, 120
      %v1427 = vpop.permute.xlu0 %1426
      %1428 = vrot.lane.b32.xlu0 %v885, 120
      %v1429 = vpop.permute.xlu0 %1428
      %1430 = vrot.lane.b32.xlu0 %v888, 120
      %v1431 = vpop.permute.xlu0 %1430
      %1432 = vrot.lane.b32.xlu0 %v890, 120
      %v1433 = vpop.permute.xlu0 %1432
      %1434 = vrot.lane.b32.xlu0 %v893, 120
      %v1435 = vpop.permute.xlu0 %1434
      %1436 = vrot.lane.b32.xlu0 %v895, 120
      %v1437 = vpop.permute.xlu0 %1436
      %1438 = vrot.lane.b32.xlu0 %v898, 120
      %v1439 = vpop.permute.xlu0 %1438
      %1440 = vrot.lane.b32.xlu0 %v900, 120
      %v1441 = vpop.permute.xlu0 %1440
      %1442 = vrot.lane.b32.xlu0 %v903, 120
      %v1443 = vpop.permute.xlu0 %1442
      %1444 = vrot.lane.b32.xlu0 %v905, 120
      %v1445 = vpop.permute.xlu0 %1444
      %1446 = vrot.lane.b32.xlu0 %v908, 120
      %v1447 = vpop.permute.xlu0 %1446
      %1448 = vrot.lane.b32.xlu0 %v910, 120
      %v1449 = vpop.permute.xlu0 %1448
      %1451 = vrot.lane.b32.xlu0 0.0, 32
      %v1452 = vpop.permute.xlu0 %1451
      %1453 = vrot.lane.b32.xlu0 %v1391, 32
      %v1454 = vpop.permute.xlu0 %1453
      %1455 = vrot.lane.b32.xlu0 %v1393, 32
      %v1456 = vpop.permute.xlu0 %1455
      %1457 = vrot.lane.b32.xlu0 %v1395, 32
      %v1458 = vpop.permute.xlu0 %1457
      %1459 = vrot.lane.b32.xlu0 %v1397, 32
      %v1460 = vpop.permute.xlu0 %1459
      %1461 = vrot.lane.b32.xlu0 %v1399, 32
      %v1462 = vpop.permute.xlu0 %1461
      %1463 = vrot.lane.b32.xlu0 %v1401, 32
      %v1464 = vpop.permute.xlu0 %1463
      %1465 = vrot.lane.b32.xlu0 %v1403, 32
      %v1466 = vpop.permute.xlu0 %1465
      %1467 = vrot.lane.b32.xlu0 %v1405, 32
      %v1468 = vpop.permute.xlu0 %1467
      %1469 = vrot.lane.b32.xlu0 %v1407, 32
      %v1470 = vpop.permute.xlu0 %1469
      %1471 = vrot.lane.b32.xlu0 %v1409, 32
      %v1472 = vpop.permute.xlu0 %1471
      %1473 = vrot.lane.b32.xlu0 %v1411, 32
      %v1474 = vpop.permute.xlu0 %1473
      %1475 = vrot.lane.b32.xlu0 %v1413, 32
      %v1476 = vpop.permute.xlu0 %1475
      %1477 = vrot.lane.b32.xlu0 %v1415, 32
      %v1478 = vpop.permute.xlu0 %1477
      %1479 = vrot.lane.b32.xlu0 %v1417, 32
      %v1480 = vpop.permute.xlu0 %1479
      %1481 = vrot.lane.b32.xlu0 %v1419, 32
      %v1482 = vpop.permute.xlu0 %1481
      %1483 = vrot.lane.b32.xlu0 %v1421, 32
      %v1484 = vpop.permute.xlu0 %1483
      %1485 = vrot.lane.b32.xlu0 %v1423, 32
      %v1486 = vpop.permute.xlu0 %1485
      %1487 = vrot.lane.b32.xlu0 %v1425, 32
      %v1488 = vpop.permute.xlu0 %1487
      %1489 = vrot.lane.b32.xlu0 %v1427, 32
      %v1490 = vpop.permute.xlu0 %1489
      %1491 = vrot.lane.b32.xlu0 %v1429, 32
      %v1492 = vpop.permute.xlu0 %1491
      %1493 = vrot.lane.b32.xlu0 %v1431, 32
      %v1494 = vpop.permute.xlu0 %1493
      %1495 = vrot.lane.b32.xlu0 %v1433, 32
      %v1496 = vpop.permute.xlu0 %1495
      %1497 = vrot.lane.b32.xlu0 %v1435, 32
      %v1498 = vpop.permute.xlu0 %1497
      %1499 = vrot.lane.b32.xlu0 %v1437, 32
      %v1500 = vpop.permute.xlu0 %1499
      %1501 = vrot.lane.b32.xlu0 %v1439, 32
      %v1502 = vpop.permute.xlu0 %1501
      %1503 = vrot.lane.b32.xlu0 %v1441, 32
      %v1504 = vpop.permute.xlu0 %1503
      %1505 = vrot.lane.b32.xlu0 %v1443, 32
      %v1506 = vpop.permute.xlu0 %1505
      %1507 = vrot.lane.b32.xlu0 %v1445, 32
      %v1508 = vpop.permute.xlu0 %1507
      %1509 = vrot.lane.b32.xlu0 %v1447, 32
      %v1510 = vpop.permute.xlu0 %1509
      %1511 = vrot.lane.b32.xlu0 %v1449, 32
      %v1512 = vpop.permute.xlu0 %1511
      %v1544 = vadd.f32 %v1358, %v1452
      %v1545 = vadd.f32 %v1359, %v1452
      %v1546 = vadd.f32 %v1360, %v1454
      %v1547 = vadd.f32 %v1361, %v1456
      %v1548 = vadd.f32 %v1362, %v1458
      %v1549 = vadd.f32 %v1363, %v1460
      %v1550 = vadd.f32 %v1364, %v1462
      %v1551 = vadd.f32 %v1365, %v1464
      %v1552 = vadd.f32 %v1366, %v1466
      %v1553 = vadd.f32 %v1367, %v1468
      %v1554 = vadd.f32 %v1368, %v1470
      %v1555 = vadd.f32 %v1369, %v1472
      %v1556 = vadd.f32 %v1370, %v1474
      %v1557 = vadd.f32 %v1371, %v1476
      %v1558 = vadd.f32 %v1372, %v1478
      %v1559 = vadd.f32 %v1373, %v1480
      %v1560 = vadd.f32 %v1374, %v1482
      %v1561 = vadd.f32 %v1375, %v1484
      %v1562 = vadd.f32 %v1376, %v1486
      %v1563 = vadd.f32 %v1377, %v1488
      %v1564 = vadd.f32 %v1378, %v1490
      %v1565 = vadd.f32 %v1379, %v1492
      %v1566 = vadd.f32 %v1380, %v1494
      %v1567 = vadd.f32 %v1381, %v1496
      %v1568 = vadd.f32 %v1382, %v1498
      %v1569 = vadd.f32 %v1383, %v1500
      %v1570 = vadd.f32 %v1384, %v1502
      %v1571 = vadd.f32 %v1385, %v1504
      %v1572 = vadd.f32 %v1386, %v1506
      %v1573 = vadd.f32 %v1387, %v1508
      %v1574 = vadd.f32 %v1388, %v1510
      %v1575 = vadd.f32 %v1389, %v1512
      %vm1577 = vcmask 1046528
      %v1578 = vrot.slane %v838, 1
      %v1579 = vrot.slane %v840, 1
      %v1580 = vsel %vm1577, %v1578, %v1579
      %v1581 = vrot.slane %v843, 1
      %v1582 = vsel %vm1577, %v1579, %v1581
      %v1583 = vrot.slane %v845, 1
      %v1584 = vsel %vm1577, %v1581, %v1583
      %v1585 = vrot.slane %v848, 1
      %v1586 = vsel %vm1577, %v1583, %v1585
      %v1587 = vrot.slane %v850, 1
      %v1588 = vsel %vm1577, %v1585, %v1587
      %v1589 = vrot.slane %v853, 1
      %v1590 = vsel %vm1577, %v1587, %v1589
      %v1591 = vrot.slane %v855, 1
      %v1592 = vsel %vm1577, %v1589, %v1591
      %v1593 = vrot.slane %v858, 1
      %v1594 = vsel %vm1577, %v1591, %v1593
      %v1595 = vrot.slane %v860, 1
      %v1596 = vsel %vm1577, %v1593, %v1595
      %v1597 = vrot.slane %v863, 1
      %v1598 = vsel %vm1577, %v1595, %v1597
      %v1599 = vrot.slane %v865, 1
      %v1600 = vsel %vm1577, %v1597, %v1599
      %v1601 = vrot.slane %v868, 1
      %v1602 = vsel %vm1577, %v1599, %v1601
      %v1603 = vrot.slane %v870, 1
      %v1604 = vsel %vm1577, %v1601, %v1603
      %v1605 = vrot.slane %v873, 1
      %v1606 = vsel %vm1577, %v1603, %v1605
      %v1607 = vrot.slane %v875, 1
      %v1608 = vsel %vm1577, %v1605, %v1607
      %v1609 = vrot.slane %v878, 1
      %v1610 = vsel %vm1577, %v1607, %v1609
      %v1611 = vrot.slane %v880, 1
      %v1612 = vsel %vm1577, %v1609, %v1611
      %v1613 = vrot.slane %v883, 1
      %v1614 = vsel %vm1577, %v1611, %v1613
      %v1615 = vrot.slane %v885, 1
      %v1616 = vsel %vm1577, %v1613, %v1615
      %v1617 = vrot.slane %v888, 1
      %v1618 = vsel %vm1577, %v1615, %v1617
      %v1619 = vrot.slane %v890, 1
      %v1620 = vsel %vm1577, %v1617, %v1619
      %v1621 = vrot.slane %v893, 1
      %v1622 = vsel %vm1577, %v1619, %v1621
      %v1623 = vrot.slane %v895, 1
      %v1624 = vsel %vm1577, %v1621, %v1623
      %v1625 = vrot.slane %v898, 1
      %v1626 = vsel %vm1577, %v1623, %v1625
      %v1627 = vrot.slane %v900, 1
      %v1628 = vsel %vm1577, %v1625, %v1627
      %v1629 = vrot.slane %v903, 1
      %v1630 = vsel %vm1577, %v1627, %v1629
      %v1631 = vrot.slane %v905, 1
      %v1632 = vsel %vm1577, %v1629, %v1631
      %v1633 = vrot.slane %v908, 1
      %v1634 = vsel %vm1577, %v1631, %v1633
      %v1635 = vrot.slane %v910, 1
      %v1636 = vsel %vm1577, %v1633, %v1635
      %v1637 = vrot.slane %v913, 1
      %v1638 = vsel %vm1577, %v1635, %v1637
      %1639 = vrot.lane.b32.xlu0 %v1578, 112
      %v1640 = vpop.permute.xlu0 %1639
      %1641 = vrot.lane.b32.xlu0 %v1580, 112
      %v1642 = vpop.permute.xlu0 %1641
      %1643 = vrot.lane.b32.xlu0 %v1582, 112
      %v1644 = vpop.permute.xlu0 %1643
      %1645 = vrot.lane.b32.xlu0 %v1584, 112
      %v1646 = vpop.permute.xlu0 %1645
      %1647 = vrot.lane.b32.xlu0 %v1586, 112
      %v1648 = vpop.permute.xlu0 %1647
      %1649 = vrot.lane.b32.xlu0 %v1588, 112
      %v1650 = vpop.permute.xlu0 %1649
      %1651 = vrot.lane.b32.xlu0 %v1590, 112
      %v1652 = vpop.permute.xlu0 %1651
      %1653 = vrot.lane.b32.xlu0 %v1592, 112
      %v1654 = vpop.permute.xlu0 %1653
      %1655 = vrot.lane.b32.xlu0 %v1594, 112
      %v1656 = vpop.permute.xlu0 %1655
      %1657 = vrot.lane.b32.xlu0 %v1596, 112
      %v1658 = vpop.permute.xlu0 %1657
      %1659 = vrot.lane.b32.xlu0 %v1598, 112
      %v1660 = vpop.permute.xlu0 %1659
      %1661 = vrot.lane.b32.xlu0 %v1600, 112
      %v1662 = vpop.permute.xlu0 %1661
      %1663 = vrot.lane.b32.xlu0 %v1602, 112
      %v1664 = vpop.permute.xlu0 %1663
      %1665 = vrot.lane.b32.xlu0 %v1604, 112
      %v1666 = vpop.permute.xlu0 %1665
      %1667 = vrot.lane.b32.xlu0 %v1606, 112
      %v1668 = vpop.permute.xlu0 %1667
      %1669 = vrot.lane.b32.xlu0 %v1608, 112
      %v1670 = vpop.permute.xlu0 %1669
      %1671 = vrot.lane.b32.xlu0 %v1610, 112
      %v1672 = vpop.permute.xlu0 %1671
      %1673 = vrot.lane.b32.xlu0 %v1612, 112
      %v1674 = vpop.permute.xlu0 %1673
      %1675 = vrot.lane.b32.xlu0 %v1614, 112
      %v1676 = vpop.permute.xlu0 %1675
      %1677 = vrot.lane.b32.xlu0 %v1616, 112
      %v1678 = vpop.permute.xlu0 %1677
      %1679 = vrot.lane.b32.xlu0 %v1618, 112
      %v1680 = vpop.permute.xlu0 %1679
      %1681 = vrot.lane.b32.xlu0 %v1620, 112
      %v1682 = vpop.permute.xlu0 %1681
      %1683 = vrot.lane.b32.xlu0 %v1622, 112
      %v1684 = vpop.permute.xlu0 %1683
      %1685 = vrot.lane.b32.xlu0 %v1624, 112
      %v1686 = vpop.permute.xlu0 %1685
      %1687 = vrot.lane.b32.xlu0 %v1626, 112
      %v1688 = vpop.permute.xlu0 %1687
      %1689 = vrot.lane.b32.xlu0 %v1628, 112
      %v1690 = vpop.permute.xlu0 %1689
      %1691 = vrot.lane.b32.xlu0 %v1630, 112
      %v1692 = vpop.permute.xlu0 %1691
      %1693 = vrot.lane.b32.xlu0 %v1632, 112
      %v1694 = vpop.permute.xlu0 %1693
      %1695 = vrot.lane.b32.xlu0 %v1634, 112
      %v1696 = vpop.permute.xlu0 %1695
      %1697 = vrot.lane.b32.xlu0 %v1636, 112
      %v1698 = vpop.permute.xlu0 %1697
      %1699 = vrot.lane.b32.xlu0 %v1638, 112
      %v1700 = vpop.permute.xlu0 %1699
      %v1732 = vsel %vm1577, 0.0, %v1640
      %1733 = vset.pattern.permute.xlu0 1
      %1734 = vperm.xlu0 %1733, %v399
      %v1735 = vpop.permute.xlu0 %1734
      %1737 = vset.pattern.permute.xlu0 1
      %1738 = vperm.xlu0 %1737, %v400
      %v1739 = vpop.permute.xlu0 %1738
      %1741 = vset.pattern.permute.xlu0 1
      %1742 = vperm.xlu0 %1741, %v401
      %v1743 = vpop.permute.xlu0 %1742
      %1745 = vset.pattern.permute.xlu0 1
      %1746 = vperm.xlu0 %1745, %v402
      %v1747 = vpop.permute.xlu0 %1746
      %1749 = vset.pattern.permute.xlu0 1
      %1750 = vperm.xlu0 %1749, %v403
      %v1751 = vpop.permute.xlu0 %1750
      %1753 = vset.pattern.permute.xlu0 1
      %1754 = vperm.xlu0 %1753, %v404
      %v1755 = vpop.permute.xlu0 %1754
      %1757 = vset.pattern.permute.xlu0 1
      %1758 = vperm.xlu0 %1757, %v405
      %v1759 = vpop.permute.xlu0 %1758
      %1761 = vset.pattern.permute.xlu0 1
      %1762 = vperm.xlu0 %1761, %v406
      %v1763 = vpop.permute.xlu0 %1762
      %1765 = vset.pattern.permute.xlu0 1
      %1766 = vperm.xlu0 %1765, %v407
      %v1767 = vpop.permute.xlu0 %1766
      %1769 = vset.pattern.permute.xlu0 1
      %1770 = vperm.xlu0 %1769, %v408
      %v1771 = vpop.permute.xlu0 %1770
      %1773 = vset.pattern.permute.xlu0 1
      %1774 = vperm.xlu0 %1773, %v409
      %v1775 = vpop.permute.xlu0 %1774
      %1777 = vset.pattern.permute.xlu0 1
      %1778 = vperm.xlu0 %1777, %v410
      %v1779 = vpop.permute.xlu0 %1778
      %1781 = vset.pattern.permute.xlu0 1
      %1782 = vperm.xlu0 %1781, %v411
      %v1783 = vpop.permute.xlu0 %1782
      %1785 = vset.pattern.permute.xlu0 1
      %1786 = vperm.xlu0 %1785, %v412
      %v1787 = vpop.permute.xlu0 %1786
      %1789 = vset.pattern.permute.xlu0 1
      %1790 = vperm.xlu0 %1789, %v413
      %v1791 = vpop.permute.xlu0 %1790
      %1793 = vset.pattern.permute.xlu0 1
      %1794 = vperm.xlu0 %1793, %v414
      %v1795 = vpop.permute.xlu0 %1794
      %1797 = vset.pattern.permute.xlu0 1
      %1798 = vperm.xlu0 %1797, %v415
      %v1799 = vpop.permute.xlu0 %1798
      %1801 = vset.pattern.permute.xlu0 1
      %1802 = vperm.xlu0 %1801, %v416
      %v1803 = vpop.permute.xlu0 %1802
      %1805 = vset.pattern.permute.xlu0 1
      %1806 = vperm.xlu0 %1805, %v417
      %v1807 = vpop.permute.xlu0 %1806
      %1809 = vset.pattern.permute.xlu0 1
      %1810 = vperm.xlu0 %1809, %v418
      %v1811 = vpop.permute.xlu0 %1810
      %1813 = vset.pattern.permute.xlu0 1
      %1814 = vperm.xlu0 %1813, %v419
      %v1815 = vpop.permute.xlu0 %1814
      %1817 = vset.pattern.permute.xlu0 1
      %1818 = vperm.xlu0 %1817, %v420
      %v1819 = vpop.permute.xlu0 %1818
      %1821 = vset.pattern.permute.xlu0 1
      %1822 = vperm.xlu0 %1821, %v421
      %v1823 = vpop.permute.xlu0 %1822
      %1825 = vset.pattern.permute.xlu0 1
      %1826 = vperm.xlu0 %1825, %v422
      %v1827 = vpop.permute.xlu0 %1826
      %1829 = vset.pattern.permute.xlu0 1
      %1830 = vperm.xlu0 %1829, %v423
      %v1831 = vpop.permute.xlu0 %1830
      %1833 = vset.pattern.permute.xlu0 1
      %1834 = vperm.xlu0 %1833, %v424
      %v1835 = vpop.permute.xlu0 %1834
      %1837 = vset.pattern.permute.xlu0 1
      %1838 = vperm.xlu0 %1837, %v425
      %v1839 = vpop.permute.xlu0 %1838
      %1841 = vset.pattern.permute.xlu0 1
      %1842 = vperm.xlu0 %1841, %v426
      %v1843 = vpop.permute.xlu0 %1842
      %1845 = vset.pattern.permute.xlu0 1
      %1846 = vperm.xlu0 %1845, %v427
      %v1847 = vpop.permute.xlu0 %1846
      %1849 = vset.pattern.permute.xlu0 1
      %1850 = vperm.xlu0 %1849, %v428
      %v1851 = vpop.permute.xlu0 %1850
      %1853 = vset.pattern.permute.xlu0 1
      %1854 = vperm.xlu0 %1853, %v429
      %v1855 = vpop.permute.xlu0 %1854
      %1857 = vset.pattern.permute.xlu0 1
      %1858 = vperm.xlu0 %1857, %v430
      %v1859 = vpop.permute.xlu0 %1858
      %v1861 = vmul.f32 %v1735, 0.0
      %v1862 = vmul.f32 %v1732, %v1739
      %v1863 = vmul.f32 %v1642, %v1743
      %v1864 = vmul.f32 %v1644, %v1747
      %v1865 = vmul.f32 %v1646, %v1751
      %v1866 = vmul.f32 %v1648, %v1755
      %v1867 = vmul.f32 %v1650, %v1759
      %v1868 = vmul.f32 %v1652, %v1763
      %v1869 = vmul.f32 %v1654, %v1767
      %v1870 = vmul.f32 %v1656, %v1771
      %v1871 = vmul.f32 %v1658, %v1775
      %v1872 = vmul.f32 %v1660, %v1779
      %v1873 = vmul.f32 %v1662, %v1783
      %v1874 = vmul.f32 %v1664, %v1787
      %v1875 = vmul.f32 %v1666, %v1791
      %v1876 = vmul.f32 %v1668, %v1795
      %v1877 = vmul.f32 %v1670, %v1799
      %v1878 = vmul.f32 %v1672, %v1803
      %v1879 = vmul.f32 %v1674, %v1807
      %v1880 = vmul.f32 %v1676, %v1811
      %v1881 = vmul.f32 %v1678, %v1815
      %v1882 = vmul.f32 %v1680, %v1819
      %v1883 = vmul.f32 %v1682, %v1823
      %v1884 = vmul.f32 %v1684, %v1827
      %v1885 = vmul.f32 %v1686, %v1831
      %v1886 = vmul.f32 %v1688, %v1835
      %v1887 = vmul.f32 %v1690, %v1839
      %v1888 = vmul.f32 %v1692, %v1843
      %v1889 = vmul.f32 %v1694, %v1847
      %v1890 = vmul.f32 %v1696, %v1851
      %v1891 = vmul.f32 %v1698, %v1855
      %v1892 = vmul.f32 %v1700, %v1859
      %1925 = vrot.lane.b32.xlu0 %v1861, 32
      %v1926 = vpop.permute.xlu0 %1925
      %1927 = vrot.lane.b32.xlu0 %v1862, 32
      %v1928 = vpop.permute.xlu0 %1927
      %1929 = vrot.lane.b32.xlu0 %v1863, 32
      %v1930 = vpop.permute.xlu0 %1929
      %1931 = vrot.lane.b32.xlu0 %v1864, 32
      %v1932 = vpop.permute.xlu0 %1931
      %1933 = vrot.lane.b32.xlu0 %v1865, 32
      %v1934 = vpop.permute.xlu0 %1933
      %1935 = vrot.lane.b32.xlu0 %v1866, 32
      %v1936 = vpop.permute.xlu0 %1935
      %1937 = vrot.lane.b32.xlu0 %v1867, 32
      %v1938 = vpop.permute.xlu0 %1937
      %1939 = vrot.lane.b32.xlu0 %v1868, 32
      %v1940 = vpop.permute.xlu0 %1939
      %1941 = vrot.lane.b32.xlu0 %v1869, 32
      %v1942 = vpop.permute.xlu0 %1941
      %1943 = vrot.lane.b32.xlu0 %v1870, 32
      %v1944 = vpop.permute.xlu0 %1943
      %1945 = vrot.lane.b32.xlu0 %v1871, 32
      %v1946 = vpop.permute.xlu0 %1945
      %1947 = vrot.lane.b32.xlu0 %v1872, 32
      %v1948 = vpop.permute.xlu0 %1947
      %1949 = vrot.lane.b32.xlu0 %v1873, 32
      %v1950 = vpop.permute.xlu0 %1949
      %1951 = vrot.lane.b32.xlu0 %v1874, 32
      %v1952 = vpop.permute.xlu0 %1951
      %1953 = vrot.lane.b32.xlu0 %v1875, 32
      %v1954 = vpop.permute.xlu0 %1953
      %1955 = vrot.lane.b32.xlu0 %v1876, 32
      %v1956 = vpop.permute.xlu0 %1955
      %1957 = vrot.lane.b32.xlu0 %v1877, 32
      %v1958 = vpop.permute.xlu0 %1957
      %1959 = vrot.lane.b32.xlu0 %v1878, 32
      %v1960 = vpop.permute.xlu0 %1959
      %1961 = vrot.lane.b32.xlu0 %v1879, 32
      %v1962 = vpop.permute.xlu0 %1961
      %1963 = vrot.lane.b32.xlu0 %v1880, 32
      %v1964 = vpop.permute.xlu0 %1963
      %1965 = vrot.lane.b32.xlu0 %v1881, 32
      %v1966 = vpop.permute.xlu0 %1965
      %1967 = vrot.lane.b32.xlu0 %v1882, 32
      %v1968 = vpop.permute.xlu0 %1967
      %1969 = vrot.lane.b32.xlu0 %v1883, 32
      %v1970 = vpop.permute.xlu0 %1969
      %1971 = vrot.lane.b32.xlu0 %v1884, 32
      %v1972 = vpop.permute.xlu0 %1971
      %1973 = vrot.lane.b32.xlu0 %v1885, 32
      %v1974 = vpop.permute.xlu0 %1973
      %1975 = vrot.lane.b32.xlu0 %v1886, 32
      %v1976 = vpop.permute.xlu0 %1975
      %1977 = vrot.lane.b32.xlu0 %v1887, 32
      %v1978 = vpop.permute.xlu0 %1977
      %1979 = vrot.lane.b32.xlu0 %v1888, 32
      %v1980 = vpop.permute.xlu0 %1979
      %1981 = vrot.lane.b32.xlu0 %v1889, 32
      %v1982 = vpop.permute.xlu0 %1981
      %1983 = vrot.lane.b32.xlu0 %v1890, 32
      %v1984 = vpop.permute.xlu0 %1983
      %1985 = vrot.lane.b32.xlu0 %v1891, 32
      %v1986 = vpop.permute.xlu0 %1985
      %1987 = vrot.lane.b32.xlu0 %v1892, 32
      %v1988 = vpop.permute.xlu0 %1987
      %v2021 = vadd.f32 %v1544, %v1926
      %v2022 = vadd.f32 %v1545, %v1928
      %v2023 = vadd.f32 %v1546, %v1930
      %v2024 = vadd.f32 %v1547, %v1932
      %v2025 = vadd.f32 %v1548, %v1934
      %v2026 = vadd.f32 %v1549, %v1936
      %v2027 = vadd.f32 %v1550, %v1938
      %v2028 = vadd.f32 %v1551, %v1940
      %v2029 = vadd.f32 %v1552, %v1942
      %v2030 = vadd.f32 %v1553, %v1944
      %v2031 = vadd.f32 %v1554, %v1946
      %v2032 = vadd.f32 %v1555, %v1948
      %v2033 = vadd.f32 %v1556, %v1950
      %v2034 = vadd.f32 %v1557, %v1952
      %v2035 = vadd.f32 %v1558, %v1954
      %v2036 = vadd.f32 %v1559, %v1956
      %v2037 = vadd.f32 %v1560, %v1958
      %v2038 = vadd.f32 %v1561, %v1960
      %v2039 = vadd.f32 %v1562, %v1962
      %v2040 = vadd.f32 %v1563, %v1964
      %v2041 = vadd.f32 %v1564, %v1966
      %v2042 = vadd.f32 %v1565, %v1968
      %v2043 = vadd.f32 %v1566, %v1970
      %v2044 = vadd.f32 %v1567, %v1972
      %v2045 = vadd.f32 %v1568, %v1974
      %v2046 = vadd.f32 %v1569, %v1976
      %v2047 = vadd.f32 %v1570, %v1978
      %v2048 = vadd.f32 %v1571, %v1980
      %v2049 = vadd.f32 %v1572, %v1982
      %v2050 = vadd.f32 %v1573, %v1984
      %v2051 = vadd.f32 %v1574, %v1986
      %v2052 = vadd.f32 %v1575, %v1988
      %v2054 = vrot.slane %v913, 7
      %v2055 = vsel %vm947, %v1005, %v2054
      %v2056 = vrot.slane %v915, 7
      %v2057 = vsel %vm947, %v2054, %v2056
      %2058 = vrot.lane.b32.xlu0 %v948, 104
      %v2059 = vpop.permute.xlu0 %2058
      %2060 = vrot.lane.b32.xlu0 %v950, 104
      %v2061 = vpop.permute.xlu0 %2060
      %2062 = vrot.lane.b32.xlu0 %v952, 104
      %v2063 = vpop.permute.xlu0 %2062
      %2064 = vrot.lane.b32.xlu0 %v954, 104
      %v2065 = vpop.permute.xlu0 %2064
      %2066 = vrot.lane.b32.xlu0 %v956, 104
      %v2067 = vpop.permute.xlu0 %2066
      %2068 = vrot.lane.b32.xlu0 %v958, 104
      %v2069 = vpop.permute.xlu0 %2068
      %2070 = vrot.lane.b32.xlu0 %v960, 104
      %v2071 = vpop.permute.xlu0 %2070
      %2072 = vrot.lane.b32.xlu0 %v962, 104
      %v2073 = vpop.permute.xlu0 %2072
      %2074 = vrot.lane.b32.xlu0 %v964, 104
      %v2075 = vpop.permute.xlu0 %2074
      %2076 = vrot.lane.b32.xlu0 %v966, 104
      %v2077 = vpop.permute.xlu0 %2076
      %2078 = vrot.lane.b32.xlu0 %v968, 104
      %v2079 = vpop.permute.xlu0 %2078
      %2080 = vrot.lane.b32.xlu0 %v970, 104
      %v2081 = vpop.permute.xlu0 %2080
      %2082 = vrot.lane.b32.xlu0 %v972, 104
      %v2083 = vpop.permute.xlu0 %2082
      %2084 = vrot.lane.b32.xlu0 %v974, 104
      %v2085 = vpop.permute.xlu0 %2084
      %2086 = vrot.lane.b32.xlu0 %v976, 104
      %v2087 = vpop.permute.xlu0 %2086
      %2088 = vrot.lane.b32.xlu0 %v978, 104
      %v2089 = vpop.permute.xlu0 %2088
      %2090 = vrot.lane.b32.xlu0 %v980, 104
      %v2091 = vpop.permute.xlu0 %2090
      %2092 = vrot.lane.b32.xlu0 %v982, 104
      %v2093 = vpop.permute.xlu0 %2092
      %2094 = vrot.lane.b32.xlu0 %v984, 104
      %v2095 = vpop.permute.xlu0 %2094
      %2096 = vrot.lane.b32.xlu0 %v986, 104
      %v2097 = vpop.permute.xlu0 %2096
      %2098 = vrot.lane.b32.xlu0 %v988, 104
      %v2099 = vpop.permute.xlu0 %2098
      %2100 = vrot.lane.b32.xlu0 %v990, 104
      %v2101 = vpop.permute.xlu0 %2100
      %2102 = vrot.lane.b32.xlu0 %v992, 104
      %v2103 = vpop.permute.xlu0 %2102
      %2104 = vrot.lane.b32.xlu0 %v994, 104
      %v2105 = vpop.permute.xlu0 %2104
      %2106 = vrot.lane.b32.xlu0 %v996, 104
      %v2107 = vpop.permute.xlu0 %2106
      %2108 = vrot.lane.b32.xlu0 %v998, 104
      %v2109 = vpop.permute.xlu0 %2108
      %2110 = vrot.lane.b32.xlu0 %v1000, 104
      %v2111 = vpop.permute.xlu0 %2110
      %2112 = vrot.lane.b32.xlu0 %v1002, 104
      %v2113 = vpop.permute.xlu0 %2112
      %2114 = vrot.lane.b32.xlu0 %v1004, 104
      %v2115 = vpop.permute.xlu0 %2114
      %2116 = vrot.lane.b32.xlu0 %v1006, 104
      %v2117 = vpop.permute.xlu0 %2116
      %2118 = vrot.lane.b32.xlu0 %v2055, 104
      %v2119 = vpop.permute.xlu0 %2118
      %2120 = vrot.lane.b32.xlu0 %v2057, 104
      %v2121 = vpop.permute.xlu0 %2120
      %v2154 = vsel %vm947, 0.0, %v2059
      %v2155 = vmul.f32 %v2154, %v1041
      %v2156 = vmul.f32 %v2061, %v1046
      %v2157 = vmul.f32 %v2063, %v1051
      %v2158 = vmul.f32 %v2065, %v1056
      %v2159 = vmul.f32 %v2067, %v1061
      %v2160 = vmul.f32 %v2069, %v1066
      %v2161 = vmul.f32 %v2071, %v1071
      %v2162 = vmul.f32 %v2073, %v1076
      %v2163 = vmul.f32 %v2075, %v1081
      %v2164 = vmul.f32 %v2077, %v1086
      %v2165 = vmul.f32 %v2079, %v1091
      %v2166 = vmul.f32 %v2081, %v1096
      %v2167 = vmul.f32 %v2083, %v1101
      %v2168 = vmul.f32 %v2085, %v1106
      %v2169 = vmul.f32 %v2087, %v1111
      %v2170 = vmul.f32 %v2089, %v1116
      %v2171 = vmul.f32 %v2091, %v1121
      %v2172 = vmul.f32 %v2093, %v1126
      %v2173 = vmul.f32 %v2095, %v1131
      %v2174 = vmul.f32 %v2097, %v1136
      %v2175 = vmul.f32 %v2099, %v1141
      %v2176 = vmul.f32 %v2101, %v1146
      %v2177 = vmul.f32 %v2103, %v1151
      %v2178 = vmul.f32 %v2105, %v1156
      %v2179 = vmul.f32 %v2107, %v1161
      %v2180 = vmul.f32 %v2109, %v1166
      %v2181 = vmul.f32 %v2111, %v1171
      %v2182 = vmul.f32 %v2113, %v1176
      %v2183 = vmul.f32 %v2115, %v1181
      %v2184 = vmul.f32 %v2117, %v1186
      %v2185 = vmul.f32 %v2119, %v1191
      %v2186 = vmul.f32 %v2121, %v1196
      %2219 = vrot.lane.b32.xlu0 %v2155, 32
      %v2220 = vpop.permute.xlu0 %2219
      %2221 = vrot.lane.b32.xlu0 %v2156, 32
      %v2222 = vpop.permute.xlu0 %2221
      %2223 = vrot.lane.b32.xlu0 %v2157, 32
      %v2224 = vpop.permute.xlu0 %2223
      %2225 = vrot.lane.b32.xlu0 %v2158, 32
      %v2226 = vpop.permute.xlu0 %2225
      %2227 = vrot.lane.b32.xlu0 %v2159, 32
      %v2228 = vpop.permute.xlu0 %2227
      %2229 = vrot.lane.b32.xlu0 %v2160, 32
      %v2230 = vpop.permute.xlu0 %2229
      %2231 = vrot.lane.b32.xlu0 %v2161, 32
      %v2232 = vpop.permute.xlu0 %2231
      %2233 = vrot.lane.b32.xlu0 %v2162, 32
      %v2234 = vpop.permute.xlu0 %2233
      %2235 = vrot.lane.b32.xlu0 %v2163, 32
      %v2236 = vpop.permute.xlu0 %2235
      %2237 = vrot.lane.b32.xlu0 %v2164, 32
      %v2238 = vpop.permute.xlu0 %2237
      %2239 = vrot.lane.b32.xlu0 %v2165, 32
      %v2240 = vpop.permute.xlu0 %2239
      %2241 = vrot.lane.b32.xlu0 %v2166, 32
      %v2242 = vpop.permute.xlu0 %2241
      %2243 = vrot.lane.b32.xlu0 %v2167, 32
      %v2244 = vpop.permute.xlu0 %2243
      %2245 = vrot.lane.b32.xlu0 %v2168, 32
      %v2246 = vpop.permute.xlu0 %2245
      %2247 = vrot.lane.b32.xlu0 %v2169, 32
      %v2248 = vpop.permute.xlu0 %2247
      %2249 = vrot.lane.b32.xlu0 %v2170, 32
      %v2250 = vpop.permute.xlu0 %2249
      %2251 = vrot.lane.b32.xlu0 %v2171, 32
      %v2252 = vpop.permute.xlu0 %2251
      %2253 = vrot.lane.b32.xlu0 %v2172, 32
      %v2254 = vpop.permute.xlu0 %2253
      %2255 = vrot.lane.b32.xlu0 %v2173, 32
      %v2256 = vpop.permute.xlu0 %2255
      %2257 = vrot.lane.b32.xlu0 %v2174, 32
      %v2258 = vpop.permute.xlu0 %2257
      %2259 = vrot.lane.b32.xlu0 %v2175, 32
      %v2260 = vpop.permute.xlu0 %2259
      %2261 = vrot.lane.b32.xlu0 %v2176, 32
      %v2262 = vpop.permute.xlu0 %2261
      %2263 = vrot.lane.b32.xlu0 %v2177, 32
      %v2264 = vpop.permute.xlu0 %2263
      %2265 = vrot.lane.b32.xlu0 %v2178, 32
      %v2266 = vpop.permute.xlu0 %2265
      %2267 = vrot.lane.b32.xlu0 %v2179, 32
      %v2268 = vpop.permute.xlu0 %2267
      %2269 = vrot.lane.b32.xlu0 %v2180, 32
      %v2270 = vpop.permute.xlu0 %2269
      %2271 = vrot.lane.b32.xlu0 %v2181, 32
      %v2272 = vpop.permute.xlu0 %2271
      %2273 = vrot.lane.b32.xlu0 %v2182, 32
      %v2274 = vpop.permute.xlu0 %2273
      %2275 = vrot.lane.b32.xlu0 %v2183, 32
      %v2276 = vpop.permute.xlu0 %2275
      %2277 = vrot.lane.b32.xlu0 %v2184, 32
      %v2278 = vpop.permute.xlu0 %2277
      %2279 = vrot.lane.b32.xlu0 %v2185, 32
      %v2280 = vpop.permute.xlu0 %2279
      %2281 = vrot.lane.b32.xlu0 %v2186, 32
      %v2282 = vpop.permute.xlu0 %2281
      %v2315 = vadd.f32 %v2021, %v2220
      %v2316 = vadd.f32 %v2022, %v2222
      %v2317 = vadd.f32 %v2023, %v2224
      %v2318 = vadd.f32 %v2024, %v2226
      %v2319 = vadd.f32 %v2025, %v2228
      %v2320 = vadd.f32 %v2026, %v2230
      %v2321 = vadd.f32 %v2027, %v2232
      %v2322 = vadd.f32 %v2028, %v2234
      %v2323 = vadd.f32 %v2029, %v2236
      %v2324 = vadd.f32 %v2030, %v2238
      %v2325 = vadd.f32 %v2031, %v2240
      %v2326 = vadd.f32 %v2032, %v2242
      %v2327 = vadd.f32 %v2033, %v2244
      %v2328 = vadd.f32 %v2034, %v2246
      %v2329 = vadd.f32 %v2035, %v2248
      %v2330 = vadd.f32 %v2036, %v2250
      %v2331 = vadd.f32 %v2037, %v2252
      %v2332 = vadd.f32 %v2038, %v2254
      %v2333 = vadd.f32 %v2039, %v2256
      %v2334 = vadd.f32 %v2040, %v2258
      %v2335 = vadd.f32 %v2041, %v2260
      %v2336 = vadd.f32 %v2042, %v2262
      %v2337 = vadd.f32 %v2043, %v2264
      %v2338 = vadd.f32 %v2044, %v2266
      %v2339 = vadd.f32 %v2045, %v2268
      %v2340 = vadd.f32 %v2046, %v2270
      %v2341 = vadd.f32 %v2047, %v2272
      %v2342 = vadd.f32 %v2048, %v2274
      %v2343 = vadd.f32 %v2049, %v2276
      %v2344 = vadd.f32 %v2050, %v2278
      %v2345 = vadd.f32 %v2051, %v2280
      %v2346 = vadd.f32 %v2052, %v2282
      %v2347 = vrot.slane %v915, 1
      %v2348 = vsel %vm1577, %v1637, %v2347
      %v2381 = vsel %vm1577, %v2347, 0.0
      %v2382 = vmul.f32 %v1580, %v1735
      %v2383 = vmul.f32 %v1582, %v1739
      %v2384 = vmul.f32 %v1584, %v1743
      %v2385 = vmul.f32 %v1586, %v1747
      %v2386 = vmul.f32 %v1588, %v1751
      %v2387 = vmul.f32 %v1590, %v1755
      %v2388 = vmul.f32 %v1592, %v1759
      %v2389 = vmul.f32 %v1594, %v1763
      %v2390 = vmul.f32 %v1596, %v1767
      %v2391 = vmul.f32 %v1598, %v1771
      %v2392 = vmul.f32 %v1600, %v1775
      %v2393 = vmul.f32 %v1602, %v1779
      %v2394 = vmul.f32 %v1604, %v1783
      %v2395 = vmul.f32 %v1606, %v1787
      %v2396 = vmul.f32 %v1608, %v1791
      %v2397 = vmul.f32 %v1610, %v1795
      %v2398 = vmul.f32 %v1612, %v1799
      %v2399 = vmul.f32 %v1614, %v1803
      %v2400 = vmul.f32 %v1616, %v1807
      %v2401 = vmul.f32 %v1618, %v1811
      %v2402 = vmul.f32 %v1620, %v1815
      %v2403 = vmul.f32 %v1622, %v1819
      %v2404 = vmul.f32 %v1624, %v1823
      %v2405 = vmul.f32 %v1626, %v1827
      %v2406 = vmul.f32 %v1628, %v1831
      %v2407 = vmul.f32 %v1630, %v1835
      %v2408 = vmul.f32 %v1632, %v1839
      %v2409 = vmul.f32 %v1634, %v1843
      %v2410 = vmul.f32 %v1636, %v1847
      %v2411 = vmul.f32 %v1638, %v1851
      %v2412 = vmul.f32 %v2348, %v1855
      %v2413 = vmul.f32 %v2381, %v1859
      %2446 = vrot.lane.b32.xlu0 %v2382, 120
      %v2447 = vpop.permute.xlu0 %2446
      %2448 = vrot.lane.b32.xlu0 %v2383, 120
      %v2449 = vpop.permute.xlu0 %2448
      %2450 = vrot.lane.b32.xlu0 %v2384, 120
      %v2451 = vpop.permute.xlu0 %2450
      %2452 = vrot.lane.b32.xlu0 %v2385, 120
      %v2453 = vpop.permute.xlu0 %2452
      %2454 = vrot.lane.b32.xlu0 %v2386, 120
      %v2455 = vpop.permute.xlu0 %2454
      %2456 = vrot.lane.b32.xlu0 %v2387, 120
      %v2457 = vpop.permute.xlu0 %2456
      %2458 = vrot.lane.b32.xlu0 %v2388, 120
      %v2459 = vpop.permute.xlu0 %2458
      %2460 = vrot.lane.b32.xlu0 %v2389, 120
      %v2461 = vpop.permute.xlu0 %2460
      %2462 = vrot.lane.b32.xlu0 %v2390, 120
      %v2463 = vpop.permute.xlu0 %2462
      %2464 = vrot.lane.b32.xlu0 %v2391, 120
      %v2465 = vpop.permute.xlu0 %2464
      %2466 = vrot.lane.b32.xlu0 %v2392, 120
      %v2467 = vpop.permute.xlu0 %2466
      %2468 = vrot.lane.b32.xlu0 %v2393, 120
      %v2469 = vpop.permute.xlu0 %2468
      %2470 = vrot.lane.b32.xlu0 %v2394, 120
      %v2471 = vpop.permute.xlu0 %2470
      %2472 = vrot.lane.b32.xlu0 %v2395, 120
      %v2473 = vpop.permute.xlu0 %2472
      %2474 = vrot.lane.b32.xlu0 %v2396, 120
      %v2475 = vpop.permute.xlu0 %2474
      %2476 = vrot.lane.b32.xlu0 %v2397, 120
      %v2477 = vpop.permute.xlu0 %2476
      %2478 = vrot.lane.b32.xlu0 %v2398, 120
      %v2479 = vpop.permute.xlu0 %2478
      %2480 = vrot.lane.b32.xlu0 %v2399, 120
      %v2481 = vpop.permute.xlu0 %2480
      %2482 = vrot.lane.b32.xlu0 %v2400, 120
      %v2483 = vpop.permute.xlu0 %2482
      %2484 = vrot.lane.b32.xlu0 %v2401, 120
      %v2485 = vpop.permute.xlu0 %2484
      %2486 = vrot.lane.b32.xlu0 %v2402, 120
      %v2487 = vpop.permute.xlu0 %2486
      %2488 = vrot.lane.b32.xlu0 %v2403, 120
      %v2489 = vpop.permute.xlu0 %2488
      %2490 = vrot.lane.b32.xlu0 %v2404, 120
      %v2491 = vpop.permute.xlu0 %2490
      %2492 = vrot.lane.b32.xlu0 %v2405, 120
      %v2493 = vpop.permute.xlu0 %2492
      %2494 = vrot.lane.b32.xlu0 %v2406, 120
      %v2495 = vpop.permute.xlu0 %2494
      %2496 = vrot.lane.b32.xlu0 %v2407, 120
      %v2497 = vpop.permute.xlu0 %2496
      %2498 = vrot.lane.b32.xlu0 %v2408, 120
      %v2499 = vpop.permute.xlu0 %2498
      %2500 = vrot.lane.b32.xlu0 %v2409, 120
      %v2501 = vpop.permute.xlu0 %2500
      %2502 = vrot.lane.b32.xlu0 %v2410, 120
      %v2503 = vpop.permute.xlu0 %2502
      %2504 = vrot.lane.b32.xlu0 %v2411, 120
      %v2505 = vpop.permute.xlu0 %2504
      %2506 = vrot.lane.b32.xlu0 %v2412, 120
      %v2507 = vpop.permute.xlu0 %2506
      %2508 = vrot.lane.b32.xlu0 %v2413, 120
      %v2509 = vpop.permute.xlu0 %2508
      %v2542 = vadd.f32 %v2315, %v2447
      %v2543 = vadd.f32 %v2316, %v2449
      %v2544 = vadd.f32 %v2317, %v2451
      %v2545 = vadd.f32 %v2318, %v2453
      %v2546 = vadd.f32 %v2319, %v2455
      %v2547 = vadd.f32 %v2320, %v2457
      %v2548 = vadd.f32 %v2321, %v2459
      %v2549 = vadd.f32 %v2322, %v2461
      %v2550 = vadd.f32 %v2323, %v2463
      %v2551 = vadd.f32 %v2324, %v2465
      %v2552 = vadd.f32 %v2325, %v2467
      %v2553 = vadd.f32 %v2326, %v2469
      %v2554 = vadd.f32 %v2327, %v2471
      %v2555 = vadd.f32 %v2328, %v2473
      %v2556 = vadd.f32 %v2329, %v2475
      %v2557 = vadd.f32 %v2330, %v2477
      %v2558 = vadd.f32 %v2331, %v2479
      %v2559 = vadd.f32 %v2332, %v2481
      %v2560 = vadd.f32 %v2333, %v2483
      %v2561 = vadd.f32 %v2334, %v2485
      %v2562 = vadd.f32 %v2335, %v2487
      %v2563 = vadd.f32 %v2336, %v2489
      %v2564 = vadd.f32 %v2337, %v2491
      %v2565 = vadd.f32 %v2338, %v2493
      %v2566 = vadd.f32 %v2339, %v2495
      %v2567 = vadd.f32 %v2340, %v2497
      %v2568 = vadd.f32 %v2341, %v2499
      %v2569 = vadd.f32 %v2342, %v2501
      %v2570 = vadd.f32 %v2343, %v2503
      %v2571 = vadd.f32 %v2344, %v2505
      %v2572 = vadd.f32 %v2345, %v2507
      %v2573 = vadd.f32 %v2346, %v2509
      %v2577 = vsel %vm947, %v2056, 0.0
      %v2578 = vmul.f32 %v952, %v1041
      %v2579 = vmul.f32 %v954, %v1046
      %v2580 = vmul.f32 %v956, %v1051
      %v2581 = vmul.f32 %v958, %v1056
      %v2582 = vmul.f32 %v960, %v1061
      %v2583 = vmul.f32 %v962, %v1066
      %v2584 = vmul.f32 %v964, %v1071
      %v2585 = vmul.f32 %v966, %v1076
      %v2586 = vmul.f32 %v968, %v1081
      %v2587 = vmul.f32 %v970, %v1086
      %v2588 = vmul.f32 %v972, %v1091
      %v2589 = vmul.f32 %v974, %v1096
      %v2590 = vmul.f32 %v976, %v1101
      %v2591 = vmul.f32 %v978, %v1106
      %v2592 = vmul.f32 %v980, %v1111
      %v2593 = vmul.f32 %v982, %v1116
      %v2594 = vmul.f32 %v984, %v1121
      %v2595 = vmul.f32 %v986, %v1126
      %v2596 = vmul.f32 %v988, %v1131
      %v2597 = vmul.f32 %v990, %v1136
      %v2598 = vmul.f32 %v992, %v1141
      %v2599 = vmul.f32 %v994, %v1146
      %v2600 = vmul.f32 %v996, %v1151
      %v2601 = vmul.f32 %v998, %v1156
      %v2602 = vmul.f32 %v1000, %v1161
      %v2603 = vmul.f32 %v1002, %v1166
      %v2604 = vmul.f32 %v1004, %v1171
      %v2605 = vmul.f32 %v1006, %v1176
      %v2606 = vmul.f32 %v2055, %v1181
      %v2607 = vmul.f32 %v2057, %v1186
      %v2608 = vmul.f32 %v2577, %v1191
      %v2609 = vmul.f32 %v1196, 0.0
      %2642 = vrot.lane.b32.xlu0 %v2578, 112
      %v2643 = vpop.permute.xlu0 %2642
      %2644 = vrot.lane.b32.xlu0 %v2579, 112
      %v2645 = vpop.permute.xlu0 %2644
      %2646 = vrot.lane.b32.xlu0 %v2580, 112
      %v2647 = vpop.permute.xlu0 %2646
      %2648 = vrot.lane.b32.xlu0 %v2581, 112
      %v2649 = vpop.permute.xlu0 %2648
      %2650 = vrot.lane.b32.xlu0 %v2582, 112
      %v2651 = vpop.permute.xlu0 %2650
      %2652 = vrot.lane.b32.xlu0 %v2583, 112
      %v2653 = vpop.permute.xlu0 %2652
      %2654 = vrot.lane.b32.xlu0 %v2584, 112
      %v2655 = vpop.permute.xlu0 %2654
      %2656 = vrot.lane.b32.xlu0 %v2585, 112
      %v2657 = vpop.permute.xlu0 %2656
      %2658 = vrot.lane.b32.xlu0 %v2586, 112
      %v2659 = vpop.permute.xlu0 %2658
      %2660 = vrot.lane.b32.xlu0 %v2587, 112
      %v2661 = vpop.permute.xlu0 %2660
      %2662 = vrot.lane.b32.xlu0 %v2588, 112
      %v2663 = vpop.permute.xlu0 %2662
      %2664 = vrot.lane.b32.xlu0 %v2589, 112
      %v2665 = vpop.permute.xlu0 %2664
      %2666 = vrot.lane.b32.xlu0 %v2590, 112
      %v2667 = vpop.permute.xlu0 %2666
      %2668 = vrot.lane.b32.xlu0 %v2591, 112
      %v2669 = vpop.permute.xlu0 %2668
      %2670 = vrot.lane.b32.xlu0 %v2592, 112
      %v2671 = vpop.permute.xlu0 %2670
      %2672 = vrot.lane.b32.xlu0 %v2593, 112
      %v2673 = vpop.permute.xlu0 %2672
      %2674 = vrot.lane.b32.xlu0 %v2594, 112
      %v2675 = vpop.permute.xlu0 %2674
      %2676 = vrot.lane.b32.xlu0 %v2595, 112
      %v2677 = vpop.permute.xlu0 %2676
      %2678 = vrot.lane.b32.xlu0 %v2596, 112
      %v2679 = vpop.permute.xlu0 %2678
      %2680 = vrot.lane.b32.xlu0 %v2597, 112
      %v2681 = vpop.permute.xlu0 %2680
      %2682 = vrot.lane.b32.xlu0 %v2598, 112
      %v2683 = vpop.permute.xlu0 %2682
      %2684 = vrot.lane.b32.xlu0 %v2599, 112
      %v2685 = vpop.permute.xlu0 %2684
      %2686 = vrot.lane.b32.xlu0 %v2600, 112
      %v2687 = vpop.permute.xlu0 %2686
      %2688 = vrot.lane.b32.xlu0 %v2601, 112
      %v2689 = vpop.permute.xlu0 %2688
      %2690 = vrot.lane.b32.xlu0 %v2602, 112
      %v2691 = vpop.permute.xlu0 %2690
      %2692 = vrot.lane.b32.xlu0 %v2603, 112
      %v2693 = vpop.permute.xlu0 %2692
      %2694 = vrot.lane.b32.xlu0 %v2604, 112
      %v2695 = vpop.permute.xlu0 %2694
      %2696 = vrot.lane.b32.xlu0 %v2605, 112
      %v2697 = vpop.permute.xlu0 %2696
      %2698 = vrot.lane.b32.xlu0 %v2606, 112
      %v2699 = vpop.permute.xlu0 %2698
      %2700 = vrot.lane.b32.xlu0 %v2607, 112
      %v2701 = vpop.permute.xlu0 %2700
      %2702 = vrot.lane.b32.xlu0 %v2608, 112
      %v2703 = vpop.permute.xlu0 %2702
      %2704 = vrot.lane.b32.xlu0 %v2609, 112
      %v2705 = vpop.permute.xlu0 %2704
      %v2738 = vadd.f32 %v2542, %v2643
      %v2739 = vadd.f32 %v2543, %v2645
      %v2740 = vadd.f32 %v2544, %v2647
      %v2741 = vadd.f32 %v2545, %v2649
      %v2742 = vadd.f32 %v2546, %v2651
      %v2743 = vadd.f32 %v2547, %v2653
      %v2744 = vadd.f32 %v2548, %v2655
      %v2745 = vadd.f32 %v2549, %v2657
      %v2746 = vadd.f32 %v2550, %v2659
      %v2747 = vadd.f32 %v2551, %v2661
      %v2748 = vadd.f32 %v2552, %v2663
      %v2749 = vadd.f32 %v2553, %v2665
      %v2750 = vadd.f32 %v2554, %v2667
      %v2751 = vadd.f32 %v2555, %v2669
      %v2752 = vadd.f32 %v2556, %v2671
      %v2753 = vadd.f32 %v2557, %v2673
      %v2754 = vadd.f32 %v2558, %v2675
      %v2755 = vadd.f32 %v2559, %v2677
      %v2756 = vadd.f32 %v2560, %v2679
      %v2757 = vadd.f32 %v2561, %v2681
      %v2758 = vadd.f32 %v2562, %v2683
      %v2759 = vadd.f32 %v2563, %v2685
      %v2760 = vadd.f32 %v2564, %v2687
      %v2761 = vadd.f32 %v2565, %v2689
      %v2762 = vadd.f32 %v2566, %v2691
      %v2763 = vadd.f32 %v2567, %v2693
      %v2764 = vadd.f32 %v2568, %v2695
      %v2765 = vadd.f32 %v2569, %v2697
      %v2766 = vadd.f32 %v2570, %v2699
      %v2767 = vadd.f32 %v2571, %v2701
      %v2768 = vadd.f32 %v2572, %v2703
      %v2769 = vadd.f32 %v2573, %v2705
      %2770 = vrot.lane.b32.xlu0 %v843, 104
      %v2771 = vpop.permute.xlu0 %2770
      %2772 = vrot.lane.b32.xlu0 %v845, 104
      %v2773 = vpop.permute.xlu0 %2772
      %2774 = vrot.lane.b32.xlu0 %v848, 104
      %v2775 = vpop.permute.xlu0 %2774
      %2776 = vrot.lane.b32.xlu0 %v850, 104
      %v2777 = vpop.permute.xlu0 %2776
      %2778 = vrot.lane.b32.xlu0 %v853, 104
      %v2779 = vpop.permute.xlu0 %2778
      %2780 = vrot.lane.b32.xlu0 %v855, 104
      %v2781 = vpop.permute.xlu0 %2780
      %2782 = vrot.lane.b32.xlu0 %v858, 104
      %v2783 = vpop.permute.xlu0 %2782
      %2784 = vrot.lane.b32.xlu0 %v860, 104
      %v2785 = vpop.permute.xlu0 %2784
      %2786 = vrot.lane.b32.xlu0 %v863, 104
      %v2787 = vpop.permute.xlu0 %2786
      %2788 = vrot.lane.b32.xlu0 %v865, 104
      %v2789 = vpop.permute.xlu0 %2788
      %2790 = vrot.lane.b32.xlu0 %v868, 104
      %v2791 = vpop.permute.xlu0 %2790
      %2792 = vrot.lane.b32.xlu0 %v870, 104
      %v2793 = vpop.permute.xlu0 %2792
      %2794 = vrot.lane.b32.xlu0 %v873, 104
      %v2795 = vpop.permute.xlu0 %2794
      %2796 = vrot.lane.b32.xlu0 %v875, 104
      %v2797 = vpop.permute.xlu0 %2796
      %2798 = vrot.lane.b32.xlu0 %v878, 104
      %v2799 = vpop.permute.xlu0 %2798
      %2800 = vrot.lane.b32.xlu0 %v880, 104
      %v2801 = vpop.permute.xlu0 %2800
      %2802 = vrot.lane.b32.xlu0 %v883, 104
      %v2803 = vpop.permute.xlu0 %2802
      %2804 = vrot.lane.b32.xlu0 %v885, 104
      %v2805 = vpop.permute.xlu0 %2804
      %2806 = vrot.lane.b32.xlu0 %v888, 104
      %v2807 = vpop.permute.xlu0 %2806
      %2808 = vrot.lane.b32.xlu0 %v890, 104
      %v2809 = vpop.permute.xlu0 %2808
      %2810 = vrot.lane.b32.xlu0 %v893, 104
      %v2811 = vpop.permute.xlu0 %2810
      %2812 = vrot.lane.b32.xlu0 %v895, 104
      %v2813 = vpop.permute.xlu0 %2812
      %2814 = vrot.lane.b32.xlu0 %v898, 104
      %v2815 = vpop.permute.xlu0 %2814
      %2816 = vrot.lane.b32.xlu0 %v900, 104
      %v2817 = vpop.permute.xlu0 %2816
      %2818 = vrot.lane.b32.xlu0 %v903, 104
      %v2819 = vpop.permute.xlu0 %2818
      %2820 = vrot.lane.b32.xlu0 %v905, 104
      %v2821 = vpop.permute.xlu0 %2820
      %2822 = vrot.lane.b32.xlu0 %v908, 104
      %v2823 = vpop.permute.xlu0 %2822
      %2824 = vrot.lane.b32.xlu0 %v910, 104
      %v2825 = vpop.permute.xlu0 %2824
      %2826 = vrot.lane.b32.xlu0 %v913, 104
      %v2827 = vpop.permute.xlu0 %2826
      %2828 = vrot.lane.b32.xlu0 %v915, 104
      %v2829 = vpop.permute.xlu0 %2828
      %2830 = vrot.lane.b32.xlu0 0.0, 104
      %v2831 = vpop.permute.xlu0 %2830
      %v2863 = vadd.f32 %v2738, %v2771
      %v2864 = vadd.f32 %v2739, %v2773
      %v2865 = vadd.f32 %v2740, %v2775
      %v2866 = vadd.f32 %v2741, %v2777
      %v2867 = vadd.f32 %v2742, %v2779
      %v2868 = vadd.f32 %v2743, %v2781
      %v2869 = vadd.f32 %v2744, %v2783
      %v2870 = vadd.f32 %v2745, %v2785
      %v2871 = vadd.f32 %v2746, %v2787
      %v2872 = vadd.f32 %v2747, %v2789
      %v2873 = vadd.f32 %v2748, %v2791
      %v2874 = vadd.f32 %v2749, %v2793
      %v2875 = vadd.f32 %v2750, %v2795
      %v2876 = vadd.f32 %v2751, %v2797
      %v2877 = vadd.f32 %v2752, %v2799
      %v2878 = vadd.f32 %v2753, %v2801
      %v2879 = vadd.f32 %v2754, %v2803
      %v2880 = vadd.f32 %v2755, %v2805
      %v2881 = vadd.f32 %v2756, %v2807
      %v2882 = vadd.f32 %v2757, %v2809
      %v2883 = vadd.f32 %v2758, %v2811
      %v2884 = vadd.f32 %v2759, %v2813
      %v2885 = vadd.f32 %v2760, %v2815
      %v2886 = vadd.f32 %v2761, %v2817
      %v2887 = vadd.f32 %v2762, %v2819
      %v2888 = vadd.f32 %v2763, %v2821
      %v2889 = vadd.f32 %v2764, %v2823
      %v2890 = vadd.f32 %v2765, %v2825
      %v2891 = vadd.f32 %v2766, %v2827
      %v2892 = vadd.f32 %v2767, %v2829
      %v2893 = vadd.f32 %v2768, %v2831
      %v2894 = vadd.f32 %v2769, %v2831
      %v2895 = vmul.f32 %v1584, %v1735
      %v2896 = vmul.f32 %v1586, %v1739
      %v2897 = vmul.f32 %v1588, %v1743
      %v2898 = vmul.f32 %v1590, %v1747
      %v2899 = vmul.f32 %v1592, %v1751
      %v2900 = vmul.f32 %v1594, %v1755
      %v2901 = vmul.f32 %v1596, %v1759
      %v2902 = vmul.f32 %v1598, %v1763
      %v2903 = vmul.f32 %v1600, %v1767
      %v2904 = vmul.f32 %v1602, %v1771
      %v2905 = vmul.f32 %v1604, %v1775
      %v2906 = vmul.f32 %v1606, %v1779
      %v2907 = vmul.f32 %v1608, %v1783
      %v2908 = vmul.f32 %v1610, %v1787
      %v2909 = vmul.f32 %v1612, %v1791
      %v2910 = vmul.f32 %v1614, %v1795
      %v2911 = vmul.f32 %v1616, %v1799
      %v2912 = vmul.f32 %v1618, %v1803
      %v2913 = vmul.f32 %v1620, %v1807
      %v2914 = vmul.f32 %v1622, %v1811
      %v2915 = vmul.f32 %v1624, %v1815
      %v2916 = vmul.f32 %v1626, %v1819
      %v2917 = vmul.f32 %v1628, %v1823
      %v2918 = vmul.f32 %v1630, %v1827
      %v2919 = vmul.f32 %v1632, %v1831
      %v2920 = vmul.f32 %v1634, %v1835
      %v2921 = vmul.f32 %v1636, %v1839
      %v2922 = vmul.f32 %v1638, %v1843
      %v2923 = vmul.f32 %v2348, %v1847
      %v2924 = vmul.f32 %v2381, %v1851
      %v2925 = vmul.f32 %v1855, 0.0
      %v2926 = vmul.f32 %v1859, 0.0
      %2959 = vrot.lane.b32.xlu0 %v2895, 96
      %v2960 = vpop.permute.xlu0 %2959
      %2961 = vrot.lane.b32.xlu0 %v2896, 96
      %v2962 = vpop.permute.xlu0 %2961
      %2963 = vrot.lane.b32.xlu0 %v2897, 96
      %v2964 = vpop.permute.xlu0 %2963
      %2965 = vrot.lane.b32.xlu0 %v2898, 96
      %v2966 = vpop.permute.xlu0 %2965
      %2967 = vrot.lane.b32.xlu0 %v2899, 96
      %v2968 = vpop.permute.xlu0 %2967
      %2969 = vrot.lane.b32.xlu0 %v2900, 96
      %v2970 = vpop.permute.xlu0 %2969
      %2971 = vrot.lane.b32.xlu0 %v2901, 96
      %v2972 = vpop.permute.xlu0 %2971
      %2973 = vrot.lane.b32.xlu0 %v2902, 96
      %v2974 = vpop.permute.xlu0 %2973
      %2975 = vrot.lane.b32.xlu0 %v2903, 96
      %v2976 = vpop.permute.xlu0 %2975
      %2977 = vrot.lane.b32.xlu0 %v2904, 96
      %v2978 = vpop.permute.xlu0 %2977
      %2979 = vrot.lane.b32.xlu0 %v2905, 96
      %v2980 = vpop.permute.xlu0 %2979
      %2981 = vrot.lane.b32.xlu0 %v2906, 96
      %v2982 = vpop.permute.xlu0 %2981
      %2983 = vrot.lane.b32.xlu0 %v2907, 96
      %v2984 = vpop.permute.xlu0 %2983
      %2985 = vrot.lane.b32.xlu0 %v2908, 96
      %v2986 = vpop.permute.xlu0 %2985
      %2987 = vrot.lane.b32.xlu0 %v2909, 96
      %v2988 = vpop.permute.xlu0 %2987
      %2989 = vrot.lane.b32.xlu0 %v2910, 96
      %v2990 = vpop.permute.xlu0 %2989
      %2991 = vrot.lane.b32.xlu0 %v2911, 96
      %v2992 = vpop.permute.xlu0 %2991
      %2993 = vrot.lane.b32.xlu0 %v2912, 96
      %v2994 = vpop.permute.xlu0 %2993
      %2995 = vrot.lane.b32.xlu0 %v2913, 96
      %v2996 = vpop.permute.xlu0 %2995
      %2997 = vrot.lane.b32.xlu0 %v2914, 96
      %v2998 = vpop.permute.xlu0 %2997
      %2999 = vrot.lane.b32.xlu0 %v2915, 96
      %v3000 = vpop.permute.xlu0 %2999
      %3001 = vrot.lane.b32.xlu0 %v2916, 96
      %v3002 = vpop.permute.xlu0 %3001
      %3003 = vrot.lane.b32.xlu0 %v2917, 96
      %v3004 = vpop.permute.xlu0 %3003
      %3005 = vrot.lane.b32.xlu0 %v2918, 96
      %v3006 = vpop.permute.xlu0 %3005
      %3007 = vrot.lane.b32.xlu0 %v2919, 96
      %v3008 = vpop.permute.xlu0 %3007
      %3009 = vrot.lane.b32.xlu0 %v2920, 96
      %v3010 = vpop.permute.xlu0 %3009
      %3011 = vrot.lane.b32.xlu0 %v2921, 96
      %v3012 = vpop.permute.xlu0 %3011
      %3013 = vrot.lane.b32.xlu0 %v2922, 96
      %v3014 = vpop.permute.xlu0 %3013
      %3015 = vrot.lane.b32.xlu0 %v2923, 96
      %v3016 = vpop.permute.xlu0 %3015
      %3017 = vrot.lane.b32.xlu0 %v2924, 96
      %v3018 = vpop.permute.xlu0 %3017
      %3019 = vrot.lane.b32.xlu0 %v2925, 96
      %v3020 = vpop.permute.xlu0 %3019
      %3021 = vrot.lane.b32.xlu0 %v2926, 96
      %v3022 = vpop.permute.xlu0 %3021
      %v3055 = vadd.f32 %v2863, %v2960
      %v3056 = vadd.f32 %v2864, %v2962
      %v3057 = vadd.f32 %v2865, %v2964
      %v3058 = vadd.f32 %v2866, %v2966
      %v3059 = vadd.f32 %v2867, %v2968
      %v3060 = vadd.f32 %v2868, %v2970
      %v3061 = vadd.f32 %v2869, %v2972
      %v3062 = vadd.f32 %v2870, %v2974
      %v3063 = vadd.f32 %v2871, %v2976
      %v3064 = vadd.f32 %v2872, %v2978
      %v3065 = vadd.f32 %v2873, %v2980
      %v3066 = vadd.f32 %v2874, %v2982
      %v3067 = vadd.f32 %v2875, %v2984
      %v3068 = vadd.f32 %v2876, %v2986
      %v3069 = vadd.f32 %v2877, %v2988
      %v3070 = vadd.f32 %v2878, %v2990
      %v3071 = vadd.f32 %v2879, %v2992
      %v3072 = vadd.f32 %v2880, %v2994
      %v3073 = vadd.f32 %v2881, %v2996
      %v3074 = vadd.f32 %v2882, %v2998
      %v3075 = vadd.f32 %v2883, %v3000
      %v3076 = vadd.f32 %v2884, %v3002
      %v3077 = vadd.f32 %v2885, %v3004
      %v3078 = vadd.f32 %v2886, %v3006
      %v3079 = vadd.f32 %v2887, %v3008
      %v3080 = vadd.f32 %v2888, %v3010
      %v3081 = vadd.f32 %v2889, %v3012
      %v3082 = vadd.f32 %v2890, %v3014
      %v3083 = vadd.f32 %v2891, %v3016
      %v3084 = vadd.f32 %v2892, %v3018
      %v3085 = vadd.f32 %v2893, %v3020
      %v3086 = vadd.f32 %v2894, %v3022
      %3119 = vrot.lane.b32.xlu0 %v3055, 104
      %v3120 = vpop.permute.xlu0 %3119
      %3121 = vrot.lane.b32.xlu0 %v3056, 104
      %v3122 = vpop.permute.xlu0 %3121
      %3123 = vrot.lane.b32.xlu0 %v3057, 104
      %v3124 = vpop.permute.xlu0 %3123
      %3125 = vrot.lane.b32.xlu0 %v3058, 104
      %v3126 = vpop.permute.xlu0 %3125
      %3127 = vrot.lane.b32.xlu0 %v3059, 104
      %v3128 = vpop.permute.xlu0 %3127
      %3129 = vrot.lane.b32.xlu0 %v3060, 104
      %v3130 = vpop.permute.xlu0 %3129
      %3131 = vrot.lane.b32.xlu0 %v3061, 104
      %v3132 = vpop.permute.xlu0 %3131
      %3133 = vrot.lane.b32.xlu0 %v3062, 104
      %v3134 = vpop.permute.xlu0 %3133
      %3135 = vrot.lane.b32.xlu0 %v3063, 104
      %v3136 = vpop.permute.xlu0 %3135
      %3137 = vrot.lane.b32.xlu0 %v3064, 104
      %v3138 = vpop.permute.xlu0 %3137
      %3139 = vrot.lane.b32.xlu0 %v3065, 104
      %v3140 = vpop.permute.xlu0 %3139
      %3141 = vrot.lane.b32.xlu0 %v3066, 104
      %v3142 = vpop.permute.xlu0 %3141
      %3143 = vrot.lane.b32.xlu0 %v3067, 104
      %v3144 = vpop.permute.xlu0 %3143
      %3145 = vrot.lane.b32.xlu0 %v3068, 104
      %v3146 = vpop.permute.xlu0 %3145
      %3147 = vrot.lane.b32.xlu0 %v3069, 104
      %v3148 = vpop.permute.xlu0 %3147
      %3149 = vrot.lane.b32.xlu0 %v3070, 104
      %v3150 = vpop.permute.xlu0 %3149
      %3151 = vrot.lane.b32.xlu0 %v3071, 104
      %v3152 = vpop.permute.xlu0 %3151
      %3153 = vrot.lane.b32.xlu0 %v3072, 104
      %v3154 = vpop.permute.xlu0 %3153
      %3155 = vrot.lane.b32.xlu0 %v3073, 104
      %v3156 = vpop.permute.xlu0 %3155
      %3157 = vrot.lane.b32.xlu0 %v3074, 104
      %v3158 = vpop.permute.xlu0 %3157
      %3159 = vrot.lane.b32.xlu0 %v3075, 104
      %v3160 = vpop.permute.xlu0 %3159
      %3161 = vrot.lane.b32.xlu0 %v3076, 104
      %v3162 = vpop.permute.xlu0 %3161
      %3163 = vrot.lane.b32.xlu0 %v3077, 104
      %v3164 = vpop.permute.xlu0 %3163
      %3165 = vrot.lane.b32.xlu0 %v3078, 104
      %v3166 = vpop.permute.xlu0 %3165
      %3167 = vrot.lane.b32.xlu0 %v3079, 104
      %v3168 = vpop.permute.xlu0 %3167
      %3169 = vrot.lane.b32.xlu0 %v3080, 104
      %v3170 = vpop.permute.xlu0 %3169
      %3171 = vrot.lane.b32.xlu0 %v3081, 104
      %v3172 = vpop.permute.xlu0 %3171
      %3173 = vrot.lane.b32.xlu0 %v3082, 104
      %v3174 = vpop.permute.xlu0 %3173
      %3175 = vrot.lane.b32.xlu0 %v3083, 104
      %v3176 = vpop.permute.xlu0 %3175
      %3177 = vrot.lane.b32.xlu0 %v3084, 104
      %v3178 = vpop.permute.xlu0 %3177
      %3179 = vrot.lane.b32.xlu0 %v3085, 104
      %v3180 = vpop.permute.xlu0 %3179
      %3181 = vrot.lane.b32.xlu0 %v3086, 104
      %v3182 = vpop.permute.xlu0 %3181
      %vm3215 = vcmask 130112
      %3216 = vst.msk [vmem:[%s332] sm:$0xff] %vm3215, %v3120
      %3217 = vst.msk [vmem:[%s332 + $0x8] sm:$0xff] %vm3215, %v3122
      %3218 = vst.msk [vmem:[%s332 + $0x10] sm:$0xff] %vm3215, %v3124
      %3219 = vst.msk [vmem:[%s332 + $0x18] sm:$0xff] %vm3215, %v3126
      %3220 = vst.msk [vmem:[%s332 + $0x20] sm:$0xff] %vm3215, %v3128
      %3221 = vst.msk [vmem:[%s332 + $0x28] sm:$0xff] %vm3215, %v3130
      %3222 = vst.msk [vmem:[%s332 + $0x30] sm:$0xff] %vm3215, %v3132
      %3223 = vst.msk [vmem:[%s332 + $0x38] sm:$0xff] %vm3215, %v3134
      %3224 = vst.msk [vmem:[%s332 + $0x40] sm:$0xff] %vm3215, %v3136
      %3225 = vst.msk [vmem:[%s332 + $0x48] sm:$0xff] %vm3215, %v3138
      %3226 = vst.msk [vmem:[%s332 + $0x50] sm:$0xff] %vm3215, %v3140
      %3227 = vst.msk [vmem:[%s332 + $0x58] sm:$0xff] %vm3215, %v3142
      %3228 = vst.msk [vmem:[%s332 + $0x60] sm:$0xff] %vm3215, %v3144
      %3229 = vst.msk [vmem:[%s332 + $0x68] sm:$0xff] %vm3215, %v3146
      %3230 = vst.msk [vmem:[%s332 + $0x70] sm:$0xff] %vm3215, %v3148
      %3231 = vst.msk [vmem:[%s332 + $0x78] sm:$0xff] %vm3215, %v3150
      %3232 = vst.msk [vmem:[%s332 + $0x80] sm:$0xff] %vm3215, %v3152
      %3233 = vst.msk [vmem:[%s332 + $0x88] sm:$0xff] %vm3215, %v3154
      %3234 = vst.msk [vmem:[%s332 + $0x90] sm:$0xff] %vm3215, %v3156
      %3235 = vst.msk [vmem:[%s332 + $0x98] sm:$0xff] %vm3215, %v3158
      %3236 = vst.msk [vmem:[%s332 + $0xa0] sm:$0xff] %vm3215, %v3160
      %3237 = vst.msk [vmem:[%s332 + $0xa8] sm:$0xff] %vm3215, %v3162
      %3238 = vst.msk [vmem:[%s332 + $0xb0] sm:$0xff] %vm3215, %v3164
      %3239 = vst.msk [vmem:[%s332 + $0xb8] sm:$0xff] %vm3215, %v3166
      %3240 = vst.msk [vmem:[%s332 + $0xc0] sm:$0xff] %vm3215, %v3168
      %3241 = vst.msk [vmem:[%s332 + $0xc8] sm:$0xff] %vm3215, %v3170
      %3242 = vst.msk [vmem:[%s332 + $0xd0] sm:$0xff] %vm3215, %v3172
      %3243 = vst.msk [vmem:[%s332 + $0xd8] sm:$0xff] %vm3215, %v3174
      %3244 = vst.msk [vmem:[%s332 + $0xe0] sm:$0xff] %vm3215, %v3176
      %3245 = vst.msk [vmem:[%s332 + $0xe8] sm:$0xff] %vm3215, %v3178
      %3246 = vst.msk [vmem:[%s332 + $0xf0] sm:$0xff] %vm3215, %v3180
      %3247 = vst.msk [vmem:[%s332 + $0xf8] sm:$0xff] %vm3215, %v3182
      %v3248 = vld [vmem:[%s332] sm:$0xff]
      %v3249 = vld [vmem:[%s332 + $0x8] sm:$0xff]
      %v3250 = vld [vmem:[%s332 + $0x10] sm:$0xff]
      %v3251 = vld [vmem:[%s332 + $0x18] sm:$0xff]
      %v3252 = vld [vmem:[%s332 + $0x20] sm:$0xff]
      %v3253 = vld [vmem:[%s332 + $0x28] sm:$0xff]
      %v3254 = vld [vmem:[%s332 + $0x30] sm:$0xff]
      %v3255 = vld [vmem:[%s332 + $0x38] sm:$0xff]
      %v3256 = vld [vmem:[%s332 + $0x40] sm:$0xff]
      %v3257 = vld [vmem:[%s332 + $0x48] sm:$0xff]
      %v3258 = vld [vmem:[%s332 + $0x50] sm:$0xff]
      %v3259 = vld [vmem:[%s332 + $0x58] sm:$0xff]
      %v3260 = vld [vmem:[%s332 + $0x60] sm:$0xff]
      %v3261 = vld [vmem:[%s332 + $0x68] sm:$0xff]
      %v3262 = vld [vmem:[%s332 + $0x70] sm:$0xff]
      %v3263 = vld [vmem:[%s332 + $0x78] sm:$0xff]
      %v3264 = vld [vmem:[%s332 + $0x80] sm:$0xff]
      %v3265 = vld [vmem:[%s332 + $0x88] sm:$0xff]
      %v3266 = vld [vmem:[%s332 + $0x90] sm:$0xff]
      %v3267 = vld [vmem:[%s332 + $0x98] sm:$0xff]
      %v3268 = vld [vmem:[%s332 + $0xa0] sm:$0xff]
      %v3269 = vld [vmem:[%s332 + $0xa8] sm:$0xff]
      %v3270 = vld [vmem:[%s332 + $0xb0] sm:$0xff]
      %v3271 = vld [vmem:[%s332 + $0xb8] sm:$0xff]
      %v3272 = vld [vmem:[%s332 + $0xc0] sm:$0xff]
      %v3273 = vld [vmem:[%s332 + $0xc8] sm:$0xff]
      %v3274 = vld [vmem:[%s332 + $0xd0] sm:$0xff]
      %v3275 = vld [vmem:[%s332 + $0xd8] sm:$0xff]
      %v3276 = vld [vmem:[%s332 + $0xe0] sm:$0xff]
      %v3277 = vld [vmem:[%s332 + $0xe8] sm:$0xff]
      %v3278 = vld [vmem:[%s332 + $0xf0] sm:$0xff]
      %v3279 = vld [vmem:[%s332 + $0xf8] sm:$0xff]
      %v3280 = vld [vmem:[%s2 + $0x1] sm:$0x1]
      %v3281 = vld [vmem:[%s3 + $0x1] sm:$0x1]
      %v3282 = vperm.slane %v3280, 0
      %v3283 = vmul.f32 %v3248, %v3282
      %v3284 = vmul.f32 %v3249, %v3282
      %v3285 = vmul.f32 %v3250, %v3282
      %v3286 = vmul.f32 %v3251, %v3282
      %v3287 = vmul.f32 %v3252, %v3282
      %v3288 = vmul.f32 %v3253, %v3282
      %v3289 = vmul.f32 %v3254, %v3282
      %v3290 = vmul.f32 %v3255, %v3282
      %v3291 = vmul.f32 %v3256, %v3282
      %v3292 = vmul.f32 %v3257, %v3282
      %v3293 = vmul.f32 %v3258, %v3282
      %v3294 = vmul.f32 %v3259, %v3282
      %v3295 = vmul.f32 %v3260, %v3282
      %v3296 = vmul.f32 %v3261, %v3282
      %v3297 = vmul.f32 %v3262, %v3282
      %v3298 = vmul.f32 %v3263, %v3282
      %v3299 = vmul.f32 %v3264, %v3282
      %v3300 = vmul.f32 %v3265, %v3282
      %v3301 = vmul.f32 %v3266, %v3282
      %v3302 = vmul.f32 %v3267, %v3282
      %v3303 = vmul.f32 %v3268, %v3282
      %v3304 = vmul.f32 %v3269, %v3282
      %v3305 = vmul.f32 %v3270, %v3282
      %v3306 = vmul.f32 %v3271, %v3282
      %v3307 = vmul.f32 %v3272, %v3282
      %v3308 = vmul.f32 %v3273, %v3282
      %v3309 = vmul.f32 %v3274, %v3282
      %v3310 = vmul.f32 %v3275, %v3282
      %v3311 = vmul.f32 %v3276, %v3282
      %v3312 = vmul.f32 %v3277, %v3282
      %v3313 = vmul.f32 %v3278, %v3282
      %v3314 = vmul.f32 %v3279, %v3282
      %v3315 = vperm.slane %v3281, 0
      %v3316 = vadd.f32 %v3283, %v3315
      %v3317 = vadd.f32 %v3284, %v3315
      %v3318 = vadd.f32 %v3285, %v3315
      %v3319 = vadd.f32 %v3286, %v3315
      %v3320 = vadd.f32 %v3287, %v3315
      %v3321 = vadd.f32 %v3288, %v3315
      %v3322 = vadd.f32 %v3289, %v3315
      %v3323 = vadd.f32 %v3290, %v3315
      %v3324 = vadd.f32 %v3291, %v3315
      %v3325 = vadd.f32 %v3292, %v3315
      %v3326 = vadd.f32 %v3293, %v3315
      %v3327 = vadd.f32 %v3294, %v3315
      %v3328 = vadd.f32 %v3295, %v3315
      %v3329 = vadd.f32 %v3296, %v3315
      %v3330 = vadd.f32 %v3297, %v3315
      %v3331 = vadd.f32 %v3298, %v3315
      %v3332 = vadd.f32 %v3299, %v3315
      %v3333 = vadd.f32 %v3300, %v3315
      %v3334 = vadd.f32 %v3301, %v3315
      %v3335 = vadd.f32 %v3302, %v3315
      %v3336 = vadd.f32 %v3303, %v3315
      %v3337 = vadd.f32 %v3304, %v3315
      %v3338 = vadd.f32 %v3305, %v3315
      %v3339 = vadd.f32 %v3306, %v3315
      %v3340 = vadd.f32 %v3307, %v3315
      %v3341 = vadd.f32 %v3308, %v3315
      %v3342 = vadd.f32 %v3309, %v3315
      %v3343 = vadd.f32 %v3310, %v3315
      %v3344 = vadd.f32 %v3311, %v3315
      %v3345 = vadd.f32 %v3312, %v3315
      %v3346 = vadd.f32 %v3313, %v3315
      %v3347 = vadd.f32 %v3314, %v3315
      %v3348 = vmax.f32 %v3316, 0.0
      %v3349 = vmax.f32 %v3317, 0.0
      %v3350 = vmax.f32 %v3318, 0.0
      %v3351 = vmax.f32 %v3319, 0.0
      %v3352 = vmax.f32 %v3320, 0.0
      %v3353 = vmax.f32 %v3321, 0.0
      %v3354 = vmax.f32 %v3322, 0.0
      %v3355 = vmax.f32 %v3323, 0.0
      %v3356 = vmax.f32 %v3324, 0.0
      %v3357 = vmax.f32 %v3325, 0.0
      %v3358 = vmax.f32 %v3326, 0.0
      %v3359 = vmax.f32 %v3327, 0.0
      %v3360 = vmax.f32 %v3328, 0.0
      %v3361 = vmax.f32 %v3329, 0.0
      %v3362 = vmax.f32 %v3330, 0.0
      %v3363 = vmax.f32 %v3331, 0.0
      %v3364 = vmax.f32 %v3332, 0.0
      %v3365 = vmax.f32 %v3333, 0.0
      %v3366 = vmax.f32 %v3334, 0.0
      %v3367 = vmax.f32 %v3335, 0.0
      %v3368 = vmax.f32 %v3336, 0.0
      %v3369 = vmax.f32 %v3337, 0.0
      %v3370 = vmax.f32 %v3338, 0.0
      %v3371 = vmax.f32 %v3339, 0.0
      %v3372 = vmax.f32 %v3340, 0.0
      %v3373 = vmax.f32 %v3341, 0.0
      %v3374 = vmax.f32 %v3342, 0.0
      %v3375 = vmax.f32 %v3343, 0.0
      %v3376 = vmax.f32 %v3344, 0.0
      %v3377 = vmax.f32 %v3345, 0.0
      %v3378 = vmax.f32 %v3346, 0.0
      %v3379 = vmax.f32 %v3347, 0.0
      %v3380 = vpack.c.bf16 %v3349, %v3348
      %v3381 = vpack.c.bf16 %v3351, %v3350
      %v3382 = vpack.c.bf16 %v3353, %v3352
      %v3383 = vpack.c.bf16 %v3355, %v3354
      %v3384 = vpack.c.bf16 %v3357, %v3356
      %v3385 = vpack.c.bf16 %v3359, %v3358
      %v3386 = vpack.c.bf16 %v3361, %v3360
      %v3387 = vpack.c.bf16 %v3363, %v3362
      %v3388 = vpack.c.bf16 %v3365, %v3364
      %v3389 = vpack.c.bf16 %v3367, %v3366
      %v3390 = vpack.c.bf16 %v3369, %v3368
      %v3391 = vpack.c.bf16 %v3371, %v3370
      %v3392 = vpack.c.bf16 %v3373, %v3372
      %v3393 = vpack.c.bf16 %v3375, %v3374
      %v3394 = vpack.c.bf16 %v3377, %v3376
      %v3395 = vpack.c.bf16 %v3379, %v3378
      %v3396 = vld [vmem:[%s7] sm:$0xf]
      %v3397 = vld [vmem:[%s7 + $0x4] sm:$0xf]
      %v3398 = vld [vmem:[%s4 + $0x1] sm:$0x1]
      %v3399 = vperm.slane %v3398, 0
      %v3402 = vunpack.c.l.b16 %v3396
      %v3403 = vunpack.c.l.b16 %v3397
      %v3404 = vpack.c.b16 %v3403, %v3402
      %v3407 = vsel %vm779, %v3380, 0
      %v3410 = vsel %vm779, %v3381, 0
      %v3413 = vsel %vm779, %v3382, 0
      %v3416 = vsel %vm779, %v3383, 0
      %v3419 = vsel %vm779, %v3384, 0
      %v3422 = vsel %vm779, %v3385, 0
      %v3425 = vsel %vm779, %v3386, 0
      %v3428 = vsel %vm779, %v3387, 0
      %v3431 = vsel %vm779, %v3388, 0
      %v3434 = vsel %vm779, %v3389, 0
      %v3437 = vsel %vm779, %v3390, 0
      %v3440 = vsel %vm779, %v3391, 0
      %v3443 = vsel %vm779, %v3392, 0
      %v3446 = vsel %vm779, %v3393, 0
      %v3449 = vsel %vm779, %v3394, 0
      %v3452 = vsel %vm779, %v3395, 0
      %3454 = vmatpush.bf16.msra.mxu0 0
      %3455 = vmatpush.bf16.msra.mxu0 0
      %3456 = vmatpush.bf16.msra.mxu0 0
      %3457 = vmatpush.bf16.msra.mxu0 0
      %3458 = vmatpush.bf16.msra.mxu0 0
      %3459 = vmatpush.bf16.msra.mxu0 0
      %3460 = vmatpush.bf16.msra.mxu0 0
      %3461 = vmatpush.bf16.msra.mxu0 %v3404
      %3462 = vmatmul.bf16.gmra.mxu0 %v3407
      %v3463 = vpop.f32.mrf.mxu0
      %v3464 = vadd.f32 %v3399, %v3463
      %v3465 = vpop.f32.mrf.mxu0
      %v3466 = vadd.f32 %v3399, %v3465
      %3467 = vmatmul.bf16.gmra.mxu0 %v3410
      %v3468 = vpop.f32.mrf.mxu0
      %v3469 = vadd.f32 %v3399, %v3468
      %v3470 = vpop.f32.mrf.mxu0
      %v3471 = vadd.f32 %v3399, %v3470
      %3472 = vmatmul.bf16.gmra.mxu0 %v3413
      %v3473 = vpop.f32.mrf.mxu0
      %v3474 = vadd.f32 %v3399, %v3473
      %v3475 = vpop.f32.mrf.mxu0
      %v3476 = vadd.f32 %v3399, %v3475
      %3477 = vmatmul.bf16.gmra.mxu0 %v3416
      %v3478 = vpop.f32.mrf.mxu0
      %v3479 = vadd.f32 %v3399, %v3478
      %v3480 = vpop.f32.mrf.mxu0
      %v3481 = vadd.f32 %v3399, %v3480
      %3482 = vmatmul.bf16.gmra.mxu0 %v3419
      %v3483 = vpop.f32.mrf.mxu0
      %v3484 = vadd.f32 %v3399, %v3483
      %v3485 = vpop.f32.mrf.mxu0
      %v3486 = vadd.f32 %v3399, %v3485
      %3487 = vmatmul.bf16.gmra.mxu0 %v3422
      %v3488 = vpop.f32.mrf.mxu0
      %v3489 = vadd.f32 %v3399, %v3488
      %v3490 = vpop.f32.mrf.mxu0
      %v3491 = vadd.f32 %v3399, %v3490
      %3492 = vmatmul.bf16.gmra.mxu0 %v3425
      %v3493 = vpop.f32.mrf.mxu0
      %v3494 = vadd.f32 %v3399, %v3493
      %v3495 = vpop.f32.mrf.mxu0
      %v3496 = vadd.f32 %v3399, %v3495
      %3497 = vmatmul.bf16.gmra.mxu0 %v3428
      %v3498 = vpop.f32.mrf.mxu0
      %v3499 = vadd.f32 %v3399, %v3498
      %v3500 = vpop.f32.mrf.mxu0
      %v3501 = vadd.f32 %v3399, %v3500
      %3502 = vmatmul.bf16.gmra.mxu0 %v3431
      %v3503 = vpop.f32.mrf.mxu0
      %v3504 = vadd.f32 %v3399, %v3503
      %v3505 = vpop.f32.mrf.mxu0
      %v3506 = vadd.f32 %v3399, %v3505
      %3507 = vmatmul.bf16.gmra.mxu0 %v3434
      %v3508 = vpop.f32.mrf.mxu0
      %v3509 = vadd.f32 %v3399, %v3508
      %v3510 = vpop.f32.mrf.mxu0
      %v3511 = vadd.f32 %v3399, %v3510
      %3512 = vmatmul.bf16.gmra.mxu0 %v3437
      %v3513 = vpop.f32.mrf.mxu0
      %v3514 = vadd.f32 %v3399, %v3513
      %v3515 = vpop.f32.mrf.mxu0
      %v3516 = vadd.f32 %v3399, %v3515
      %3517 = vmatmul.bf16.gmra.mxu0 %v3440
      %v3518 = vpop.f32.mrf.mxu0
      %v3519 = vadd.f32 %v3399, %v3518
      %v3520 = vpop.f32.mrf.mxu0
      %v3521 = vadd.f32 %v3399, %v3520
      %3522 = vmatmul.bf16.gmra.mxu0 %v3443
      %v3523 = vpop.f32.mrf.mxu0
      %v3524 = vadd.f32 %v3399, %v3523
      %v3525 = vpop.f32.mrf.mxu0
      %v3526 = vadd.f32 %v3399, %v3525
      %3527 = vmatmul.bf16.gmra.mxu0 %v3446
      %v3528 = vpop.f32.mrf.mxu0
      %v3529 = vadd.f32 %v3399, %v3528
      %v3530 = vpop.f32.mrf.mxu0
      %v3531 = vadd.f32 %v3399, %v3530
      %3532 = vmatmul.bf16.gmra.mxu0 %v3449
      %v3533 = vpop.f32.mrf.mxu0
      %v3534 = vadd.f32 %v3399, %v3533
      %v3535 = vpop.f32.mrf.mxu0
      %v3536 = vadd.f32 %v3399, %v3535
      %3537 = vmatmul.bf16.gmra.mxu0 %v3452
      %v3538 = vpop.f32.mrf.mxu0
      %v3539 = vadd.f32 %v3399, %v3538
      %v3540 = vpop.f32.mrf.mxu0
      %v3541 = vadd.f32 %v3399, %v3540
      %3542 = vdwg.mxu0
      %v3543 = vmax.f32 %v3464, 0.0
      %v3544 = vmax.f32 %v3466, 0.0
      %v3545 = vmax.f32 %v3469, 0.0
      %v3546 = vmax.f32 %v3471, 0.0
      %v3547 = vmax.f32 %v3474, 0.0
      %v3548 = vmax.f32 %v3476, 0.0
      %v3549 = vmax.f32 %v3479, 0.0
      %v3550 = vmax.f32 %v3481, 0.0
      %v3551 = vmax.f32 %v3484, 0.0
      %v3552 = vmax.f32 %v3486, 0.0
      %v3553 = vmax.f32 %v3489, 0.0
      %v3554 = vmax.f32 %v3491, 0.0
      %v3555 = vmax.f32 %v3494, 0.0
      %v3556 = vmax.f32 %v3496, 0.0
      %v3557 = vmax.f32 %v3499, 0.0
      %v3558 = vmax.f32 %v3501, 0.0
      %v3559 = vmax.f32 %v3504, 0.0
      %v3560 = vmax.f32 %v3506, 0.0
      %v3561 = vmax.f32 %v3509, 0.0
      %v3562 = vmax.f32 %v3511, 0.0
      %v3563 = vmax.f32 %v3514, 0.0
      %v3564 = vmax.f32 %v3516, 0.0
      %v3565 = vmax.f32 %v3519, 0.0
      %v3566 = vmax.f32 %v3521, 0.0
      %v3567 = vmax.f32 %v3524, 0.0
      %v3568 = vmax.f32 %v3526, 0.0
      %v3569 = vmax.f32 %v3529, 0.0
      %v3570 = vmax.f32 %v3531, 0.0
      %v3571 = vmax.f32 %v3534, 0.0
      %v3572 = vmax.f32 %v3536, 0.0
      %v3573 = vmax.f32 %v3539, 0.0
      %v3574 = vmax.f32 %v3541, 0.0
      %v3575 = vpack.c.bf16 %v3544, %v3543
      %v3576 = vpack.c.bf16 %v3546, %v3545
      %v3577 = vpack.c.bf16 %v3548, %v3547
      %v3578 = vpack.c.bf16 %v3550, %v3549
      %v3579 = vpack.c.bf16 %v3552, %v3551
      %v3580 = vpack.c.bf16 %v3554, %v3553
      %v3581 = vpack.c.bf16 %v3556, %v3555
      %v3582 = vpack.c.bf16 %v3558, %v3557
      %v3583 = vpack.c.bf16 %v3560, %v3559
      %v3584 = vpack.c.bf16 %v3562, %v3561
      %v3585 = vpack.c.bf16 %v3564, %v3563
      %v3586 = vpack.c.bf16 %v3566, %v3565
      %v3587 = vpack.c.bf16 %v3568, %v3567
      %v3588 = vpack.c.bf16 %v3570, %v3569
      %v3589 = vpack.c.bf16 %v3572, %v3571
      %v3590 = vpack.c.bf16 %v3574, %v3573
      %s3591 = scalar_lea.vmem %s5, 8
      %v3592 = vld [vmem:[%s3591] sm:$0xf]
      %v3593 = vld [vmem:[%s3591 + $0x4] sm:$0xf]
      %v3596 = vunpack.c.l.b16 %v3592
      %v3597 = vunpack.c.l.b16 %v3593
      %v3598 = vpack.c.b16 %v3597, %v3596
      %v3601 = vsel %vm779, %v3575, 0
      %v3604 = vsel %vm779, %v3576, 0
      %v3607 = vsel %vm779, %v3577, 0
      %v3610 = vsel %vm779, %v3578, 0
      %v3613 = vsel %vm779, %v3579, 0
      %v3616 = vsel %vm779, %v3580, 0
      %v3619 = vsel %vm779, %v3581, 0
      %v3622 = vsel %vm779, %v3582, 0
      %v3625 = vsel %vm779, %v3583, 0
      %v3628 = vsel %vm779, %v3584, 0
      %v3631 = vsel %vm779, %v3585, 0
      %v3634 = vsel %vm779, %v3586, 0
      %v3637 = vsel %vm779, %v3587, 0
      %v3640 = vsel %vm779, %v3588, 0
      %v3643 = vsel %vm779, %v3589, 0
      %v3646 = vsel %vm779, %v3590, 0
      %3648 = vmatpush.bf16.msra.mxu0 0
      %3649 = vmatpush.bf16.msra.mxu0 0
      %3650 = vmatpush.bf16.msra.mxu0 0
      %3651 = vmatpush.bf16.msra.mxu0 0
      %3652 = vmatpush.bf16.msra.mxu0 0
      %3653 = vmatpush.bf16.msra.mxu0 0
      %3654 = vmatpush.bf16.msra.mxu0 0
      %3655 = vmatpush.bf16.msra.mxu0 %v3598
      %3656 = vmatmul.bf16.gmra.mxu0 %v3601
      %v3657 = vpop.f32.mrf.mxu0
      %v3658 = vadd.f32 0.0, %v3657
      %v3659 = vpop.f32.mrf.mxu0
      %v3660 = vadd.f32 0.0, %v3659
      %3661 = vmatmul.bf16.gmra.mxu0 %v3604
      %v3662 = vpop.f32.mrf.mxu0
      %v3663 = vadd.f32 0.0, %v3662
      %v3664 = vpop.f32.mrf.mxu0
      %v3665 = vadd.f32 0.0, %v3664
      %3666 = vmatmul.bf16.gmra.mxu0 %v3607
      %v3667 = vpop.f32.mrf.mxu0
      %v3668 = vadd.f32 0.0, %v3667
      %v3669 = vpop.f32.mrf.mxu0
      %v3670 = vadd.f32 0.0, %v3669
      %3671 = vmatmul.bf16.gmra.mxu0 %v3610
      %v3672 = vpop.f32.mrf.mxu0
      %v3673 = vadd.f32 0.0, %v3672
      %v3674 = vpop.f32.mrf.mxu0
      %v3675 = vadd.f32 0.0, %v3674
      %3676 = vmatmul.bf16.gmra.mxu0 %v3613
      %v3677 = vpop.f32.mrf.mxu0
      %v3678 = vadd.f32 0.0, %v3677
      %v3679 = vpop.f32.mrf.mxu0
      %v3680 = vadd.f32 0.0, %v3679
      %3681 = vmatmul.bf16.gmra.mxu0 %v3616
      %v3682 = vpop.f32.mrf.mxu0
      %v3683 = vadd.f32 0.0, %v3682
      %v3684 = vpop.f32.mrf.mxu0
      %v3685 = vadd.f32 0.0, %v3684
      %3686 = vmatmul.bf16.gmra.mxu0 %v3619
      %v3687 = vpop.f32.mrf.mxu0
      %v3688 = vadd.f32 0.0, %v3687
      %v3689 = vpop.f32.mrf.mxu0
      %v3690 = vadd.f32 0.0, %v3689
      %3691 = vmatmul.bf16.gmra.mxu0 %v3622
      %v3692 = vpop.f32.mrf.mxu0
      %v3693 = vadd.f32 0.0, %v3692
      %v3694 = vpop.f32.mrf.mxu0
      %v3695 = vadd.f32 0.0, %v3694
      %3696 = vmatmul.bf16.gmra.mxu0 %v3625
      %v3697 = vpop.f32.mrf.mxu0
      %v3698 = vadd.f32 0.0, %v3697
      %v3699 = vpop.f32.mrf.mxu0
      %v3700 = vadd.f32 0.0, %v3699
      %3701 = vmatmul.bf16.gmra.mxu0 %v3628
      %v3702 = vpop.f32.mrf.mxu0
      %v3703 = vadd.f32 0.0, %v3702
      %v3704 = vpop.f32.mrf.mxu0
      %v3705 = vadd.f32 0.0, %v3704
      %3706 = vmatmul.bf16.gmra.mxu0 %v3631
      %v3707 = vpop.f32.mrf.mxu0
      %v3708 = vadd.f32 0.0, %v3707
      %v3709 = vpop.f32.mrf.mxu0
      %v3710 = vadd.f32 0.0, %v3709
      %3711 = vmatmul.bf16.gmra.mxu0 %v3634
      %v3712 = vpop.f32.mrf.mxu0
      %v3713 = vadd.f32 0.0, %v3712
      %v3714 = vpop.f32.mrf.mxu0
      %v3715 = vadd.f32 0.0, %v3714
      %3716 = vmatmul.bf16.gmra.mxu0 %v3637
      %v3717 = vpop.f32.mrf.mxu0
      %v3718 = vadd.f32 0.0, %v3717
      %v3719 = vpop.f32.mrf.mxu0
      %v3720 = vadd.f32 0.0, %v3719
      %3721 = vmatmul.bf16.gmra.mxu0 %v3640
      %v3722 = vpop.f32.mrf.mxu0
      %v3723 = vadd.f32 0.0, %v3722
      %v3724 = vpop.f32.mrf.mxu0
      %v3725 = vadd.f32 0.0, %v3724
      %3726 = vmatmul.bf16.gmra.mxu0 %v3643
      %v3727 = vpop.f32.mrf.mxu0
      %v3728 = vadd.f32 0.0, %v3727
      %v3729 = vpop.f32.mrf.mxu0
      %v3730 = vadd.f32 0.0, %v3729
      %3731 = vmatmul.bf16.gmra.mxu0 %v3646
      %v3732 = vpop.f32.mrf.mxu0
      %v3733 = vadd.f32 0.0, %v3732
      %v3734 = vpop.f32.mrf.mxu0
      %v3735 = vadd.f32 0.0, %v3734
      %3736 = vdwg.mxu0
      %v3767 = vrot.slane %v3658, 7
      %v3768 = vrot.slane %v3660, 7
      %v3769 = vsel %vm947, %v3767, %v3768
      %v3770 = vrot.slane %v3663, 7
      %v3771 = vsel %vm947, %v3768, %v3770
      %v3772 = vrot.slane %v3665, 7
      %v3773 = vsel %vm947, %v3770, %v3772
      %v3774 = vrot.slane %v3668, 7
      %v3775 = vsel %vm947, %v3772, %v3774
      %v3776 = vrot.slane %v3670, 7
      %v3777 = vsel %vm947, %v3774, %v3776
      %v3778 = vrot.slane %v3673, 7
      %v3779 = vsel %vm947, %v3776, %v3778
      %v3780 = vrot.slane %v3675, 7
      %v3781 = vsel %vm947, %v3778, %v3780
      %v3782 = vrot.slane %v3678, 7
      %v3783 = vsel %vm947, %v3780, %v3782
      %v3784 = vrot.slane %v3680, 7
      %v3785 = vsel %vm947, %v3782, %v3784
      %v3786 = vrot.slane %v3683, 7
      %v3787 = vsel %vm947, %v3784, %v3786
      %v3788 = vrot.slane %v3685, 7
      %v3789 = vsel %vm947, %v3786, %v3788
      %v3790 = vrot.slane %v3688, 7
      %v3791 = vsel %vm947, %v3788, %v3790
      %v3792 = vrot.slane %v3690, 7
      %v3793 = vsel %vm947, %v3790, %v3792
      %v3794 = vrot.slane %v3693, 7
      %v3795 = vsel %vm947, %v3792, %v3794
      %v3796 = vrot.slane %v3695, 7
      %v3797 = vsel %vm947, %v3794, %v3796
      %v3798 = vrot.slane %v3698, 7
      %v3799 = vsel %vm947, %v3796, %v3798
      %v3800 = vrot.slane %v3700, 7
      %v3801 = vsel %vm947, %v3798, %v3800
      %v3802 = vrot.slane %v3703, 7
      %v3803 = vsel %vm947, %v3800, %v3802
      %v3804 = vrot.slane %v3705, 7
      %v3805 = vsel %vm947, %v3802, %v3804
      %v3806 = vrot.slane %v3708, 7
      %v3807 = vsel %vm947, %v3804, %v3806
      %v3808 = vrot.slane %v3710, 7
      %v3809 = vsel %vm947, %v3806, %v3808
      %v3810 = vrot.slane %v3713, 7
      %v3811 = vsel %vm947, %v3808, %v3810
      %v3812 = vrot.slane %v3715, 7
      %v3813 = vsel %vm947, %v3810, %v3812
      %v3814 = vrot.slane %v3718, 7
      %v3815 = vsel %vm947, %v3812, %v3814
      %v3816 = vrot.slane %v3720, 7
      %v3817 = vsel %vm947, %v3814, %v3816
      %v3818 = vrot.slane %v3723, 7
      %v3819 = vsel %vm947, %v3816, %v3818
      %v3820 = vrot.slane %v3725, 7
      %v3821 = vsel %vm947, %v3818, %v3820
      %v3822 = vrot.slane %v3728, 7
      %v3823 = vsel %vm947, %v3820, %v3822
      %v3824 = vrot.slane %v3730, 7
      %v3825 = vsel %vm947, %v3822, %v3824
      %v3856 = vsel %vm947, 0.0, %v3767
      %v3857 = vmul.f32 %v3856, %v1051
      %v3858 = vmul.f32 %v3769, %v1056
      %v3859 = vmul.f32 %v3771, %v1061
      %v3860 = vmul.f32 %v3773, %v1066
      %v3861 = vmul.f32 %v3775, %v1071
      %v3862 = vmul.f32 %v3777, %v1076
      %v3863 = vmul.f32 %v3779, %v1081
      %v3864 = vmul.f32 %v3781, %v1086
      %v3865 = vmul.f32 %v3783, %v1091
      %v3866 = vmul.f32 %v3785, %v1096
      %v3867 = vmul.f32 %v3787, %v1101
      %v3868 = vmul.f32 %v3789, %v1106
      %v3869 = vmul.f32 %v3791, %v1111
      %v3870 = vmul.f32 %v3793, %v1116
      %v3871 = vmul.f32 %v3795, %v1121
      %v3872 = vmul.f32 %v3797, %v1126
      %v3873 = vmul.f32 %v3799, %v1131
      %v3874 = vmul.f32 %v3801, %v1136
      %v3875 = vmul.f32 %v3803, %v1141
      %v3876 = vmul.f32 %v3805, %v1146
      %v3877 = vmul.f32 %v3807, %v1151
      %v3878 = vmul.f32 %v3809, %v1156
      %v3879 = vmul.f32 %v3811, %v1161
      %v3880 = vmul.f32 %v3813, %v1166
      %v3881 = vmul.f32 %v3815, %v1171
      %v3882 = vmul.f32 %v3817, %v1176
      %v3883 = vmul.f32 %v3819, %v1181
      %v3884 = vmul.f32 %v3821, %v1186
      %v3885 = vmul.f32 %v3823, %v1191
      %v3886 = vmul.f32 %v3825, %v1196
      %3917 = vrot.lane.b32.xlu0 %v3857, 32
      %v3918 = vpop.permute.xlu0 %3917
      %3919 = vrot.lane.b32.xlu0 %v3858, 32
      %v3920 = vpop.permute.xlu0 %3919
      %3921 = vrot.lane.b32.xlu0 %v3859, 32
      %v3922 = vpop.permute.xlu0 %3921
      %3923 = vrot.lane.b32.xlu0 %v3860, 32
      %v3924 = vpop.permute.xlu0 %3923
      %3925 = vrot.lane.b32.xlu0 %v3861, 32
      %v3926 = vpop.permute.xlu0 %3925
      %3927 = vrot.lane.b32.xlu0 %v3862, 32
      %v3928 = vpop.permute.xlu0 %3927
      %3929 = vrot.lane.b32.xlu0 %v3863, 32
      %v3930 = vpop.permute.xlu0 %3929
      %3931 = vrot.lane.b32.xlu0 %v3864, 32
      %v3932 = vpop.permute.xlu0 %3931
      %3933 = vrot.lane.b32.xlu0 %v3865, 32
      %v3934 = vpop.permute.xlu0 %3933
      %3935 = vrot.lane.b32.xlu0 %v3866, 32
      %v3936 = vpop.permute.xlu0 %3935
      %3937 = vrot.lane.b32.xlu0 %v3867, 32
      %v3938 = vpop.permute.xlu0 %3937
      %3939 = vrot.lane.b32.xlu0 %v3868, 32
      %v3940 = vpop.permute.xlu0 %3939
      %3941 = vrot.lane.b32.xlu0 %v3869, 32
      %v3942 = vpop.permute.xlu0 %3941
      %3943 = vrot.lane.b32.xlu0 %v3870, 32
      %v3944 = vpop.permute.xlu0 %3943
      %3945 = vrot.lane.b32.xlu0 %v3871, 32
      %v3946 = vpop.permute.xlu0 %3945
      %3947 = vrot.lane.b32.xlu0 %v3872, 32
      %v3948 = vpop.permute.xlu0 %3947
      %3949 = vrot.lane.b32.xlu0 %v3873, 32
      %v3950 = vpop.permute.xlu0 %3949
      %3951 = vrot.lane.b32.xlu0 %v3874, 32
      %v3952 = vpop.permute.xlu0 %3951
      %3953 = vrot.lane.b32.xlu0 %v3875, 32
      %v3954 = vpop.permute.xlu0 %3953
      %3955 = vrot.lane.b32.xlu0 %v3876, 32
      %v3956 = vpop.permute.xlu0 %3955
      %3957 = vrot.lane.b32.xlu0 %v3877, 32
      %v3958 = vpop.permute.xlu0 %3957
      %3959 = vrot.lane.b32.xlu0 %v3878, 32
      %v3960 = vpop.permute.xlu0 %3959
      %3961 = vrot.lane.b32.xlu0 %v3879, 32
      %v3962 = vpop.permute.xlu0 %3961
      %3963 = vrot.lane.b32.xlu0 %v3880, 32
      %v3964 = vpop.permute.xlu0 %3963
      %3965 = vrot.lane.b32.xlu0 %v3881, 32
      %v3966 = vpop.permute.xlu0 %3965
      %3967 = vrot.lane.b32.xlu0 %v3882, 32
      %v3968 = vpop.permute.xlu0 %3967
      %3969 = vrot.lane.b32.xlu0 %v3883, 32
      %v3970 = vpop.permute.xlu0 %3969
      %3971 = vrot.lane.b32.xlu0 %v3884, 32
      %v3972 = vpop.permute.xlu0 %3971
      %3973 = vrot.lane.b32.xlu0 %v3885, 32
      %v3974 = vpop.permute.xlu0 %3973
      %3975 = vrot.lane.b32.xlu0 %v3886, 32
      %v3976 = vpop.permute.xlu0 %3975
      %v4007 = vadd.f32 %v3658, %v1263
      %v4008 = vadd.f32 %v3660, %v1265
      %v4009 = vadd.f32 %v3663, %v3918
      %v4010 = vadd.f32 %v3665, %v3920
      %v4011 = vadd.f32 %v3668, %v3922
      %v4012 = vadd.f32 %v3670, %v3924
      %v4013 = vadd.f32 %v3673, %v3926
      %v4014 = vadd.f32 %v3675, %v3928
      %v4015 = vadd.f32 %v3678, %v3930
      %v4016 = vadd.f32 %v3680, %v3932
      %v4017 = vadd.f32 %v3683, %v3934
      %v4018 = vadd.f32 %v3685, %v3936
      %v4019 = vadd.f32 %v3688, %v3938
      %v4020 = vadd.f32 %v3690, %v3940
      %v4021 = vadd.f32 %v3693, %v3942
      %v4022 = vadd.f32 %v3695, %v3944
      %v4023 = vadd.f32 %v3698, %v3946
      %v4024 = vadd.f32 %v3700, %v3948
      %v4025 = vadd.f32 %v3703, %v3950
      %v4026 = vadd.f32 %v3705, %v3952
      %v4027 = vadd.f32 %v3708, %v3954
      %v4028 = vadd.f32 %v3710, %v3956
      %v4029 = vadd.f32 %v3713, %v3958
      %v4030 = vadd.f32 %v3715, %v3960
      %v4031 = vadd.f32 %v3718, %v3962
      %v4032 = vadd.f32 %v3720, %v3964
      %v4033 = vadd.f32 %v3723, %v3966
      %v4034 = vadd.f32 %v3725, %v3968
      %v4035 = vadd.f32 %v3728, %v3970
      %v4036 = vadd.f32 %v3730, %v3972
      %v4037 = vadd.f32 %v3733, %v3974
      %v4038 = vadd.f32 %v3735, %v3976
      %4039 = vrot.lane.b32.xlu0 %v3658, 120
      %v4040 = vpop.permute.xlu0 %4039
      %4041 = vrot.lane.b32.xlu0 %v3660, 120
      %v4042 = vpop.permute.xlu0 %4041
      %4043 = vrot.lane.b32.xlu0 %v3663, 120
      %v4044 = vpop.permute.xlu0 %4043
      %4045 = vrot.lane.b32.xlu0 %v3665, 120
      %v4046 = vpop.permute.xlu0 %4045
      %4047 = vrot.lane.b32.xlu0 %v3668, 120
      %v4048 = vpop.permute.xlu0 %4047
      %4049 = vrot.lane.b32.xlu0 %v3670, 120
      %v4050 = vpop.permute.xlu0 %4049
      %4051 = vrot.lane.b32.xlu0 %v3673, 120
      %v4052 = vpop.permute.xlu0 %4051
      %4053 = vrot.lane.b32.xlu0 %v3675, 120
      %v4054 = vpop.permute.xlu0 %4053
      %4055 = vrot.lane.b32.xlu0 %v3678, 120
      %v4056 = vpop.permute.xlu0 %4055
      %4057 = vrot.lane.b32.xlu0 %v3680, 120
      %v4058 = vpop.permute.xlu0 %4057
      %4059 = vrot.lane.b32.xlu0 %v3683, 120
      %v4060 = vpop.permute.xlu0 %4059
      %4061 = vrot.lane.b32.xlu0 %v3685, 120
      %v4062 = vpop.permute.xlu0 %4061
      %4063 = vrot.lane.b32.xlu0 %v3688, 120
      %v4064 = vpop.permute.xlu0 %4063
      %4065 = vrot.lane.b32.xlu0 %v3690, 120
      %v4066 = vpop.permute.xlu0 %4065
      %4067 = vrot.lane.b32.xlu0 %v3693, 120
      %v4068 = vpop.permute.xlu0 %4067
      %4069 = vrot.lane.b32.xlu0 %v3695, 120
      %v4070 = vpop.permute.xlu0 %4069
      %4071 = vrot.lane.b32.xlu0 %v3698, 120
      %v4072 = vpop.permute.xlu0 %4071
      %4073 = vrot.lane.b32.xlu0 %v3700, 120
      %v4074 = vpop.permute.xlu0 %4073
      %4075 = vrot.lane.b32.xlu0 %v3703, 120
      %v4076 = vpop.permute.xlu0 %4075
      %4077 = vrot.lane.b32.xlu0 %v3705, 120
      %v4078 = vpop.permute.xlu0 %4077
      %4079 = vrot.lane.b32.xlu0 %v3708, 120
      %v4080 = vpop.permute.xlu0 %4079
      %4081 = vrot.lane.b32.xlu0 %v3710, 120
      %v4082 = vpop.permute.xlu0 %4081
      %4083 = vrot.lane.b32.xlu0 %v3713, 120
      %v4084 = vpop.permute.xlu0 %4083
      %4085 = vrot.lane.b32.xlu0 %v3715, 120
      %v4086 = vpop.permute.xlu0 %4085
      %4087 = vrot.lane.b32.xlu0 %v3718, 120
      %v4088 = vpop.permute.xlu0 %4087
      %4089 = vrot.lane.b32.xlu0 %v3720, 120
      %v4090 = vpop.permute.xlu0 %4089
      %4091 = vrot.lane.b32.xlu0 %v3723, 120
      %v4092 = vpop.permute.xlu0 %4091
      %4093 = vrot.lane.b32.xlu0 %v3725, 120
      %v4094 = vpop.permute.xlu0 %4093
      %4095 = vrot.lane.b32.xlu0 %v3728, 120
      %v4096 = vpop.permute.xlu0 %4095
      %4097 = vrot.lane.b32.xlu0 %v3730, 120
      %v4098 = vpop.permute.xlu0 %4097
      %4099 = vrot.lane.b32.xlu0 %v4040, 32
      %v4100 = vpop.permute.xlu0 %4099
      %4101 = vrot.lane.b32.xlu0 %v4042, 32
      %v4102 = vpop.permute.xlu0 %4101
      %4103 = vrot.lane.b32.xlu0 %v4044, 32
      %v4104 = vpop.permute.xlu0 %4103
      %4105 = vrot.lane.b32.xlu0 %v4046, 32
      %v4106 = vpop.permute.xlu0 %4105
      %4107 = vrot.lane.b32.xlu0 %v4048, 32
      %v4108 = vpop.permute.xlu0 %4107
      %4109 = vrot.lane.b32.xlu0 %v4050, 32
      %v4110 = vpop.permute.xlu0 %4109
      %4111 = vrot.lane.b32.xlu0 %v4052, 32
      %v4112 = vpop.permute.xlu0 %4111
      %4113 = vrot.lane.b32.xlu0 %v4054, 32
      %v4114 = vpop.permute.xlu0 %4113
      %4115 = vrot.lane.b32.xlu0 %v4056, 32
      %v4116 = vpop.permute.xlu0 %4115
      %4117 = vrot.lane.b32.xlu0 %v4058, 32
      %v4118 = vpop.permute.xlu0 %4117
      %4119 = vrot.lane.b32.xlu0 %v4060, 32
      %v4120 = vpop.permute.xlu0 %4119
      %4121 = vrot.lane.b32.xlu0 %v4062, 32
      %v4122 = vpop.permute.xlu0 %4121
      %4123 = vrot.lane.b32.xlu0 %v4064, 32
      %v4124 = vpop.permute.xlu0 %4123
      %4125 = vrot.lane.b32.xlu0 %v4066, 32
      %v4126 = vpop.permute.xlu0 %4125
      %4127 = vrot.lane.b32.xlu0 %v4068, 32
      %v4128 = vpop.permute.xlu0 %4127
      %4129 = vrot.lane.b32.xlu0 %v4070, 32
      %v4130 = vpop.permute.xlu0 %4129
      %4131 = vrot.lane.b32.xlu0 %v4072, 32
      %v4132 = vpop.permute.xlu0 %4131
      %4133 = vrot.lane.b32.xlu0 %v4074, 32
      %v4134 = vpop.permute.xlu0 %4133
      %4135 = vrot.lane.b32.xlu0 %v4076, 32
      %v4136 = vpop.permute.xlu0 %4135
      %4137 = vrot.lane.b32.xlu0 %v4078, 32
      %v4138 = vpop.permute.xlu0 %4137
      %4139 = vrot.lane.b32.xlu0 %v4080, 32
      %v4140 = vpop.permute.xlu0 %4139
      %4141 = vrot.lane.b32.xlu0 %v4082, 32
      %v4142 = vpop.permute.xlu0 %4141
      %4143 = vrot.lane.b32.xlu0 %v4084, 32
      %v4144 = vpop.permute.xlu0 %4143
      %4145 = vrot.lane.b32.xlu0 %v4086, 32
      %v4146 = vpop.permute.xlu0 %4145
      %4147 = vrot.lane.b32.xlu0 %v4088, 32
      %v4148 = vpop.permute.xlu0 %4147
      %4149 = vrot.lane.b32.xlu0 %v4090, 32
      %v4150 = vpop.permute.xlu0 %4149
      %4151 = vrot.lane.b32.xlu0 %v4092, 32
      %v4152 = vpop.permute.xlu0 %4151
      %4153 = vrot.lane.b32.xlu0 %v4094, 32
      %v4154 = vpop.permute.xlu0 %4153
      %4155 = vrot.lane.b32.xlu0 %v4096, 32
      %v4156 = vpop.permute.xlu0 %4155
      %4157 = vrot.lane.b32.xlu0 %v4098, 32
      %v4158 = vpop.permute.xlu0 %4157
      %v4189 = vadd.f32 %v4007, %v1452
      %v4190 = vadd.f32 %v4008, %v1452
      %v4191 = vadd.f32 %v4009, %v4100
      %v4192 = vadd.f32 %v4010, %v4102
      %v4193 = vadd.f32 %v4011, %v4104
      %v4194 = vadd.f32 %v4012, %v4106
      %v4195 = vadd.f32 %v4013, %v4108
      %v4196 = vadd.f32 %v4014, %v4110
      %v4197 = vadd.f32 %v4015, %v4112
      %v4198 = vadd.f32 %v4016, %v4114
      %v4199 = vadd.f32 %v4017, %v4116
      %v4200 = vadd.f32 %v4018, %v4118
      %v4201 = vadd.f32 %v4019, %v4120
      %v4202 = vadd.f32 %v4020, %v4122
      %v4203 = vadd.f32 %v4021, %v4124
      %v4204 = vadd.f32 %v4022, %v4126
      %v4205 = vadd.f32 %v4023, %v4128
      %v4206 = vadd.f32 %v4024, %v4130
      %v4207 = vadd.f32 %v4025, %v4132
      %v4208 = vadd.f32 %v4026, %v4134
      %v4209 = vadd.f32 %v4027, %v4136
      %v4210 = vadd.f32 %v4028, %v4138
      %v4211 = vadd.f32 %v4029, %v4140
      %v4212 = vadd.f32 %v4030, %v4142
      %v4213 = vadd.f32 %v4031, %v4144
      %v4214 = vadd.f32 %v4032, %v4146
      %v4215 = vadd.f32 %v4033, %v4148
      %v4216 = vadd.f32 %v4034, %v4150
      %v4217 = vadd.f32 %v4035, %v4152
      %v4218 = vadd.f32 %v4036, %v4154
      %v4219 = vadd.f32 %v4037, %v4156
      %v4220 = vadd.f32 %v4038, %v4158
      %v4222 = vrot.slane %v3658, 1
      %v4223 = vrot.slane %v3660, 1
      %v4224 = vsel %vm1577, %v4222, %v4223
      %v4225 = vrot.slane %v3663, 1
      %v4226 = vsel %vm1577, %v4223, %v4225
      %v4227 = vrot.slane %v3665, 1
      %v4228 = vsel %vm1577, %v4225, %v4227
      %v4229 = vrot.slane %v3668, 1
      %v4230 = vsel %vm1577, %v4227, %v4229
      %v4231 = vrot.slane %v3670, 1
      %v4232 = vsel %vm1577, %v4229, %v4231
      %v4233 = vrot.slane %v3673, 1
      %v4234 = vsel %vm1577, %v4231, %v4233
      %v4235 = vrot.slane %v3675, 1
      %v4236 = vsel %vm1577, %v4233, %v4235
      %v4237 = vrot.slane %v3678, 1
      %v4238 = vsel %vm1577, %v4235, %v4237
      %v4239 = vrot.slane %v3680, 1
      %v4240 = vsel %vm1577, %v4237, %v4239
      %v4241 = vrot.slane %v3683, 1
      %v4242 = vsel %vm1577, %v4239, %v4241
      %v4243 = vrot.slane %v3685, 1
      %v4244 = vsel %vm1577, %v4241, %v4243
      %v4245 = vrot.slane %v3688, 1
      %v4246 = vsel %vm1577, %v4243, %v4245
      %v4247 = vrot.slane %v3690, 1
      %v4248 = vsel %vm1577, %v4245, %v4247
      %v4249 = vrot.slane %v3693, 1
      %v4250 = vsel %vm1577, %v4247, %v4249
      %v4251 = vrot.slane %v3695, 1
      %v4252 = vsel %vm1577, %v4249, %v4251
      %v4253 = vrot.slane %v3698, 1
      %v4254 = vsel %vm1577, %v4251, %v4253
      %v4255 = vrot.slane %v3700, 1
      %v4256 = vsel %vm1577, %v4253, %v4255
      %v4257 = vrot.slane %v3703, 1
      %v4258 = vsel %vm1577, %v4255, %v4257
      %v4259 = vrot.slane %v3705, 1
      %v4260 = vsel %vm1577, %v4257, %v4259
      %v4261 = vrot.slane %v3708, 1
      %v4262 = vsel %vm1577, %v4259, %v4261
      %v4263 = vrot.slane %v3710, 1
      %v4264 = vsel %vm1577, %v4261, %v4263
      %v4265 = vrot.slane %v3713, 1
      %v4266 = vsel %vm1577, %v4263, %v4265
      %v4267 = vrot.slane %v3715, 1
      %v4268 = vsel %vm1577, %v4265, %v4267
      %v4269 = vrot.slane %v3718, 1
      %v4270 = vsel %vm1577, %v4267, %v4269
      %v4271 = vrot.slane %v3720, 1
      %v4272 = vsel %vm1577, %v4269, %v4271
      %v4273 = vrot.slane %v3723, 1
      %v4274 = vsel %vm1577, %v4271, %v4273
      %v4275 = vrot.slane %v3725, 1
      %v4276 = vsel %vm1577, %v4273, %v4275
      %v4277 = vrot.slane %v3728, 1
      %v4278 = vsel %vm1577, %v4275, %v4277
      %v4279 = vrot.slane %v3730, 1
      %v4280 = vsel %vm1577, %v4277, %v4279
      %v4281 = vrot.slane %v3733, 1
      %v4282 = vsel %vm1577, %v4279, %v4281
      %4283 = vrot.lane.b32.xlu0 %v4222, 112
      %v4284 = vpop.permute.xlu0 %4283
      %4285 = vrot.lane.b32.xlu0 %v4224, 112
      %v4286 = vpop.permute.xlu0 %4285
      %4287 = vrot.lane.b32.xlu0 %v4226, 112
      %v4288 = vpop.permute.xlu0 %4287
      %4289 = vrot.lane.b32.xlu0 %v4228, 112
      %v4290 = vpop.permute.xlu0 %4289
      %4291 = vrot.lane.b32.xlu0 %v4230, 112
      %v4292 = vpop.permute.xlu0 %4291
      %4293 = vrot.lane.b32.xlu0 %v4232, 112
      %v4294 = vpop.permute.xlu0 %4293
      %4295 = vrot.lane.b32.xlu0 %v4234, 112
      %v4296 = vpop.permute.xlu0 %4295
      %4297 = vrot.lane.b32.xlu0 %v4236, 112
      %v4298 = vpop.permute.xlu0 %4297
      %4299 = vrot.lane.b32.xlu0 %v4238, 112
      %v4300 = vpop.permute.xlu0 %4299
      %4301 = vrot.lane.b32.xlu0 %v4240, 112
      %v4302 = vpop.permute.xlu0 %4301
      %4303 = vrot.lane.b32.xlu0 %v4242, 112
      %v4304 = vpop.permute.xlu0 %4303
      %4305 = vrot.lane.b32.xlu0 %v4244, 112
      %v4306 = vpop.permute.xlu0 %4305
      %4307 = vrot.lane.b32.xlu0 %v4246, 112
      %v4308 = vpop.permute.xlu0 %4307
      %4309 = vrot.lane.b32.xlu0 %v4248, 112
      %v4310 = vpop.permute.xlu0 %4309
      %4311 = vrot.lane.b32.xlu0 %v4250, 112
      %v4312 = vpop.permute.xlu0 %4311
      %4313 = vrot.lane.b32.xlu0 %v4252, 112
      %v4314 = vpop.permute.xlu0 %4313
      %4315 = vrot.lane.b32.xlu0 %v4254, 112
      %v4316 = vpop.permute.xlu0 %4315
      %4317 = vrot.lane.b32.xlu0 %v4256, 112
      %v4318 = vpop.permute.xlu0 %4317
      %4319 = vrot.lane.b32.xlu0 %v4258, 112
      %v4320 = vpop.permute.xlu0 %4319
      %4321 = vrot.lane.b32.xlu0 %v4260, 112
      %v4322 = vpop.permute.xlu0 %4321
      %4323 = vrot.lane.b32.xlu0 %v4262, 112
      %v4324 = vpop.permute.xlu0 %4323
      %4325 = vrot.lane.b32.xlu0 %v4264, 112
      %v4326 = vpop.permute.xlu0 %4325
      %4327 = vrot.lane.b32.xlu0 %v4266, 112
      %v4328 = vpop.permute.xlu0 %4327
      %4329 = vrot.lane.b32.xlu0 %v4268, 112
      %v4330 = vpop.permute.xlu0 %4329
      %4331 = vrot.lane.b32.xlu0 %v4270, 112
      %v4332 = vpop.permute.xlu0 %4331
      %4333 = vrot.lane.b32.xlu0 %v4272, 112
      %v4334 = vpop.permute.xlu0 %4333
      %4335 = vrot.lane.b32.xlu0 %v4274, 112
      %v4336 = vpop.permute.xlu0 %4335
      %4337 = vrot.lane.b32.xlu0 %v4276, 112
      %v4338 = vpop.permute.xlu0 %4337
      %4339 = vrot.lane.b32.xlu0 %v4278, 112
      %v4340 = vpop.permute.xlu0 %4339
      %4341 = vrot.lane.b32.xlu0 %v4280, 112
      %v4342 = vpop.permute.xlu0 %4341
      %4343 = vrot.lane.b32.xlu0 %v4282, 112
      %v4344 = vpop.permute.xlu0 %4343
      %v4376 = vsel %vm1577, 0.0, %v4284
      %v4377 = vmul.f32 %v4376, %v1739
      %v4378 = vmul.f32 %v4286, %v1743
      %v4379 = vmul.f32 %v4288, %v1747
      %v4380 = vmul.f32 %v4290, %v1751
      %v4381 = vmul.f32 %v4292, %v1755
      %v4382 = vmul.f32 %v4294, %v1759
      %v4383 = vmul.f32 %v4296, %v1763
      %v4384 = vmul.f32 %v4298, %v1767
      %v4385 = vmul.f32 %v4300, %v1771
      %v4386 = vmul.f32 %v4302, %v1775
      %v4387 = vmul.f32 %v4304, %v1779
      %v4388 = vmul.f32 %v4306, %v1783
      %v4389 = vmul.f32 %v4308, %v1787
      %v4390 = vmul.f32 %v4310, %v1791
      %v4391 = vmul.f32 %v4312, %v1795
      %v4392 = vmul.f32 %v4314, %v1799
      %v4393 = vmul.f32 %v4316, %v1803
      %v4394 = vmul.f32 %v4318, %v1807
      %v4395 = vmul.f32 %v4320, %v1811
      %v4396 = vmul.f32 %v4322, %v1815
      %v4397 = vmul.f32 %v4324, %v1819
      %v4398 = vmul.f32 %v4326, %v1823
      %v4399 = vmul.f32 %v4328, %v1827
      %v4400 = vmul.f32 %v4330, %v1831
      %v4401 = vmul.f32 %v4332, %v1835
      %v4402 = vmul.f32 %v4334, %v1839
      %v4403 = vmul.f32 %v4336, %v1843
      %v4404 = vmul.f32 %v4338, %v1847
      %v4405 = vmul.f32 %v4340, %v1851
      %v4406 = vmul.f32 %v4342, %v1855
      %v4407 = vmul.f32 %v4344, %v1859
      %4439 = vrot.lane.b32.xlu0 %v4377, 32
      %v4440 = vpop.permute.xlu0 %4439
      %4441 = vrot.lane.b32.xlu0 %v4378, 32
      %v4442 = vpop.permute.xlu0 %4441
      %4443 = vrot.lane.b32.xlu0 %v4379, 32
      %v4444 = vpop.permute.xlu0 %4443
      %4445 = vrot.lane.b32.xlu0 %v4380, 32
      %v4446 = vpop.permute.xlu0 %4445
      %4447 = vrot.lane.b32.xlu0 %v4381, 32
      %v4448 = vpop.permute.xlu0 %4447
      %4449 = vrot.lane.b32.xlu0 %v4382, 32
      %v4450 = vpop.permute.xlu0 %4449
      %4451 = vrot.lane.b32.xlu0 %v4383, 32
      %v4452 = vpop.permute.xlu0 %4451
      %4453 = vrot.lane.b32.xlu0 %v4384, 32
      %v4454 = vpop.permute.xlu0 %4453
      %4455 = vrot.lane.b32.xlu0 %v4385, 32
      %v4456 = vpop.permute.xlu0 %4455
      %4457 = vrot.lane.b32.xlu0 %v4386, 32
      %v4458 = vpop.permute.xlu0 %4457
      %4459 = vrot.lane.b32.xlu0 %v4387, 32
      %v4460 = vpop.permute.xlu0 %4459
      %4461 = vrot.lane.b32.xlu0 %v4388, 32
      %v4462 = vpop.permute.xlu0 %4461
      %4463 = vrot.lane.b32.xlu0 %v4389, 32
      %v4464 = vpop.permute.xlu0 %4463
      %4465 = vrot.lane.b32.xlu0 %v4390, 32
      %v4466 = vpop.permute.xlu0 %4465
      %4467 = vrot.lane.b32.xlu0 %v4391, 32
      %v4468 = vpop.permute.xlu0 %4467
      %4469 = vrot.lane.b32.xlu0 %v4392, 32
      %v4470 = vpop.permute.xlu0 %4469
      %4471 = vrot.lane.b32.xlu0 %v4393, 32
      %v4472 = vpop.permute.xlu0 %4471
      %4473 = vrot.lane.b32.xlu0 %v4394, 32
      %v4474 = vpop.permute.xlu0 %4473
      %4475 = vrot.lane.b32.xlu0 %v4395, 32
      %v4476 = vpop.permute.xlu0 %4475
      %4477 = vrot.lane.b32.xlu0 %v4396, 32
      %v4478 = vpop.permute.xlu0 %4477
      %4479 = vrot.lane.b32.xlu0 %v4397, 32
      %v4480 = vpop.permute.xlu0 %4479
      %4481 = vrot.lane.b32.xlu0 %v4398, 32
      %v4482 = vpop.permute.xlu0 %4481
      %4483 = vrot.lane.b32.xlu0 %v4399, 32
      %v4484 = vpop.permute.xlu0 %4483
      %4485 = vrot.lane.b32.xlu0 %v4400, 32
      %v4486 = vpop.permute.xlu0 %4485
      %4487 = vrot.lane.b32.xlu0 %v4401, 32
      %v4488 = vpop.permute.xlu0 %4487
      %4489 = vrot.lane.b32.xlu0 %v4402, 32
      %v4490 = vpop.permute.xlu0 %4489
      %4491 = vrot.lane.b32.xlu0 %v4403, 32
      %v4492 = vpop.permute.xlu0 %4491
      %4493 = vrot.lane.b32.xlu0 %v4404, 32
      %v4494 = vpop.permute.xlu0 %4493
      %4495 = vrot.lane.b32.xlu0 %v4405, 32
      %v4496 = vpop.permute.xlu0 %4495
      %4497 = vrot.lane.b32.xlu0 %v4406, 32
      %v4498 = vpop.permute.xlu0 %4497
      %4499 = vrot.lane.b32.xlu0 %v4407, 32
      %v4500 = vpop.permute.xlu0 %4499
      %v4532 = vadd.f32 %v4189, %v1926
      %v4533 = vadd.f32 %v4190, %v4440
      %v4534 = vadd.f32 %v4191, %v4442
      %v4535 = vadd.f32 %v4192, %v4444
      %v4536 = vadd.f32 %v4193, %v4446
      %v4537 = vadd.f32 %v4194, %v4448
      %v4538 = vadd.f32 %v4195, %v4450
      %v4539 = vadd.f32 %v4196, %v4452
      %v4540 = vadd.f32 %v4197, %v4454
      %v4541 = vadd.f32 %v4198, %v4456
      %v4542 = vadd.f32 %v4199, %v4458
      %v4543 = vadd.f32 %v4200, %v4460
      %v4544 = vadd.f32 %v4201, %v4462
      %v4545 = vadd.f32 %v4202, %v4464
      %v4546 = vadd.f32 %v4203, %v4466
      %v4547 = vadd.f32 %v4204, %v4468
      %v4548 = vadd.f32 %v4205, %v4470
      %v4549 = vadd.f32 %v4206, %v4472
      %v4550 = vadd.f32 %v4207, %v4474
      %v4551 = vadd.f32 %v4208, %v4476
      %v4552 = vadd.f32 %v4209, %v4478
      %v4553 = vadd.f32 %v4210, %v4480
      %v4554 = vadd.f32 %v4211, %v4482
      %v4555 = vadd.f32 %v4212, %v4484
      %v4556 = vadd.f32 %v4213, %v4486
      %v4557 = vadd.f32 %v4214, %v4488
      %v4558 = vadd.f32 %v4215, %v4490
      %v4559 = vadd.f32 %v4216, %v4492
      %v4560 = vadd.f32 %v4217, %v4494
      %v4561 = vadd.f32 %v4218, %v4496
      %v4562 = vadd.f32 %v4219, %v4498
      %v4563 = vadd.f32 %v4220, %v4500
      %v4565 = vrot.slane %v3733, 7
      %v4566 = vsel %vm947, %v3824, %v4565
      %v4567 = vrot.slane %v3735, 7
      %v4568 = vsel %vm947, %v4565, %v4567
      %4569 = vrot.lane.b32.xlu0 %v3767, 104
      %v4570 = vpop.permute.xlu0 %4569
      %4571 = vrot.lane.b32.xlu0 %v3769, 104
      %v4572 = vpop.permute.xlu0 %4571
      %4573 = vrot.lane.b32.xlu0 %v3771, 104
      %v4574 = vpop.permute.xlu0 %4573
      %4575 = vrot.lane.b32.xlu0 %v3773, 104
      %v4576 = vpop.permute.xlu0 %4575
      %4577 = vrot.lane.b32.xlu0 %v3775, 104
      %v4578 = vpop.permute.xlu0 %4577
      %4579 = vrot.lane.b32.xlu0 %v3777, 104
      %v4580 = vpop.permute.xlu0 %4579
      %4581 = vrot.lane.b32.xlu0 %v3779, 104
      %v4582 = vpop.permute.xlu0 %4581
      %4583 = vrot.lane.b32.xlu0 %v3781, 104
      %v4584 = vpop.permute.xlu0 %4583
      %4585 = vrot.lane.b32.xlu0 %v3783, 104
      %v4586 = vpop.permute.xlu0 %4585
      %4587 = vrot.lane.b32.xlu0 %v3785, 104
      %v4588 = vpop.permute.xlu0 %4587
      %4589 = vrot.lane.b32.xlu0 %v3787, 104
      %v4590 = vpop.permute.xlu0 %4589
      %4591 = vrot.lane.b32.xlu0 %v3789, 104
      %v4592 = vpop.permute.xlu0 %4591
      %4593 = vrot.lane.b32.xlu0 %v3791, 104
      %v4594 = vpop.permute.xlu0 %4593
      %4595 = vrot.lane.b32.xlu0 %v3793, 104
      %v4596 = vpop.permute.xlu0 %4595
      %4597 = vrot.lane.b32.xlu0 %v3795, 104
      %v4598 = vpop.permute.xlu0 %4597
      %4599 = vrot.lane.b32.xlu0 %v3797, 104
      %v4600 = vpop.permute.xlu0 %4599
      %4601 = vrot.lane.b32.xlu0 %v3799, 104
      %v4602 = vpop.permute.xlu0 %4601
      %4603 = vrot.lane.b32.xlu0 %v3801, 104
      %v4604 = vpop.permute.xlu0 %4603
      %4605 = vrot.lane.b32.xlu0 %v3803, 104
      %v4606 = vpop.permute.xlu0 %4605
      %4607 = vrot.lane.b32.xlu0 %v3805, 104
      %v4608 = vpop.permute.xlu0 %4607
      %4609 = vrot.lane.b32.xlu0 %v3807, 104
      %v4610 = vpop.permute.xlu0 %4609
      %4611 = vrot.lane.b32.xlu0 %v3809, 104
      %v4612 = vpop.permute.xlu0 %4611
      %4613 = vrot.lane.b32.xlu0 %v3811, 104
      %v4614 = vpop.permute.xlu0 %4613
      %4615 = vrot.lane.b32.xlu0 %v3813, 104
      %v4616 = vpop.permute.xlu0 %4615
      %4617 = vrot.lane.b32.xlu0 %v3815, 104
      %v4618 = vpop.permute.xlu0 %4617
      %4619 = vrot.lane.b32.xlu0 %v3817, 104
      %v4620 = vpop.permute.xlu0 %4619
      %4621 = vrot.lane.b32.xlu0 %v3819, 104
      %v4622 = vpop.permute.xlu0 %4621
      %4623 = vrot.lane.b32.xlu0 %v3821, 104
      %v4624 = vpop.permute.xlu0 %4623
      %4625 = vrot.lane.b32.xlu0 %v3823, 104
      %v4626 = vpop.permute.xlu0 %4625
      %4627 = vrot.lane.b32.xlu0 %v3825, 104
      %v4628 = vpop.permute.xlu0 %4627
      %4629 = vrot.lane.b32.xlu0 %v4566, 104
      %v4630 = vpop.permute.xlu0 %4629
      %4631 = vrot.lane.b32.xlu0 %v4568, 104
      %v4632 = vpop.permute.xlu0 %4631
      %v4665 = vsel %vm947, 0.0, %v4570
      %v4666 = vmul.f32 %v4665, %v1041
      %v4667 = vmul.f32 %v4572, %v1046
      %v4668 = vmul.f32 %v4574, %v1051
      %v4669 = vmul.f32 %v4576, %v1056
      %v4670 = vmul.f32 %v4578, %v1061
      %v4671 = vmul.f32 %v4580, %v1066
      %v4672 = vmul.f32 %v4582, %v1071
      %v4673 = vmul.f32 %v4584, %v1076
      %v4674 = vmul.f32 %v4586, %v1081
      %v4675 = vmul.f32 %v4588, %v1086
      %v4676 = vmul.f32 %v4590, %v1091
      %v4677 = vmul.f32 %v4592, %v1096
      %v4678 = vmul.f32 %v4594, %v1101
      %v4679 = vmul.f32 %v4596, %v1106
      %v4680 = vmul.f32 %v4598, %v1111
      %v4681 = vmul.f32 %v4600, %v1116
      %v4682 = vmul.f32 %v4602, %v1121
      %v4683 = vmul.f32 %v4604, %v1126
      %v4684 = vmul.f32 %v4606, %v1131
      %v4685 = vmul.f32 %v4608, %v1136
      %v4686 = vmul.f32 %v4610, %v1141
      %v4687 = vmul.f32 %v4612, %v1146
      %v4688 = vmul.f32 %v4614, %v1151
      %v4689 = vmul.f32 %v4616, %v1156
      %v4690 = vmul.f32 %v4618, %v1161
      %v4691 = vmul.f32 %v4620, %v1166
      %v4692 = vmul.f32 %v4622, %v1171
      %v4693 = vmul.f32 %v4624, %v1176
      %v4694 = vmul.f32 %v4626, %v1181
      %v4695 = vmul.f32 %v4628, %v1186
      %v4696 = vmul.f32 %v4630, %v1191
      %v4697 = vmul.f32 %v4632, %v1196
      %4730 = vrot.lane.b32.xlu0 %v4666, 32
      %v4731 = vpop.permute.xlu0 %4730
      %4732 = vrot.lane.b32.xlu0 %v4667, 32
      %v4733 = vpop.permute.xlu0 %4732
      %4734 = vrot.lane.b32.xlu0 %v4668, 32
      %v4735 = vpop.permute.xlu0 %4734
      %4736 = vrot.lane.b32.xlu0 %v4669, 32
      %v4737 = vpop.permute.xlu0 %4736
      %4738 = vrot.lane.b32.xlu0 %v4670, 32
      %v4739 = vpop.permute.xlu0 %4738
      %4740 = vrot.lane.b32.xlu0 %v4671, 32
      %v4741 = vpop.permute.xlu0 %4740
      %4742 = vrot.lane.b32.xlu0 %v4672, 32
      %v4743 = vpop.permute.xlu0 %4742
      %4744 = vrot.lane.b32.xlu0 %v4673, 32
      %v4745 = vpop.permute.xlu0 %4744
      %4746 = vrot.lane.b32.xlu0 %v4674, 32
      %v4747 = vpop.permute.xlu0 %4746
      %4748 = vrot.lane.b32.xlu0 %v4675, 32
      %v4749 = vpop.permute.xlu0 %4748
      %4750 = vrot.lane.b32.xlu0 %v4676, 32
      %v4751 = vpop.permute.xlu0 %4750
      %4752 = vrot.lane.b32.xlu0 %v4677, 32
      %v4753 = vpop.permute.xlu0 %4752
      %4754 = vrot.lane.b32.xlu0 %v4678, 32
      %v4755 = vpop.permute.xlu0 %4754
      %4756 = vrot.lane.b32.xlu0 %v4679, 32
      %v4757 = vpop.permute.xlu0 %4756
      %4758 = vrot.lane.b32.xlu0 %v4680, 32
      %v4759 = vpop.permute.xlu0 %4758
      %4760 = vrot.lane.b32.xlu0 %v4681, 32
      %v4761 = vpop.permute.xlu0 %4760
      %4762 = vrot.lane.b32.xlu0 %v4682, 32
      %v4763 = vpop.permute.xlu0 %4762
      %4764 = vrot.lane.b32.xlu0 %v4683, 32
      %v4765 = vpop.permute.xlu0 %4764
      %4766 = vrot.lane.b32.xlu0 %v4684, 32
      %v4767 = vpop.permute.xlu0 %4766
      %4768 = vrot.lane.b32.xlu0 %v4685, 32
      %v4769 = vpop.permute.xlu0 %4768
      %4770 = vrot.lane.b32.xlu0 %v4686, 32
      %v4771 = vpop.permute.xlu0 %4770
      %4772 = vrot.lane.b32.xlu0 %v4687, 32
      %v4773 = vpop.permute.xlu0 %4772
      %4774 = vrot.lane.b32.xlu0 %v4688, 32
      %v4775 = vpop.permute.xlu0 %4774
      %4776 = vrot.lane.b32.xlu0 %v4689, 32
      %v4777 = vpop.permute.xlu0 %4776
      %4778 = vrot.lane.b32.xlu0 %v4690, 32
      %v4779 = vpop.permute.xlu0 %4778
      %4780 = vrot.lane.b32.xlu0 %v4691, 32
      %v4781 = vpop.permute.xlu0 %4780
      %4782 = vrot.lane.b32.xlu0 %v4692, 32
      %v4783 = vpop.permute.xlu0 %4782
      %4784 = vrot.lane.b32.xlu0 %v4693, 32
      %v4785 = vpop.permute.xlu0 %4784
      %4786 = vrot.lane.b32.xlu0 %v4694, 32
      %v4787 = vpop.permute.xlu0 %4786
      %4788 = vrot.lane.b32.xlu0 %v4695, 32
      %v4789 = vpop.permute.xlu0 %4788
      %4790 = vrot.lane.b32.xlu0 %v4696, 32
      %v4791 = vpop.permute.xlu0 %4790
      %4792 = vrot.lane.b32.xlu0 %v4697, 32
      %v4793 = vpop.permute.xlu0 %4792
      %v4826 = vadd.f32 %v4532, %v4731
      %v4827 = vadd.f32 %v4533, %v4733
      %v4828 = vadd.f32 %v4534, %v4735
      %v4829 = vadd.f32 %v4535, %v4737
      %v4830 = vadd.f32 %v4536, %v4739
      %v4831 = vadd.f32 %v4537, %v4741
      %v4832 = vadd.f32 %v4538, %v4743
      %v4833 = vadd.f32 %v4539, %v4745
      %v4834 = vadd.f32 %v4540, %v4747
      %v4835 = vadd.f32 %v4541, %v4749
      %v4836 = vadd.f32 %v4542, %v4751
      %v4837 = vadd.f32 %v4543, %v4753
      %v4838 = vadd.f32 %v4544, %v4755
      %v4839 = vadd.f32 %v4545, %v4757
      %v4840 = vadd.f32 %v4546, %v4759
      %v4841 = vadd.f32 %v4547, %v4761
      %v4842 = vadd.f32 %v4548, %v4763
      %v4843 = vadd.f32 %v4549, %v4765
      %v4844 = vadd.f32 %v4550, %v4767
      %v4845 = vadd.f32 %v4551, %v4769
      %v4846 = vadd.f32 %v4552, %v4771
      %v4847 = vadd.f32 %v4553, %v4773
      %v4848 = vadd.f32 %v4554, %v4775
      %v4849 = vadd.f32 %v4555, %v4777
      %v4850 = vadd.f32 %v4556, %v4779
      %v4851 = vadd.f32 %v4557, %v4781
      %v4852 = vadd.f32 %v4558, %v4783
      %v4853 = vadd.f32 %v4559, %v4785
      %v4854 = vadd.f32 %v4560, %v4787
      %v4855 = vadd.f32 %v4561, %v4789
      %v4856 = vadd.f32 %v4562, %v4791
      %v4857 = vadd.f32 %v4563, %v4793
      %v4858 = vrot.slane %v3735, 1
      %v4859 = vsel %vm1577, %v4281, %v4858
      %v4892 = vsel %vm1577, %v4858, 0.0
      %v4893 = vmul.f32 %v4224, %v1735
      %v4894 = vmul.f32 %v4226, %v1739
      %v4895 = vmul.f32 %v4228, %v1743
      %v4896 = vmul.f32 %v4230, %v1747
      %v4897 = vmul.f32 %v4232, %v1751
      %v4898 = vmul.f32 %v4234, %v1755
      %v4899 = vmul.f32 %v4236, %v1759
      %v4900 = vmul.f32 %v4238, %v1763
      %v4901 = vmul.f32 %v4240, %v1767
      %v4902 = vmul.f32 %v4242, %v1771
      %v4903 = vmul.f32 %v4244, %v1775
      %v4904 = vmul.f32 %v4246, %v1779
      %v4905 = vmul.f32 %v4248, %v1783
      %v4906 = vmul.f32 %v4250, %v1787
      %v4907 = vmul.f32 %v4252, %v1791
      %v4908 = vmul.f32 %v4254, %v1795
      %v4909 = vmul.f32 %v4256, %v1799
      %v4910 = vmul.f32 %v4258, %v1803
      %v4911 = vmul.f32 %v4260, %v1807
      %v4912 = vmul.f32 %v4262, %v1811
      %v4913 = vmul.f32 %v4264, %v1815
      %v4914 = vmul.f32 %v4266, %v1819
      %v4915 = vmul.f32 %v4268, %v1823
      %v4916 = vmul.f32 %v4270, %v1827
      %v4917 = vmul.f32 %v4272, %v1831
      %v4918 = vmul.f32 %v4274, %v1835
      %v4919 = vmul.f32 %v4276, %v1839
      %v4920 = vmul.f32 %v4278, %v1843
      %v4921 = vmul.f32 %v4280, %v1847
      %v4922 = vmul.f32 %v4282, %v1851
      %v4923 = vmul.f32 %v4859, %v1855
      %v4924 = vmul.f32 %v4892, %v1859
      %4957 = vrot.lane.b32.xlu0 %v4893, 120
      %v4958 = vpop.permute.xlu0 %4957
      %4959 = vrot.lane.b32.xlu0 %v4894, 120
      %v4960 = vpop.permute.xlu0 %4959
      %4961 = vrot.lane.b32.xlu0 %v4895, 120
      %v4962 = vpop.permute.xlu0 %4961
      %4963 = vrot.lane.b32.xlu0 %v4896, 120
      %v4964 = vpop.permute.xlu0 %4963
      %4965 = vrot.lane.b32.xlu0 %v4897, 120
      %v4966 = vpop.permute.xlu0 %4965
      %4967 = vrot.lane.b32.xlu0 %v4898, 120
      %v4968 = vpop.permute.xlu0 %4967
      %4969 = vrot.lane.b32.xlu0 %v4899, 120
      %v4970 = vpop.permute.xlu0 %4969
      %4971 = vrot.lane.b32.xlu0 %v4900, 120
      %v4972 = vpop.permute.xlu0 %4971
      %4973 = vrot.lane.b32.xlu0 %v4901, 120
      %v4974 = vpop.permute.xlu0 %4973
      %4975 = vrot.lane.b32.xlu0 %v4902, 120
      %v4976 = vpop.permute.xlu0 %4975
      %4977 = vrot.lane.b32.xlu0 %v4903, 120
      %v4978 = vpop.permute.xlu0 %4977
      %4979 = vrot.lane.b32.xlu0 %v4904, 120
      %v4980 = vpop.permute.xlu0 %4979
      %4981 = vrot.lane.b32.xlu0 %v4905, 120
      %v4982 = vpop.permute.xlu0 %4981
      %4983 = vrot.lane.b32.xlu0 %v4906, 120
      %v4984 = vpop.permute.xlu0 %4983
      %4985 = vrot.lane.b32.xlu0 %v4907, 120
      %v4986 = vpop.permute.xlu0 %4985
      %4987 = vrot.lane.b32.xlu0 %v4908, 120
      %v4988 = vpop.permute.xlu0 %4987
      %4989 = vrot.lane.b32.xlu0 %v4909, 120
      %v4990 = vpop.permute.xlu0 %4989
      %4991 = vrot.lane.b32.xlu0 %v4910, 120
      %v4992 = vpop.permute.xlu0 %4991
      %4993 = vrot.lane.b32.xlu0 %v4911, 120
      %v4994 = vpop.permute.xlu0 %4993
      %4995 = vrot.lane.b32.xlu0 %v4912, 120
      %v4996 = vpop.permute.xlu0 %4995
      %4997 = vrot.lane.b32.xlu0 %v4913, 120
      %v4998 = vpop.permute.xlu0 %4997
      %4999 = vrot.lane.b32.xlu0 %v4914, 120
      %v5000 = vpop.permute.xlu0 %4999
      %5001 = vrot.lane.b32.xlu0 %v4915, 120
      %v5002 = vpop.permute.xlu0 %5001
      %5003 = vrot.lane.b32.xlu0 %v4916, 120
      %v5004 = vpop.permute.xlu0 %5003
      %5005 = vrot.lane.b32.xlu0 %v4917, 120
      %v5006 = vpop.permute.xlu0 %5005
      %5007 = vrot.lane.b32.xlu0 %v4918, 120
      %v5008 = vpop.permute.xlu0 %5007
      %5009 = vrot.lane.b32.xlu0 %v4919, 120
      %v5010 = vpop.permute.xlu0 %5009
      %5011 = vrot.lane.b32.xlu0 %v4920, 120
      %v5012 = vpop.permute.xlu0 %5011
      %5013 = vrot.lane.b32.xlu0 %v4921, 120
      %v5014 = vpop.permute.xlu0 %5013
      %5015 = vrot.lane.b32.xlu0 %v4922, 120
      %v5016 = vpop.permute.xlu0 %5015
      %5017 = vrot.lane.b32.xlu0 %v4923, 120
      %v5018 = vpop.permute.xlu0 %5017
      %5019 = vrot.lane.b32.xlu0 %v4924, 120
      %v5020 = vpop.permute.xlu0 %5019
      %v5053 = vadd.f32 %v4826, %v4958
      %v5054 = vadd.f32 %v4827, %v4960
      %v5055 = vadd.f32 %v4828, %v4962
      %v5056 = vadd.f32 %v4829, %v4964
      %v5057 = vadd.f32 %v4830, %v4966
      %v5058 = vadd.f32 %v4831, %v4968
      %v5059 = vadd.f32 %v4832, %v4970
      %v5060 = vadd.f32 %v4833, %v4972
      %v5061 = vadd.f32 %v4834, %v4974
      %v5062 = vadd.f32 %v4835, %v4976
      %v5063 = vadd.f32 %v4836, %v4978
      %v5064 = vadd.f32 %v4837, %v4980
      %v5065 = vadd.f32 %v4838, %v4982
      %v5066 = vadd.f32 %v4839, %v4984
      %v5067 = vadd.f32 %v4840, %v4986
      %v5068 = vadd.f32 %v4841, %v4988
      %v5069 = vadd.f32 %v4842, %v4990
      %v5070 = vadd.f32 %v4843, %v4992
      %v5071 = vadd.f32 %v4844, %v4994
      %v5072 = vadd.f32 %v4845, %v4996
      %v5073 = vadd.f32 %v4846, %v4998
      %v5074 = vadd.f32 %v4847, %v5000
      %v5075 = vadd.f32 %v4848, %v5002
      %v5076 = vadd.f32 %v4849, %v5004
      %v5077 = vadd.f32 %v4850, %v5006
      %v5078 = vadd.f32 %v4851, %v5008
      %v5079 = vadd.f32 %v4852, %v5010
      %v5080 = vadd.f32 %v4853, %v5012
      %v5081 = vadd.f32 %v4854, %v5014
      %v5082 = vadd.f32 %v4855, %v5016
      %v5083 = vadd.f32 %v4856, %v5018
      %v5084 = vadd.f32 %v4857, %v5020
      %v5088 = vsel %vm947, %v4567, 0.0
      %v5089 = vmul.f32 %v3771, %v1041
      %v5090 = vmul.f32 %v3773, %v1046
      %v5091 = vmul.f32 %v3775, %v1051
      %v5092 = vmul.f32 %v3777, %v1056
      %v5093 = vmul.f32 %v3779, %v1061
      %v5094 = vmul.f32 %v3781, %v1066
      %v5095 = vmul.f32 %v3783, %v1071
      %v5096 = vmul.f32 %v3785, %v1076
      %v5097 = vmul.f32 %v3787, %v1081
      %v5098 = vmul.f32 %v3789, %v1086
      %v5099 = vmul.f32 %v3791, %v1091
      %v5100 = vmul.f32 %v3793, %v1096
      %v5101 = vmul.f32 %v3795, %v1101
      %v5102 = vmul.f32 %v3797, %v1106
      %v5103 = vmul.f32 %v3799, %v1111
      %v5104 = vmul.f32 %v3801, %v1116
      %v5105 = vmul.f32 %v3803, %v1121
      %v5106 = vmul.f32 %v3805, %v1126
      %v5107 = vmul.f32 %v3807, %v1131
      %v5108 = vmul.f32 %v3809, %v1136
      %v5109 = vmul.f32 %v3811, %v1141
      %v5110 = vmul.f32 %v3813, %v1146
      %v5111 = vmul.f32 %v3815, %v1151
      %v5112 = vmul.f32 %v3817, %v1156
      %v5113 = vmul.f32 %v3819, %v1161
      %v5114 = vmul.f32 %v3821, %v1166
      %v5115 = vmul.f32 %v3823, %v1171
      %v5116 = vmul.f32 %v3825, %v1176
      %v5117 = vmul.f32 %v4566, %v1181
      %v5118 = vmul.f32 %v4568, %v1186
      %v5119 = vmul.f32 %v5088, %v1191
      %5151 = vrot.lane.b32.xlu0 %v5089, 112
      %v5152 = vpop.permute.xlu0 %5151
      %5153 = vrot.lane.b32.xlu0 %v5090, 112
      %v5154 = vpop.permute.xlu0 %5153
      %5155 = vrot.lane.b32.xlu0 %v5091, 112
      %v5156 = vpop.permute.xlu0 %5155
      %5157 = vrot.lane.b32.xlu0 %v5092, 112
      %v5158 = vpop.permute.xlu0 %5157
      %5159 = vrot.lane.b32.xlu0 %v5093, 112
      %v5160 = vpop.permute.xlu0 %5159
      %5161 = vrot.lane.b32.xlu0 %v5094, 112
      %v5162 = vpop.permute.xlu0 %5161
      %5163 = vrot.lane.b32.xlu0 %v5095, 112
      %v5164 = vpop.permute.xlu0 %5163
      %5165 = vrot.lane.b32.xlu0 %v5096, 112
      %v5166 = vpop.permute.xlu0 %5165
      %5167 = vrot.lane.b32.xlu0 %v5097, 112
      %v5168 = vpop.permute.xlu0 %5167
      %5169 = vrot.lane.b32.xlu0 %v5098, 112
      %v5170 = vpop.permute.xlu0 %5169
      %5171 = vrot.lane.b32.xlu0 %v5099, 112
      %v5172 = vpop.permute.xlu0 %5171
      %5173 = vrot.lane.b32.xlu0 %v5100, 112
      %v5174 = vpop.permute.xlu0 %5173
      %5175 = vrot.lane.b32.xlu0 %v5101, 112
      %v5176 = vpop.permute.xlu0 %5175
      %5177 = vrot.lane.b32.xlu0 %v5102, 112
      %v5178 = vpop.permute.xlu0 %5177
      %5179 = vrot.lane.b32.xlu0 %v5103, 112
      %v5180 = vpop.permute.xlu0 %5179
      %5181 = vrot.lane.b32.xlu0 %v5104, 112
      %v5182 = vpop.permute.xlu0 %5181
      %5183 = vrot.lane.b32.xlu0 %v5105, 112
      %v5184 = vpop.permute.xlu0 %5183
      %5185 = vrot.lane.b32.xlu0 %v5106, 112
      %v5186 = vpop.permute.xlu0 %5185
      %5187 = vrot.lane.b32.xlu0 %v5107, 112
      %v5188 = vpop.permute.xlu0 %5187
      %5189 = vrot.lane.b32.xlu0 %v5108, 112
      %v5190 = vpop.permute.xlu0 %5189
      %5191 = vrot.lane.b32.xlu0 %v5109, 112
      %v5192 = vpop.permute.xlu0 %5191
      %5193 = vrot.lane.b32.xlu0 %v5110, 112
      %v5194 = vpop.permute.xlu0 %5193
      %5195 = vrot.lane.b32.xlu0 %v5111, 112
      %v5196 = vpop.permute.xlu0 %5195
      %5197 = vrot.lane.b32.xlu0 %v5112, 112
      %v5198 = vpop.permute.xlu0 %5197
      %5199 = vrot.lane.b32.xlu0 %v5113, 112
      %v5200 = vpop.permute.xlu0 %5199
      %5201 = vrot.lane.b32.xlu0 %v5114, 112
      %v5202 = vpop.permute.xlu0 %5201
      %5203 = vrot.lane.b32.xlu0 %v5115, 112
      %v5204 = vpop.permute.xlu0 %5203
      %5205 = vrot.lane.b32.xlu0 %v5116, 112
      %v5206 = vpop.permute.xlu0 %5205
      %5207 = vrot.lane.b32.xlu0 %v5117, 112
      %v5208 = vpop.permute.xlu0 %5207
      %5209 = vrot.lane.b32.xlu0 %v5118, 112
      %v5210 = vpop.permute.xlu0 %5209
      %5211 = vrot.lane.b32.xlu0 %v5119, 112
      %v5212 = vpop.permute.xlu0 %5211
      %v5244 = vadd.f32 %v5053, %v5152
      %v5245 = vadd.f32 %v5054, %v5154
      %v5246 = vadd.f32 %v5055, %v5156
      %v5247 = vadd.f32 %v5056, %v5158
      %v5248 = vadd.f32 %v5057, %v5160
      %v5249 = vadd.f32 %v5058, %v5162
      %v5250 = vadd.f32 %v5059, %v5164
      %v5251 = vadd.f32 %v5060, %v5166
      %v5252 = vadd.f32 %v5061, %v5168
      %v5253 = vadd.f32 %v5062, %v5170
      %v5254 = vadd.f32 %v5063, %v5172
      %v5255 = vadd.f32 %v5064, %v5174
      %v5256 = vadd.f32 %v5065, %v5176
      %v5257 = vadd.f32 %v5066, %v5178
      %v5258 = vadd.f32 %v5067, %v5180
      %v5259 = vadd.f32 %v5068, %v5182
      %v5260 = vadd.f32 %v5069, %v5184
      %v5261 = vadd.f32 %v5070, %v5186
      %v5262 = vadd.f32 %v5071, %v5188
      %v5263 = vadd.f32 %v5072, %v5190
      %v5264 = vadd.f32 %v5073, %v5192
      %v5265 = vadd.f32 %v5074, %v5194
      %v5266 = vadd.f32 %v5075, %v5196
      %v5267 = vadd.f32 %v5076, %v5198
      %v5268 = vadd.f32 %v5077, %v5200
      %v5269 = vadd.f32 %v5078, %v5202
      %v5270 = vadd.f32 %v5079, %v5204
      %v5271 = vadd.f32 %v5080, %v5206
      %v5272 = vadd.f32 %v5081, %v5208
      %v5273 = vadd.f32 %v5082, %v5210
      %v5274 = vadd.f32 %v5083, %v5212
      %v5275 = vadd.f32 %v5084, %v2705
      %5276 = vrot.lane.b32.xlu0 %v3663, 104
      %v5277 = vpop.permute.xlu0 %5276
      %5278 = vrot.lane.b32.xlu0 %v3665, 104
      %v5279 = vpop.permute.xlu0 %5278
      %5280 = vrot.lane.b32.xlu0 %v3668, 104
      %v5281 = vpop.permute.xlu0 %5280
      %5282 = vrot.lane.b32.xlu0 %v3670, 104
      %v5283 = vpop.permute.xlu0 %5282
      %5284 = vrot.lane.b32.xlu0 %v3673, 104
      %v5285 = vpop.permute.xlu0 %5284
      %5286 = vrot.lane.b32.xlu0 %v3675, 104
      %v5287 = vpop.permute.xlu0 %5286
      %5288 = vrot.lane.b32.xlu0 %v3678, 104
      %v5289 = vpop.permute.xlu0 %5288
      %5290 = vrot.lane.b32.xlu0 %v3680, 104
      %v5291 = vpop.permute.xlu0 %5290
      %5292 = vrot.lane.b32.xlu0 %v3683, 104
      %v5293 = vpop.permute.xlu0 %5292
      %5294 = vrot.lane.b32.xlu0 %v3685, 104
      %v5295 = vpop.permute.xlu0 %5294
      %5296 = vrot.lane.b32.xlu0 %v3688, 104
      %v5297 = vpop.permute.xlu0 %5296
      %5298 = vrot.lane.b32.xlu0 %v3690, 104
      %v5299 = vpop.permute.xlu0 %5298
      %5300 = vrot.lane.b32.xlu0 %v3693, 104
      %v5301 = vpop.permute.xlu0 %5300
      %5302 = vrot.lane.b32.xlu0 %v3695, 104
      %v5303 = vpop.permute.xlu0 %5302
      %5304 = vrot.lane.b32.xlu0 %v3698, 104
      %v5305 = vpop.permute.xlu0 %5304
      %5306 = vrot.lane.b32.xlu0 %v3700, 104
      %v5307 = vpop.permute.xlu0 %5306
      %5308 = vrot.lane.b32.xlu0 %v3703, 104
      %v5309 = vpop.permute.xlu0 %5308
      %5310 = vrot.lane.b32.xlu0 %v3705, 104
      %v5311 = vpop.permute.xlu0 %5310
      %5312 = vrot.lane.b32.xlu0 %v3708, 104
      %v5313 = vpop.permute.xlu0 %5312
      %5314 = vrot.lane.b32.xlu0 %v3710, 104
      %v5315 = vpop.permute.xlu0 %5314
      %5316 = vrot.lane.b32.xlu0 %v3713, 104
      %v5317 = vpop.permute.xlu0 %5316
      %5318 = vrot.lane.b32.xlu0 %v3715, 104
      %v5319 = vpop.permute.xlu0 %5318
      %5320 = vrot.lane.b32.xlu0 %v3718, 104
      %v5321 = vpop.permute.xlu0 %5320
      %5322 = vrot.lane.b32.xlu0 %v3720, 104
      %v5323 = vpop.permute.xlu0 %5322
      %5324 = vrot.lane.b32.xlu0 %v3723, 104
      %v5325 = vpop.permute.xlu0 %5324
      %5326 = vrot.lane.b32.xlu0 %v3725, 104
      %v5327 = vpop.permute.xlu0 %5326
      %5328 = vrot.lane.b32.xlu0 %v3728, 104
      %v5329 = vpop.permute.xlu0 %5328
      %5330 = vrot.lane.b32.xlu0 %v3730, 104
      %v5331 = vpop.permute.xlu0 %5330
      %5332 = vrot.lane.b32.xlu0 %v3733, 104
      %v5333 = vpop.permute.xlu0 %5332
      %5334 = vrot.lane.b32.xlu0 %v3735, 104
      %v5335 = vpop.permute.xlu0 %5334
      %v5366 = vadd.f32 %v5244, %v5277
      %v5367 = vadd.f32 %v5245, %v5279
      %v5368 = vadd.f32 %v5246, %v5281
      %v5369 = vadd.f32 %v5247, %v5283
      %v5370 = vadd.f32 %v5248, %v5285
      %v5371 = vadd.f32 %v5249, %v5287
      %v5372 = vadd.f32 %v5250, %v5289
      %v5373 = vadd.f32 %v5251, %v5291
      %v5374 = vadd.f32 %v5252, %v5293
      %v5375 = vadd.f32 %v5253, %v5295
      %v5376 = vadd.f32 %v5254, %v5297
      %v5377 = vadd.f32 %v5255, %v5299
      %v5378 = vadd.f32 %v5256, %v5301
      %v5379 = vadd.f32 %v5257, %v5303
      %v5380 = vadd.f32 %v5258, %v5305
      %v5381 = vadd.f32 %v5259, %v5307
      %v5382 = vadd.f32 %v5260, %v5309
      %v5383 = vadd.f32 %v5261, %v5311
      %v5384 = vadd.f32 %v5262, %v5313
      %v5385 = vadd.f32 %v5263, %v5315
      %v5386 = vadd.f32 %v5264, %v5317
      %v5387 = vadd.f32 %v5265, %v5319
      %v5388 = vadd.f32 %v5266, %v5321
      %v5389 = vadd.f32 %v5267, %v5323
      %v5390 = vadd.f32 %v5268, %v5325
      %v5391 = vadd.f32 %v5269, %v5327
      %v5392 = vadd.f32 %v5270, %v5329
      %v5393 = vadd.f32 %v5271, %v5331
      %v5394 = vadd.f32 %v5272, %v5333
      %v5395 = vadd.f32 %v5273, %v5335
      %v5396 = vadd.f32 %v5274, %v2831
      %v5397 = vadd.f32 %v5275, %v2831
      %v5398 = vmul.f32 %v4228, %v1735
      %v5399 = vmul.f32 %v4230, %v1739
      %v5400 = vmul.f32 %v4232, %v1743
      %v5401 = vmul.f32 %v4234, %v1747
      %v5402 = vmul.f32 %v4236, %v1751
      %v5403 = vmul.f32 %v4238, %v1755
      %v5404 = vmul.f32 %v4240, %v1759
      %v5405 = vmul.f32 %v4242, %v1763
      %v5406 = vmul.f32 %v4244, %v1767
      %v5407 = vmul.f32 %v4246, %v1771
      %v5408 = vmul.f32 %v4248, %v1775
      %v5409 = vmul.f32 %v4250, %v1779
      %v5410 = vmul.f32 %v4252, %v1783
      %v5411 = vmul.f32 %v4254, %v1787
      %v5412 = vmul.f32 %v4256, %v1791
      %v5413 = vmul.f32 %v4258, %v1795
      %v5414 = vmul.f32 %v4260, %v1799
      %v5415 = vmul.f32 %v4262, %v1803
      %v5416 = vmul.f32 %v4264, %v1807
      %v5417 = vmul.f32 %v4266, %v1811
      %v5418 = vmul.f32 %v4268, %v1815
      %v5419 = vmul.f32 %v4270, %v1819
      %v5420 = vmul.f32 %v4272, %v1823
      %v5421 = vmul.f32 %v4274, %v1827
      %v5422 = vmul.f32 %v4276, %v1831
      %v5423 = vmul.f32 %v4278, %v1835
      %v5424 = vmul.f32 %v4280, %v1839
      %v5425 = vmul.f32 %v4282, %v1843
      %v5426 = vmul.f32 %v4859, %v1847
      %v5427 = vmul.f32 %v4892, %v1851
      %5458 = vrot.lane.b32.xlu0 %v5398, 96
      %v5459 = vpop.permute.xlu0 %5458
      %5460 = vrot.lane.b32.xlu0 %v5399, 96
      %v5461 = vpop.permute.xlu0 %5460
      %5462 = vrot.lane.b32.xlu0 %v5400, 96
      %v5463 = vpop.permute.xlu0 %5462
      %5464 = vrot.lane.b32.xlu0 %v5401, 96
      %v5465 = vpop.permute.xlu0 %5464
      %5466 = vrot.lane.b32.xlu0 %v5402, 96
      %v5467 = vpop.permute.xlu0 %5466
      %5468 = vrot.lane.b32.xlu0 %v5403, 96
      %v5469 = vpop.permute.xlu0 %5468
      %5470 = vrot.lane.b32.xlu0 %v5404, 96
      %v5471 = vpop.permute.xlu0 %5470
      %5472 = vrot.lane.b32.xlu0 %v5405, 96
      %v5473 = vpop.permute.xlu0 %5472
      %5474 = vrot.lane.b32.xlu0 %v5406, 96
      %v5475 = vpop.permute.xlu0 %5474
      %5476 = vrot.lane.b32.xlu0 %v5407, 96
      %v5477 = vpop.permute.xlu0 %5476
      %5478 = vrot.lane.b32.xlu0 %v5408, 96
      %v5479 = vpop.permute.xlu0 %5478
      %5480 = vrot.lane.b32.xlu0 %v5409, 96
      %v5481 = vpop.permute.xlu0 %5480
      %5482 = vrot.lane.b32.xlu0 %v5410, 96
      %v5483 = vpop.permute.xlu0 %5482
      %5484 = vrot.lane.b32.xlu0 %v5411, 96
      %v5485 = vpop.permute.xlu0 %5484
      %5486 = vrot.lane.b32.xlu0 %v5412, 96
      %v5487 = vpop.permute.xlu0 %5486
      %5488 = vrot.lane.b32.xlu0 %v5413, 96
      %v5489 = vpop.permute.xlu0 %5488
      %5490 = vrot.lane.b32.xlu0 %v5414, 96
      %v5491 = vpop.permute.xlu0 %5490
      %5492 = vrot.lane.b32.xlu0 %v5415, 96
      %v5493 = vpop.permute.xlu0 %5492
      %5494 = vrot.lane.b32.xlu0 %v5416, 96
      %v5495 = vpop.permute.xlu0 %5494
      %5496 = vrot.lane.b32.xlu0 %v5417, 96
      %v5497 = vpop.permute.xlu0 %5496
      %5498 = vrot.lane.b32.xlu0 %v5418, 96
      %v5499 = vpop.permute.xlu0 %5498
      %5500 = vrot.lane.b32.xlu0 %v5419, 96
      %v5501 = vpop.permute.xlu0 %5500
      %5502 = vrot.lane.b32.xlu0 %v5420, 96
      %v5503 = vpop.permute.xlu0 %5502
      %5504 = vrot.lane.b32.xlu0 %v5421, 96
      %v5505 = vpop.permute.xlu0 %5504
      %5506 = vrot.lane.b32.xlu0 %v5422, 96
      %v5507 = vpop.permute.xlu0 %5506
      %5508 = vrot.lane.b32.xlu0 %v5423, 96
      %v5509 = vpop.permute.xlu0 %5508
      %5510 = vrot.lane.b32.xlu0 %v5424, 96
      %v5511 = vpop.permute.xlu0 %5510
      %5512 = vrot.lane.b32.xlu0 %v5425, 96
      %v5513 = vpop.permute.xlu0 %5512
      %5514 = vrot.lane.b32.xlu0 %v5426, 96
      %v5515 = vpop.permute.xlu0 %5514
      %5516 = vrot.lane.b32.xlu0 %v5427, 96
      %v5517 = vpop.permute.xlu0 %5516
      %v5548 = vadd.f32 %v5366, %v5459
      %v5549 = vadd.f32 %v5367, %v5461
      %v5550 = vadd.f32 %v5368, %v5463
      %v5551 = vadd.f32 %v5369, %v5465
      %v5552 = vadd.f32 %v5370, %v5467
      %v5553 = vadd.f32 %v5371, %v5469
      %v5554 = vadd.f32 %v5372, %v5471
      %v5555 = vadd.f32 %v5373, %v5473
      %v5556 = vadd.f32 %v5374, %v5475
      %v5557 = vadd.f32 %v5375, %v5477
      %v5558 = vadd.f32 %v5376, %v5479
      %v5559 = vadd.f32 %v5377, %v5481
      %v5560 = vadd.f32 %v5378, %v5483
      %v5561 = vadd.f32 %v5379, %v5485
      %v5562 = vadd.f32 %v5380, %v5487
      %v5563 = vadd.f32 %v5381, %v5489
      %v5564 = vadd.f32 %v5382, %v5491
      %v5565 = vadd.f32 %v5383, %v5493
      %v5566 = vadd.f32 %v5384, %v5495
      %v5567 = vadd.f32 %v5385, %v5497
      %v5568 = vadd.f32 %v5386, %v5499
      %v5569 = vadd.f32 %v5387, %v5501
      %v5570 = vadd.f32 %v5388, %v5503
      %v5571 = vadd.f32 %v5389, %v5505
      %v5572 = vadd.f32 %v5390, %v5507
      %v5573 = vadd.f32 %v5391, %v5509
      %v5574 = vadd.f32 %v5392, %v5511
      %v5575 = vadd.f32 %v5393, %v5513
      %v5576 = vadd.f32 %v5394, %v5515
      %v5577 = vadd.f32 %v5395, %v5517
      %v5578 = vadd.f32 %v5396, %v3020
      %v5579 = vadd.f32 %v5397, %v3022
      %5612 = vrot.lane.b32.xlu0 %v5548, 112
      %v5613 = vpop.permute.xlu0 %5612
      %5614 = vrot.lane.b32.xlu0 %v5549, 112
      %v5615 = vpop.permute.xlu0 %5614
      %5616 = vrot.lane.b32.xlu0 %v5550, 112
      %v5617 = vpop.permute.xlu0 %5616
      %5618 = vrot.lane.b32.xlu0 %v5551, 112
      %v5619 = vpop.permute.xlu0 %5618
      %5620 = vrot.lane.b32.xlu0 %v5552, 112
      %v5621 = vpop.permute.xlu0 %5620
      %5622 = vrot.lane.b32.xlu0 %v5553, 112
      %v5623 = vpop.permute.xlu0 %5622
      %5624 = vrot.lane.b32.xlu0 %v5554, 112
      %v5625 = vpop.permute.xlu0 %5624
      %5626 = vrot.lane.b32.xlu0 %v5555, 112
      %v5627 = vpop.permute.xlu0 %5626
      %5628 = vrot.lane.b32.xlu0 %v5556, 112
      %v5629 = vpop.permute.xlu0 %5628
      %5630 = vrot.lane.b32.xlu0 %v5557, 112
      %v5631 = vpop.permute.xlu0 %5630
      %5632 = vrot.lane.b32.xlu0 %v5558, 112
      %v5633 = vpop.permute.xlu0 %5632
      %5634 = vrot.lane.b32.xlu0 %v5559, 112
      %v5635 = vpop.permute.xlu0 %5634
      %5636 = vrot.lane.b32.xlu0 %v5560, 112
      %v5637 = vpop.permute.xlu0 %5636
      %5638 = vrot.lane.b32.xlu0 %v5561, 112
      %v5639 = vpop.permute.xlu0 %5638
      %5640 = vrot.lane.b32.xlu0 %v5562, 112
      %v5641 = vpop.permute.xlu0 %5640
      %5642 = vrot.lane.b32.xlu0 %v5563, 112
      %v5643 = vpop.permute.xlu0 %5642
      %5644 = vrot.lane.b32.xlu0 %v5564, 112
      %v5645 = vpop.permute.xlu0 %5644
      %5646 = vrot.lane.b32.xlu0 %v5565, 112
      %v5647 = vpop.permute.xlu0 %5646
      %5648 = vrot.lane.b32.xlu0 %v5566, 112
      %v5649 = vpop.permute.xlu0 %5648
      %5650 = vrot.lane.b32.xlu0 %v5567, 112
      %v5651 = vpop.permute.xlu0 %5650
      %5652 = vrot.lane.b32.xlu0 %v5568, 112
      %v5653 = vpop.permute.xlu0 %5652
      %5654 = vrot.lane.b32.xlu0 %v5569, 112
      %v5655 = vpop.permute.xlu0 %5654
      %5656 = vrot.lane.b32.xlu0 %v5570, 112
      %v5657 = vpop.permute.xlu0 %5656
      %5658 = vrot.lane.b32.xlu0 %v5571, 112
      %v5659 = vpop.permute.xlu0 %5658
      %5660 = vrot.lane.b32.xlu0 %v5572, 112
      %v5661 = vpop.permute.xlu0 %5660
      %5662 = vrot.lane.b32.xlu0 %v5573, 112
      %v5663 = vpop.permute.xlu0 %5662
      %5664 = vrot.lane.b32.xlu0 %v5574, 112
      %v5665 = vpop.permute.xlu0 %5664
      %5666 = vrot.lane.b32.xlu0 %v5575, 112
      %v5667 = vpop.permute.xlu0 %5666
      %5668 = vrot.lane.b32.xlu0 %v5576, 112
      %v5669 = vpop.permute.xlu0 %5668
      %5670 = vrot.lane.b32.xlu0 %v5577, 112
      %v5671 = vpop.permute.xlu0 %5670
      %5672 = vrot.lane.b32.xlu0 %v5578, 112
      %v5673 = vpop.permute.xlu0 %5672
      %5674 = vrot.lane.b32.xlu0 %v5579, 112
      %v5675 = vpop.permute.xlu0 %5674
      %vm5708 = vcmask 195712
      %5709 = vst.msk [vmem:[%s332] sm:$0xff] %vm5708, %v5613
      %5710 = vst.msk [vmem:[%s332 + $0x8] sm:$0xff] %vm5708, %v5615
      %5711 = vst.msk [vmem:[%s332 + $0x10] sm:$0xff] %vm5708, %v5617
      %5712 = vst.msk [vmem:[%s332 + $0x18] sm:$0xff] %vm5708, %v5619
      %5713 = vst.msk [vmem:[%s332 + $0x20] sm:$0xff] %vm5708, %v5621
      %5714 = vst.msk [vmem:[%s332 + $0x28] sm:$0xff] %vm5708, %v5623
      %5715 = vst.msk [vmem:[%s332 + $0x30] sm:$0xff] %vm5708, %v5625
      %5716 = vst.msk [vmem:[%s332 + $0x38] sm:$0xff] %vm5708, %v5627
      %5717 = vst.msk [vmem:[%s332 + $0x40] sm:$0xff] %vm5708, %v5629
      %5718 = vst.msk [vmem:[%s332 + $0x48] sm:$0xff] %vm5708, %v5631
      %5719 = vst.msk [vmem:[%s332 + $0x50] sm:$0xff] %vm5708, %v5633
      %5720 = vst.msk [vmem:[%s332 + $0x58] sm:$0xff] %vm5708, %v5635
      %5721 = vst.msk [vmem:[%s332 + $0x60] sm:$0xff] %vm5708, %v5637
      %5722 = vst.msk [vmem:[%s332 + $0x68] sm:$0xff] %vm5708, %v5639
      %5723 = vst.msk [vmem:[%s332 + $0x70] sm:$0xff] %vm5708, %v5641
      %5724 = vst.msk [vmem:[%s332 + $0x78] sm:$0xff] %vm5708, %v5643
      %5725 = vst.msk [vmem:[%s332 + $0x80] sm:$0xff] %vm5708, %v5645
      %5726 = vst.msk [vmem:[%s332 + $0x88] sm:$0xff] %vm5708, %v5647
      %5727 = vst.msk [vmem:[%s332 + $0x90] sm:$0xff] %vm5708, %v5649
      %5728 = vst.msk [vmem:[%s332 + $0x98] sm:$0xff] %vm5708, %v5651
      %5729 = vst.msk [vmem:[%s332 + $0xa0] sm:$0xff] %vm5708, %v5653
      %5730 = vst.msk [vmem:[%s332 + $0xa8] sm:$0xff] %vm5708, %v5655
      %5731 = vst.msk [vmem:[%s332 + $0xb0] sm:$0xff] %vm5708, %v5657
      %5732 = vst.msk [vmem:[%s332 + $0xb8] sm:$0xff] %vm5708, %v5659
      %5733 = vst.msk [vmem:[%s332 + $0xc0] sm:$0xff] %vm5708, %v5661
      %5734 = vst.msk [vmem:[%s332 + $0xc8] sm:$0xff] %vm5708, %v5663
      %5735 = vst.msk [vmem:[%s332 + $0xd0] sm:$0xff] %vm5708, %v5665
      %5736 = vst.msk [vmem:[%s332 + $0xd8] sm:$0xff] %vm5708, %v5667
      %5737 = vst.msk [vmem:[%s332 + $0xe0] sm:$0xff] %vm5708, %v5669
      %5738 = vst.msk [vmem:[%s332 + $0xe8] sm:$0xff] %vm5708, %v5671
      %5739 = vst.msk [vmem:[%s332 + $0xf0] sm:$0xff] %vm5708, %v5673
      %5740 = vst.msk [vmem:[%s332 + $0xf8] sm:$0xff] %vm5708, %v5675
      %v5741 = vld [vmem:[%s332] sm:$0xff]
      %v5742 = vld [vmem:[%s332 + $0x8] sm:$0xff]
      %v5743 = vld [vmem:[%s332 + $0x10] sm:$0xff]
      %v5744 = vld [vmem:[%s332 + $0x18] sm:$0xff]
      %v5745 = vld [vmem:[%s332 + $0x20] sm:$0xff]
      %v5746 = vld [vmem:[%s332 + $0x28] sm:$0xff]
      %v5747 = vld [vmem:[%s332 + $0x30] sm:$0xff]
      %v5748 = vld [vmem:[%s332 + $0x38] sm:$0xff]
      %v5749 = vld [vmem:[%s332 + $0x40] sm:$0xff]
      %v5750 = vld [vmem:[%s332 + $0x48] sm:$0xff]
      %v5751 = vld [vmem:[%s332 + $0x50] sm:$0xff]
      %v5752 = vld [vmem:[%s332 + $0x58] sm:$0xff]
      %v5753 = vld [vmem:[%s332 + $0x60] sm:$0xff]
      %v5754 = vld [vmem:[%s332 + $0x68] sm:$0xff]
      %v5755 = vld [vmem:[%s332 + $0x70] sm:$0xff]
      %v5756 = vld [vmem:[%s332 + $0x78] sm:$0xff]
      %v5757 = vld [vmem:[%s332 + $0x80] sm:$0xff]
      %v5758 = vld [vmem:[%s332 + $0x88] sm:$0xff]
      %v5759 = vld [vmem:[%s332 + $0x90] sm:$0xff]
      %v5760 = vld [vmem:[%s332 + $0x98] sm:$0xff]
      %v5761 = vld [vmem:[%s332 + $0xa0] sm:$0xff]
      %v5762 = vld [vmem:[%s332 + $0xa8] sm:$0xff]
      %v5763 = vld [vmem:[%s332 + $0xb0] sm:$0xff]
      %v5764 = vld [vmem:[%s332 + $0xb8] sm:$0xff]
      %v5765 = vld [vmem:[%s332 + $0xc0] sm:$0xff]
      %v5766 = vld [vmem:[%s332 + $0xc8] sm:$0xff]
      %v5767 = vld [vmem:[%s332 + $0xd0] sm:$0xff]
      %v5768 = vld [vmem:[%s332 + $0xd8] sm:$0xff]
      %v5769 = vld [vmem:[%s332 + $0xe0] sm:$0xff]
      %v5770 = vld [vmem:[%s332 + $0xe8] sm:$0xff]
      %v5771 = vld [vmem:[%s332 + $0xf0] sm:$0xff]
      %v5772 = vld [vmem:[%s332 + $0xf8] sm:$0xff]
      %v5773 = vld [vmem:[%s2 + $0x2] sm:$0x1]
      %v5774 = vld [vmem:[%s3 + $0x2] sm:$0x1]
      %v5775 = vperm.slane %v5773, 0
      %v5776 = vmul.f32 %v5741, %v5775
      %v5777 = vmul.f32 %v5742, %v5775
      %v5778 = vmul.f32 %v5743, %v5775
      %v5779 = vmul.f32 %v5744, %v5775
      %v5780 = vmul.f32 %v5745, %v5775
      %v5781 = vmul.f32 %v5746, %v5775
      %v5782 = vmul.f32 %v5747, %v5775
      %v5783 = vmul.f32 %v5748, %v5775
      %v5784 = vmul.f32 %v5749, %v5775
      %v5785 = vmul.f32 %v5750, %v5775
      %v5786 = vmul.f32 %v5751, %v5775
      %v5787 = vmul.f32 %v5752, %v5775
      %v5788 = vmul.f32 %v5753, %v5775
      %v5789 = vmul.f32 %v5754, %v5775
      %v5790 = vmul.f32 %v5755, %v5775
      %v5791 = vmul.f32 %v5756, %v5775
      %v5792 = vmul.f32 %v5757, %v5775
      %v5793 = vmul.f32 %v5758, %v5775
      %v5794 = vmul.f32 %v5759, %v5775
      %v5795 = vmul.f32 %v5760, %v5775
      %v5796 = vmul.f32 %v5761, %v5775
      %v5797 = vmul.f32 %v5762, %v5775
      %v5798 = vmul.f32 %v5763, %v5775
      %v5799 = vmul.f32 %v5764, %v5775
      %v5800 = vmul.f32 %v5765, %v5775
      %v5801 = vmul.f32 %v5766, %v5775
      %v5802 = vmul.f32 %v5767, %v5775
      %v5803 = vmul.f32 %v5768, %v5775
      %v5804 = vmul.f32 %v5769, %v5775
      %v5805 = vmul.f32 %v5770, %v5775
      %v5806 = vmul.f32 %v5771, %v5775
      %v5807 = vmul.f32 %v5772, %v5775
      %v5808 = vperm.slane %v5774, 0
      %v5809 = vadd.f32 %v5776, %v5808
      %v5810 = vadd.f32 %v5777, %v5808
      %v5811 = vadd.f32 %v5778, %v5808
      %v5812 = vadd.f32 %v5779, %v5808
      %v5813 = vadd.f32 %v5780, %v5808
      %v5814 = vadd.f32 %v5781, %v5808
      %v5815 = vadd.f32 %v5782, %v5808
      %v5816 = vadd.f32 %v5783, %v5808
      %v5817 = vadd.f32 %v5784, %v5808
      %v5818 = vadd.f32 %v5785, %v5808
      %v5819 = vadd.f32 %v5786, %v5808
      %v5820 = vadd.f32 %v5787, %v5808
      %v5821 = vadd.f32 %v5788, %v5808
      %v5822 = vadd.f32 %v5789, %v5808
      %v5823 = vadd.f32 %v5790, %v5808
      %v5824 = vadd.f32 %v5791, %v5808
      %v5825 = vadd.f32 %v5792, %v5808
      %v5826 = vadd.f32 %v5793, %v5808
      %v5827 = vadd.f32 %v5794, %v5808
      %v5828 = vadd.f32 %v5795, %v5808
      %v5829 = vadd.f32 %v5796, %v5808
      %v5830 = vadd.f32 %v5797, %v5808
      %v5831 = vadd.f32 %v5798, %v5808
      %v5832 = vadd.f32 %v5799, %v5808
      %v5833 = vadd.f32 %v5800, %v5808
      %v5834 = vadd.f32 %v5801, %v5808
      %v5835 = vadd.f32 %v5802, %v5808
      %v5836 = vadd.f32 %v5803, %v5808
      %v5837 = vadd.f32 %v5804, %v5808
      %v5838 = vadd.f32 %v5805, %v5808
      %v5839 = vadd.f32 %v5806, %v5808
      %v5840 = vadd.f32 %v5807, %v5808
      %v5841 = vmax.f32 %v5809, 0.0
      %v5842 = vmax.f32 %v5810, 0.0
      %v5843 = vmax.f32 %v5811, 0.0
      %v5844 = vmax.f32 %v5812, 0.0
      %v5845 = vmax.f32 %v5813, 0.0
      %v5846 = vmax.f32 %v5814, 0.0
      %v5847 = vmax.f32 %v5815, 0.0
      %v5848 = vmax.f32 %v5816, 0.0
      %v5849 = vmax.f32 %v5817, 0.0
      %v5850 = vmax.f32 %v5818, 0.0
      %v5851 = vmax.f32 %v5819, 0.0
      %v5852 = vmax.f32 %v5820, 0.0
      %v5853 = vmax.f32 %v5821, 0.0
      %v5854 = vmax.f32 %v5822, 0.0
      %v5855 = vmax.f32 %v5823, 0.0
      %v5856 = vmax.f32 %v5824, 0.0
      %v5857 = vmax.f32 %v5825, 0.0
      %v5858 = vmax.f32 %v5826, 0.0
      %v5859 = vmax.f32 %v5827, 0.0
      %v5860 = vmax.f32 %v5828, 0.0
      %v5861 = vmax.f32 %v5829, 0.0
      %v5862 = vmax.f32 %v5830, 0.0
      %v5863 = vmax.f32 %v5831, 0.0
      %v5864 = vmax.f32 %v5832, 0.0
      %v5865 = vmax.f32 %v5833, 0.0
      %v5866 = vmax.f32 %v5834, 0.0
      %v5867 = vmax.f32 %v5835, 0.0
      %v5868 = vmax.f32 %v5836, 0.0
      %v5869 = vmax.f32 %v5837, 0.0
      %v5870 = vmax.f32 %v5838, 0.0
      %v5871 = vmax.f32 %v5839, 0.0
      %v5872 = vmax.f32 %v5840, 0.0
      %v5873 = vpack.c.bf16 %v5842, %v5841
      %v5874 = vpack.c.bf16 %v5844, %v5843
      %v5875 = vpack.c.bf16 %v5846, %v5845
      %v5876 = vpack.c.bf16 %v5848, %v5847
      %v5877 = vpack.c.bf16 %v5850, %v5849
      %v5878 = vpack.c.bf16 %v5852, %v5851
      %v5879 = vpack.c.bf16 %v5854, %v5853
      %v5880 = vpack.c.bf16 %v5856, %v5855
      %v5881 = vpack.c.bf16 %v5858, %v5857
      %v5882 = vpack.c.bf16 %v5860, %v5859
      %v5883 = vpack.c.bf16 %v5862, %v5861
      %v5884 = vpack.c.bf16 %v5864, %v5863
      %v5885 = vpack.c.bf16 %v5866, %v5865
      %v5886 = vpack.c.bf16 %v5868, %v5867
      %v5887 = vpack.c.bf16 %v5870, %v5869
      %v5888 = vpack.c.bf16 %v5872, %v5871
      %v5889 = vld [vmem:[%s8] sm:$0xf]
      %v5890 = vld [vmem:[%s8 + $0x4] sm:$0xf]
      %v5891 = vld [vmem:[%s8 + $0x8] sm:$0xf]
      %v5892 = vld [vmem:[%s4 + $0x2] sm:$0x1]
      %v5893 = vperm.slane %v5892, 0
      %v5897 = vunpack.c.l.b16 %v5889
      %v5898 = vunpack.c.l.b16 %v5890
      %v5899 = vunpack.c.l.b16 %v5891
      %v5900 = vpack.c.b16 %v5898, %v5897
      %v5901 = vpack.c.b16 %v5899, %v5899
      %vm5903 = vcmask 195584
      %v5905 = vsel %vm5903, %v5873, 0
      %v5908 = vsel %vm5903, %v5874, 0
      %v5911 = vsel %vm5903, %v5875, 0
      %v5914 = vsel %vm5903, %v5876, 0
      %v5917 = vsel %vm5903, %v5877, 0
      %v5920 = vsel %vm5903, %v5878, 0
      %v5923 = vsel %vm5903, %v5879, 0
      %v5926 = vsel %vm5903, %v5880, 0
      %v5929 = vsel %vm5903, %v5881, 0
      %v5932 = vsel %vm5903, %v5882, 0
      %v5935 = vsel %vm5903, %v5883, 0
      %v5938 = vsel %vm5903, %v5884, 0
      %v5941 = vsel %vm5903, %v5885, 0
      %v5944 = vsel %vm5903, %v5886, 0
      %v5947 = vsel %vm5903, %v5887, 0
      %v5950 = vsel %vm5903, %v5888, 0
      %v5953 = vsel %vm630, %v5901, 0
      %5955 = vmatpush.bf16.msra.mxu0 0
      %5956 = vmatpush.bf16.msra.mxu0 0
      %5957 = vmatpush.bf16.msra.mxu0 0
      %5958 = vmatpush.bf16.msra.mxu0 0
      %5959 = vmatpush.bf16.msra.mxu0 0
      %5960 = vmatpush.bf16.msra.mxu0 0
      %5961 = vmatpush.bf16.msra.mxu0 %v5953
      %5962 = vmatpush.bf16.msra.mxu0 %v5900
      %5963 = vmatmul.bf16.gmra.mxu0 %v5905
      %v5964 = vpop.f32.mrf.mxu0
      %v5965 = vadd.f32 %v5893, %v5964
      %v5966 = vpop.f32.mrf.mxu0
      %v5967 = vadd.f32 %v5893, %v5966
      %5968 = vmatmul.bf16.gmra.mxu0 %v5908
      %v5969 = vpop.f32.mrf.mxu0
      %v5970 = vadd.f32 %v5893, %v5969
      %v5971 = vpop.f32.mrf.mxu0
      %v5972 = vadd.f32 %v5893, %v5971
      %5973 = vmatmul.bf16.gmra.mxu0 %v5911
      %v5974 = vpop.f32.mrf.mxu0
      %v5975 = vadd.f32 %v5893, %v5974
      %v5976 = vpop.f32.mrf.mxu0
      %v5977 = vadd.f32 %v5893, %v5976
      %5978 = vmatmul.bf16.gmra.mxu0 %v5914
      %v5979 = vpop.f32.mrf.mxu0
      %v5980 = vadd.f32 %v5893, %v5979
      %v5981 = vpop.f32.mrf.mxu0
      %v5982 = vadd.f32 %v5893, %v5981
      %5983 = vmatmul.bf16.gmra.mxu0 %v5917
      %v5984 = vpop.f32.mrf.mxu0
      %v5985 = vadd.f32 %v5893, %v5984
      %v5986 = vpop.f32.mrf.mxu0
      %v5987 = vadd.f32 %v5893, %v5986
      %5988 = vmatmul.bf16.gmra.mxu0 %v5920
      %v5989 = vpop.f32.mrf.mxu0
      %v5990 = vadd.f32 %v5893, %v5989
      %v5991 = vpop.f32.mrf.mxu0
      %v5992 = vadd.f32 %v5893, %v5991
      %5993 = vmatmul.bf16.gmra.mxu0 %v5923
      %v5994 = vpop.f32.mrf.mxu0
      %v5995 = vadd.f32 %v5893, %v5994
      %v5996 = vpop.f32.mrf.mxu0
      %v5997 = vadd.f32 %v5893, %v5996
      %5998 = vmatmul.bf16.gmra.mxu0 %v5926
      %v5999 = vpop.f32.mrf.mxu0
      %v6000 = vadd.f32 %v5893, %v5999
      %v6001 = vpop.f32.mrf.mxu0
      %v6002 = vadd.f32 %v5893, %v6001
      %6003 = vmatmul.bf16.gmra.mxu0 %v5929
      %v6004 = vpop.f32.mrf.mxu0
      %v6005 = vadd.f32 %v5893, %v6004
      %v6006 = vpop.f32.mrf.mxu0
      %v6007 = vadd.f32 %v5893, %v6006
      %6008 = vmatmul.bf16.gmra.mxu0 %v5932
      %v6009 = vpop.f32.mrf.mxu0
      %v6010 = vadd.f32 %v5893, %v6009
      %v6011 = vpop.f32.mrf.mxu0
      %v6012 = vadd.f32 %v5893, %v6011
      %6013 = vmatmul.bf16.gmra.mxu0 %v5935
      %v6014 = vpop.f32.mrf.mxu0
      %v6015 = vadd.f32 %v5893, %v6014
      %v6016 = vpop.f32.mrf.mxu0
      %v6017 = vadd.f32 %v5893, %v6016
      %6018 = vmatmul.bf16.gmra.mxu0 %v5938
      %v6019 = vpop.f32.mrf.mxu0
      %v6020 = vadd.f32 %v5893, %v6019
      %v6021 = vpop.f32.mrf.mxu0
      %v6022 = vadd.f32 %v5893, %v6021
      %6023 = vmatmul.bf16.gmra.mxu0 %v5941
      %v6024 = vpop.f32.mrf.mxu0
      %v6025 = vadd.f32 %v5893, %v6024
      %v6026 = vpop.f32.mrf.mxu0
      %v6027 = vadd.f32 %v5893, %v6026
      %6028 = vmatmul.bf16.gmra.mxu0 %v5944
      %v6029 = vpop.f32.mrf.mxu0
      %v6030 = vadd.f32 %v5893, %v6029
      %v6031 = vpop.f32.mrf.mxu0
      %v6032 = vadd.f32 %v5893, %v6031
      %6033 = vmatmul.bf16.gmra.mxu0 %v5947
      %v6034 = vpop.f32.mrf.mxu0
      %v6035 = vadd.f32 %v5893, %v6034
      %v6036 = vpop.f32.mrf.mxu0
      %v6037 = vadd.f32 %v5893, %v6036
      %6038 = vmatmul.bf16.gmra.mxu0 %v5950
      %v6039 = vpop.f32.mrf.mxu0
      %v6040 = vadd.f32 %v5893, %v6039
      %v6041 = vpop.f32.mrf.mxu0
      %v6042 = vadd.f32 %v5893, %v6041
      %6043 = vdwg.mxu0
      %v6044 = vmax.f32 %v5965, 0.0
      %v6045 = vmax.f32 %v5967, 0.0
      %v6046 = vmax.f32 %v5970, 0.0
      %v6047 = vmax.f32 %v5972, 0.0
      %v6048 = vmax.f32 %v5975, 0.0
      %v6049 = vmax.f32 %v5977, 0.0
      %v6050 = vmax.f32 %v5980, 0.0
      %v6051 = vmax.f32 %v5982, 0.0
      %v6052 = vmax.f32 %v5985, 0.0
      %v6053 = vmax.f32 %v5987, 0.0
      %v6054 = vmax.f32 %v5990, 0.0
      %v6055 = vmax.f32 %v5992, 0.0
      %v6056 = vmax.f32 %v5995, 0.0
      %v6057 = vmax.f32 %v5997, 0.0
      %v6058 = vmax.f32 %v6000, 0.0
      %v6059 = vmax.f32 %v6002, 0.0
      %v6060 = vmax.f32 %v6005, 0.0
      %v6061 = vmax.f32 %v6007, 0.0
      %v6062 = vmax.f32 %v6010, 0.0
      %v6063 = vmax.f32 %v6012, 0.0
      %v6064 = vmax.f32 %v6015, 0.0
      %v6065 = vmax.f32 %v6017, 0.0
      %v6066 = vmax.f32 %v6020, 0.0
      %v6067 = vmax.f32 %v6022, 0.0
      %v6068 = vmax.f32 %v6025, 0.0
      %v6069 = vmax.f32 %v6027, 0.0
      %v6070 = vmax.f32 %v6030, 0.0
      %v6071 = vmax.f32 %v6032, 0.0
      %v6072 = vmax.f32 %v6035, 0.0
      %v6073 = vmax.f32 %v6037, 0.0
      %v6074 = vmax.f32 %v6040, 0.0
      %v6075 = vmax.f32 %v6042, 0.0
      %v6076 = vpack.c.bf16 %v6045, %v6044
      %v6077 = vpack.c.bf16 %v6047, %v6046
      %v6078 = vpack.c.bf16 %v6049, %v6048
      %v6079 = vpack.c.bf16 %v6051, %v6050
      %v6080 = vpack.c.bf16 %v6053, %v6052
      %v6081 = vpack.c.bf16 %v6055, %v6054
      %v6082 = vpack.c.bf16 %v6057, %v6056
      %v6083 = vpack.c.bf16 %v6059, %v6058
      %v6084 = vpack.c.bf16 %v6061, %v6060
      %v6085 = vpack.c.bf16 %v6063, %v6062
      %v6086 = vpack.c.bf16 %v6065, %v6064
      %v6087 = vpack.c.bf16 %v6067, %v6066
      %v6088 = vpack.c.bf16 %v6069, %v6068
      %v6089 = vpack.c.bf16 %v6071, %v6070
      %v6090 = vpack.c.bf16 %v6073, %v6072
      %v6091 = vpack.c.bf16 %v6075, %v6074
      %s6092 = scalar_lea.vmem %s5, 16
      %v6093 = vld [vmem:[%s6092] sm:$0xf]
      %v6094 = vld [vmem:[%s6092 + $0x4] sm:$0xf]
      %v6097 = vunpack.c.l.b16 %v6093
      %v6098 = vunpack.c.l.b16 %v6094
      %v6099 = vpack.c.b16 %v6098, %v6097
      %v6102 = vsel %vm779, %v6076, 0
      %v6105 = vsel %vm779, %v6077, 0
      %v6108 = vsel %vm779, %v6078, 0
      %v6111 = vsel %vm779, %v6079, 0
      %v6114 = vsel %vm779, %v6080, 0
      %v6117 = vsel %vm779, %v6081, 0
      %v6120 = vsel %vm779, %v6082, 0
      %v6123 = vsel %vm779, %v6083, 0
      %v6126 = vsel %vm779, %v6084, 0
      %v6129 = vsel %vm779, %v6085, 0
      %v6132 = vsel %vm779, %v6086, 0
      %v6135 = vsel %vm779, %v6087, 0
      %v6138 = vsel %vm779, %v6088, 0
      %v6141 = vsel %vm779, %v6089, 0
      %v6144 = vsel %vm779, %v6090, 0
      %v6147 = vsel %vm779, %v6091, 0
      %6149 = vmatpush.bf16.msra.mxu0 0
      %6150 = vmatpush.bf16.msra.mxu0 0
      %6151 = vmatpush.bf16.msra.mxu0 0
      %6152 = vmatpush.bf16.msra.mxu0 0
      %6153 = vmatpush.bf16.msra.mxu0 0
      %6154 = vmatpush.bf16.msra.mxu0 0
      %6155 = vmatpush.bf16.msra.mxu0 0
      %6156 = vmatpush.bf16.msra.mxu0 %v6099
      %6157 = vmatmul.bf16.gmra.mxu0 %v6102
      %v6158 = vpop.f32.mrf.mxu0
      %v6159 = vadd.f32 0.0, %v6158
      %v6160 = vpop.f32.mrf.mxu0
      %v6161 = vadd.f32 0.0, %v6160
      %6162 = vmatmul.bf16.gmra.mxu0 %v6105
      %v6163 = vpop.f32.mrf.mxu0
      %v6164 = vadd.f32 0.0, %v6163
      %v6165 = vpop.f32.mrf.mxu0
      %v6166 = vadd.f32 0.0, %v6165
      %6167 = vmatmul.bf16.gmra.mxu0 %v6108
      %v6168 = vpop.f32.mrf.mxu0
      %v6169 = vadd.f32 0.0, %v6168
      %v6170 = vpop.f32.mrf.mxu0
      %v6171 = vadd.f32 0.0, %v6170
      %6172 = vmatmul.bf16.gmra.mxu0 %v6111
      %v6173 = vpop.f32.mrf.mxu0
      %v6174 = vadd.f32 0.0, %v6173
      %v6175 = vpop.f32.mrf.mxu0
      %v6176 = vadd.f32 0.0, %v6175
      %6177 = vmatmul.bf16.gmra.mxu0 %v6114
      %v6178 = vpop.f32.mrf.mxu0
      %v6179 = vadd.f32 0.0, %v6178
      %v6180 = vpop.f32.mrf.mxu0
      %v6181 = vadd.f32 0.0, %v6180
      %6182 = vmatmul.bf16.gmra.mxu0 %v6117
      %v6183 = vpop.f32.mrf.mxu0
      %v6184 = vadd.f32 0.0, %v6183
      %v6185 = vpop.f32.mrf.mxu0
      %v6186 = vadd.f32 0.0, %v6185
      %6187 = vmatmul.bf16.gmra.mxu0 %v6120
      %v6188 = vpop.f32.mrf.mxu0
      %v6189 = vadd.f32 0.0, %v6188
      %v6190 = vpop.f32.mrf.mxu0
      %v6191 = vadd.f32 0.0, %v6190
      %6192 = vmatmul.bf16.gmra.mxu0 %v6123
      %v6193 = vpop.f32.mrf.mxu0
      %v6194 = vadd.f32 0.0, %v6193
      %v6195 = vpop.f32.mrf.mxu0
      %v6196 = vadd.f32 0.0, %v6195
      %6197 = vmatmul.bf16.gmra.mxu0 %v6126
      %v6198 = vpop.f32.mrf.mxu0
      %v6199 = vadd.f32 0.0, %v6198
      %v6200 = vpop.f32.mrf.mxu0
      %v6201 = vadd.f32 0.0, %v6200
      %6202 = vmatmul.bf16.gmra.mxu0 %v6129
      %v6203 = vpop.f32.mrf.mxu0
      %v6204 = vadd.f32 0.0, %v6203
      %v6205 = vpop.f32.mrf.mxu0
      %v6206 = vadd.f32 0.0, %v6205
      %6207 = vmatmul.bf16.gmra.mxu0 %v6132
      %v6208 = vpop.f32.mrf.mxu0
      %v6209 = vadd.f32 0.0, %v6208
      %v6210 = vpop.f32.mrf.mxu0
      %v6211 = vadd.f32 0.0, %v6210
      %6212 = vmatmul.bf16.gmra.mxu0 %v6135
      %v6213 = vpop.f32.mrf.mxu0
      %v6214 = vadd.f32 0.0, %v6213
      %v6215 = vpop.f32.mrf.mxu0
      %v6216 = vadd.f32 0.0, %v6215
      %6217 = vmatmul.bf16.gmra.mxu0 %v6138
      %v6218 = vpop.f32.mrf.mxu0
      %v6219 = vadd.f32 0.0, %v6218
      %v6220 = vpop.f32.mrf.mxu0
      %v6221 = vadd.f32 0.0, %v6220
      %6222 = vmatmul.bf16.gmra.mxu0 %v6141
      %v6223 = vpop.f32.mrf.mxu0
      %v6224 = vadd.f32 0.0, %v6223
      %v6225 = vpop.f32.mrf.mxu0
      %v6226 = vadd.f32 0.0, %v6225
      %6227 = vmatmul.bf16.gmra.mxu0 %v6144
      %v6228 = vpop.f32.mrf.mxu0
      %v6229 = vadd.f32 0.0, %v6228
      %v6230 = vpop.f32.mrf.mxu0
      %v6231 = vadd.f32 0.0, %v6230
      %6232 = vmatmul.bf16.gmra.mxu0 %v6147
      %v6233 = vpop.f32.mrf.mxu0
      %v6234 = vadd.f32 0.0, %v6233
      %v6235 = vpop.f32.mrf.mxu0
      %v6236 = vadd.f32 0.0, %v6235
      %6237 = vdwg.mxu0
      %v6268 = vrot.slane %v6159, 7
      %v6269 = vrot.slane %v6161, 7
      %v6270 = vsel %vm947, %v6268, %v6269
      %v6271 = vrot.slane %v6164, 7
      %v6272 = vsel %vm947, %v6269, %v6271
      %v6273 = vrot.slane %v6166, 7
      %v6274 = vsel %vm947, %v6271, %v6273
      %v6275 = vrot.slane %v6169, 7
      %v6276 = vsel %vm947, %v6273, %v6275
      %v6277 = vrot.slane %v6171, 7
      %v6278 = vsel %vm947, %v6275, %v6277
      %v6279 = vrot.slane %v6174, 7
      %v6280 = vsel %vm947, %v6277, %v6279
      %v6281 = vrot.slane %v6176, 7
      %v6282 = vsel %vm947, %v6279, %v6281
      %v6283 = vrot.slane %v6179, 7
      %v6284 = vsel %vm947, %v6281, %v6283
      %v6285 = vrot.slane %v6181, 7
      %v6286 = vsel %vm947, %v6283, %v6285
      %v6287 = vrot.slane %v6184, 7
      %v6288 = vsel %vm947, %v6285, %v6287
      %v6289 = vrot.slane %v6186, 7
      %v6290 = vsel %vm947, %v6287, %v6289
      %v6291 = vrot.slane %v6189, 7
      %v6292 = vsel %vm947, %v6289, %v6291
      %v6293 = vrot.slane %v6191, 7
      %v6294 = vsel %vm947, %v6291, %v6293
      %v6295 = vrot.slane %v6194, 7
      %v6296 = vsel %vm947, %v6293, %v6295
      %v6297 = vrot.slane %v6196, 7
      %v6298 = vsel %vm947, %v6295, %v6297
      %v6299 = vrot.slane %v6199, 7
      %v6300 = vsel %vm947, %v6297, %v6299
      %v6301 = vrot.slane %v6201, 7
      %v6302 = vsel %vm947, %v6299, %v6301
      %v6303 = vrot.slane %v6204, 7
      %v6304 = vsel %vm947, %v6301, %v6303
      %v6305 = vrot.slane %v6206, 7
      %v6306 = vsel %vm947, %v6303, %v6305
      %v6307 = vrot.slane %v6209, 7
      %v6308 = vsel %vm947, %v6305, %v6307
      %v6309 = vrot.slane %v6211, 7
      %v6310 = vsel %vm947, %v6307, %v6309
      %v6311 = vrot.slane %v6214, 7
      %v6312 = vsel %vm947, %v6309, %v6311
      %v6313 = vrot.slane %v6216, 7
      %v6314 = vsel %vm947, %v6311, %v6313
      %v6315 = vrot.slane %v6219, 7
      %v6316 = vsel %vm947, %v6313, %v6315
      %v6317 = vrot.slane %v6221, 7
      %v6318 = vsel %vm947, %v6315, %v6317
      %v6319 = vrot.slane %v6224, 7
      %v6320 = vsel %vm947, %v6317, %v6319
      %v6321 = vrot.slane %v6226, 7
      %v6322 = vsel %vm947, %v6319, %v6321
      %v6323 = vrot.slane %v6229, 7
      %v6324 = vsel %vm947, %v6321, %v6323
      %v6325 = vrot.slane %v6231, 7
      %v6326 = vsel %vm947, %v6323, %v6325
      %v6357 = vsel %vm947, 0.0, %v6268
      %v6358 = vmul.f32 %v6357, %v1051
      %v6359 = vmul.f32 %v6270, %v1056
      %v6360 = vmul.f32 %v6272, %v1061
      %v6361 = vmul.f32 %v6274, %v1066
      %v6362 = vmul.f32 %v6276, %v1071
      %v6363 = vmul.f32 %v6278, %v1076
      %v6364 = vmul.f32 %v6280, %v1081
      %v6365 = vmul.f32 %v6282, %v1086
      %v6366 = vmul.f32 %v6284, %v1091
      %v6367 = vmul.f32 %v6286, %v1096
      %v6368 = vmul.f32 %v6288, %v1101
      %v6369 = vmul.f32 %v6290, %v1106
      %v6370 = vmul.f32 %v6292, %v1111
      %v6371 = vmul.f32 %v6294, %v1116
      %v6372 = vmul.f32 %v6296, %v1121
      %v6373 = vmul.f32 %v6298, %v1126
      %v6374 = vmul.f32 %v6300, %v1131
      %v6375 = vmul.f32 %v6302, %v1136
      %v6376 = vmul.f32 %v6304, %v1141
      %v6377 = vmul.f32 %v6306, %v1146
      %v6378 = vmul.f32 %v6308, %v1151
      %v6379 = vmul.f32 %v6310, %v1156
      %v6380 = vmul.f32 %v6312, %v1161
      %v6381 = vmul.f32 %v6314, %v1166
      %v6382 = vmul.f32 %v6316, %v1171
      %v6383 = vmul.f32 %v6318, %v1176
      %v6384 = vmul.f32 %v6320, %v1181
      %v6385 = vmul.f32 %v6322, %v1186
      %v6386 = vmul.f32 %v6324, %v1191
      %v6387 = vmul.f32 %v6326, %v1196
      %6418 = vrot.lane.b32.xlu0 %v6358, 32
      %v6419 = vpop.permute.xlu0 %6418
      %6420 = vrot.lane.b32.xlu0 %v6359, 32
      %v6421 = vpop.permute.xlu0 %6420
      %6422 = vrot.lane.b32.xlu0 %v6360, 32
      %v6423 = vpop.permute.xlu0 %6422
      %6424 = vrot.lane.b32.xlu0 %v6361, 32
      %v6425 = vpop.permute.xlu0 %6424
      %6426 = vrot.lane.b32.xlu0 %v6362, 32
      %v6427 = vpop.permute.xlu0 %6426
      %6428 = vrot.lane.b32.xlu0 %v6363, 32
      %v6429 = vpop.permute.xlu0 %6428
      %6430 = vrot.lane.b32.xlu0 %v6364, 32
      %v6431 = vpop.permute.xlu0 %6430
      %6432 = vrot.lane.b32.xlu0 %v6365, 32
      %v6433 = vpop.permute.xlu0 %6432
      %6434 = vrot.lane.b32.xlu0 %v6366, 32
      %v6435 = vpop.permute.xlu0 %6434
      %6436 = vrot.lane.b32.xlu0 %v6367, 32
      %v6437 = vpop.permute.xlu0 %6436
      %6438 = vrot.lane.b32.xlu0 %v6368, 32
      %v6439 = vpop.permute.xlu0 %6438
      %6440 = vrot.lane.b32.xlu0 %v6369, 32
      %v6441 = vpop.permute.xlu0 %6440
      %6442 = vrot.lane.b32.xlu0 %v6370, 32
      %v6443 = vpop.permute.xlu0 %6442
      %6444 = vrot.lane.b32.xlu0 %v6371, 32
      %v6445 = vpop.permute.xlu0 %6444
      %6446 = vrot.lane.b32.xlu0 %v6372, 32
      %v6447 = vpop.permute.xlu0 %6446
      %6448 = vrot.lane.b32.xlu0 %v6373, 32
      %v6449 = vpop.permute.xlu0 %6448
      %6450 = vrot.lane.b32.xlu0 %v6374, 32
      %v6451 = vpop.permute.xlu0 %6450
      %6452 = vrot.lane.b32.xlu0 %v6375, 32
      %v6453 = vpop.permute.xlu0 %6452
      %6454 = vrot.lane.b32.xlu0 %v6376, 32
      %v6455 = vpop.permute.xlu0 %6454
      %6456 = vrot.lane.b32.xlu0 %v6377, 32
      %v6457 = vpop.permute.xlu0 %6456
      %6458 = vrot.lane.b32.xlu0 %v6378, 32
      %v6459 = vpop.permute.xlu0 %6458
      %6460 = vrot.lane.b32.xlu0 %v6379, 32
      %v6461 = vpop.permute.xlu0 %6460
      %6462 = vrot.lane.b32.xlu0 %v6380, 32
      %v6463 = vpop.permute.xlu0 %6462
      %6464 = vrot.lane.b32.xlu0 %v6381, 32
      %v6465 = vpop.permute.xlu0 %6464
      %6466 = vrot.lane.b32.xlu0 %v6382, 32
      %v6467 = vpop.permute.xlu0 %6466
      %6468 = vrot.lane.b32.xlu0 %v6383, 32
      %v6469 = vpop.permute.xlu0 %6468
      %6470 = vrot.lane.b32.xlu0 %v6384, 32
      %v6471 = vpop.permute.xlu0 %6470
      %6472 = vrot.lane.b32.xlu0 %v6385, 32
      %v6473 = vpop.permute.xlu0 %6472
      %6474 = vrot.lane.b32.xlu0 %v6386, 32
      %v6475 = vpop.permute.xlu0 %6474
      %6476 = vrot.lane.b32.xlu0 %v6387, 32
      %v6477 = vpop.permute.xlu0 %6476
      %v6508 = vadd.f32 %v6159, %v1263
      %v6509 = vadd.f32 %v6161, %v1265
      %v6510 = vadd.f32 %v6164, %v6419
      %v6511 = vadd.f32 %v6166, %v6421
      %v6512 = vadd.f32 %v6169, %v6423
      %v6513 = vadd.f32 %v6171, %v6425
      %v6514 = vadd.f32 %v6174, %v6427
      %v6515 = vadd.f32 %v6176, %v6429
      %v6516 = vadd.f32 %v6179, %v6431
      %v6517 = vadd.f32 %v6181, %v6433
      %v6518 = vadd.f32 %v6184, %v6435
      %v6519 = vadd.f32 %v6186, %v6437
      %v6520 = vadd.f32 %v6189, %v6439
      %v6521 = vadd.f32 %v6191, %v6441
      %v6522 = vadd.f32 %v6194, %v6443
      %v6523 = vadd.f32 %v6196, %v6445
      %v6524 = vadd.f32 %v6199, %v6447
      %v6525 = vadd.f32 %v6201, %v6449
      %v6526 = vadd.f32 %v6204, %v6451
      %v6527 = vadd.f32 %v6206, %v6453
      %v6528 = vadd.f32 %v6209, %v6455
      %v6529 = vadd.f32 %v6211, %v6457
      %v6530 = vadd.f32 %v6214, %v6459
      %v6531 = vadd.f32 %v6216, %v6461
      %v6532 = vadd.f32 %v6219, %v6463
      %v6533 = vadd.f32 %v6221, %v6465
      %v6534 = vadd.f32 %v6224, %v6467
      %v6535 = vadd.f32 %v6226, %v6469
      %v6536 = vadd.f32 %v6229, %v6471
      %v6537 = vadd.f32 %v6231, %v6473
      %v6538 = vadd.f32 %v6234, %v6475
      %v6539 = vadd.f32 %v6236, %v6477
      %6540 = vrot.lane.b32.xlu0 %v6159, 120
      %v6541 = vpop.permute.xlu0 %6540
      %6542 = vrot.lane.b32.xlu0 %v6161, 120
      %v6543 = vpop.permute.xlu0 %6542
      %6544 = vrot.lane.b32.xlu0 %v6164, 120
      %v6545 = vpop.permute.xlu0 %6544
      %6546 = vrot.lane.b32.xlu0 %v6166, 120
      %v6547 = vpop.permute.xlu0 %6546
      %6548 = vrot.lane.b32.xlu0 %v6169, 120
      %v6549 = vpop.permute.xlu0 %6548
      %6550 = vrot.lane.b32.xlu0 %v6171, 120
      %v6551 = vpop.permute.xlu0 %6550
      %6552 = vrot.lane.b32.xlu0 %v6174, 120
      %v6553 = vpop.permute.xlu0 %6552
      %6554 = vrot.lane.b32.xlu0 %v6176, 120
      %v6555 = vpop.permute.xlu0 %6554
      %6556 = vrot.lane.b32.xlu0 %v6179, 120
      %v6557 = vpop.permute.xlu0 %6556
      %6558 = vrot.lane.b32.xlu0 %v6181, 120
      %v6559 = vpop.permute.xlu0 %6558
      %6560 = vrot.lane.b32.xlu0 %v6184, 120
      %v6561 = vpop.permute.xlu0 %6560
      %6562 = vrot.lane.b32.xlu0 %v6186, 120
      %v6563 = vpop.permute.xlu0 %6562
      %6564 = vrot.lane.b32.xlu0 %v6189, 120
      %v6565 = vpop.permute.xlu0 %6564
      %6566 = vrot.lane.b32.xlu0 %v6191, 120
      %v6567 = vpop.permute.xlu0 %6566
      %6568 = vrot.lane.b32.xlu0 %v6194, 120
      %v6569 = vpop.permute.xlu0 %6568
      %6570 = vrot.lane.b32.xlu0 %v6196, 120
      %v6571 = vpop.permute.xlu0 %6570
      %6572 = vrot.lane.b32.xlu0 %v6199, 120
      %v6573 = vpop.permute.xlu0 %6572
      %6574 = vrot.lane.b32.xlu0 %v6201, 120
      %v6575 = vpop.permute.xlu0 %6574
      %6576 = vrot.lane.b32.xlu0 %v6204, 120
      %v6577 = vpop.permute.xlu0 %6576
      %6578 = vrot.lane.b32.xlu0 %v6206, 120
      %v6579 = vpop.permute.xlu0 %6578
      %6580 = vrot.lane.b32.xlu0 %v6209, 120
      %v6581 = vpop.permute.xlu0 %6580
      %6582 = vrot.lane.b32.xlu0 %v6211, 120
      %v6583 = vpop.permute.xlu0 %6582
      %6584 = vrot.lane.b32.xlu0 %v6214, 120
      %v6585 = vpop.permute.xlu0 %6584
      %6586 = vrot.lane.b32.xlu0 %v6216, 120
      %v6587 = vpop.permute.xlu0 %6586
      %6588 = vrot.lane.b32.xlu0 %v6219, 120
      %v6589 = vpop.permute.xlu0 %6588
      %6590 = vrot.lane.b32.xlu0 %v6221, 120
      %v6591 = vpop.permute.xlu0 %6590
      %6592 = vrot.lane.b32.xlu0 %v6224, 120
      %v6593 = vpop.permute.xlu0 %6592
      %6594 = vrot.lane.b32.xlu0 %v6226, 120
      %v6595 = vpop.permute.xlu0 %6594
      %6596 = vrot.lane.b32.xlu0 %v6229, 120
      %v6597 = vpop.permute.xlu0 %6596
      %6598 = vrot.lane.b32.xlu0 %v6231, 120
      %v6599 = vpop.permute.xlu0 %6598
      %6600 = vrot.lane.b32.xlu0 %v6541, 32
      %v6601 = vpop.permute.xlu0 %6600
      %6602 = vrot.lane.b32.xlu0 %v6543, 32
      %v6603 = vpop.permute.xlu0 %6602
      %6604 = vrot.lane.b32.xlu0 %v6545, 32
      %v6605 = vpop.permute.xlu0 %6604
      %6606 = vrot.lane.b32.xlu0 %v6547, 32
      %v6607 = vpop.permute.xlu0 %6606
      %6608 = vrot.lane.b32.xlu0 %v6549, 32
      %v6609 = vpop.permute.xlu0 %6608
      %6610 = vrot.lane.b32.xlu0 %v6551, 32
      %v6611 = vpop.permute.xlu0 %6610
      %6612 = vrot.lane.b32.xlu0 %v6553, 32
      %v6613 = vpop.permute.xlu0 %6612
      %6614 = vrot.lane.b32.xlu0 %v6555, 32
      %v6615 = vpop.permute.xlu0 %6614
      %6616 = vrot.lane.b32.xlu0 %v6557, 32
      %v6617 = vpop.permute.xlu0 %6616
      %6618 = vrot.lane.b32.xlu0 %v6559, 32
      %v6619 = vpop.permute.xlu0 %6618
      %6620 = vrot.lane.b32.xlu0 %v6561, 32
      %v6621 = vpop.permute.xlu0 %6620
      %6622 = vrot.lane.b32.xlu0 %v6563, 32
      %v6623 = vpop.permute.xlu0 %6622
      %6624 = vrot.lane.b32.xlu0 %v6565, 32
      %v6625 = vpop.permute.xlu0 %6624
      %6626 = vrot.lane.b32.xlu0 %v6567, 32
      %v6627 = vpop.permute.xlu0 %6626
      %6628 = vrot.lane.b32.xlu0 %v6569, 32
      %v6629 = vpop.permute.xlu0 %6628
      %6630 = vrot.lane.b32.xlu0 %v6571, 32
      %v6631 = vpop.permute.xlu0 %6630
      %6632 = vrot.lane.b32.xlu0 %v6573, 32
      %v6633 = vpop.permute.xlu0 %6632
      %6634 = vrot.lane.b32.xlu0 %v6575, 32
      %v6635 = vpop.permute.xlu0 %6634
      %6636 = vrot.lane.b32.xlu0 %v6577, 32
      %v6637 = vpop.permute.xlu0 %6636
      %6638 = vrot.lane.b32.xlu0 %v6579, 32
      %v6639 = vpop.permute.xlu0 %6638
      %6640 = vrot.lane.b32.xlu0 %v6581, 32
      %v6641 = vpop.permute.xlu0 %6640
      %6642 = vrot.lane.b32.xlu0 %v6583, 32
      %v6643 = vpop.permute.xlu0 %6642
      %6644 = vrot.lane.b32.xlu0 %v6585, 32
      %v6645 = vpop.permute.xlu0 %6644
      %6646 = vrot.lane.b32.xlu0 %v6587, 32
      %v6647 = vpop.permute.xlu0 %6646
      %6648 = vrot.lane.b32.xlu0 %v6589, 32
      %v6649 = vpop.permute.xlu0 %6648
      %6650 = vrot.lane.b32.xlu0 %v6591, 32
      %v6651 = vpop.permute.xlu0 %6650
      %6652 = vrot.lane.b32.xlu0 %v6593, 32
      %v6653 = vpop.permute.xlu0 %6652
      %6654 = vrot.lane.b32.xlu0 %v6595, 32
      %v6655 = vpop.permute.xlu0 %6654
      %6656 = vrot.lane.b32.xlu0 %v6597, 32
      %v6657 = vpop.permute.xlu0 %6656
      %6658 = vrot.lane.b32.xlu0 %v6599, 32
      %v6659 = vpop.permute.xlu0 %6658
      %v6690 = vadd.f32 %v6508, %v1452
      %v6691 = vadd.f32 %v6509, %v1452
      %v6692 = vadd.f32 %v6510, %v6601
      %v6693 = vadd.f32 %v6511, %v6603
      %v6694 = vadd.f32 %v6512, %v6605
      %v6695 = vadd.f32 %v6513, %v6607
      %v6696 = vadd.f32 %v6514, %v6609
      %v6697 = vadd.f32 %v6515, %v6611
      %v6698 = vadd.f32 %v6516, %v6613
      %v6699 = vadd.f32 %v6517, %v6615
      %v6700 = vadd.f32 %v6518, %v6617
      %v6701 = vadd.f32 %v6519, %v6619
      %v6702 = vadd.f32 %v6520, %v6621
      %v6703 = vadd.f32 %v6521, %v6623
      %v6704 = vadd.f32 %v6522, %v6625
      %v6705 = vadd.f32 %v6523, %v6627
      %v6706 = vadd.f32 %v6524, %v6629
      %v6707 = vadd.f32 %v6525, %v6631
      %v6708 = vadd.f32 %v6526, %v6633
      %v6709 = vadd.f32 %v6527, %v6635
      %v6710 = vadd.f32 %v6528, %v6637
      %v6711 = vadd.f32 %v6529, %v6639
      %v6712 = vadd.f32 %v6530, %v6641
      %v6713 = vadd.f32 %v6531, %v6643
      %v6714 = vadd.f32 %v6532, %v6645
      %v6715 = vadd.f32 %v6533, %v6647
      %v6716 = vadd.f32 %v6534, %v6649
      %v6717 = vadd.f32 %v6535, %v6651
      %v6718 = vadd.f32 %v6536, %v6653
      %v6719 = vadd.f32 %v6537, %v6655
      %v6720 = vadd.f32 %v6538, %v6657
      %v6721 = vadd.f32 %v6539, %v6659
      %v6723 = vrot.slane %v6159, 1
      %v6724 = vrot.slane %v6161, 1
      %v6725 = vsel %vm1577, %v6723, %v6724
      %v6726 = vrot.slane %v6164, 1
      %v6727 = vsel %vm1577, %v6724, %v6726
      %v6728 = vrot.slane %v6166, 1
      %v6729 = vsel %vm1577, %v6726, %v6728
      %v6730 = vrot.slane %v6169, 1
      %v6731 = vsel %vm1577, %v6728, %v6730
      %v6732 = vrot.slane %v6171, 1
      %v6733 = vsel %vm1577, %v6730, %v6732
      %v6734 = vrot.slane %v6174, 1
      %v6735 = vsel %vm1577, %v6732, %v6734
      %v6736 = vrot.slane %v6176, 1
      %v6737 = vsel %vm1577, %v6734, %v6736
      %v6738 = vrot.slane %v6179, 1
      %v6739 = vsel %vm1577, %v6736, %v6738
      %v6740 = vrot.slane %v6181, 1
      %v6741 = vsel %vm1577, %v6738, %v6740
      %v6742 = vrot.slane %v6184, 1
      %v6743 = vsel %vm1577, %v6740, %v6742
      %v6744 = vrot.slane %v6186, 1
      %v6745 = vsel %vm1577, %v6742, %v6744
      %v6746 = vrot.slane %v6189, 1
      %v6747 = vsel %vm1577, %v6744, %v6746
      %v6748 = vrot.slane %v6191, 1
      %v6749 = vsel %vm1577, %v6746, %v6748
      %v6750 = vrot.slane %v6194, 1
      %v6751 = vsel %vm1577, %v6748, %v6750
      %v6752 = vrot.slane %v6196, 1
      %v6753 = vsel %vm1577, %v6750, %v6752
      %v6754 = vrot.slane %v6199, 1
      %v6755 = vsel %vm1577, %v6752, %v6754
      %v6756 = vrot.slane %v6201, 1
      %v6757 = vsel %vm1577, %v6754, %v6756
      %v6758 = vrot.slane %v6204, 1
      %v6759 = vsel %vm1577, %v6756, %v6758
      %v6760 = vrot.slane %v6206, 1
      %v6761 = vsel %vm1577, %v6758, %v6760
      %v6762 = vrot.slane %v6209, 1
      %v6763 = vsel %vm1577, %v6760, %v6762
      %v6764 = vrot.slane %v6211, 1
      %v6765 = vsel %vm1577, %v6762, %v6764
      %v6766 = vrot.slane %v6214, 1
      %v6767 = vsel %vm1577, %v6764, %v6766
      %v6768 = vrot.slane %v6216, 1
      %v6769 = vsel %vm1577, %v6766, %v6768
      %v6770 = vrot.slane %v6219, 1
      %v6771 = vsel %vm1577, %v6768, %v6770
      %v6772 = vrot.slane %v6221, 1
      %v6773 = vsel %vm1577, %v6770, %v6772
      %v6774 = vrot.slane %v6224, 1
      %v6775 = vsel %vm1577, %v6772, %v6774
      %v6776 = vrot.slane %v6226, 1
      %v6777 = vsel %vm1577, %v6774, %v6776
      %v6778 = vrot.slane %v6229, 1
      %v6779 = vsel %vm1577, %v6776, %v6778
      %v6780 = vrot.slane %v6231, 1
      %v6781 = vsel %vm1577, %v6778, %v6780
      %v6782 = vrot.slane %v6234, 1
      %v6783 = vsel %vm1577, %v6780, %v6782
      %6784 = vrot.lane.b32.xlu0 %v6723, 112
      %v6785 = vpop.permute.xlu0 %6784
      %6786 = vrot.lane.b32.xlu0 %v6725, 112
      %v6787 = vpop.permute.xlu0 %6786
      %6788 = vrot.lane.b32.xlu0 %v6727, 112
      %v6789 = vpop.permute.xlu0 %6788
      %6790 = vrot.lane.b32.xlu0 %v6729, 112
      %v6791 = vpop.permute.xlu0 %6790
      %6792 = vrot.lane.b32.xlu0 %v6731, 112
      %v6793 = vpop.permute.xlu0 %6792
      %6794 = vrot.lane.b32.xlu0 %v6733, 112
      %v6795 = vpop.permute.xlu0 %6794
      %6796 = vrot.lane.b32.xlu0 %v6735, 112
      %v6797 = vpop.permute.xlu0 %6796
      %6798 = vrot.lane.b32.xlu0 %v6737, 112
      %v6799 = vpop.permute.xlu0 %6798
      %6800 = vrot.lane.b32.xlu0 %v6739, 112
      %v6801 = vpop.permute.xlu0 %6800
      %6802 = vrot.lane.b32.xlu0 %v6741, 112
      %v6803 = vpop.permute.xlu0 %6802
      %6804 = vrot.lane.b32.xlu0 %v6743, 112
      %v6805 = vpop.permute.xlu0 %6804
      %6806 = vrot.lane.b32.xlu0 %v6745, 112
      %v6807 = vpop.permute.xlu0 %6806
      %6808 = vrot.lane.b32.xlu0 %v6747, 112
      %v6809 = vpop.permute.xlu0 %6808
      %6810 = vrot.lane.b32.xlu0 %v6749, 112
      %v6811 = vpop.permute.xlu0 %6810
      %6812 = vrot.lane.b32.xlu0 %v6751, 112
      %v6813 = vpop.permute.xlu0 %6812
      %6814 = vrot.lane.b32.xlu0 %v6753, 112
      %v6815 = vpop.permute.xlu0 %6814
      %6816 = vrot.lane.b32.xlu0 %v6755, 112
      %v6817 = vpop.permute.xlu0 %6816
      %6818 = vrot.lane.b32.xlu0 %v6757, 112
      %v6819 = vpop.permute.xlu0 %6818
      %6820 = vrot.lane.b32.xlu0 %v6759, 112
      %v6821 = vpop.permute.xlu0 %6820
      %6822 = vrot.lane.b32.xlu0 %v6761, 112
      %v6823 = vpop.permute.xlu0 %6822
      %6824 = vrot.lane.b32.xlu0 %v6763, 112
      %v6825 = vpop.permute.xlu0 %6824
      %6826 = vrot.lane.b32.xlu0 %v6765, 112
      %v6827 = vpop.permute.xlu0 %6826
      %6828 = vrot.lane.b32.xlu0 %v6767, 112
      %v6829 = vpop.permute.xlu0 %6828
      %6830 = vrot.lane.b32.xlu0 %v6769, 112
      %v6831 = vpop.permute.xlu0 %6830
      %6832 = vrot.lane.b32.xlu0 %v6771, 112
      %v6833 = vpop.permute.xlu0 %6832
      %6834 = vrot.lane.b32.xlu0 %v6773, 112
      %v6835 = vpop.permute.xlu0 %6834
      %6836 = vrot.lane.b32.xlu0 %v6775, 112
      %v6837 = vpop.permute.xlu0 %6836
      %6838 = vrot.lane.b32.xlu0 %v6777, 112
      %v6839 = vpop.permute.xlu0 %6838
      %6840 = vrot.lane.b32.xlu0 %v6779, 112
      %v6841 = vpop.permute.xlu0 %6840
      %6842 = vrot.lane.b32.xlu0 %v6781, 112
      %v6843 = vpop.permute.xlu0 %6842
      %6844 = vrot.lane.b32.xlu0 %v6783, 112
      %v6845 = vpop.permute.xlu0 %6844
      %v6877 = vsel %vm1577, 0.0, %v6785
      %v6878 = vmul.f32 %v6877, %v1739
      %v6879 = vmul.f32 %v6787, %v1743
      %v6880 = vmul.f32 %v6789, %v1747
      %v6881 = vmul.f32 %v6791, %v1751
      %v6882 = vmul.f32 %v6793, %v1755
      %v6883 = vmul.f32 %v6795, %v1759
      %v6884 = vmul.f32 %v6797, %v1763
      %v6885 = vmul.f32 %v6799, %v1767
      %v6886 = vmul.f32 %v6801, %v1771
      %v6887 = vmul.f32 %v6803, %v1775
      %v6888 = vmul.f32 %v6805, %v1779
      %v6889 = vmul.f32 %v6807, %v1783
      %v6890 = vmul.f32 %v6809, %v1787
      %v6891 = vmul.f32 %v6811, %v1791
      %v6892 = vmul.f32 %v6813, %v1795
      %v6893 = vmul.f32 %v6815, %v1799
      %v6894 = vmul.f32 %v6817, %v1803
      %v6895 = vmul.f32 %v6819, %v1807
      %v6896 = vmul.f32 %v6821, %v1811
      %v6897 = vmul.f32 %v6823, %v1815
      %v6898 = vmul.f32 %v6825, %v1819
      %v6899 = vmul.f32 %v6827, %v1823
      %v6900 = vmul.f32 %v6829, %v1827
      %v6901 = vmul.f32 %v6831, %v1831
      %v6902 = vmul.f32 %v6833, %v1835
      %v6903 = vmul.f32 %v6835, %v1839
      %v6904 = vmul.f32 %v6837, %v1843
      %v6905 = vmul.f32 %v6839, %v1847
      %v6906 = vmul.f32 %v6841, %v1851
      %v6907 = vmul.f32 %v6843, %v1855
      %v6908 = vmul.f32 %v6845, %v1859
      %6940 = vrot.lane.b32.xlu0 %v6878, 32
      %v6941 = vpop.permute.xlu0 %6940
      %6942 = vrot.lane.b32.xlu0 %v6879, 32
      %v6943 = vpop.permute.xlu0 %6942
      %6944 = vrot.lane.b32.xlu0 %v6880, 32
      %v6945 = vpop.permute.xlu0 %6944
      %6946 = vrot.lane.b32.xlu0 %v6881, 32
      %v6947 = vpop.permute.xlu0 %6946
      %6948 = vrot.lane.b32.xlu0 %v6882, 32
      %v6949 = vpop.permute.xlu0 %6948
      %6950 = vrot.lane.b32.xlu0 %v6883, 32
      %v6951 = vpop.permute.xlu0 %6950
      %6952 = vrot.lane.b32.xlu0 %v6884, 32
      %v6953 = vpop.permute.xlu0 %6952
      %6954 = vrot.lane.b32.xlu0 %v6885, 32
      %v6955 = vpop.permute.xlu0 %6954
      %6956 = vrot.lane.b32.xlu0 %v6886, 32
      %v6957 = vpop.permute.xlu0 %6956
      %6958 = vrot.lane.b32.xlu0 %v6887, 32
      %v6959 = vpop.permute.xlu0 %6958
      %6960 = vrot.lane.b32.xlu0 %v6888, 32
      %v6961 = vpop.permute.xlu0 %6960
      %6962 = vrot.lane.b32.xlu0 %v6889, 32
      %v6963 = vpop.permute.xlu0 %6962
      %6964 = vrot.lane.b32.xlu0 %v6890, 32
      %v6965 = vpop.permute.xlu0 %6964
      %6966 = vrot.lane.b32.xlu0 %v6891, 32
      %v6967 = vpop.permute.xlu0 %6966
      %6968 = vrot.lane.b32.xlu0 %v6892, 32
      %v6969 = vpop.permute.xlu0 %6968
      %6970 = vrot.lane.b32.xlu0 %v6893, 32
      %v6971 = vpop.permute.xlu0 %6970
      %6972 = vrot.lane.b32.xlu0 %v6894, 32
      %v6973 = vpop.permute.xlu0 %6972
      %6974 = vrot.lane.b32.xlu0 %v6895, 32
      %v6975 = vpop.permute.xlu0 %6974
      %6976 = vrot.lane.b32.xlu0 %v6896, 32
      %v6977 = vpop.permute.xlu0 %6976
      %6978 = vrot.lane.b32.xlu0 %v6897, 32
      %v6979 = vpop.permute.xlu0 %6978
      %6980 = vrot.lane.b32.xlu0 %v6898, 32
      %v6981 = vpop.permute.xlu0 %6980
      %6982 = vrot.lane.b32.xlu0 %v6899, 32
      %v6983 = vpop.permute.xlu0 %6982
      %6984 = vrot.lane.b32.xlu0 %v6900, 32
      %v6985 = vpop.permute.xlu0 %6984
      %6986 = vrot.lane.b32.xlu0 %v6901, 32
      %v6987 = vpop.permute.xlu0 %6986
      %6988 = vrot.lane.b32.xlu0 %v6902, 32
      %v6989 = vpop.permute.xlu0 %6988
      %6990 = vrot.lane.b32.xlu0 %v6903, 32
      %v6991 = vpop.permute.xlu0 %6990
      %6992 = vrot.lane.b32.xlu0 %v6904, 32
      %v6993 = vpop.permute.xlu0 %6992
      %6994 = vrot.lane.b32.xlu0 %v6905, 32
      %v6995 = vpop.permute.xlu0 %6994
      %6996 = vrot.lane.b32.xlu0 %v6906, 32
      %v6997 = vpop.permute.xlu0 %6996
      %6998 = vrot.lane.b32.xlu0 %v6907, 32
      %v6999 = vpop.permute.xlu0 %6998
      %7000 = vrot.lane.b32.xlu0 %v6908, 32
      %v7001 = vpop.permute.xlu0 %7000
      %v7033 = vadd.f32 %v6690, %v1926
      %v7034 = vadd.f32 %v6691, %v6941
      %v7035 = vadd.f32 %v6692, %v6943
      %v7036 = vadd.f32 %v6693, %v6945
      %v7037 = vadd.f32 %v6694, %v6947
      %v7038 = vadd.f32 %v6695, %v6949
      %v7039 = vadd.f32 %v6696, %v6951
      %v7040 = vadd.f32 %v6697, %v6953
      %v7041 = vadd.f32 %v6698, %v6955
      %v7042 = vadd.f32 %v6699, %v6957
      %v7043 = vadd.f32 %v6700, %v6959
      %v7044 = vadd.f32 %v6701, %v6961
      %v7045 = vadd.f32 %v6702, %v6963
      %v7046 = vadd.f32 %v6703, %v6965
      %v7047 = vadd.f32 %v6704, %v6967
      %v7048 = vadd.f32 %v6705, %v6969
      %v7049 = vadd.f32 %v6706, %v6971
      %v7050 = vadd.f32 %v6707, %v6973
      %v7051 = vadd.f32 %v6708, %v6975
      %v7052 = vadd.f32 %v6709, %v6977
      %v7053 = vadd.f32 %v6710, %v6979
      %v7054 = vadd.f32 %v6711, %v6981
      %v7055 = vadd.f32 %v6712, %v6983
      %v7056 = vadd.f32 %v6713, %v6985
      %v7057 = vadd.f32 %v6714, %v6987
      %v7058 = vadd.f32 %v6715, %v6989
      %v7059 = vadd.f32 %v6716, %v6991
      %v7060 = vadd.f32 %v6717, %v6993
      %v7061 = vadd.f32 %v6718, %v6995
      %v7062 = vadd.f32 %v6719, %v6997
      %v7063 = vadd.f32 %v6720, %v6999
      %v7064 = vadd.f32 %v6721, %v7001
      %v7066 = vrot.slane %v6234, 7
      %v7067 = vsel %vm947, %v6325, %v7066
      %v7068 = vrot.slane %v6236, 7
      %v7069 = vsel %vm947, %v7066, %v7068
      %7070 = vrot.lane.b32.xlu0 %v6268, 104
      %v7071 = vpop.permute.xlu0 %7070
      %7072 = vrot.lane.b32.xlu0 %v6270, 104
      %v7073 = vpop.permute.xlu0 %7072
      %7074 = vrot.lane.b32.xlu0 %v6272, 104
      %v7075 = vpop.permute.xlu0 %7074
      %7076 = vrot.lane.b32.xlu0 %v6274, 104
      %v7077 = vpop.permute.xlu0 %7076
      %7078 = vrot.lane.b32.xlu0 %v6276, 104
      %v7079 = vpop.permute.xlu0 %7078
      %7080 = vrot.lane.b32.xlu0 %v6278, 104
      %v7081 = vpop.permute.xlu0 %7080
      %7082 = vrot.lane.b32.xlu0 %v6280, 104
      %v7083 = vpop.permute.xlu0 %7082
      %7084 = vrot.lane.b32.xlu0 %v6282, 104
      %v7085 = vpop.permute.xlu0 %7084
      %7086 = vrot.lane.b32.xlu0 %v6284, 104
      %v7087 = vpop.permute.xlu0 %7086
      %7088 = vrot.lane.b32.xlu0 %v6286, 104
      %v7089 = vpop.permute.xlu0 %7088
      %7090 = vrot.lane.b32.xlu0 %v6288, 104
      %v7091 = vpop.permute.xlu0 %7090
      %7092 = vrot.lane.b32.xlu0 %v6290, 104
      %v7093 = vpop.permute.xlu0 %7092
      %7094 = vrot.lane.b32.xlu0 %v6292, 104
      %v7095 = vpop.permute.xlu0 %7094
      %7096 = vrot.lane.b32.xlu0 %v6294, 104
      %v7097 = vpop.permute.xlu0 %7096
      %7098 = vrot.lane.b32.xlu0 %v6296, 104
      %v7099 = vpop.permute.xlu0 %7098
      %7100 = vrot.lane.b32.xlu0 %v6298, 104
      %v7101 = vpop.permute.xlu0 %7100
      %7102 = vrot.lane.b32.xlu0 %v6300, 104
      %v7103 = vpop.permute.xlu0 %7102
      %7104 = vrot.lane.b32.xlu0 %v6302, 104
      %v7105 = vpop.permute.xlu0 %7104
      %7106 = vrot.lane.b32.xlu0 %v6304, 104
      %v7107 = vpop.permute.xlu0 %7106
      %7108 = vrot.lane.b32.xlu0 %v6306, 104
      %v7109 = vpop.permute.xlu0 %7108
      %7110 = vrot.lane.b32.xlu0 %v6308, 104
      %v7111 = vpop.permute.xlu0 %7110
      %7112 = vrot.lane.b32.xlu0 %v6310, 104
      %v7113 = vpop.permute.xlu0 %7112
      %7114 = vrot.lane.b32.xlu0 %v6312, 104
      %v7115 = vpop.permute.xlu0 %7114
      %7116 = vrot.lane.b32.xlu0 %v6314, 104
      %v7117 = vpop.permute.xlu0 %7116
      %7118 = vrot.lane.b32.xlu0 %v6316, 104
      %v7119 = vpop.permute.xlu0 %7118
      %7120 = vrot.lane.b32.xlu0 %v6318, 104
      %v7121 = vpop.permute.xlu0 %7120
      %7122 = vrot.lane.b32.xlu0 %v6320, 104
      %v7123 = vpop.permute.xlu0 %7122
      %7124 = vrot.lane.b32.xlu0 %v6322, 104
      %v7125 = vpop.permute.xlu0 %7124
      %7126 = vrot.lane.b32.xlu0 %v6324, 104
      %v7127 = vpop.permute.xlu0 %7126
      %7128 = vrot.lane.b32.xlu0 %v6326, 104
      %v7129 = vpop.permute.xlu0 %7128
      %7130 = vrot.lane.b32.xlu0 %v7067, 104
      %v7131 = vpop.permute.xlu0 %7130
      %7132 = vrot.lane.b32.xlu0 %v7069, 104
      %v7133 = vpop.permute.xlu0 %7132
      %v7166 = vsel %vm947, 0.0, %v7071
      %v7167 = vmul.f32 %v7166, %v1041
      %v7168 = vmul.f32 %v7073, %v1046
      %v7169 = vmul.f32 %v7075, %v1051
      %v7170 = vmul.f32 %v7077, %v1056
      %v7171 = vmul.f32 %v7079, %v1061
      %v7172 = vmul.f32 %v7081, %v1066
      %v7173 = vmul.f32 %v7083, %v1071
      %v7174 = vmul.f32 %v7085, %v1076
      %v7175 = vmul.f32 %v7087, %v1081
      %v7176 = vmul.f32 %v7089, %v1086
      %v7177 = vmul.f32 %v7091, %v1091
      %v7178 = vmul.f32 %v7093, %v1096
      %v7179 = vmul.f32 %v7095, %v1101
      %v7180 = vmul.f32 %v7097, %v1106
      %v7181 = vmul.f32 %v7099, %v1111
      %v7182 = vmul.f32 %v7101, %v1116
      %v7183 = vmul.f32 %v7103, %v1121
      %v7184 = vmul.f32 %v7105, %v1126
      %v7185 = vmul.f32 %v7107, %v1131
      %v7186 = vmul.f32 %v7109, %v1136
      %v7187 = vmul.f32 %v7111, %v1141
      %v7188 = vmul.f32 %v7113, %v1146
      %v7189 = vmul.f32 %v7115, %v1151
      %v7190 = vmul.f32 %v7117, %v1156
      %v7191 = vmul.f32 %v7119, %v1161
      %v7192 = vmul.f32 %v7121, %v1166
      %v7193 = vmul.f32 %v7123, %v1171
      %v7194 = vmul.f32 %v7125, %v1176
      %v7195 = vmul.f32 %v7127, %v1181
      %v7196 = vmul.f32 %v7129, %v1186
      %v7197 = vmul.f32 %v7131, %v1191
      %v7198 = vmul.f32 %v7133, %v1196
      %7231 = vrot.lane.b32.xlu0 %v7167, 32
      %v7232 = vpop.permute.xlu0 %7231
      %7233 = vrot.lane.b32.xlu0 %v7168, 32
      %v7234 = vpop.permute.xlu0 %7233
      %7235 = vrot.lane.b32.xlu0 %v7169, 32
      %v7236 = vpop.permute.xlu0 %7235
      %7237 = vrot.lane.b32.xlu0 %v7170, 32
      %v7238 = vpop.permute.xlu0 %7237
      %7239 = vrot.lane.b32.xlu0 %v7171, 32
      %v7240 = vpop.permute.xlu0 %7239
      %7241 = vrot.lane.b32.xlu0 %v7172, 32
      %v7242 = vpop.permute.xlu0 %7241
      %7243 = vrot.lane.b32.xlu0 %v7173, 32
      %v7244 = vpop.permute.xlu0 %7243
      %7245 = vrot.lane.b32.xlu0 %v7174, 32
      %v7246 = vpop.permute.xlu0 %7245
      %7247 = vrot.lane.b32.xlu0 %v7175, 32
      %v7248 = vpop.permute.xlu0 %7247
      %7249 = vrot.lane.b32.xlu0 %v7176, 32
      %v7250 = vpop.permute.xlu0 %7249
      %7251 = vrot.lane.b32.xlu0 %v7177, 32
      %v7252 = vpop.permute.xlu0 %7251
      %7253 = vrot.lane.b32.xlu0 %v7178, 32
      %v7254 = vpop.permute.xlu0 %7253
      %7255 = vrot.lane.b32.xlu0 %v7179, 32
      %v7256 = vpop.permute.xlu0 %7255
      %7257 = vrot.lane.b32.xlu0 %v7180, 32
      %v7258 = vpop.permute.xlu0 %7257
      %7259 = vrot.lane.b32.xlu0 %v7181, 32
      %v7260 = vpop.permute.xlu0 %7259
      %7261 = vrot.lane.b32.xlu0 %v7182, 32
      %v7262 = vpop.permute.xlu0 %7261
      %7263 = vrot.lane.b32.xlu0 %v7183, 32
      %v7264 = vpop.permute.xlu0 %7263
      %7265 = vrot.lane.b32.xlu0 %v7184, 32
      %v7266 = vpop.permute.xlu0 %7265
      %7267 = vrot.lane.b32.xlu0 %v7185, 32
      %v7268 = vpop.permute.xlu0 %7267
      %7269 = vrot.lane.b32.xlu0 %v7186, 32
      %v7270 = vpop.permute.xlu0 %7269
      %7271 = vrot.lane.b32.xlu0 %v7187, 32
      %v7272 = vpop.permute.xlu0 %7271
      %7273 = vrot.lane.b32.xlu0 %v7188, 32
      %v7274 = vpop.permute.xlu0 %7273
      %7275 = vrot.lane.b32.xlu0 %v7189, 32
      %v7276 = vpop.permute.xlu0 %7275
      %7277 = vrot.lane.b32.xlu0 %v7190, 32
      %v7278 = vpop.permute.xlu0 %7277
      %7279 = vrot.lane.b32.xlu0 %v7191, 32
      %v7280 = vpop.permute.xlu0 %7279
      %7281 = vrot.lane.b32.xlu0 %v7192, 32
      %v7282 = vpop.permute.xlu0 %7281
      %7283 = vrot.lane.b32.xlu0 %v7193, 32
      %v7284 = vpop.permute.xlu0 %7283
      %7285 = vrot.lane.b32.xlu0 %v7194, 32
      %v7286 = vpop.permute.xlu0 %7285
      %7287 = vrot.lane.b32.xlu0 %v7195, 32
      %v7288 = vpop.permute.xlu0 %7287
      %7289 = vrot.lane.b32.xlu0 %v7196, 32
      %v7290 = vpop.permute.xlu0 %7289
      %7291 = vrot.lane.b32.xlu0 %v7197, 32
      %v7292 = vpop.permute.xlu0 %7291
      %7293 = vrot.lane.b32.xlu0 %v7198, 32
      %v7294 = vpop.permute.xlu0 %7293
      %v7327 = vadd.f32 %v7033, %v7232
      %v7328 = vadd.f32 %v7034, %v7234
      %v7329 = vadd.f32 %v7035, %v7236
      %v7330 = vadd.f32 %v7036, %v7238
      %v7331 = vadd.f32 %v7037, %v7240
      %v7332 = vadd.f32 %v7038, %v7242
      %v7333 = vadd.f32 %v7039, %v7244
      %v7334 = vadd.f32 %v7040, %v7246
      %v7335 = vadd.f32 %v7041, %v7248
      %v7336 = vadd.f32 %v7042, %v7250
      %v7337 = vadd.f32 %v7043, %v7252
      %v7338 = vadd.f32 %v7044, %v7254
      %v7339 = vadd.f32 %v7045, %v7256
      %v7340 = vadd.f32 %v7046, %v7258
      %v7341 = vadd.f32 %v7047, %v7260
      %v7342 = vadd.f32 %v7048, %v7262
      %v7343 = vadd.f32 %v7049, %v7264
      %v7344 = vadd.f32 %v7050, %v7266
      %v7345 = vadd.f32 %v7051, %v7268
      %v7346 = vadd.f32 %v7052, %v7270
      %v7347 = vadd.f32 %v7053, %v7272
      %v7348 = vadd.f32 %v7054, %v7274
      %v7349 = vadd.f32 %v7055, %v7276
      %v7350 = vadd.f32 %v7056, %v7278
      %v7351 = vadd.f32 %v7057, %v7280
      %v7352 = vadd.f32 %v7058, %v7282
      %v7353 = vadd.f32 %v7059, %v7284
      %v7354 = vadd.f32 %v7060, %v7286
      %v7355 = vadd.f32 %v7061, %v7288
      %v7356 = vadd.f32 %v7062, %v7290
      %v7357 = vadd.f32 %v7063, %v7292
      %v7358 = vadd.f32 %v7064, %v7294
      %v7359 = vrot.slane %v6236, 1
      %v7360 = vsel %vm1577, %v6782, %v7359
      %v7393 = vsel %vm1577, %v7359, 0.0
      %v7394 = vmul.f32 %v6725, %v1735
      %v7395 = vmul.f32 %v6727, %v1739
      %v7396 = vmul.f32 %v6729, %v1743
      %v7397 = vmul.f32 %v6731, %v1747
      %v7398 = vmul.f32 %v6733, %v1751
      %v7399 = vmul.f32 %v6735, %v1755
      %v7400 = vmul.f32 %v6737, %v1759
      %v7401 = vmul.f32 %v6739, %v1763
      %v7402 = vmul.f32 %v6741, %v1767
      %v7403 = vmul.f32 %v6743, %v1771
      %v7404 = vmul.f32 %v6745, %v1775
      %v7405 = vmul.f32 %v6747, %v1779
      %v7406 = vmul.f32 %v6749, %v1783
      %v7407 = vmul.f32 %v6751, %v1787
      %v7408 = vmul.f32 %v6753, %v1791
      %v7409 = vmul.f32 %v6755, %v1795
      %v7410 = vmul.f32 %v6757, %v1799
      %v7411 = vmul.f32 %v6759, %v1803
      %v7412 = vmul.f32 %v6761, %v1807
      %v7413 = vmul.f32 %v6763, %v1811
      %v7414 = vmul.f32 %v6765, %v1815
      %v7415 = vmul.f32 %v6767, %v1819
      %v7416 = vmul.f32 %v6769, %v1823
      %v7417 = vmul.f32 %v6771, %v1827
      %v7418 = vmul.f32 %v6773, %v1831
      %v7419 = vmul.f32 %v6775, %v1835
      %v7420 = vmul.f32 %v6777, %v1839
      %v7421 = vmul.f32 %v6779, %v1843
      %v7422 = vmul.f32 %v6781, %v1847
      %v7423 = vmul.f32 %v6783, %v1851
      %v7424 = vmul.f32 %v7360, %v1855
      %v7425 = vmul.f32 %v7393, %v1859
      %7458 = vrot.lane.b32.xlu0 %v7394, 120
      %v7459 = vpop.permute.xlu0 %7458
      %7460 = vrot.lane.b32.xlu0 %v7395, 120
      %v7461 = vpop.permute.xlu0 %7460
      %7462 = vrot.lane.b32.xlu0 %v7396, 120
      %v7463 = vpop.permute.xlu0 %7462
      %7464 = vrot.lane.b32.xlu0 %v7397, 120
      %v7465 = vpop.permute.xlu0 %7464
      %7466 = vrot.lane.b32.xlu0 %v7398, 120
      %v7467 = vpop.permute.xlu0 %7466
      %7468 = vrot.lane.b32.xlu0 %v7399, 120
      %v7469 = vpop.permute.xlu0 %7468
      %7470 = vrot.lane.b32.xlu0 %v7400, 120
      %v7471 = vpop.permute.xlu0 %7470
      %7472 = vrot.lane.b32.xlu0 %v7401, 120
      %v7473 = vpop.permute.xlu0 %7472
      %7474 = vrot.lane.b32.xlu0 %v7402, 120
      %v7475 = vpop.permute.xlu0 %7474
      %7476 = vrot.lane.b32.xlu0 %v7403, 120
      %v7477 = vpop.permute.xlu0 %7476
      %7478 = vrot.lane.b32.xlu0 %v7404, 120
      %v7479 = vpop.permute.xlu0 %7478
      %7480 = vrot.lane.b32.xlu0 %v7405, 120
      %v7481 = vpop.permute.xlu0 %7480
      %7482 = vrot.lane.b32.xlu0 %v7406, 120
      %v7483 = vpop.permute.xlu0 %7482
      %7484 = vrot.lane.b32.xlu0 %v7407, 120
      %v7485 = vpop.permute.xlu0 %7484
      %7486 = vrot.lane.b32.xlu0 %v7408, 120
      %v7487 = vpop.permute.xlu0 %7486
      %7488 = vrot.lane.b32.xlu0 %v7409, 120
      %v7489 = vpop.permute.xlu0 %7488
      %7490 = vrot.lane.b32.xlu0 %v7410, 120
      %v7491 = vpop.permute.xlu0 %7490
      %7492 = vrot.lane.b32.xlu0 %v7411, 120
      %v7493 = vpop.permute.xlu0 %7492
      %7494 = vrot.lane.b32.xlu0 %v7412, 120
      %v7495 = vpop.permute.xlu0 %7494
      %7496 = vrot.lane.b32.xlu0 %v7413, 120
      %v7497 = vpop.permute.xlu0 %7496
      %7498 = vrot.lane.b32.xlu0 %v7414, 120
      %v7499 = vpop.permute.xlu0 %7498
      %7500 = vrot.lane.b32.xlu0 %v7415, 120
      %v7501 = vpop.permute.xlu0 %7500
      %7502 = vrot.lane.b32.xlu0 %v7416, 120
      %v7503 = vpop.permute.xlu0 %7502
      %7504 = vrot.lane.b32.xlu0 %v7417, 120
      %v7505 = vpop.permute.xlu0 %7504
      %7506 = vrot.lane.b32.xlu0 %v7418, 120
      %v7507 = vpop.permute.xlu0 %7506
      %7508 = vrot.lane.b32.xlu0 %v7419, 120
      %v7509 = vpop.permute.xlu0 %7508
      %7510 = vrot.lane.b32.xlu0 %v7420, 120
      %v7511 = vpop.permute.xlu0 %7510
      %7512 = vrot.lane.b32.xlu0 %v7421, 120
      %v7513 = vpop.permute.xlu0 %7512
      %7514 = vrot.lane.b32.xlu0 %v7422, 120
      %v7515 = vpop.permute.xlu0 %7514
      %7516 = vrot.lane.b32.xlu0 %v7423, 120
      %v7517 = vpop.permute.xlu0 %7516
      %7518 = vrot.lane.b32.xlu0 %v7424, 120
      %v7519 = vpop.permute.xlu0 %7518
      %7520 = vrot.lane.b32.xlu0 %v7425, 120
      %v7521 = vpop.permute.xlu0 %7520
      %v7554 = vadd.f32 %v7327, %v7459
      %v7555 = vadd.f32 %v7328, %v7461
      %v7556 = vadd.f32 %v7329, %v7463
      %v7557 = vadd.f32 %v7330, %v7465
      %v7558 = vadd.f32 %v7331, %v7467
      %v7559 = vadd.f32 %v7332, %v7469
      %v7560 = vadd.f32 %v7333, %v7471
      %v7561 = vadd.f32 %v7334, %v7473
      %v7562 = vadd.f32 %v7335, %v7475
      %v7563 = vadd.f32 %v7336, %v7477
      %v7564 = vadd.f32 %v7337, %v7479
      %v7565 = vadd.f32 %v7338, %v7481
      %v7566 = vadd.f32 %v7339, %v7483
      %v7567 = vadd.f32 %v7340, %v7485
      %v7568 = vadd.f32 %v7341, %v7487
      %v7569 = vadd.f32 %v7342, %v7489
      %v7570 = vadd.f32 %v7343, %v7491
      %v7571 = vadd.f32 %v7344, %v7493
      %v7572 = vadd.f32 %v7345, %v7495
      %v7573 = vadd.f32 %v7346, %v7497
      %v7574 = vadd.f32 %v7347, %v7499
      %v7575 = vadd.f32 %v7348, %v7501
      %v7576 = vadd.f32 %v7349, %v7503
      %v7577 = vadd.f32 %v7350, %v7505
      %v7578 = vadd.f32 %v7351, %v7507
      %v7579 = vadd.f32 %v7352, %v7509
      %v7580 = vadd.f32 %v7353, %v7511
      %v7581 = vadd.f32 %v7354, %v7513
      %v7582 = vadd.f32 %v7355, %v7515
      %v7583 = vadd.f32 %v7356, %v7517
      %v7584 = vadd.f32 %v7357, %v7519
      %v7585 = vadd.f32 %v7358, %v7521
      %v7589 = vsel %vm947, %v7068, 0.0
      %v7590 = vmul.f32 %v6272, %v1041
      %v7591 = vmul.f32 %v6274, %v1046
      %v7592 = vmul.f32 %v6276, %v1051
      %v7593 = vmul.f32 %v6278, %v1056
      %v7594 = vmul.f32 %v6280, %v1061
      %v7595 = vmul.f32 %v6282, %v1066
      %v7596 = vmul.f32 %v6284, %v1071
      %v7597 = vmul.f32 %v6286, %v1076
      %v7598 = vmul.f32 %v6288, %v1081
      %v7599 = vmul.f32 %v6290, %v1086
      %v7600 = vmul.f32 %v6292, %v1091
      %v7601 = vmul.f32 %v6294, %v1096
      %v7602 = vmul.f32 %v6296, %v1101
      %v7603 = vmul.f32 %v6298, %v1106
      %v7604 = vmul.f32 %v6300, %v1111
      %v7605 = vmul.f32 %v6302, %v1116
      %v7606 = vmul.f32 %v6304, %v1121
      %v7607 = vmul.f32 %v6306, %v1126
      %v7608 = vmul.f32 %v6308, %v1131
      %v7609 = vmul.f32 %v6310, %v1136
      %v7610 = vmul.f32 %v6312, %v1141
      %v7611 = vmul.f32 %v6314, %v1146
      %v7612 = vmul.f32 %v6316, %v1151
      %v7613 = vmul.f32 %v6318, %v1156
      %v7614 = vmul.f32 %v6320, %v1161
      %v7615 = vmul.f32 %v6322, %v1166
      %v7616 = vmul.f32 %v6324, %v1171
      %v7617 = vmul.f32 %v6326, %v1176
      %v7618 = vmul.f32 %v7067, %v1181
      %v7619 = vmul.f32 %v7069, %v1186
      %v7620 = vmul.f32 %v7589, %v1191
      %7652 = vrot.lane.b32.xlu0 %v7590, 112
      %v7653 = vpop.permute.xlu0 %7652
      %7654 = vrot.lane.b32.xlu0 %v7591, 112
      %v7655 = vpop.permute.xlu0 %7654
      %7656 = vrot.lane.b32.xlu0 %v7592, 112
      %v7657 = vpop.permute.xlu0 %7656
      %7658 = vrot.lane.b32.xlu0 %v7593, 112
      %v7659 = vpop.permute.xlu0 %7658
      %7660 = vrot.lane.b32.xlu0 %v7594, 112
      %v7661 = vpop.permute.xlu0 %7660
      %7662 = vrot.lane.b32.xlu0 %v7595, 112
      %v7663 = vpop.permute.xlu0 %7662
      %7664 = vrot.lane.b32.xlu0 %v7596, 112
      %v7665 = vpop.permute.xlu0 %7664
      %7666 = vrot.lane.b32.xlu0 %v7597, 112
      %v7667 = vpop.permute.xlu0 %7666
      %7668 = vrot.lane.b32.xlu0 %v7598, 112
      %v7669 = vpop.permute.xlu0 %7668
      %7670 = vrot.lane.b32.xlu0 %v7599, 112
      %v7671 = vpop.permute.xlu0 %7670
      %7672 = vrot.lane.b32.xlu0 %v7600, 112
      %v7673 = vpop.permute.xlu0 %7672
      %7674 = vrot.lane.b32.xlu0 %v7601, 112
      %v7675 = vpop.permute.xlu0 %7674
      %7676 = vrot.lane.b32.xlu0 %v7602, 112
      %v7677 = vpop.permute.xlu0 %7676
      %7678 = vrot.lane.b32.xlu0 %v7603, 112
      %v7679 = vpop.permute.xlu0 %7678
      %7680 = vrot.lane.b32.xlu0 %v7604, 112
      %v7681 = vpop.permute.xlu0 %7680
      %7682 = vrot.lane.b32.xlu0 %v7605, 112
      %v7683 = vpop.permute.xlu0 %7682
      %7684 = vrot.lane.b32.xlu0 %v7606, 112
      %v7685 = vpop.permute.xlu0 %7684
      %7686 = vrot.lane.b32.xlu0 %v7607, 112
      %v7687 = vpop.permute.xlu0 %7686
      %7688 = vrot.lane.b32.xlu0 %v7608, 112
      %v7689 = vpop.permute.xlu0 %7688
      %7690 = vrot.lane.b32.xlu0 %v7609, 112
      %v7691 = vpop.permute.xlu0 %7690
      %7692 = vrot.lane.b32.xlu0 %v7610, 112
      %v7693 = vpop.permute.xlu0 %7692
      %7694 = vrot.lane.b32.xlu0 %v7611, 112
      %v7695 = vpop.permute.xlu0 %7694
      %7696 = vrot.lane.b32.xlu0 %v7612, 112
      %v7697 = vpop.permute.xlu0 %7696
      %7698 = vrot.lane.b32.xlu0 %v7613, 112
      %v7699 = vpop.permute.xlu0 %7698
      %7700 = vrot.lane.b32.xlu0 %v7614, 112
      %v7701 = vpop.permute.xlu0 %7700
      %7702 = vrot.lane.b32.xlu0 %v7615, 112
      %v7703 = vpop.permute.xlu0 %7702
      %7704 = vrot.lane.b32.xlu0 %v7616, 112
      %v7705 = vpop.permute.xlu0 %7704
      %7706 = vrot.lane.b32.xlu0 %v7617, 112
      %v7707 = vpop.permute.xlu0 %7706
      %7708 = vrot.lane.b32.xlu0 %v7618, 112
      %v7709 = vpop.permute.xlu0 %7708
      %7710 = vrot.lane.b32.xlu0 %v7619, 112
      %v7711 = vpop.permute.xlu0 %7710
      %7712 = vrot.lane.b32.xlu0 %v7620, 112
      %v7713 = vpop.permute.xlu0 %7712
      %v7745 = vadd.f32 %v7554, %v7653
      %v7746 = vadd.f32 %v7555, %v7655
      %v7747 = vadd.f32 %v7556, %v7657
      %v7748 = vadd.f32 %v7557, %v7659
      %v7749 = vadd.f32 %v7558, %v7661
      %v7750 = vadd.f32 %v7559, %v7663
      %v7751 = vadd.f32 %v7560, %v7665
      %v7752 = vadd.f32 %v7561, %v7667
      %v7753 = vadd.f32 %v7562, %v7669
      %v7754 = vadd.f32 %v7563, %v7671
      %v7755 = vadd.f32 %v7564, %v7673
      %v7756 = vadd.f32 %v7565, %v7675
      %v7757 = vadd.f32 %v7566, %v7677
      %v7758 = vadd.f32 %v7567, %v7679
      %v7759 = vadd.f32 %v7568, %v7681
      %v7760 = vadd.f32 %v7569, %v7683
      %v7761 = vadd.f32 %v7570, %v7685
      %v7762 = vadd.f32 %v7571, %v7687
      %v7763 = vadd.f32 %v7572, %v7689
      %v7764 = vadd.f32 %v7573, %v7691
      %v7765 = vadd.f32 %v7574, %v7693
      %v7766 = vadd.f32 %v7575, %v7695
      %v7767 = vadd.f32 %v7576, %v7697
      %v7768 = vadd.f32 %v7577, %v7699
      %v7769 = vadd.f32 %v7578, %v7701
      %v7770 = vadd.f32 %v7579, %v7703
      %v7771 = vadd.f32 %v7580, %v7705
      %v7772 = vadd.f32 %v7581, %v7707
      %v7773 = vadd.f32 %v7582, %v7709
      %v7774 = vadd.f32 %v7583, %v7711
      %v7775 = vadd.f32 %v7584, %v7713
      %v7776 = vadd.f32 %v7585, %v2705
      %7777 = vrot.lane.b32.xlu0 %v6164, 104
      %v7778 = vpop.permute.xlu0 %7777
      %7779 = vrot.lane.b32.xlu0 %v6166, 104
      %v7780 = vpop.permute.xlu0 %7779
      %7781 = vrot.lane.b32.xlu0 %v6169, 104
      %v7782 = vpop.permute.xlu0 %7781
      %7783 = vrot.lane.b32.xlu0 %v6171, 104
      %v7784 = vpop.permute.xlu0 %7783
      %7785 = vrot.lane.b32.xlu0 %v6174, 104
      %v7786 = vpop.permute.xlu0 %7785
      %7787 = vrot.lane.b32.xlu0 %v6176, 104
      %v7788 = vpop.permute.xlu0 %7787
      %7789 = vrot.lane.b32.xlu0 %v6179, 104
      %v7790 = vpop.permute.xlu0 %7789
      %7791 = vrot.lane.b32.xlu0 %v6181, 104
      %v7792 = vpop.permute.xlu0 %7791
      %7793 = vrot.lane.b32.xlu0 %v6184, 104
      %v7794 = vpop.permute.xlu0 %7793
      %7795 = vrot.lane.b32.xlu0 %v6186, 104
      %v7796 = vpop.permute.xlu0 %7795
      %7797 = vrot.lane.b32.xlu0 %v6189, 104
      %v7798 = vpop.permute.xlu0 %7797
      %7799 = vrot.lane.b32.xlu0 %v6191, 104
      %v7800 = vpop.permute.xlu0 %7799
      %7801 = vrot.lane.b32.xlu0 %v6194, 104
      %v7802 = vpop.permute.xlu0 %7801
      %7803 = vrot.lane.b32.xlu0 %v6196, 104
      %v7804 = vpop.permute.xlu0 %7803
      %7805 = vrot.lane.b32.xlu0 %v6199, 104
      %v7806 = vpop.permute.xlu0 %7805
      %7807 = vrot.lane.b32.xlu0 %v6201, 104
      %v7808 = vpop.permute.xlu0 %7807
      %7809 = vrot.lane.b32.xlu0 %v6204, 104
      %v7810 = vpop.permute.xlu0 %7809
      %7811 = vrot.lane.b32.xlu0 %v6206, 104
      %v7812 = vpop.permute.xlu0 %7811
      %7813 = vrot.lane.b32.xlu0 %v6209, 104
      %v7814 = vpop.permute.xlu0 %7813
      %7815 = vrot.lane.b32.xlu0 %v6211, 104
      %v7816 = vpop.permute.xlu0 %7815
      %7817 = vrot.lane.b32.xlu0 %v6214, 104
      %v7818 = vpop.permute.xlu0 %7817
      %7819 = vrot.lane.b32.xlu0 %v6216, 104
      %v7820 = vpop.permute.xlu0 %7819
      %7821 = vrot.lane.b32.xlu0 %v6219, 104
      %v7822 = vpop.permute.xlu0 %7821
      %7823 = vrot.lane.b32.xlu0 %v6221, 104
      %v7824 = vpop.permute.xlu0 %7823
      %7825 = vrot.lane.b32.xlu0 %v6224, 104
      %v7826 = vpop.permute.xlu0 %7825
      %7827 = vrot.lane.b32.xlu0 %v6226, 104
      %v7828 = vpop.permute.xlu0 %7827
      %7829 = vrot.lane.b32.xlu0 %v6229, 104
      %v7830 = vpop.permute.xlu0 %7829
      %7831 = vrot.lane.b32.xlu0 %v6231, 104
      %v7832 = vpop.permute.xlu0 %7831
      %7833 = vrot.lane.b32.xlu0 %v6234, 104
      %v7834 = vpop.permute.xlu0 %7833
      %7835 = vrot.lane.b32.xlu0 %v6236, 104
      %v7836 = vpop.permute.xlu0 %7835
      %v7867 = vadd.f32 %v7745, %v7778
      %v7868 = vadd.f32 %v7746, %v7780
      %v7869 = vadd.f32 %v7747, %v7782
      %v7870 = vadd.f32 %v7748, %v7784
      %v7871 = vadd.f32 %v7749, %v7786
      %v7872 = vadd.f32 %v7750, %v7788
      %v7873 = vadd.f32 %v7751, %v7790
      %v7874 = vadd.f32 %v7752, %v7792
      %v7875 = vadd.f32 %v7753, %v7794
      %v7876 = vadd.f32 %v7754, %v7796
      %v7877 = vadd.f32 %v7755, %v7798
      %v7878 = vadd.f32 %v7756, %v7800
      %v7879 = vadd.f32 %v7757, %v7802
      %v7880 = vadd.f32 %v7758, %v7804
      %v7881 = vadd.f32 %v7759, %v7806
      %v7882 = vadd.f32 %v7760, %v7808
      %v7883 = vadd.f32 %v7761, %v7810
      %v7884 = vadd.f32 %v7762, %v7812
      %v7885 = vadd.f32 %v7763, %v7814
      %v7886 = vadd.f32 %v7764, %v7816
      %v7887 = vadd.f32 %v7765, %v7818
      %v7888 = vadd.f32 %v7766, %v7820
      %v7889 = vadd.f32 %v7767, %v7822
      %v7890 = vadd.f32 %v7768, %v7824
      %v7891 = vadd.f32 %v7769, %v7826
      %v7892 = vadd.f32 %v7770, %v7828
      %v7893 = vadd.f32 %v7771, %v7830
      %v7894 = vadd.f32 %v7772, %v7832
      %v7895 = vadd.f32 %v7773, %v7834
      %v7896 = vadd.f32 %v7774, %v7836
      %v7897 = vadd.f32 %v7775, %v2831
      %v7898 = vadd.f32 %v7776, %v2831
      %v7899 = vmul.f32 %v6729, %v1735
      %v7900 = vmul.f32 %v6731, %v1739
      %v7901 = vmul.f32 %v6733, %v1743
      %v7902 = vmul.f32 %v6735, %v1747
      %v7903 = vmul.f32 %v6737, %v1751
      %v7904 = vmul.f32 %v6739, %v1755
      %v7905 = vmul.f32 %v6741, %v1759
      %v7906 = vmul.f32 %v6743, %v1763
      %v7907 = vmul.f32 %v6745, %v1767
      %v7908 = vmul.f32 %v6747, %v1771
      %v7909 = vmul.f32 %v6749, %v1775
      %v7910 = vmul.f32 %v6751, %v1779
      %v7911 = vmul.f32 %v6753, %v1783
      %v7912 = vmul.f32 %v6755, %v1787
      %v7913 = vmul.f32 %v6757, %v1791
      %v7914 = vmul.f32 %v6759, %v1795
      %v7915 = vmul.f32 %v6761, %v1799
      %v7916 = vmul.f32 %v6763, %v1803
      %v7917 = vmul.f32 %v6765, %v1807
      %v7918 = vmul.f32 %v6767, %v1811
      %v7919 = vmul.f32 %v6769, %v1815
      %v7920 = vmul.f32 %v6771, %v1819
      %v7921 = vmul.f32 %v6773, %v1823
      %v7922 = vmul.f32 %v6775, %v1827
      %v7923 = vmul.f32 %v6777, %v1831
      %v7924 = vmul.f32 %v6779, %v1835
      %v7925 = vmul.f32 %v6781, %v1839
      %v7926 = vmul.f32 %v6783, %v1843
      %v7927 = vmul.f32 %v7360, %v1847
      %v7928 = vmul.f32 %v7393, %v1851
      %7959 = vrot.lane.b32.xlu0 %v7899, 96
      %v7960 = vpop.permute.xlu0 %7959
      %7961 = vrot.lane.b32.xlu0 %v7900, 96
      %v7962 = vpop.permute.xlu0 %7961
      %7963 = vrot.lane.b32.xlu0 %v7901, 96
      %v7964 = vpop.permute.xlu0 %7963
      %7965 = vrot.lane.b32.xlu0 %v7902, 96
      %v7966 = vpop.permute.xlu0 %7965
      %7967 = vrot.lane.b32.xlu0 %v7903, 96
      %v7968 = vpop.permute.xlu0 %7967
      %7969 = vrot.lane.b32.xlu0 %v7904, 96
      %v7970 = vpop.permute.xlu0 %7969
      %7971 = vrot.lane.b32.xlu0 %v7905, 96
      %v7972 = vpop.permute.xlu0 %7971
      %7973 = vrot.lane.b32.xlu0 %v7906, 96
      %v7974 = vpop.permute.xlu0 %7973
      %7975 = vrot.lane.b32.xlu0 %v7907, 96
      %v7976 = vpop.permute.xlu0 %7975
      %7977 = vrot.lane.b32.xlu0 %v7908, 96
      %v7978 = vpop.permute.xlu0 %7977
      %7979 = vrot.lane.b32.xlu0 %v7909, 96
      %v7980 = vpop.permute.xlu0 %7979
      %7981 = vrot.lane.b32.xlu0 %v7910, 96
      %v7982 = vpop.permute.xlu0 %7981
      %7983 = vrot.lane.b32.xlu0 %v7911, 96
      %v7984 = vpop.permute.xlu0 %7983
      %7985 = vrot.lane.b32.xlu0 %v7912, 96
      %v7986 = vpop.permute.xlu0 %7985
      %7987 = vrot.lane.b32.xlu0 %v7913, 96
      %v7988 = vpop.permute.xlu0 %7987
      %7989 = vrot.lane.b32.xlu0 %v7914, 96
      %v7990 = vpop.permute.xlu0 %7989
      %7991 = vrot.lane.b32.xlu0 %v7915, 96
      %v7992 = vpop.permute.xlu0 %7991
      %7993 = vrot.lane.b32.xlu0 %v7916, 96
      %v7994 = vpop.permute.xlu0 %7993
      %7995 = vrot.lane.b32.xlu0 %v7917, 96
      %v7996 = vpop.permute.xlu0 %7995
      %7997 = vrot.lane.b32.xlu0 %v7918, 96
      %v7998 = vpop.permute.xlu0 %7997
      %7999 = vrot.lane.b32.xlu0 %v7919, 96
      %v8000 = vpop.permute.xlu0 %7999
      %8001 = vrot.lane.b32.xlu0 %v7920, 96
      %v8002 = vpop.permute.xlu0 %8001
      %8003 = vrot.lane.b32.xlu0 %v7921, 96
      %v8004 = vpop.permute.xlu0 %8003
      %8005 = vrot.lane.b32.xlu0 %v7922, 96
      %v8006 = vpop.permute.xlu0 %8005
      %8007 = vrot.lane.b32.xlu0 %v7923, 96
      %v8008 = vpop.permute.xlu0 %8007
      %8009 = vrot.lane.b32.xlu0 %v7924, 96
      %v8010 = vpop.permute.xlu0 %8009
      %8011 = vrot.lane.b32.xlu0 %v7925, 96
      %v8012 = vpop.permute.xlu0 %8011
      %8013 = vrot.lane.b32.xlu0 %v7926, 96
      %v8014 = vpop.permute.xlu0 %8013
      %8015 = vrot.lane.b32.xlu0 %v7927, 96
      %v8016 = vpop.permute.xlu0 %8015
      %8017 = vrot.lane.b32.xlu0 %v7928, 96
      %v8018 = vpop.permute.xlu0 %8017
      %v8049 = vadd.f32 %v7867, %v7960
      %v8050 = vadd.f32 %v7868, %v7962
      %v8051 = vadd.f32 %v7869, %v7964
      %v8052 = vadd.f32 %v7870, %v7966
      %v8053 = vadd.f32 %v7871, %v7968
      %v8054 = vadd.f32 %v7872, %v7970
      %v8055 = vadd.f32 %v7873, %v7972
      %v8056 = vadd.f32 %v7874, %v7974
      %v8057 = vadd.f32 %v7875, %v7976
      %v8058 = vadd.f32 %v7876, %v7978
      %v8059 = vadd.f32 %v7877, %v7980
      %v8060 = vadd.f32 %v7878, %v7982
      %v8061 = vadd.f32 %v7879, %v7984
      %v8062 = vadd.f32 %v7880, %v7986
      %v8063 = vadd.f32 %v7881, %v7988
      %v8064 = vadd.f32 %v7882, %v7990
      %v8065 = vadd.f32 %v7883, %v7992
      %v8066 = vadd.f32 %v7884, %v7994
      %v8067 = vadd.f32 %v7885, %v7996
      %v8068 = vadd.f32 %v7886, %v7998
      %v8069 = vadd.f32 %v7887, %v8000
      %v8070 = vadd.f32 %v7888, %v8002
      %v8071 = vadd.f32 %v7889, %v8004
      %v8072 = vadd.f32 %v7890, %v8006
      %v8073 = vadd.f32 %v7891, %v8008
      %v8074 = vadd.f32 %v7892, %v8010
      %v8075 = vadd.f32 %v7893, %v8012
      %v8076 = vadd.f32 %v7894, %v8014
      %v8077 = vadd.f32 %v7895, %v8016
      %v8078 = vadd.f32 %v7896, %v8018
      %v8079 = vadd.f32 %v7897, %v3020
      %v8080 = vadd.f32 %v7898, %v3022
      %8113 = vrot.lane.b32.xlu0 %v8049, 120
      %v8114 = vpop.permute.xlu0 %8113
      %8115 = vrot.lane.b32.xlu0 %v8050, 120
      %v8116 = vpop.permute.xlu0 %8115
      %8117 = vrot.lane.b32.xlu0 %v8051, 120
      %v8118 = vpop.permute.xlu0 %8117
      %8119 = vrot.lane.b32.xlu0 %v8052, 120
      %v8120 = vpop.permute.xlu0 %8119
      %8121 = vrot.lane.b32.xlu0 %v8053, 120
      %v8122 = vpop.permute.xlu0 %8121
      %8123 = vrot.lane.b32.xlu0 %v8054, 120
      %v8124 = vpop.permute.xlu0 %8123
      %8125 = vrot.lane.b32.xlu0 %v8055, 120
      %v8126 = vpop.permute.xlu0 %8125
      %8127 = vrot.lane.b32.xlu0 %v8056, 120
      %v8128 = vpop.permute.xlu0 %8127
      %8129 = vrot.lane.b32.xlu0 %v8057, 120
      %v8130 = vpop.permute.xlu0 %8129
      %8131 = vrot.lane.b32.xlu0 %v8058, 120
      %v8132 = vpop.permute.xlu0 %8131
      %8133 = vrot.lane.b32.xlu0 %v8059, 120
      %v8134 = vpop.permute.xlu0 %8133
      %8135 = vrot.lane.b32.xlu0 %v8060, 120
      %v8136 = vpop.permute.xlu0 %8135
      %8137 = vrot.lane.b32.xlu0 %v8061, 120
      %v8138 = vpop.permute.xlu0 %8137
      %8139 = vrot.lane.b32.xlu0 %v8062, 120
      %v8140 = vpop.permute.xlu0 %8139
      %8141 = vrot.lane.b32.xlu0 %v8063, 120
      %v8142 = vpop.permute.xlu0 %8141
      %8143 = vrot.lane.b32.xlu0 %v8064, 120
      %v8144 = vpop.permute.xlu0 %8143
      %8145 = vrot.lane.b32.xlu0 %v8065, 120
      %v8146 = vpop.permute.xlu0 %8145
      %8147 = vrot.lane.b32.xlu0 %v8066, 120
      %v8148 = vpop.permute.xlu0 %8147
      %8149 = vrot.lane.b32.xlu0 %v8067, 120
      %v8150 = vpop.permute.xlu0 %8149
      %8151 = vrot.lane.b32.xlu0 %v8068, 120
      %v8152 = vpop.permute.xlu0 %8151
      %8153 = vrot.lane.b32.xlu0 %v8069, 120
      %v8154 = vpop.permute.xlu0 %8153
      %8155 = vrot.lane.b32.xlu0 %v8070, 120
      %v8156 = vpop.permute.xlu0 %8155
      %8157 = vrot.lane.b32.xlu0 %v8071, 120
      %v8158 = vpop.permute.xlu0 %8157
      %8159 = vrot.lane.b32.xlu0 %v8072, 120
      %v8160 = vpop.permute.xlu0 %8159
      %8161 = vrot.lane.b32.xlu0 %v8073, 120
      %v8162 = vpop.permute.xlu0 %8161
      %8163 = vrot.lane.b32.xlu0 %v8074, 120
      %v8164 = vpop.permute.xlu0 %8163
      %8165 = vrot.lane.b32.xlu0 %v8075, 120
      %v8166 = vpop.permute.xlu0 %8165
      %8167 = vrot.lane.b32.xlu0 %v8076, 120
      %v8168 = vpop.permute.xlu0 %8167
      %8169 = vrot.lane.b32.xlu0 %v8077, 120
      %v8170 = vpop.permute.xlu0 %8169
      %8171 = vrot.lane.b32.xlu0 %v8078, 120
      %v8172 = vpop.permute.xlu0 %8171
      %8173 = vrot.lane.b32.xlu0 %v8079, 120
      %v8174 = vpop.permute.xlu0 %8173
      %8175 = vrot.lane.b32.xlu0 %v8080, 120
      %v8176 = vpop.permute.xlu0 %8175
      %vm8209 = vcmask 261312
      %8210 = vst.msk [vmem:[%s332] sm:$0xff] %vm8209, %v8114
      %8211 = vst.msk [vmem:[%s332 + $0x8] sm:$0xff] %vm8209, %v8116
      %8212 = vst.msk [vmem:[%s332 + $0x10] sm:$0xff] %vm8209, %v8118
      %8213 = vst.msk [vmem:[%s332 + $0x18] sm:$0xff] %vm8209, %v8120
      %8214 = vst.msk [vmem:[%s332 + $0x20] sm:$0xff] %vm8209, %v8122
      %8215 = vst.msk [vmem:[%s332 + $0x28] sm:$0xff] %vm8209, %v8124
      %8216 = vst.msk [vmem:[%s332 + $0x30] sm:$0xff] %vm8209, %v8126
      %8217 = vst.msk [vmem:[%s332 + $0x38] sm:$0xff] %vm8209, %v8128
      %8218 = vst.msk [vmem:[%s332 + $0x40] sm:$0xff] %vm8209, %v8130
      %8219 = vst.msk [vmem:[%s332 + $0x48] sm:$0xff] %vm8209, %v8132
      %8220 = vst.msk [vmem:[%s332 + $0x50] sm:$0xff] %vm8209, %v8134
      %8221 = vst.msk [vmem:[%s332 + $0x58] sm:$0xff] %vm8209, %v8136
      %8222 = vst.msk [vmem:[%s332 + $0x60] sm:$0xff] %vm8209, %v8138
      %8223 = vst.msk [vmem:[%s332 + $0x68] sm:$0xff] %vm8209, %v8140
      %8224 = vst.msk [vmem:[%s332 + $0x70] sm:$0xff] %vm8209, %v8142
      %8225 = vst.msk [vmem:[%s332 + $0x78] sm:$0xff] %vm8209, %v8144
      %8226 = vst.msk [vmem:[%s332 + $0x80] sm:$0xff] %vm8209, %v8146
      %8227 = vst.msk [vmem:[%s332 + $0x88] sm:$0xff] %vm8209, %v8148
      %8228 = vst.msk [vmem:[%s332 + $0x90] sm:$0xff] %vm8209, %v8150
      %8229 = vst.msk [vmem:[%s332 + $0x98] sm:$0xff] %vm8209, %v8152
      %8230 = vst.msk [vmem:[%s332 + $0xa0] sm:$0xff] %vm8209, %v8154
      %8231 = vst.msk [vmem:[%s332 + $0xa8] sm:$0xff] %vm8209, %v8156
      %8232 = vst.msk [vmem:[%s332 + $0xb0] sm:$0xff] %vm8209, %v8158
      %8233 = vst.msk [vmem:[%s332 + $0xb8] sm:$0xff] %vm8209, %v8160
      %8234 = vst.msk [vmem:[%s332 + $0xc0] sm:$0xff] %vm8209, %v8162
      %8235 = vst.msk [vmem:[%s332 + $0xc8] sm:$0xff] %vm8209, %v8164
      %8236 = vst.msk [vmem:[%s332 + $0xd0] sm:$0xff] %vm8209, %v8166
      %8237 = vst.msk [vmem:[%s332 + $0xd8] sm:$0xff] %vm8209, %v8168
      %8238 = vst.msk [vmem:[%s332 + $0xe0] sm:$0xff] %vm8209, %v8170
      %8239 = vst.msk [vmem:[%s332 + $0xe8] sm:$0xff] %vm8209, %v8172
      %8240 = vst.msk [vmem:[%s332 + $0xf0] sm:$0xff] %vm8209, %v8174
      %8241 = vst.msk [vmem:[%s332 + $0xf8] sm:$0xff] %vm8209, %v8176
      %p8242 = scmp.lt.s32.totalorder %s20, 1
      %s8243 = scalar_select %p8242, %s20, 1
      %s8244 = smul.addr %s8243, 32
      %s8245 = smul.addr %s8244, 8
      %s8246 = scalar_lea.vmem %s9, %s8245
      // Predicated region
      $region57: #{tpu_custom_call.1} parent=55 // pred_check
        %p8247 = pneg %p232
      $region58: #{tpu_custom_call.1} parent=55 // pred_check_branch
        %8249 = sbr.rel (%p8247) target = $region60
      $region59: #{tpu_custom_call.1} parent=55 // pred_region
        _
      $region60: #{tpu_custom_call.1} parent=55 // pred_fallthru
        _
    $region56: #{tpu_custom_call.1} parent=5 // pred_fallthru
      _
    %p8250 = scmp.le.s32.totalorder 2, %s15
    // Predicated region
    $region61: #{tpu_custom_call.1} parent=5 // pred_check
      %p8251 = pneg %p8250
    $region62: #{tpu_custom_call.1} parent=5 // pred_check_branch
      %8253 = sbr.rel (%p8251) target = $region64
    $region63: #{tpu_custom_call.1} parent=5 // pred_region
      %s8254 = ssub.s32 %s15, 2
      // Predicated region
      $region65: #{tpu_custom_call.1} parent=63 // pred_check
        %p8255 = pneg %p238
      $region66: #{tpu_custom_call.1} parent=63 // pred_check_branch
        %8257 = sbr.rel (%p8255) target = $region68
      $region67: #{tpu_custom_call.1} parent=63 // pred_region
        %p8258 = scmp.lt.s32.totalorder %s21, 1
        %s8259 = scalar_select %p8258, %s21, 1
        %s8260 = smul.addr %s8259, 32
        %s8261 = smul.addr %s8260, 8
        %s8262 = scalar_lea.vmem %s9, %s8261
      $region68: #{tpu_custom_call.1} parent=63 // pred_fallthru
        _
    $region64: #{tpu_custom_call.1} parent=5 // pred_fallthru
      _
  $region6: #{tpu_custom_call.1} parent=0 // loop_footer
    %s19 = sadd.s32 1, %s15
  $region7: #{tpu_custom_call.1} parent=0 // loop_footer_branch
    %14 = sbr.rel target = $region3
  $region8: #{tpu_custom_call.1} parent=0 // loop_exit
    _

</llo_original>
